<compile_context>
chip_gen: v5e
topology: v5e:2x2
jax: 0.10.0
libtpu: 0.0.40
codegen_flags: <defaults>
</compile_context>

<pallas_src>
import functools
import math

import jax
import jax.numpy as jnp
from jax import lax
from jax.experimental import pallas as pl
from jax.experimental.pallas import tpu as pltpu

MATMUL_DTYPE = jnp.float32   # keep f32 on v5e; bf16 only halves bytes on v6e/v7x
LN_EPS = 1e-5


# ----------------------------------------------------------------------------
# In-kernel helpers (operate on VMEM values)
# ----------------------------------------------------------------------------
def _mxu(a, b, dims):
    return lax.dot_general(a.astype(MATMUL_DTYPE), b.astype(MATMUL_DTYPE), dims,
                           preferred_element_type=jnp.float32)


def _mm(a, b):                      # (M, K) @ (K, N)
    return _mxu(a, b, (((1,), (0,)), ((), ())))


def _layernorm(x, g, b):
    mu = jnp.mean(x, axis=-1, keepdims=True)
    xc = x - mu
    var = jnp.mean(xc * xc, axis=-1, keepdims=True)   # biased var (torch LayerNorm)
    return xc * lax.rsqrt(var + LN_EPS) * g + b


def _attn(q, k, v, wo, bo, nhead):
    """Softmax attention with the head-concat folded into the out-projection."""
    D = q.shape[-1]
    dh = D // nhead
    q = q * (1.0 / math.sqrt(dh))                      # scale q once, not each score mat
    acc = bo                                           # (1, D) bias, broadcasts up
    for h in range(nhead):                             # static unroll, nhead small
        sl = slice(h * dh, (h + 1) * dh)
        s = _mxu(q[:, sl], k[:, sl], (((1,), (1,)), ((), ())))      # (Lq, Lk)
        p = jnp.exp(s - jnp.max(s, axis=-1, keepdims=True))
        p = p * pl.reciprocal(jnp.sum(p, axis=-1, keepdims=True), approx=False)
        oh = _mxu(p, v[:, sl], (((1,), (0,)), ((), ())))            # (Lq, dh)
        acc = acc + _mxu(oh, wo[sl, :], (((1,), (0,)), ((), ())))   # partial out-proj
    return acc


# ----------------------------------------------------------------------------
# Fully fused transformer kernel: encoder + decoder + final LN, one batch elem
# ----------------------------------------------------------------------------
def _transformer_kernel(x_ref, pe_ref, qe_ref,
                        enc_wa_ref, enc_w1_ref, enc_w2_ref, enc_vd_ref, enc_b1_ref,
                        dec_wa_ref, dec_w1_ref, dec_w2_ref, dec_vd_ref, dec_b1_ref,
                        fin_ref, o_ref, *, nhead, n_enc, n_dec):
    x = x_ref[0]                      # (S, D)
    pe = pe_ref[0]                    # (S, D)
    qe = qe_ref[0]                    # (T, D)
    D = x.shape[-1]
    T = qe.shape[0]

    # ---------------- encoder (post-norm): q = k = x + pos, v = x ----------------
    for l in range(n_enc):
        w = enc_wa_ref[l]             # (D, 4D) = [Wq | Wk | Wv | Wo]
        vd = enc_vd_ref[l]            # (9, D)  = [bq bk bv bo g1 bn1 b2 g2 bn2]
        x_pe = x + pe
        q = _mm(x_pe, w[:, 0:D]) + vd[0:1]
        k = _mm(x_pe, w[:, D:2 * D]) + vd[1:2]
        v = _mm(x, w[:, 2 * D:3 * D]) + vd[2:3]
        sa = _attn(q, k, v, w[:, 3 * D:4 * D], vd[3:4], nhead)
        x = _layernorm(x + sa, vd[4:5], vd[5:6])
        hid = jnp.maximum(_mm(x, enc_w1_ref[l]) + enc_b1_ref[l], 0.0)
        ff = _mm(hid, enc_w2_ref[l]) + vd[6:7]
        x = _layernorm(x + ff, vd[7:8], vd[8:9])
    mem = x
    mem_pe = mem + pe

    # ---------------- decoder (post-norm, tgt = zeros), final LN fused -----------
    y = jnp.zeros((T, D), jnp.float32)
    for l in range(n_dec):
        w = dec_wa_ref[l]             # (D, 8D) = [sa Wq|Wk|Wv|Wo | ca Wq|Wk|Wv|Wo]
        vd = dec_vd_ref[l]            # (15, D)
        # self-attention: q = k = y + query_pos, v = y
        y_qe = y + qe
        q = _mm(y_qe, w[:, 0:D]) + vd[0:1]
        k = _mm(y_qe, w[:, D:2 * D]) + vd[1:2]
        v = _mm(y, w[:, 2 * D:3 * D]) + vd[2:3]
        sa = _attn(q, k, v, w[:, 3 * D:4 * D], vd[3:4], nhead)
        y = _layernorm(y + sa, vd[4:5], vd[5:6])
        # cross-attention: q = y + query_pos, k = mem + pos, v = mem
        q = _mm(y + qe, w[:, 4 * D:5 * D]) + vd[6:7]
        k = _mm(mem_pe, w[:, 5 * D:6 * D]) + vd[7:8]
        v = _mm(mem, w[:, 6 * D:7 * D]) + vd[8:9]
        ca = _attn(q, k, v, w[:, 7 * D:8 * D], vd[9:10], nhead)
        y = _layernorm(y + ca, vd[10:11], vd[11:12])
        # feed-forward (ReLU)
        hid = jnp.maximum(_mm(y, dec_w1_ref[l]) + dec_b1_ref[l], 0.0)
        ff = _mm(hid, dec_w2_ref[l]) + vd[12:13]
        y = _layernorm(y + ff, vd[13:14], vd[14:15])

    fin = fin_ref[...]                # (2, D) = [gamma; beta] of final decoder norm
    o_ref[0] = _layernorm(y, fin[0:1], fin[1:2])


def transformer_pallas(params, x, pe, q_emb, nhead):
    B, S, D = x.shape
    T = q_emb.shape[1]
    F = params["enc_w1"].shape[-1]
    n_enc = params["enc_wa"].shape[0]
    n_dec = params["dec_wa"].shape[0]

    weights = (params["enc_wa"], params["enc_w1"], params["enc_w2"],
               params["enc_vd"], params["enc_b1"],
               params["dec_wa"], params["dec_w1"], params["dec_w2"],
               params["dec_vd"], params["dec_b1"], params["fin"])

    def _const_spec(a):
        nd = a.ndim
        return pl.BlockSpec(a.shape, lambda b, _n=nd: (0,) * _n)

    # Rough advisory cost estimate (helps XLA schedule the tiny custom call).
    enc_fl = 8 * S * D * D + 4 * S * S * D + 4 * S * D * F
    dec_fl = 12 * T * D * D + 4 * S * D * D + 4 * T * T * D + 4 * T * S * D + 4 * T * D * F
    flops = B * (n_enc * enc_fl + n_dec * dec_fl)
    transc = B * (n_enc * nhead * S * S + n_dec * nhead * (T * T + T * S))
    bytes_acc = 4 * (x.size + pe.size + q_emb.size
                     + sum(w.size for w in weights) + B * T * D)

    return pl.pallas_call(
        functools.partial(_transformer_kernel, nhead=nhead, n_enc=n_enc, n_dec=n_dec),
        grid=(B,),
        out_shape=jax.ShapeDtypeStruct((B, T, D), jnp.float32),
        in_specs=[pl.BlockSpec((1, S, D), lambda b: (b, 0, 0)),    # x: per-batch block
                  pl.BlockSpec((1, S, D), lambda b: (0, 0, 0)),    # pos embed (broadcast)
                  pl.BlockSpec((1, T, D), lambda b: (0, 0, 0))]    # query embed (broadcast)
                 + [_const_spec(w) for w in weights],              # resident weights
        out_specs=pl.BlockSpec((1, T, D), lambda b: (b, 0, 0)),
        compiler_params=pltpu.CompilerParams(dimension_semantics=("parallel",)),
        cost_estimate=pl.CostEstimate(flops=flops, transcendentals=transc,
                                      bytes_accessed=bytes_acc),
    )(x, pe, q_emb, *weights)


# ----------------------------------------------------------------------------
# Input preparation (batch-major everywhere, broadcasting instead of tiling)
# ----------------------------------------------------------------------------
def _prepare_inputs(src, query_embed, pos_embed, latent_input, proprio_input,
                    additional_pos_embed, task_emb):
    if src.ndim == 4:
        bs, c, h, w = src.shape
        src_seq = src.reshape(bs, c, h * w).transpose(0, 2, 1)                 # (bs, HW, c)
        pe_img = pos_embed.reshape(pos_embed.shape[0], c, h * w).transpose(0, 2, 1)[:1]
        add_tok = jnp.stack([latent_input, proprio_input], axis=1)             # (bs, 2, c)
        if task_emb is not None:
            add_tok = jnp.concatenate([add_tok, task_emb[:, None, :]], axis=1)
        x = jnp.concatenate([add_tok, src_seq], axis=1)                        # (bs, S, c)
        pe = jnp.concatenate([additional_pos_embed[None], pe_img], axis=1)     # (1, S, c)
    else:
        assert src.ndim == 3
        x = src                                                                # (bs, hw, c)
        pe = pos_embed[None]                                                   # (1, hw, c)
    q_emb = query_embed[None]                                                  # (1, T, c)
    return x, pe, q_emb


@functools.partial(jax.jit, static_argnames=("nhead",))
def transformer_forward(params, src, mask, query_embed, pos_embed,
                        latent_input=None, proprio_input=None,
                        additional_pos_embed=None, task_emb=None, nhead=4):
    # TODO(synk): key_padding_mask (mask) path not implemented; only mask=None.
    assert mask is None
    x, pe, q_emb = _prepare_inputs(src, query_embed, pos_embed, latent_input,
                                   proprio_input, additional_pos_embed, task_emb)
    out = transformer_pallas(params, x, pe, q_emb, nhead)
    # torch: decoder output (T, bs, D) -> unsqueeze(0) -> transpose(1, 2) == (1, bs, T, D)
    return out[None]


# ----------------------------------------------------------------------------
# Pure-JAX reference (numerical check of the fused kernel)
# ----------------------------------------------------------------------------
def _ref_ln(x, g, b):
    mu = x.mean(-1, keepdims=True)
    xc = x - mu
    var = (xc * xc).mean(-1, keepdims=True)
    return xc * lax.rsqrt(var + LN_EPS) * g + b


def reference_forward(params, src, mask, query_embed, pos_embed,
                      latent_input=None, proprio_input=None,
                      additional_pos_embed=None, task_emb=None, nhead=4):
    assert mask is None
    x, pe, qe = _prepare_inputs(src, query_embed, pos_embed, latent_input,
                                proprio_input, additional_pos_embed, task_emb)
    B, S, D = x.shape
    T = qe.shape[1]
    n_enc = params["enc_wa"].shape[0]
    n_dec = params["dec_wa"].shape[0]
    dh = D // nhead

    def mha(q_in, k_in, v_in, wq, bq, wk, bk, wv, bv, wo, bo):
        L, Sk = q_in.shape[1], k_in.shape[1]
        q = (q_in @ wq + bq).reshape(B, L, nhead, dh)
        k = (k_in @ wk + bk).reshape(B, Sk, nhead, dh)
        v = (v_in @ wv + bv).reshape(B, Sk, nhead, dh)
        s = jnp.einsum("blhd,bshd->bhls", q, k) / math.sqrt(dh)
        p = jax.nn.softmax(s, axis=-1)
        o = jnp.einsum("bhls,bshd->blhd", p, v).reshape(B, L, D)
        return o @ wo + bo

    for l in range(n_enc):
        w, vd = params["enc_wa"][l], params["enc_vd"][l]
        sa = mha(x + pe, x + pe, x, w[:, :D], vd[0], w[:, D:2 * D], vd[1],
                 w[:, 2 * D:3 * D], vd[2], w[:, 3 * D:], vd[3])
        x = _ref_ln(x + sa, vd[4], vd[5])
        hid = jnp.maximum(x @ params["enc_w1"][l] + params["enc_b1"][l, 0], 0.0)
        x = _ref_ln(x + hid @ params["enc_w2"][l] + vd[6], vd[7], vd[8])
    mem = x

    y = jnp.zeros((B, T, D), jnp.float32)
    for l in range(n_dec):
        w, vd = params["dec_wa"][l], params["dec_vd"][l]
        sa = mha(y + qe, y + qe, y, w[:, :D], vd[0], w[:, D:2 * D], vd[1],
                 w[:, 2 * D:3 * D], vd[2], w[:, 3 * D:4 * D], vd[3])
        y = _ref_ln(y + sa, vd[4], vd[5])
        ca = mha(y + qe, mem + pe, mem, w[:, 4 * D:5 * D], vd[6], w[:, 5 * D:6 * D], vd[7],
                 w[:, 6 * D:7 * D], vd[8], w[:, 7 * D:], vd[9])
        y = _ref_ln(y + ca, vd[10], vd[11])
        hid = jnp.maximum(y @ params["dec_w1"][l] + params["dec_b1"][l, 0], 0.0)
        y = _ref_ln(y + hid @ params["dec_w2"][l] + vd[12], vd[13], vd[14])
    y = _ref_ln(y, params["fin"][0], params["fin"][1])
    return y[None]


# ----------------------------------------------------------------------------
# Deterministic parameter init (xavier-uniform weights, small random biases)
# ----------------------------------------------------------------------------
def _xavier(key, shape):
    limit = math.sqrt(6.0 / (shape[0] + shape[1]))
    return jax.random.uniform(key, shape, jnp.float32, -limit, limit)


def _vec(key, n, scale=0.02):
    return scale * jax.random.normal(key, (n,), jnp.float32)


def init_transformer(key, d, f, n_enc, n_dec):
    keys = jax.random.split(key, n_enc + n_dec + 1)
    enc_wa, enc_w1, enc_w2, enc_vd, enc_b1 = [], [], [], [], []
    for i in range(n_enc):
        k = jax.random.split(keys[i], 16)
        enc_wa.append(jnp.concatenate([_xavier(k[j], (d, d)) for j in range(4)], axis=1))
        enc_w1.append(_xavier(k[4], (d, f)))
        enc_w2.append(_xavier(k[5], (f, d)))
        enc_vd.append(jnp.stack([
            _vec(k[6], d), _vec(k[7], d), _vec(k[8], d), _vec(k[9], d),        # bq bk bv bo
            1.0 + _vec(k[10], d), _vec(k[11], d),                              # g1 bn1
            _vec(k[12], d),                                                    # b2
            1.0 + _vec(k[13], d), _vec(k[14], d)]))                            # g2 bn2
        enc_b1.append(_vec(k[15], f)[None])

    dec_wa, dec_w1, dec_w2, dec_vd, dec_b1 = [], [], [], [], []
    for i in range(n_dec):
        k = jax.random.split(keys[n_enc + i], 26)
        dec_wa.append(jnp.concatenate([_xavier(k[j], (d, d)) for j in range(8)], axis=1))
        dec_w1.append(_xavier(k[8], (d, f)))
        dec_w2.append(_xavier(k[9], (f, d)))
        dec_vd.append(jnp.stack([
            _vec(k[10], d), _vec(k[11], d), _vec(k[12], d), _vec(k[13], d),    # sa bq bk bv bo
            1.0 + _vec(k[14], d), _vec(k[15], d),                              # g1 bn1
            _vec(k[16], d), _vec(k[17], d), _vec(k[18], d), _vec(k[19], d),    # ca bq bk bv bo
            1.0 + _vec(k[20], d), _vec(k[21], d),                              # g2 bn2
            _vec(k[22], d),                                                    # b2
            1.0 + _vec(k[23], d), _vec(k[24], d)]))                            # g3 bn3
        dec_b1.append(_vec(k[25], f)[None])

    kf = jax.random.split(keys[-1], 2)
    fin = jnp.stack([1.0 + _vec(kf[0], d), _vec(kf[1], d)])
    return dict(enc_wa=jnp.stack(enc_wa), enc_w1=jnp.stack(enc_w1),
                enc_w2=jnp.stack(enc_w2), enc_vd=jnp.stack(enc_vd),
                enc_b1=jnp.stack(enc_b1),
                dec_wa=jnp.stack(dec_wa), dec_w1=jnp.stack(dec_w1),
                dec_w2=jnp.stack(dec_w2), dec_vd=jnp.stack(dec_vd),
                dec_b1=jnp.stack(dec_b1), fin=fin)


# ----------------------------------------------------------------------------
if __name__ == "__main__":
    d_model, nhead = 32, 4
    num_encoder_layers, num_decoder_layers, dim_feedforward = 2, 2, 64
    bs, h, w, num_queries = 2, 4, 4, 8

    key = jax.random.PRNGKey(0)
    k_par, k_in = jax.random.split(key)
    params = init_transformer(k_par, d_model, dim_feedforward,
                              num_encoder_layers, num_decoder_layers)

    ks = jax.random.split(k_in, 6)
    src = jax.random.normal(ks[0], (bs, d_model, h, w), jnp.float32)
    pos_embed = jax.random.normal(ks[1], (1, d_model, h, w), jnp.float32)
    query_embed = jax.random.normal(ks[2], (num_queries, d_model), jnp.float32)
    latent_input = jax.random.normal(ks[3], (bs, d_model), jnp.float32)
    proprio_input = jax.random.normal(ks[4], (bs, d_model), jnp.float32)
    additional_pos_embed = jax.random.normal(ks[5], (2, d_model), jnp.float32)

    out = transformer_forward(params, src, None, query_embed, pos_embed,
                              latent_input=latent_input,
                              proprio_input=proprio_input,
                              additional_pos_embed=additional_pos_embed,
                              task_emb=None, nhead=nhead)
    out = jax.block_until_ready(out)
    assert out.shape == (1, bs, num_queries, d_model), out.shape
    assert bool(jnp.all(jnp.isfinite(out)))

    ref = reference_forward(params, src, None, query_embed, pos_embed,
                            latent_input=latent_input,
                            proprio_input=proprio_input,
                            additional_pos_embed=additional_pos_embed,
                            task_emb=None, nhead=nhead)
    max_err = float(jnp.max(jnp.abs(out - ref)))
    assert bool(jnp.allclose(out, ref, rtol=2e-3, atol=2e-3)), max_err

    print("KERNEL_OK")
</pallas_src>

<mosaic_0001>
module attributes {stable_mosaic.version = 11 : i64} {
  func.func @_transformer_kernel(%arg0: i32, %arg1: memref<1x18x32xf32, #tpu.memory_space<vmem>>, %arg2: memref<1x18x32xf32, #tpu.memory_space<vmem>>, %arg3: memref<1x8x32xf32, #tpu.memory_space<vmem>>, %arg4: memref<2x32x128xf32, #tpu.memory_space<vmem>>, %arg5: memref<2x32x64xf32, #tpu.memory_space<vmem>>, %arg6: memref<2x64x32xf32, #tpu.memory_space<vmem>>, %arg7: memref<2x9x32xf32, #tpu.memory_space<vmem>>, %arg8: memref<2x1x64xf32, #tpu.memory_space<vmem>>, %arg9: memref<2x32x256xf32, #tpu.memory_space<vmem>>, %arg10: memref<2x32x64xf32, #tpu.memory_space<vmem>>, %arg11: memref<2x64x32xf32, #tpu.memory_space<vmem>>, %arg12: memref<2x15x32xf32, #tpu.memory_space<vmem>>, %arg13: memref<2x1x64xf32, #tpu.memory_space<vmem>>, %arg14: memref<2x32xf32, #tpu.memory_space<vmem>>, %arg15: memref<1x8x32xf32, #tpu.memory_space<vmem>>) attributes {dimension_semantics = [#tpu.dimension_semantics<parallel>], iteration_bounds = array<i64: 2>, scalar_prefetch = 0 : i64, scratch_operands = 0 : i64, tpu.core_type = #tpu.core_type<tc>, window_params = [{transform_indices = @transform_0, window_bounds = array<i64: 1, 18, 32>}, {pipeline_mode = #tpu.pipeline_mode<synchronous>, transform_indices = @transform_1, window_bounds = array<i64: 1, 18, 32>}, {pipeline_mode = #tpu.pipeline_mode<synchronous>, transform_indices = @transform_2, window_bounds = array<i64: 1, 8, 32>}, {pipeline_mode = #tpu.pipeline_mode<synchronous>, transform_indices = @transform_3, window_bounds = array<i64: 2, 32, 128>}, {pipeline_mode = #tpu.pipeline_mode<synchronous>, transform_indices = @transform_4, window_bounds = array<i64: 2, 32, 64>}, {pipeline_mode = #tpu.pipeline_mode<synchronous>, transform_indices = @transform_5, window_bounds = array<i64: 2, 64, 32>}, {pipeline_mode = #tpu.pipeline_mode<synchronous>, transform_indices = @transform_6, window_bounds = array<i64: 2, 9, 32>}, {pipeline_mode = #tpu.pipeline_mode<synchronous>, transform_indices = @transform_7, window_bounds = array<i64: 2, 1, 64>}, {pipeline_mode = #tpu.pipeline_mode<synchronous>, transform_indices = @transform_8, window_bounds = array<i64: 2, 32, 256>}, {pipeline_mode = #tpu.pipeline_mode<synchronous>, transform_indices = @transform_9, window_bounds = array<i64: 2, 32, 64>}, {pipeline_mode = #tpu.pipeline_mode<synchronous>, transform_indices = @transform_10, window_bounds = array<i64: 2, 64, 32>}, {pipeline_mode = #tpu.pipeline_mode<synchronous>, transform_indices = @transform_11, window_bounds = array<i64: 2, 15, 32>}, {pipeline_mode = #tpu.pipeline_mode<synchronous>, transform_indices = @transform_12, window_bounds = array<i64: 2, 1, 64>}, {pipeline_mode = #tpu.pipeline_mode<synchronous>, transform_indices = @transform_13, window_bounds = array<i64: 2, 32>}, {transform_indices = @transform_14, window_bounds = array<i64: 1, 8, 32>}]} {
    %c0 = arith.constant 0 : index
    %c0_0 = arith.constant 0 : index
    %c0_1 = arith.constant 0 : index
    %0 = vector.load %arg1[%c0, %c0_0, %c0_1] : memref<1x18x32xf32, #tpu.memory_space<vmem>>, vector<1x18x32xf32>
    %1 = vector.shape_cast %0 : vector<1x18x32xf32> to vector<18x32xf32>
    %c0_2 = arith.constant 0 : index
    %c0_3 = arith.constant 0 : index
    %c0_4 = arith.constant 0 : index
    %2 = vector.load %arg2[%c0_2, %c0_3, %c0_4] : memref<1x18x32xf32, #tpu.memory_space<vmem>>, vector<1x18x32xf32>
    %3 = vector.shape_cast %2 : vector<1x18x32xf32> to vector<18x32xf32>
    %c0_5 = arith.constant 0 : index
    %c0_6 = arith.constant 0 : index
    %c0_7 = arith.constant 0 : index
    %4 = vector.load %arg3[%c0_5, %c0_6, %c0_7] : memref<1x8x32xf32, #tpu.memory_space<vmem>>, vector<1x8x32xf32>
    %5 = vector.shape_cast %4 : vector<1x8x32xf32> to vector<8x32xf32>
    %c0_8 = arith.constant 0 : index
    %c0_9 = arith.constant 0 : index
    %c0_10 = arith.constant 0 : index
    %6 = vector.load %arg4[%c0_8, %c0_9, %c0_10] : memref<2x32x128xf32, #tpu.memory_space<vmem>>, vector<1x32x128xf32>
    %7 = vector.shape_cast %6 : vector<1x32x128xf32> to vector<32x128xf32>
    %c0_11 = arith.constant 0 : index
    %c0_12 = arith.constant 0 : index
    %c0_13 = arith.constant 0 : index
    %8 = vector.load %arg7[%c0_11, %c0_12, %c0_13] : memref<2x9x32xf32, #tpu.memory_space<vmem>>, vector<1x9x32xf32>
    %9 = vector.shape_cast %8 : vector<1x9x32xf32> to vector<9x32xf32>
    %10 = arith.addf %1, %3 : vector<18x32xf32>
    %11 = vector.extract_strided_slice %7 {offsets = [0, 0], sizes = [32, 32], strides = [1, 1]} : vector<32x128xf32> to vector<32x32xf32>
    %cst = arith.constant dense<0.000000e+00> : vector<18x32xf32>
    %12 = tpu.matmul %10, %11, %cst {dimension_numbers = #tpu.dot_dimension_numbers<[1], [0], [0], [1], [0, 0, 1, 1], [], []>} : vector<18x32xf32>, vector<32x32xf32>, vector<18x32xf32> -> vector<18x32xf32>
    %13 = vector.extract_strided_slice %9 {offsets = [0, 0], sizes = [1, 32], strides = [1, 1]} : vector<9x32xf32> to vector<1x32xf32>
    %14 = vector.broadcast %13 : vector<1x32xf32> to vector<18x32xf32>
    %15 = arith.addf %12, %14 : vector<18x32xf32>
    %16 = vector.extract_strided_slice %7 {offsets = [0, 32], sizes = [32, 32], strides = [1, 1]} : vector<32x128xf32> to vector<32x32xf32>
    %cst_14 = arith.constant dense<0.000000e+00> : vector<18x32xf32>
    %17 = tpu.matmul %10, %16, %cst_14 {dimension_numbers = #tpu.dot_dimension_numbers<[1], [0], [0], [1], [0, 0, 1, 1], [], []>} : vector<18x32xf32>, vector<32x32xf32>, vector<18x32xf32> -> vector<18x32xf32>
    %18 = vector.extract_strided_slice %9 {offsets = [1, 0], sizes = [1, 32], strides = [1, 1]} : vector<9x32xf32> to vector<1x32xf32>
    %19 = vector.broadcast %18 : vector<1x32xf32> to vector<18x32xf32>
    %20 = arith.addf %17, %19 : vector<18x32xf32>
    %21 = vector.extract_strided_slice %7 {offsets = [0, 64], sizes = [32, 32], strides = [1, 1]} : vector<32x128xf32> to vector<32x32xf32>
    %cst_15 = arith.constant dense<0.000000e+00> : vector<18x32xf32>
    %22 = tpu.matmul %1, %21, %cst_15 {dimension_numbers = #tpu.dot_dimension_numbers<[1], [0], [0], [1], [0, 0, 1, 1], [], []>} : vector<18x32xf32>, vector<32x32xf32>, vector<18x32xf32> -> vector<18x32xf32>
    %23 = vector.extract_strided_slice %9 {offsets = [2, 0], sizes = [1, 32], strides = [1, 1]} : vector<9x32xf32> to vector<1x32xf32>
    %24 = vector.broadcast %23 : vector<1x32xf32> to vector<18x32xf32>
    %25 = arith.addf %22, %24 : vector<18x32xf32>
    %26 = vector.extract_strided_slice %7 {offsets = [0, 96], sizes = [32, 32], strides = [1, 1]} : vector<32x128xf32> to vector<32x32xf32>
    %27 = vector.extract_strided_slice %9 {offsets = [3, 0], sizes = [1, 32], strides = [1, 1]} : vector<9x32xf32> to vector<1x32xf32>
    %cst_16 = arith.constant 0.353553385 : f32
    %28 = vector.broadcast %cst_16 : f32 to vector<18x32xf32>
    %29 = arith.mulf %15, %28 : vector<18x32xf32>
    %30 = vector.extract_strided_slice %29 {offsets = [0, 0], sizes = [18, 8], strides = [1, 1]} : vector<18x32xf32> to vector<18x8xf32>
    %31 = vector.extract_strided_slice %20 {offsets = [0, 0], sizes = [18, 8], strides = [1, 1]} : vector<18x32xf32> to vector<18x8xf32>
    %cst_17 = arith.constant dense<0.000000e+00> : vector<18x18xf32>
    %32 = tpu.matmul %30, %31, %cst_17 {dimension_numbers = #tpu.dot_dimension_numbers<[1], [1], [0], [0], [0, 0, 1, 0], [], []>} : vector<18x8xf32>, vector<18x8xf32>, vector<18x18xf32> -> vector<18x18xf32>
    %cst_18 = arith.constant dense<0xFF800000> : vector<18xf32>
    %33 = vector.multi_reduction <maximumf>, %32, %cst_18 [1] : vector<18x18xf32> to vector<18xf32>
    %34 = vector.shape_cast %33 : vector<18xf32> to vector<18x1xf32>
    %35 = vector.broadcast %34 : vector<18x1xf32> to vector<18x18xf32>
    %36 = arith.subf %32, %35 : vector<18x18xf32>
    %37 = math.exp %36 : vector<18x18xf32>
    %cst_19 = arith.constant dense<0.000000e+00> : vector<18xf32>
    %38 = vector.multi_reduction <add>, %37, %cst_19 [1] : vector<18x18xf32> to vector<18xf32>
    %39 = vector.shape_cast %38 : vector<18xf32> to vector<18x1xf32>
    %40 = tpu.reciprocal %39 : vector<18x1xf32> -> vector<18x1xf32>
    %41 = vector.broadcast %40 : vector<18x1xf32> to vector<18x18xf32>
    %42 = arith.mulf %37, %41 : vector<18x18xf32>
    %43 = vector.extract_strided_slice %25 {offsets = [0, 0], sizes = [18, 8], strides = [1, 1]} : vector<18x32xf32> to vector<18x8xf32>
    %cst_20 = arith.constant dense<0.000000e+00> : vector<18x8xf32>
    %44 = tpu.matmul %42, %43, %cst_20 {dimension_numbers = #tpu.dot_dimension_numbers<[1], [0], [0], [1], [0, 0, 1, 1], [], []>} : vector<18x18xf32>, vector<18x8xf32>, vector<18x8xf32> -> vector<18x8xf32>
    %45 = vector.extract_strided_slice %26 {offsets = [0, 0], sizes = [8, 32], strides = [1, 1]} : vector<32x32xf32> to vector<8x32xf32>
    %cst_21 = arith.constant dense<0.000000e+00> : vector<18x32xf32>
    %46 = tpu.matmul %44, %45, %cst_21 {dimension_numbers = #tpu.dot_dimension_numbers<[1], [0], [0], [1], [0, 0, 1, 1], [], []>} : vector<18x8xf32>, vector<8x32xf32>, vector<18x32xf32> -> vector<18x32xf32>
    %47 = vector.broadcast %27 : vector<1x32xf32> to vector<18x32xf32>
    %48 = arith.addf %47, %46 : vector<18x32xf32>
    %49 = vector.extract_strided_slice %29 {offsets = [0, 8], sizes = [18, 8], strides = [1, 1]} : vector<18x32xf32> to vector<18x8xf32>
    %50 = vector.extract_strided_slice %20 {offsets = [0, 8], sizes = [18, 8], strides = [1, 1]} : vector<18x32xf32> to vector<18x8xf32>
    %cst_22 = arith.constant dense<0.000000e+00> : vector<18x18xf32>
    %51 = tpu.matmul %49, %50, %cst_22 {dimension_numbers = #tpu.dot_dimension_numbers<[1], [1], [0], [0], [0, 0, 1, 0], [], []>} : vector<18x8xf32>, vector<18x8xf32>, vector<18x18xf32> -> vector<18x18xf32>
    %cst_23 = arith.constant dense<0xFF800000> : vector<18xf32>
    %52 = vector.multi_reduction <maximumf>, %51, %cst_23 [1] : vector<18x18xf32> to vector<18xf32>
    %53 = vector.shape_cast %52 : vector<18xf32> to vector<18x1xf32>
    %54 = vector.broadcast %53 : vector<18x1xf32> to vector<18x18xf32>
    %55 = arith.subf %51, %54 : vector<18x18xf32>
    %56 = math.exp %55 : vector<18x18xf32>
    %cst_24 = arith.constant dense<0.000000e+00> : vector<18xf32>
    %57 = vector.multi_reduction <add>, %56, %cst_24 [1] : vector<18x18xf32> to vector<18xf32>
    %58 = vector.shape_cast %57 : vector<18xf32> to vector<18x1xf32>
    %59 = tpu.reciprocal %58 : vector<18x1xf32> -> vector<18x1xf32>
    %60 = vector.broadcast %59 : vector<18x1xf32> to vector<18x18xf32>
    %61 = arith.mulf %56, %60 : vector<18x18xf32>
    %62 = vector.extract_strided_slice %25 {offsets = [0, 8], sizes = [18, 8], strides = [1, 1]} : vector<18x32xf32> to vector<18x8xf32>
    %cst_25 = arith.constant dense<0.000000e+00> : vector<18x8xf32>
    %63 = tpu.matmul %61, %62, %cst_25 {dimension_numbers = #tpu.dot_dimension_numbers<[1], [0], [0], [1], [0, 0, 1, 1], [], []>} : vector<18x18xf32>, vector<18x8xf32>, vector<18x8xf32> -> vector<18x8xf32>
    %64 = vector.extract_strided_slice %26 {offsets = [8, 0], sizes = [8, 32], strides = [1, 1]} : vector<32x32xf32> to vector<8x32xf32>
    %cst_26 = arith.constant dense<0.000000e+00> : vector<18x32xf32>
    %65 = tpu.matmul %63, %64, %cst_26 {dimension_numbers = #tpu.dot_dimension_numbers<[1], [0], [0], [1], [0, 0, 1, 1], [], []>} : vector<18x8xf32>, vector<8x32xf32>, vector<18x32xf32> -> vector<18x32xf32>
    %66 = arith.addf %48, %65 : vector<18x32xf32>
    %67 = vector.extract_strided_slice %29 {offsets = [0, 16], sizes = [18, 8], strides = [1, 1]} : vector<18x32xf32> to vector<18x8xf32>
    %68 = vector.extract_strided_slice %20 {offsets = [0, 16], sizes = [18, 8], strides = [1, 1]} : vector<18x32xf32> to vector<18x8xf32>
    %cst_27 = arith.constant dense<0.000000e+00> : vector<18x18xf32>
    %69 = tpu.matmul %67, %68, %cst_27 {dimension_numbers = #tpu.dot_dimension_numbers<[1], [1], [0], [0], [0, 0, 1, 0], [], []>} : vector<18x8xf32>, vector<18x8xf32>, vector<18x18xf32> -> vector<18x18xf32>
    %cst_28 = arith.constant dense<0xFF800000> : vector<18xf32>
    %70 = vector.multi_reduction <maximumf>, %69, %cst_28 [1] : vector<18x18xf32> to vector<18xf32>
    %71 = vector.shape_cast %70 : vector<18xf32> to vector<18x1xf32>
    %72 = vector.broadcast %71 : vector<18x1xf32> to vector<18x18xf32>
    %73 = arith.subf %69, %72 : vector<18x18xf32>
    %74 = math.exp %73 : vector<18x18xf32>
    %cst_29 = arith.constant dense<0.000000e+00> : vector<18xf32>
    %75 = vector.multi_reduction <add>, %74, %cst_29 [1] : vector<18x18xf32> to vector<18xf32>
    %76 = vector.shape_cast %75 : vector<18xf32> to vector<18x1xf32>
    %77 = tpu.reciprocal %76 : vector<18x1xf32> -> vector<18x1xf32>
    %78 = vector.broadcast %77 : vector<18x1xf32> to vector<18x18xf32>
    %79 = arith.mulf %74, %78 : vector<18x18xf32>
    %80 = vector.extract_strided_slice %25 {offsets = [0, 16], sizes = [18, 8], strides = [1, 1]} : vector<18x32xf32> to vector<18x8xf32>
    %cst_30 = arith.constant dense<0.000000e+00> : vector<18x8xf32>
    %81 = tpu.matmul %79, %80, %cst_30 {dimension_numbers = #tpu.dot_dimension_numbers<[1], [0], [0], [1], [0, 0, 1, 1], [], []>} : vector<18x18xf32>, vector<18x8xf32>, vector<18x8xf32> -> vector<18x8xf32>
    %82 = vector.extract_strided_slice %26 {offsets = [16, 0], sizes = [8, 32], strides = [1, 1]} : vector<32x32xf32> to vector<8x32xf32>
    %cst_31 = arith.constant dense<0.000000e+00> : vector<18x32xf32>
    %83 = tpu.matmul %81, %82, %cst_31 {dimension_numbers = #tpu.dot_dimension_numbers<[1], [0], [0], [1], [0, 0, 1, 1], [], []>} : vector<18x8xf32>, vector<8x32xf32>, vector<18x32xf32> -> vector<18x32xf32>
    %84 = arith.addf %66, %83 : vector<18x32xf32>
    %85 = vector.extract_strided_slice %29 {offsets = [0, 24], sizes = [18, 8], strides = [1, 1]} : vector<18x32xf32> to vector<18x8xf32>
    %86 = vector.extract_strided_slice %20 {offsets = [0, 24], sizes = [18, 8], strides = [1, 1]} : vector<18x32xf32> to vector<18x8xf32>
    %cst_32 = arith.constant dense<0.000000e+00> : vector<18x18xf32>
    %87 = tpu.matmul %85, %86, %cst_32 {dimension_numbers = #tpu.dot_dimension_numbers<[1], [1], [0], [0], [0, 0, 1, 0], [], []>} : vector<18x8xf32>, vector<18x8xf32>, vector<18x18xf32> -> vector<18x18xf32>
    %cst_33 = arith.constant dense<0xFF800000> : vector<18xf32>
    %88 = vector.multi_reduction <maximumf>, %87, %cst_33 [1] : vector<18x18xf32> to vector<18xf32>
    %89 = vector.shape_cast %88 : vector<18xf32> to vector<18x1xf32>
    %90 = vector.broadcast %89 : vector<18x1xf32> to vector<18x18xf32>
    %91 = arith.subf %87, %90 : vector<18x18xf32>
    %92 = math.exp %91 : vector<18x18xf32>
    %cst_34 = arith.constant dense<0.000000e+00> : vector<18xf32>
    %93 = vector.multi_reduction <add>, %92, %cst_34 [1] : vector<18x18xf32> to vector<18xf32>
    %94 = vector.shape_cast %93 : vector<18xf32> to vector<18x1xf32>
    %95 = tpu.reciprocal %94 : vector<18x1xf32> -> vector<18x1xf32>
    %96 = vector.broadcast %95 : vector<18x1xf32> to vector<18x18xf32>
    %97 = arith.mulf %92, %96 : vector<18x18xf32>
    %98 = vector.extract_strided_slice %25 {offsets = [0, 24], sizes = [18, 8], strides = [1, 1]} : vector<18x32xf32> to vector<18x8xf32>
    %cst_35 = arith.constant dense<0.000000e+00> : vector<18x8xf32>
    %99 = tpu.matmul %97, %98, %cst_35 {dimension_numbers = #tpu.dot_dimension_numbers<[1], [0], [0], [1], [0, 0, 1, 1], [], []>} : vector<18x18xf32>, vector<18x8xf32>, vector<18x8xf32> -> vector<18x8xf32>
    %100 = vector.extract_strided_slice %26 {offsets = [24, 0], sizes = [8, 32], strides = [1, 1]} : vector<32x32xf32> to vector<8x32xf32>
    %cst_36 = arith.constant dense<0.000000e+00> : vector<18x32xf32>
    %101 = tpu.matmul %99, %100, %cst_36 {dimension_numbers = #tpu.dot_dimension_numbers<[1], [0], [0], [1], [0, 0, 1, 1], [], []>} : vector<18x8xf32>, vector<8x32xf32>, vector<18x32xf32> -> vector<18x32xf32>
    %102 = arith.addf %84, %101 : vector<18x32xf32>
    %103 = arith.addf %1, %102 : vector<18x32xf32>
    %104 = vector.extract_strided_slice %9 {offsets = [4, 0], sizes = [1, 32], strides = [1, 1]} : vector<9x32xf32> to vector<1x32xf32>
    %105 = vector.extract_strided_slice %9 {offsets = [5, 0], sizes = [1, 32], strides = [1, 1]} : vector<9x32xf32> to vector<1x32xf32>
    %cst_37 = arith.constant dense<0.000000e+00> : vector<18xf32>
    %106 = vector.multi_reduction <add>, %103, %cst_37 [1] : vector<18x32xf32> to vector<18xf32>
    %107 = vector.shape_cast %106 : vector<18xf32> to vector<18x1xf32>
    %cst_38 = arith.constant 3.200000e+01 : f32
    %108 = vector.broadcast %cst_38 : f32 to vector<18x1xf32>
    %109 = arith.divf %107, %108 : vector<18x1xf32>
    %110 = vector.broadcast %109 : vector<18x1xf32> to vector<18x32xf32>
    %111 = arith.subf %103, %110 : vector<18x32xf32>
    %112 = arith.mulf %111, %111 : vector<18x32xf32>
    %cst_39 = arith.constant dense<0.000000e+00> : vector<18xf32>
    %113 = vector.multi_reduction <add>, %112, %cst_39 [1] : vector<18x32xf32> to vector<18xf32>
    %114 = vector.shape_cast %113 : vector<18xf32> to vector<18x1xf32>
    %cst_40 = arith.constant 3.200000e+01 : f32
    %115 = vector.broadcast %cst_40 : f32 to vector<18x1xf32>
    %116 = arith.divf %114, %115 : vector<18x1xf32>
    %cst_41 = arith.constant 9.99999974E-6 : f32
    %117 = vector.broadcast %cst_41 : f32 to vector<18x1xf32>
    %118 = arith.addf %116, %117 : vector<18x1xf32>
    %119 = math.rsqrt %118 : vector<18x1xf32>
    %120 = vector.broadcast %119 : vector<18x1xf32> to vector<18x32xf32>
    %121 = arith.mulf %111, %120 : vector<18x32xf32>
    %122 = vector.broadcast %104 : vector<1x32xf32> to vector<18x32xf32>
    %123 = arith.mulf %121, %122 : vector<18x32xf32>
    %124 = vector.broadcast %105 : vector<1x32xf32> to vector<18x32xf32>
    %125 = arith.addf %123, %124 : vector<18x32xf32>
    %c0_42 = arith.constant 0 : index
    %c0_43 = arith.constant 0 : index
    %c0_44 = arith.constant 0 : index
    %126 = vector.load %arg5[%c0_42, %c0_43, %c0_44] : memref<2x32x64xf32, #tpu.memory_space<vmem>>, vector<1x32x64xf32>
    %127 = vector.shape_cast %126 : vector<1x32x64xf32> to vector<32x64xf32>
    %cst_45 = arith.constant dense<0.000000e+00> : vector<18x64xf32>
    %128 = tpu.matmul %125, %127, %cst_45 {dimension_numbers = #tpu.dot_dimension_numbers<[1], [0], [0], [1], [0, 0, 1, 1], [], []>} : vector<18x32xf32>, vector<32x64xf32>, vector<18x64xf32> -> vector<18x64xf32>
    %c0_46 = arith.constant 0 : index
    %c0_47 = arith.constant 0 : index
    %c0_48 = arith.constant 0 : index
    %129 = vector.load %arg8[%c0_46, %c0_47, %c0_48] : memref<2x1x64xf32, #tpu.memory_space<vmem>>, vector<1x1x64xf32>
    %130 = vector.shape_cast %129 : vector<1x1x64xf32> to vector<1x64xf32>
    %131 = vector.broadcast %130 : vector<1x64xf32> to vector<18x64xf32>
    %132 = arith.addf %128, %131 : vector<18x64xf32>
    %cst_49 = arith.constant 0.000000e+00 : f32
    %133 = vector.broadcast %cst_49 : f32 to vector<18x64xf32>
    %134 = arith.maximumf %132, %133 : vector<18x64xf32>
    %c0_50 = arith.constant 0 : index
    %c0_51 = arith.constant 0 : index
    %c0_52 = arith.constant 0 : index
    %135 = vector.load %arg6[%c0_50, %c0_51, %c0_52] : memref<2x64x32xf32, #tpu.memory_space<vmem>>, vector<1x64x32xf32>
    %136 = vector.shape_cast %135 : vector<1x64x32xf32> to vector<64x32xf32>
    %cst_53 = arith.constant dense<0.000000e+00> : vector<18x32xf32>
    %137 = tpu.matmul %134, %136, %cst_53 {dimension_numbers = #tpu.dot_dimension_numbers<[1], [0], [0], [1], [0, 0, 1, 1], [], []>} : vector<18x64xf32>, vector<64x32xf32>, vector<18x32xf32> -> vector<18x32xf32>
    %138 = vector.extract_strided_slice %9 {offsets = [6, 0], sizes = [1, 32], strides = [1, 1]} : vector<9x32xf32> to vector<1x32xf32>
    %139 = vector.broadcast %138 : vector<1x32xf32> to vector<18x32xf32>
    %140 = arith.addf %137, %139 : vector<18x32xf32>
    %141 = arith.addf %125, %140 : vector<18x32xf32>
    %142 = vector.extract_strided_slice %9 {offsets = [7, 0], sizes = [1, 32], strides = [1, 1]} : vector<9x32xf32> to vector<1x32xf32>
    %143 = vector.extract_strided_slice %9 {offsets = [8, 0], sizes = [1, 32], strides = [1, 1]} : vector<9x32xf32> to vector<1x32xf32>
    %cst_54 = arith.constant dense<0.000000e+00> : vector<18xf32>
    %144 = vector.multi_reduction <add>, %141, %cst_54 [1] : vector<18x32xf32> to vector<18xf32>
    %145 = vector.shape_cast %144 : vector<18xf32> to vector<18x1xf32>
    %cst_55 = arith.constant 3.200000e+01 : f32
    %146 = vector.broadcast %cst_55 : f32 to vector<18x1xf32>
    %147 = arith.divf %145, %146 : vector<18x1xf32>
    %148 = vector.broadcast %147 : vector<18x1xf32> to vector<18x32xf32>
    %149 = arith.subf %141, %148 : vector<18x32xf32>
    %150 = arith.mulf %149, %149 : vector<18x32xf32>
    %cst_56 = arith.constant dense<0.000000e+00> : vector<18xf32>
    %151 = vector.multi_reduction <add>, %150, %cst_56 [1] : vector<18x32xf32> to vector<18xf32>
    %152 = vector.shape_cast %151 : vector<18xf32> to vector<18x1xf32>
    %cst_57 = arith.constant 3.200000e+01 : f32
    %153 = vector.broadcast %cst_57 : f32 to vector<18x1xf32>
    %154 = arith.divf %152, %153 : vector<18x1xf32>
    %cst_58 = arith.constant 9.99999974E-6 : f32
    %155 = vector.broadcast %cst_58 : f32 to vector<18x1xf32>
    %156 = arith.addf %154, %155 : vector<18x1xf32>
    %157 = math.rsqrt %156 : vector<18x1xf32>
    %158 = vector.broadcast %157 : vector<18x1xf32> to vector<18x32xf32>
    %159 = arith.mulf %149, %158 : vector<18x32xf32>
    %160 = vector.broadcast %142 : vector<1x32xf32> to vector<18x32xf32>
    %161 = arith.mulf %159, %160 : vector<18x32xf32>
    %162 = vector.broadcast %143 : vector<1x32xf32> to vector<18x32xf32>
    %163 = arith.addf %161, %162 : vector<18x32xf32>
    %c1 = arith.constant 1 : index
    %c0_59 = arith.constant 0 : index
    %c0_60 = arith.constant 0 : index
    %164 = vector.load %arg4[%c1, %c0_59, %c0_60] : memref<2x32x128xf32, #tpu.memory_space<vmem>>, vector<1x32x128xf32>
    %165 = vector.shape_cast %164 : vector<1x32x128xf32> to vector<32x128xf32>
    %c1_61 = arith.constant 1 : index
    %c0_62 = arith.constant 0 : index
    %c0_63 = arith.constant 0 : index
    %166 = vector.load %arg7[%c1_61, %c0_62, %c0_63] : memref<2x9x32xf32, #tpu.memory_space<vmem>>, vector<1x9x32xf32>
    %167 = vector.shape_cast %166 : vector<1x9x32xf32> to vector<9x32xf32>
    %168 = arith.addf %163, %3 : vector<18x32xf32>
    %169 = vector.extract_strided_slice %165 {offsets = [0, 0], sizes = [32, 32], strides = [1, 1]} : vector<32x128xf32> to vector<32x32xf32>
    %cst_64 = arith.constant dense<0.000000e+00> : vector<18x32xf32>
    %170 = tpu.matmul %168, %169, %cst_64 {dimension_numbers = #tpu.dot_dimension_numbers<[1], [0], [0], [1], [0, 0, 1, 1], [], []>} : vector<18x32xf32>, vector<32x32xf32>, vector<18x32xf32> -> vector<18x32xf32>
    %171 = vector.extract_strided_slice %167 {offsets = [0, 0], sizes = [1, 32], strides = [1, 1]} : vector<9x32xf32> to vector<1x32xf32>
    %172 = vector.broadcast %171 : vector<1x32xf32> to vector<18x32xf32>
    %173 = arith.addf %170, %172 : vector<18x32xf32>
    %174 = vector.extract_strided_slice %165 {offsets = [0, 32], sizes = [32, 32], strides = [1, 1]} : vector<32x128xf32> to vector<32x32xf32>
    %cst_65 = arith.constant dense<0.000000e+00> : vector<18x32xf32>
    %175 = tpu.matmul %168, %174, %cst_65 {dimension_numbers = #tpu.dot_dimension_numbers<[1], [0], [0], [1], [0, 0, 1, 1], [], []>} : vector<18x32xf32>, vector<32x32xf32>, vector<18x32xf32> -> vector<18x32xf32>
    %176 = vector.extract_strided_slice %167 {offsets = [1, 0], sizes = [1, 32], strides = [1, 1]} : vector<9x32xf32> to vector<1x32xf32>
    %177 = vector.broadcast %176 : vector<1x32xf32> to vector<18x32xf32>
    %178 = arith.addf %175, %177 : vector<18x32xf32>
    %179 = vector.extract_strided_slice %165 {offsets = [0, 64], sizes = [32, 32], strides = [1, 1]} : vector<32x128xf32> to vector<32x32xf32>
    %cst_66 = arith.constant dense<0.000000e+00> : vector<18x32xf32>
    %180 = tpu.matmul %163, %179, %cst_66 {dimension_numbers = #tpu.dot_dimension_numbers<[1], [0], [0], [1], [0, 0, 1, 1], [], []>} : vector<18x32xf32>, vector<32x32xf32>, vector<18x32xf32> -> vector<18x32xf32>
    %181 = vector.extract_strided_slice %167 {offsets = [2, 0], sizes = [1, 32], strides = [1, 1]} : vector<9x32xf32> to vector<1x32xf32>
    %182 = vector.broadcast %181 : vector<1x32xf32> to vector<18x32xf32>
    %183 = arith.addf %180, %182 : vector<18x32xf32>
    %184 = vector.extract_strided_slice %165 {offsets = [0, 96], sizes = [32, 32], strides = [1, 1]} : vector<32x128xf32> to vector<32x32xf32>
    %185 = vector.extract_strided_slice %167 {offsets = [3, 0], sizes = [1, 32], strides = [1, 1]} : vector<9x32xf32> to vector<1x32xf32>
    %cst_67 = arith.constant 0.353553385 : f32
    %186 = vector.broadcast %cst_67 : f32 to vector<18x32xf32>
    %187 = arith.mulf %173, %186 : vector<18x32xf32>
    %188 = vector.extract_strided_slice %187 {offsets = [0, 0], sizes = [18, 8], strides = [1, 1]} : vector<18x32xf32> to vector<18x8xf32>
    %189 = vector.extract_strided_slice %178 {offsets = [0, 0], sizes = [18, 8], strides = [1, 1]} : vector<18x32xf32> to vector<18x8xf32>
    %cst_68 = arith.constant dense<0.000000e+00> : vector<18x18xf32>
    %190 = tpu.matmul %188, %189, %cst_68 {dimension_numbers = #tpu.dot_dimension_numbers<[1], [1], [0], [0], [0, 0, 1, 0], [], []>} : vector<18x8xf32>, vector<18x8xf32>, vector<18x18xf32> -> vector<18x18xf32>
    %cst_69 = arith.constant dense<0xFF800000> : vector<18xf32>
    %191 = vector.multi_reduction <maximumf>, %190, %cst_69 [1] : vector<18x18xf32> to vector<18xf32>
    %192 = vector.shape_cast %191 : vector<18xf32> to vector<18x1xf32>
    %193 = vector.broadcast %192 : vector<18x1xf32> to vector<18x18xf32>
    %194 = arith.subf %190, %193 : vector<18x18xf32>
    %195 = math.exp %194 : vector<18x18xf32>
    %cst_70 = arith.constant dense<0.000000e+00> : vector<18xf32>
    %196 = vector.multi_reduction <add>, %195, %cst_70 [1] : vector<18x18xf32> to vector<18xf32>
    %197 = vector.shape_cast %196 : vector<18xf32> to vector<18x1xf32>
    %198 = tpu.reciprocal %197 : vector<18x1xf32> -> vector<18x1xf32>
    %199 = vector.broadcast %198 : vector<18x1xf32> to vector<18x18xf32>
    %200 = arith.mulf %195, %199 : vector<18x18xf32>
    %201 = vector.extract_strided_slice %183 {offsets = [0, 0], sizes = [18, 8], strides = [1, 1]} : vector<18x32xf32> to vector<18x8xf32>
    %cst_71 = arith.constant dense<0.000000e+00> : vector<18x8xf32>
    %202 = tpu.matmul %200, %201, %cst_71 {dimension_numbers = #tpu.dot_dimension_numbers<[1], [0], [0], [1], [0, 0, 1, 1], [], []>} : vector<18x18xf32>, vector<18x8xf32>, vector<18x8xf32> -> vector<18x8xf32>
    %203 = vector.extract_strided_slice %184 {offsets = [0, 0], sizes = [8, 32], strides = [1, 1]} : vector<32x32xf32> to vector<8x32xf32>
    %cst_72 = arith.constant dense<0.000000e+00> : vector<18x32xf32>
    %204 = tpu.matmul %202, %203, %cst_72 {dimension_numbers = #tpu.dot_dimension_numbers<[1], [0], [0], [1], [0, 0, 1, 1], [], []>} : vector<18x8xf32>, vector<8x32xf32>, vector<18x32xf32> -> vector<18x32xf32>
    %205 = vector.broadcast %185 : vector<1x32xf32> to vector<18x32xf32>
    %206 = arith.addf %205, %204 : vector<18x32xf32>
    %207 = vector.extract_strided_slice %187 {offsets = [0, 8], sizes = [18, 8], strides = [1, 1]} : vector<18x32xf32> to vector<18x8xf32>
    %208 = vector.extract_strided_slice %178 {offsets = [0, 8], sizes = [18, 8], strides = [1, 1]} : vector<18x32xf32> to vector<18x8xf32>
    %cst_73 = arith.constant dense<0.000000e+00> : vector<18x18xf32>
    %209 = tpu.matmul %207, %208, %cst_73 {dimension_numbers = #tpu.dot_dimension_numbers<[1], [1], [0], [0], [0, 0, 1, 0], [], []>} : vector<18x8xf32>, vector<18x8xf32>, vector<18x18xf32> -> vector<18x18xf32>
    %cst_74 = arith.constant dense<0xFF800000> : vector<18xf32>
    %210 = vector.multi_reduction <maximumf>, %209, %cst_74 [1] : vector<18x18xf32> to vector<18xf32>
    %211 = vector.shape_cast %210 : vector<18xf32> to vector<18x1xf32>
    %212 = vector.broadcast %211 : vector<18x1xf32> to vector<18x18xf32>
    %213 = arith.subf %209, %212 : vector<18x18xf32>
    %214 = math.exp %213 : vector<18x18xf32>
    %cst_75 = arith.constant dense<0.000000e+00> : vector<18xf32>
    %215 = vector.multi_reduction <add>, %214, %cst_75 [1] : vector<18x18xf32> to vector<18xf32>
    %216 = vector.shape_cast %215 : vector<18xf32> to vector<18x1xf32>
    %217 = tpu.reciprocal %216 : vector<18x1xf32> -> vector<18x1xf32>
    %218 = vector.broadcast %217 : vector<18x1xf32> to vector<18x18xf32>
    %219 = arith.mulf %214, %218 : vector<18x18xf32>
    %220 = vector.extract_strided_slice %183 {offsets = [0, 8], sizes = [18, 8], strides = [1, 1]} : vector<18x32xf32> to vector<18x8xf32>
    %cst_76 = arith.constant dense<0.000000e+00> : vector<18x8xf32>
    %221 = tpu.matmul %219, %220, %cst_76 {dimension_numbers = #tpu.dot_dimension_numbers<[1], [0], [0], [1], [0, 0, 1, 1], [], []>} : vector<18x18xf32>, vector<18x8xf32>, vector<18x8xf32> -> vector<18x8xf32>
    %222 = vector.extract_strided_slice %184 {offsets = [8, 0], sizes = [8, 32], strides = [1, 1]} : vector<32x32xf32> to vector<8x32xf32>
    %cst_77 = arith.constant dense<0.000000e+00> : vector<18x32xf32>
    %223 = tpu.matmul %221, %222, %cst_77 {dimension_numbers = #tpu.dot_dimension_numbers<[1], [0], [0], [1], [0, 0, 1, 1], [], []>} : vector<18x8xf32>, vector<8x32xf32>, vector<18x32xf32> -> vector<18x32xf32>
    %224 = arith.addf %206, %223 : vector<18x32xf32>
    %225 = vector.extract_strided_slice %187 {offsets = [0, 16], sizes = [18, 8], strides = [1, 1]} : vector<18x32xf32> to vector<18x8xf32>
    %226 = vector.extract_strided_slice %178 {offsets = [0, 16], sizes = [18, 8], strides = [1, 1]} : vector<18x32xf32> to vector<18x8xf32>
    %cst_78 = arith.constant dense<0.000000e+00> : vector<18x18xf32>
    %227 = tpu.matmul %225, %226, %cst_78 {dimension_numbers = #tpu.dot_dimension_numbers<[1], [1], [0], [0], [0, 0, 1, 0], [], []>} : vector<18x8xf32>, vector<18x8xf32>, vector<18x18xf32> -> vector<18x18xf32>
    %cst_79 = arith.constant dense<0xFF800000> : vector<18xf32>
    %228 = vector.multi_reduction <maximumf>, %227, %cst_79 [1] : vector<18x18xf32> to vector<18xf32>
    %229 = vector.shape_cast %228 : vector<18xf32> to vector<18x1xf32>
    %230 = vector.broadcast %229 : vector<18x1xf32> to vector<18x18xf32>
    %231 = arith.subf %227, %230 : vector<18x18xf32>
    %232 = math.exp %231 : vector<18x18xf32>
    %cst_80 = arith.constant dense<0.000000e+00> : vector<18xf32>
    %233 = vector.multi_reduction <add>, %232, %cst_80 [1] : vector<18x18xf32> to vector<18xf32>
    %234 = vector.shape_cast %233 : vector<18xf32> to vector<18x1xf32>
    %235 = tpu.reciprocal %234 : vector<18x1xf32> -> vector<18x1xf32>
    %236 = vector.broadcast %235 : vector<18x1xf32> to vector<18x18xf32>
    %237 = arith.mulf %232, %236 : vector<18x18xf32>
    %238 = vector.extract_strided_slice %183 {offsets = [0, 16], sizes = [18, 8], strides = [1, 1]} : vector<18x32xf32> to vector<18x8xf32>
    %cst_81 = arith.constant dense<0.000000e+00> : vector<18x8xf32>
    %239 = tpu.matmul %237, %238, %cst_81 {dimension_numbers = #tpu.dot_dimension_numbers<[1], [0], [0], [1], [0, 0, 1, 1], [], []>} : vector<18x18xf32>, vector<18x8xf32>, vector<18x8xf32> -> vector<18x8xf32>
    %240 = vector.extract_strided_slice %184 {offsets = [16, 0], sizes = [8, 32], strides = [1, 1]} : vector<32x32xf32> to vector<8x32xf32>
    %cst_82 = arith.constant dense<0.000000e+00> : vector<18x32xf32>
    %241 = tpu.matmul %239, %240, %cst_82 {dimension_numbers = #tpu.dot_dimension_numbers<[1], [0], [0], [1], [0, 0, 1, 1], [], []>} : vector<18x8xf32>, vector<8x32xf32>, vector<18x32xf32> -> vector<18x32xf32>
    %242 = arith.addf %224, %241 : vector<18x32xf32>
    %243 = vector.extract_strided_slice %187 {offsets = [0, 24], sizes = [18, 8], strides = [1, 1]} : vector<18x32xf32> to vector<18x8xf32>
    %244 = vector.extract_strided_slice %178 {offsets = [0, 24], sizes = [18, 8], strides = [1, 1]} : vector<18x32xf32> to vector<18x8xf32>
    %cst_83 = arith.constant dense<0.000000e+00> : vector<18x18xf32>
    %245 = tpu.matmul %243, %244, %cst_83 {dimension_numbers = #tpu.dot_dimension_numbers<[1], [1], [0], [0], [0, 0, 1, 0], [], []>} : vector<18x8xf32>, vector<18x8xf32>, vector<18x18xf32> -> vector<18x18xf32>
    %cst_84 = arith.constant dense<0xFF800000> : vector<18xf32>
    %246 = vector.multi_reduction <maximumf>, %245, %cst_84 [1] : vector<18x18xf32> to vector<18xf32>
    %247 = vector.shape_cast %246 : vector<18xf32> to vector<18x1xf32>
    %248 = vector.broadcast %247 : vector<18x1xf32> to vector<18x18xf32>
    %249 = arith.subf %245, %248 : vector<18x18xf32>
    %250 = math.exp %249 : vector<18x18xf32>
    %cst_85 = arith.constant dense<0.000000e+00> : vector<18xf32>
    %251 = vector.multi_reduction <add>, %250, %cst_85 [1] : vector<18x18xf32> to vector<18xf32>
    %252 = vector.shape_cast %251 : vector<18xf32> to vector<18x1xf32>
    %253 = tpu.reciprocal %252 : vector<18x1xf32> -> vector<18x1xf32>
    %254 = vector.broadcast %253 : vector<18x1xf32> to vector<18x18xf32>
    %255 = arith.mulf %250, %254 : vector<18x18xf32>
    %256 = vector.extract_strided_slice %183 {offsets = [0, 24], sizes = [18, 8], strides = [1, 1]} : vector<18x32xf32> to vector<18x8xf32>
    %cst_86 = arith.constant dense<0.000000e+00> : vector<18x8xf32>
    %257 = tpu.matmul %255, %256, %cst_86 {dimension_numbers = #tpu.dot_dimension_numbers<[1], [0], [0], [1], [0, 0, 1, 1], [], []>} : vector<18x18xf32>, vector<18x8xf32>, vector<18x8xf32> -> vector<18x8xf32>
    %258 = vector.extract_strided_slice %184 {offsets = [24, 0], sizes = [8, 32], strides = [1, 1]} : vector<32x32xf32> to vector<8x32xf32>
    %cst_87 = arith.constant dense<0.000000e+00> : vector<18x32xf32>
    %259 = tpu.matmul %257, %258, %cst_87 {dimension_numbers = #tpu.dot_dimension_numbers<[1], [0], [0], [1], [0, 0, 1, 1], [], []>} : vector<18x8xf32>, vector<8x32xf32>, vector<18x32xf32> -> vector<18x32xf32>
    %260 = arith.addf %242, %259 : vector<18x32xf32>
    %261 = arith.addf %163, %260 : vector<18x32xf32>
    %262 = vector.extract_strided_slice %167 {offsets = [4, 0], sizes = [1, 32], strides = [1, 1]} : vector<9x32xf32> to vector<1x32xf32>
    %263 = vector.extract_strided_slice %167 {offsets = [5, 0], sizes = [1, 32], strides = [1, 1]} : vector<9x32xf32> to vector<1x32xf32>
    %cst_88 = arith.constant dense<0.000000e+00> : vector<18xf32>
    %264 = vector.multi_reduction <add>, %261, %cst_88 [1] : vector<18x32xf32> to vector<18xf32>
    %265 = vector.shape_cast %264 : vector<18xf32> to vector<18x1xf32>
    %cst_89 = arith.constant 3.200000e+01 : f32
    %266 = vector.broadcast %cst_89 : f32 to vector<18x1xf32>
    %267 = arith.divf %265, %266 : vector<18x1xf32>
    %268 = vector.broadcast %267 : vector<18x1xf32> to vector<18x32xf32>
    %269 = arith.subf %261, %268 : vector<18x32xf32>
    %270 = arith.mulf %269, %269 : vector<18x32xf32>
    %cst_90 = arith.constant dense<0.000000e+00> : vector<18xf32>
    %271 = vector.multi_reduction <add>, %270, %cst_90 [1] : vector<18x32xf32> to vector<18xf32>
    %272 = vector.shape_cast %271 : vector<18xf32> to vector<18x1xf32>
    %cst_91 = arith.constant 3.200000e+01 : f32
    %273 = vector.broadcast %cst_91 : f32 to vector<18x1xf32>
    %274 = arith.divf %272, %273 : vector<18x1xf32>
    %cst_92 = arith.constant 9.99999974E-6 : f32
    %275 = vector.broadcast %cst_92 : f32 to vector<18x1xf32>
    %276 = arith.addf %274, %275 : vector<18x1xf32>
    %277 = math.rsqrt %276 : vector<18x1xf32>
    %278 = vector.broadcast %277 : vector<18x1xf32> to vector<18x32xf32>
    %279 = arith.mulf %269, %278 : vector<18x32xf32>
    %280 = vector.broadcast %262 : vector<1x32xf32> to vector<18x32xf32>
    %281 = arith.mulf %279, %280 : vector<18x32xf32>
    %282 = vector.broadcast %263 : vector<1x32xf32> to vector<18x32xf32>
    %283 = arith.addf %281, %282 : vector<18x32xf32>
    %c1_93 = arith.constant 1 : index
    %c0_94 = arith.constant 0 : index
    %c0_95 = arith.constant 0 : index
    %284 = vector.load %arg5[%c1_93, %c0_94, %c0_95] : memref<2x32x64xf32, #tpu.memory_space<vmem>>, vector<1x32x64xf32>
    %285 = vector.shape_cast %284 : vector<1x32x64xf32> to vector<32x64xf32>
    %cst_96 = arith.constant dense<0.000000e+00> : vector<18x64xf32>
    %286 = tpu.matmul %283, %285, %cst_96 {dimension_numbers = #tpu.dot_dimension_numbers<[1], [0], [0], [1], [0, 0, 1, 1], [], []>} : vector<18x32xf32>, vector<32x64xf32>, vector<18x64xf32> -> vector<18x64xf32>
    %c1_97 = arith.constant 1 : index
    %c0_98 = arith.constant 0 : index
    %c0_99 = arith.constant 0 : index
    %287 = vector.load %arg8[%c1_97, %c0_98, %c0_99] : memref<2x1x64xf32, #tpu.memory_space<vmem>>, vector<1x1x64xf32>
    %288 = vector.shape_cast %287 : vector<1x1x64xf32> to vector<1x64xf32>
    %289 = vector.broadcast %288 : vector<1x64xf32> to vector<18x64xf32>
    %290 = arith.addf %286, %289 : vector<18x64xf32>
    %cst_100 = arith.constant 0.000000e+00 : f32
    %291 = vector.broadcast %cst_100 : f32 to vector<18x64xf32>
    %292 = arith.maximumf %290, %291 : vector<18x64xf32>
    %c1_101 = arith.constant 1 : index
    %c0_102 = arith.constant 0 : index
    %c0_103 = arith.constant 0 : index
    %293 = vector.load %arg6[%c1_101, %c0_102, %c0_103] : memref<2x64x32xf32, #tpu.memory_space<vmem>>, vector<1x64x32xf32>
    %294 = vector.shape_cast %293 : vector<1x64x32xf32> to vector<64x32xf32>
    %cst_104 = arith.constant dense<0.000000e+00> : vector<18x32xf32>
    %295 = tpu.matmul %292, %294, %cst_104 {dimension_numbers = #tpu.dot_dimension_numbers<[1], [0], [0], [1], [0, 0, 1, 1], [], []>} : vector<18x64xf32>, vector<64x32xf32>, vector<18x32xf32> -> vector<18x32xf32>
    %296 = vector.extract_strided_slice %167 {offsets = [6, 0], sizes = [1, 32], strides = [1, 1]} : vector<9x32xf32> to vector<1x32xf32>
    %297 = vector.broadcast %296 : vector<1x32xf32> to vector<18x32xf32>
    %298 = arith.addf %295, %297 : vector<18x32xf32>
    %299 = arith.addf %283, %298 : vector<18x32xf32>
    %300 = vector.extract_strided_slice %167 {offsets = [7, 0], sizes = [1, 32], strides = [1, 1]} : vector<9x32xf32> to vector<1x32xf32>
    %301 = vector.extract_strided_slice %167 {offsets = [8, 0], sizes = [1, 32], strides = [1, 1]} : vector<9x32xf32> to vector<1x32xf32>
    %cst_105 = arith.constant dense<0.000000e+00> : vector<18xf32>
    %302 = vector.multi_reduction <add>, %299, %cst_105 [1] : vector<18x32xf32> to vector<18xf32>
    %303 = vector.shape_cast %302 : vector<18xf32> to vector<18x1xf32>
    %cst_106 = arith.constant 3.200000e+01 : f32
    %304 = vector.broadcast %cst_106 : f32 to vector<18x1xf32>
    %305 = arith.divf %303, %304 : vector<18x1xf32>
    %306 = vector.broadcast %305 : vector<18x1xf32> to vector<18x32xf32>
    %307 = arith.subf %299, %306 : vector<18x32xf32>
    %308 = arith.mulf %307, %307 : vector<18x32xf32>
    %cst_107 = arith.constant dense<0.000000e+00> : vector<18xf32>
    %309 = vector.multi_reduction <add>, %308, %cst_107 [1] : vector<18x32xf32> to vector<18xf32>
    %310 = vector.shape_cast %309 : vector<18xf32> to vector<18x1xf32>
    %cst_108 = arith.constant 3.200000e+01 : f32
    %311 = vector.broadcast %cst_108 : f32 to vector<18x1xf32>
    %312 = arith.divf %310, %311 : vector<18x1xf32>
    %cst_109 = arith.constant 9.99999974E-6 : f32
    %313 = vector.broadcast %cst_109 : f32 to vector<18x1xf32>
    %314 = arith.addf %312, %313 : vector<18x1xf32>
    %315 = math.rsqrt %314 : vector<18x1xf32>
    %316 = vector.broadcast %315 : vector<18x1xf32> to vector<18x32xf32>
    %317 = arith.mulf %307, %316 : vector<18x32xf32>
    %318 = vector.broadcast %300 : vector<1x32xf32> to vector<18x32xf32>
    %319 = arith.mulf %317, %318 : vector<18x32xf32>
    %320 = vector.broadcast %301 : vector<1x32xf32> to vector<18x32xf32>
    %321 = arith.addf %319, %320 : vector<18x32xf32>
    %322 = arith.addf %321, %3 : vector<18x32xf32>
    %cst_110 = arith.constant 0.000000e+00 : f32
    %323 = vector.broadcast %cst_110 : f32 to vector<8x32xf32>
    %c0_111 = arith.constant 0 : index
    %c0_112 = arith.constant 0 : index
    %c0_113 = arith.constant 0 : index
    %324 = vector.load %arg9[%c0_111, %c0_112, %c0_113] : memref<2x32x256xf32, #tpu.memory_space<vmem>>, vector<1x32x256xf32>
    %325 = vector.shape_cast %324 : vector<1x32x256xf32> to vector<32x256xf32>
    %c0_114 = arith.constant 0 : index
    %c0_115 = arith.constant 0 : index
    %c0_116 = arith.constant 0 : index
    %326 = vector.load %arg12[%c0_114, %c0_115, %c0_116] : memref<2x15x32xf32, #tpu.memory_space<vmem>>, vector<1x15x32xf32>
    %327 = vector.shape_cast %326 : vector<1x15x32xf32> to vector<15x32xf32>
    %328 = arith.addf %323, %5 : vector<8x32xf32>
    %329 = vector.extract_strided_slice %325 {offsets = [0, 0], sizes = [32, 32], strides = [1, 1]} : vector<32x256xf32> to vector<32x32xf32>
    %cst_117 = arith.constant dense<0.000000e+00> : vector<8x32xf32>
    %330 = tpu.matmul %328, %329, %cst_117 {dimension_numbers = #tpu.dot_dimension_numbers<[1], [0], [0], [1], [0, 0, 1, 1], [], []>} : vector<8x32xf32>, vector<32x32xf32>, vector<8x32xf32> -> vector<8x32xf32>
    %331 = vector.extract_strided_slice %327 {offsets = [0, 0], sizes = [1, 32], strides = [1, 1]} : vector<15x32xf32> to vector<1x32xf32>
    %332 = vector.broadcast %331 : vector<1x32xf32> to vector<8x32xf32>
    %333 = arith.addf %330, %332 : vector<8x32xf32>
    %334 = vector.extract_strided_slice %325 {offsets = [0, 32], sizes = [32, 32], strides = [1, 1]} : vector<32x256xf32> to vector<32x32xf32>
    %cst_118 = arith.constant dense<0.000000e+00> : vector<8x32xf32>
    %335 = tpu.matmul %328, %334, %cst_118 {dimension_numbers = #tpu.dot_dimension_numbers<[1], [0], [0], [1], [0, 0, 1, 1], [], []>} : vector<8x32xf32>, vector<32x32xf32>, vector<8x32xf32> -> vector<8x32xf32>
    %336 = vector.extract_strided_slice %327 {offsets = [1, 0], sizes = [1, 32], strides = [1, 1]} : vector<15x32xf32> to vector<1x32xf32>
    %337 = vector.broadcast %336 : vector<1x32xf32> to vector<8x32xf32>
    %338 = arith.addf %335, %337 : vector<8x32xf32>
    %339 = vector.extract_strided_slice %325 {offsets = [0, 64], sizes = [32, 32], strides = [1, 1]} : vector<32x256xf32> to vector<32x32xf32>
    %cst_119 = arith.constant dense<0.000000e+00> : vector<8x32xf32>
    %340 = tpu.matmul %323, %339, %cst_119 {dimension_numbers = #tpu.dot_dimension_numbers<[1], [0], [0], [1], [0, 0, 1, 1], [], []>} : vector<8x32xf32>, vector<32x32xf32>, vector<8x32xf32> -> vector<8x32xf32>
    %341 = vector.extract_strided_slice %327 {offsets = [2, 0], sizes = [1, 32], strides = [1, 1]} : vector<15x32xf32> to vector<1x32xf32>
    %342 = vector.broadcast %341 : vector<1x32xf32> to vector<8x32xf32>
    %343 = arith.addf %340, %342 : vector<8x32xf32>
    %344 = vector.extract_strided_slice %325 {offsets = [0, 96], sizes = [32, 32], strides = [1, 1]} : vector<32x256xf32> to vector<32x32xf32>
    %345 = vector.extract_strided_slice %327 {offsets = [3, 0], sizes = [1, 32], strides = [1, 1]} : vector<15x32xf32> to vector<1x32xf32>
    %cst_120 = arith.constant 0.353553385 : f32
    %346 = vector.broadcast %cst_120 : f32 to vector<8x32xf32>
    %347 = arith.mulf %333, %346 : vector<8x32xf32>
    %348 = vector.extract_strided_slice %347 {offsets = [0, 0], sizes = [8, 8], strides = [1, 1]} : vector<8x32xf32> to vector<8x8xf32>
    %349 = vector.extract_strided_slice %338 {offsets = [0, 0], sizes = [8, 8], strides = [1, 1]} : vector<8x32xf32> to vector<8x8xf32>
    %cst_121 = arith.constant dense<0.000000e+00> : vector<8x8xf32>
    %350 = tpu.matmul %348, %349, %cst_121 {dimension_numbers = #tpu.dot_dimension_numbers<[1], [1], [0], [0], [0, 0, 1, 0], [], []>} : vector<8x8xf32>, vector<8x8xf32>, vector<8x8xf32> -> vector<8x8xf32>
    %cst_122 = arith.constant dense<0xFF800000> : vector<8xf32>
    %351 = vector.multi_reduction <maximumf>, %350, %cst_122 [1] : vector<8x8xf32> to vector<8xf32>
    %352 = vector.shape_cast %351 : vector<8xf32> to vector<8x1xf32>
    %353 = vector.broadcast %352 : vector<8x1xf32> to vector<8x8xf32>
    %354 = arith.subf %350, %353 : vector<8x8xf32>
    %355 = math.exp %354 : vector<8x8xf32>
    %cst_123 = arith.constant dense<0.000000e+00> : vector<8xf32>
    %356 = vector.multi_reduction <add>, %355, %cst_123 [1] : vector<8x8xf32> to vector<8xf32>
    %357 = vector.shape_cast %356 : vector<8xf32> to vector<8x1xf32>
    %358 = tpu.reciprocal %357 : vector<8x1xf32> -> vector<8x1xf32>
    %359 = vector.broadcast %358 : vector<8x1xf32> to vector<8x8xf32>
    %360 = arith.mulf %355, %359 : vector<8x8xf32>
    %361 = vector.extract_strided_slice %343 {offsets = [0, 0], sizes = [8, 8], strides = [1, 1]} : vector<8x32xf32> to vector<8x8xf32>
    %cst_124 = arith.constant dense<0.000000e+00> : vector<8x8xf32>
    %362 = tpu.matmul %360, %361, %cst_124 {dimension_numbers = #tpu.dot_dimension_numbers<[1], [0], [0], [1], [0, 0, 1, 1], [], []>} : vector<8x8xf32>, vector<8x8xf32>, vector<8x8xf32> -> vector<8x8xf32>
    %363 = vector.extract_strided_slice %344 {offsets = [0, 0], sizes = [8, 32], strides = [1, 1]} : vector<32x32xf32> to vector<8x32xf32>
    %cst_125 = arith.constant dense<0.000000e+00> : vector<8x32xf32>
    %364 = tpu.matmul %362, %363, %cst_125 {dimension_numbers = #tpu.dot_dimension_numbers<[1], [0], [0], [1], [0, 0, 1, 1], [], []>} : vector<8x8xf32>, vector<8x32xf32>, vector<8x32xf32> -> vector<8x32xf32>
    %365 = vector.broadcast %345 : vector<1x32xf32> to vector<8x32xf32>
    %366 = arith.addf %365, %364 : vector<8x32xf32>
    %367 = vector.extract_strided_slice %347 {offsets = [0, 8], sizes = [8, 8], strides = [1, 1]} : vector<8x32xf32> to vector<8x8xf32>
    %368 = vector.extract_strided_slice %338 {offsets = [0, 8], sizes = [8, 8], strides = [1, 1]} : vector<8x32xf32> to vector<8x8xf32>
    %cst_126 = arith.constant dense<0.000000e+00> : vector<8x8xf32>
    %369 = tpu.matmul %367, %368, %cst_126 {dimension_numbers = #tpu.dot_dimension_numbers<[1], [1], [0], [0], [0, 0, 1, 0], [], []>} : vector<8x8xf32>, vector<8x8xf32>, vector<8x8xf32> -> vector<8x8xf32>
    %cst_127 = arith.constant dense<0xFF800000> : vector<8xf32>
    %370 = vector.multi_reduction <maximumf>, %369, %cst_127 [1] : vector<8x8xf32> to vector<8xf32>
    %371 = vector.shape_cast %370 : vector<8xf32> to vector<8x1xf32>
    %372 = vector.broadcast %371 : vector<8x1xf32> to vector<8x8xf32>
    %373 = arith.subf %369, %372 : vector<8x8xf32>
    %374 = math.exp %373 : vector<8x8xf32>
    %cst_128 = arith.constant dense<0.000000e+00> : vector<8xf32>
    %375 = vector.multi_reduction <add>, %374, %cst_128 [1] : vector<8x8xf32> to vector<8xf32>
    %376 = vector.shape_cast %375 : vector<8xf32> to vector<8x1xf32>
    %377 = tpu.reciprocal %376 : vector<8x1xf32> -> vector<8x1xf32>
    %378 = vector.broadcast %377 : vector<8x1xf32> to vector<8x8xf32>
    %379 = arith.mulf %374, %378 : vector<8x8xf32>
    %380 = vector.extract_strided_slice %343 {offsets = [0, 8], sizes = [8, 8], strides = [1, 1]} : vector<8x32xf32> to vector<8x8xf32>
    %cst_129 = arith.constant dense<0.000000e+00> : vector<8x8xf32>
    %381 = tpu.matmul %379, %380, %cst_129 {dimension_numbers = #tpu.dot_dimension_numbers<[1], [0], [0], [1], [0, 0, 1, 1], [], []>} : vector<8x8xf32>, vector<8x8xf32>, vector<8x8xf32> -> vector<8x8xf32>
    %382 = vector.extract_strided_slice %344 {offsets = [8, 0], sizes = [8, 32], strides = [1, 1]} : vector<32x32xf32> to vector<8x32xf32>
    %cst_130 = arith.constant dense<0.000000e+00> : vector<8x32xf32>
    %383 = tpu.matmul %381, %382, %cst_130 {dimension_numbers = #tpu.dot_dimension_numbers<[1], [0], [0], [1], [0, 0, 1, 1], [], []>} : vector<8x8xf32>, vector<8x32xf32>, vector<8x32xf32> -> vector<8x32xf32>
    %384 = arith.addf %366, %383 : vector<8x32xf32>
    %385 = vector.extract_strided_slice %347 {offsets = [0, 16], sizes = [8, 8], strides = [1, 1]} : vector<8x32xf32> to vector<8x8xf32>
    %386 = vector.extract_strided_slice %338 {offsets = [0, 16], sizes = [8, 8], strides = [1, 1]} : vector<8x32xf32> to vector<8x8xf32>
    %cst_131 = arith.constant dense<0.000000e+00> : vector<8x8xf32>
    %387 = tpu.matmul %385, %386, %cst_131 {dimension_numbers = #tpu.dot_dimension_numbers<[1], [1], [0], [0], [0, 0, 1, 0], [], []>} : vector<8x8xf32>, vector<8x8xf32>, vector<8x8xf32> -> vector<8x8xf32>
    %cst_132 = arith.constant dense<0xFF800000> : vector<8xf32>
    %388 = vector.multi_reduction <maximumf>, %387, %cst_132 [1] : vector<8x8xf32> to vector<8xf32>
    %389 = vector.shape_cast %388 : vector<8xf32> to vector<8x1xf32>
    %390 = vector.broadcast %389 : vector<8x1xf32> to vector<8x8xf32>
    %391 = arith.subf %387, %390 : vector<8x8xf32>
    %392 = math.exp %391 : vector<8x8xf32>
    %cst_133 = arith.constant dense<0.000000e+00> : vector<8xf32>
    %393 = vector.multi_reduction <add>, %392, %cst_133 [1] : vector<8x8xf32> to vector<8xf32>
    %394 = vector.shape_cast %393 : vector<8xf32> to vector<8x1xf32>
    %395 = tpu.reciprocal %394 : vector<8x1xf32> -> vector<8x1xf32>
    %396 = vector.broadcast %395 : vector<8x1xf32> to vector<8x8xf32>
    %397 = arith.mulf %392, %396 : vector<8x8xf32>
    %398 = vector.extract_strided_slice %343 {offsets = [0, 16], sizes = [8, 8], strides = [1, 1]} : vector<8x32xf32> to vector<8x8xf32>
    %cst_134 = arith.constant dense<0.000000e+00> : vector<8x8xf32>
    %399 = tpu.matmul %397, %398, %cst_134 {dimension_numbers = #tpu.dot_dimension_numbers<[1], [0], [0], [1], [0, 0, 1, 1], [], []>} : vector<8x8xf32>, vector<8x8xf32>, vector<8x8xf32> -> vector<8x8xf32>
    %400 = vector.extract_strided_slice %344 {offsets = [16, 0], sizes = [8, 32], strides = [1, 1]} : vector<32x32xf32> to vector<8x32xf32>
    %cst_135 = arith.constant dense<0.000000e+00> : vector<8x32xf32>
    %401 = tpu.matmul %399, %400, %cst_135 {dimension_numbers = #tpu.dot_dimension_numbers<[1], [0], [0], [1], [0, 0, 1, 1], [], []>} : vector<8x8xf32>, vector<8x32xf32>, vector<8x32xf32> -> vector<8x32xf32>
    %402 = arith.addf %384, %401 : vector<8x32xf32>
    %403 = vector.extract_strided_slice %347 {offsets = [0, 24], sizes = [8, 8], strides = [1, 1]} : vector<8x32xf32> to vector<8x8xf32>
    %404 = vector.extract_strided_slice %338 {offsets = [0, 24], sizes = [8, 8], strides = [1, 1]} : vector<8x32xf32> to vector<8x8xf32>
    %cst_136 = arith.constant dense<0.000000e+00> : vector<8x8xf32>
    %405 = tpu.matmul %403, %404, %cst_136 {dimension_numbers = #tpu.dot_dimension_numbers<[1], [1], [0], [0], [0, 0, 1, 0], [], []>} : vector<8x8xf32>, vector<8x8xf32>, vector<8x8xf32> -> vector<8x8xf32>
    %cst_137 = arith.constant dense<0xFF800000> : vector<8xf32>
    %406 = vector.multi_reduction <maximumf>, %405, %cst_137 [1] : vector<8x8xf32> to vector<8xf32>
    %407 = vector.shape_cast %406 : vector<8xf32> to vector<8x1xf32>
    %408 = vector.broadcast %407 : vector<8x1xf32> to vector<8x8xf32>
    %409 = arith.subf %405, %408 : vector<8x8xf32>
    %410 = math.exp %409 : vector<8x8xf32>
    %cst_138 = arith.constant dense<0.000000e+00> : vector<8xf32>
    %411 = vector.multi_reduction <add>, %410, %cst_138 [1] : vector<8x8xf32> to vector<8xf32>
    %412 = vector.shape_cast %411 : vector<8xf32> to vector<8x1xf32>
    %413 = tpu.reciprocal %412 : vector<8x1xf32> -> vector<8x1xf32>
    %414 = vector.broadcast %413 : vector<8x1xf32> to vector<8x8xf32>
    %415 = arith.mulf %410, %414 : vector<8x8xf32>
    %416 = vector.extract_strided_slice %343 {offsets = [0, 24], sizes = [8, 8], strides = [1, 1]} : vector<8x32xf32> to vector<8x8xf32>
    %cst_139 = arith.constant dense<0.000000e+00> : vector<8x8xf32>
    %417 = tpu.matmul %415, %416, %cst_139 {dimension_numbers = #tpu.dot_dimension_numbers<[1], [0], [0], [1], [0, 0, 1, 1], [], []>} : vector<8x8xf32>, vector<8x8xf32>, vector<8x8xf32> -> vector<8x8xf32>
    %418 = vector.extract_strided_slice %344 {offsets = [24, 0], sizes = [8, 32], strides = [1, 1]} : vector<32x32xf32> to vector<8x32xf32>
    %cst_140 = arith.constant dense<0.000000e+00> : vector<8x32xf32>
    %419 = tpu.matmul %417, %418, %cst_140 {dimension_numbers = #tpu.dot_dimension_numbers<[1], [0], [0], [1], [0, 0, 1, 1], [], []>} : vector<8x8xf32>, vector<8x32xf32>, vector<8x32xf32> -> vector<8x32xf32>
    %420 = arith.addf %402, %419 : vector<8x32xf32>
    %421 = arith.addf %323, %420 : vector<8x32xf32>
    %422 = vector.extract_strided_slice %327 {offsets = [4, 0], sizes = [1, 32], strides = [1, 1]} : vector<15x32xf32> to vector<1x32xf32>
    %423 = vector.extract_strided_slice %327 {offsets = [5, 0], sizes = [1, 32], strides = [1, 1]} : vector<15x32xf32> to vector<1x32xf32>
    %cst_141 = arith.constant dense<0.000000e+00> : vector<8xf32>
    %424 = vector.multi_reduction <add>, %421, %cst_141 [1] : vector<8x32xf32> to vector<8xf32>
    %425 = vector.shape_cast %424 : vector<8xf32> to vector<8x1xf32>
    %cst_142 = arith.constant 3.200000e+01 : f32
    %426 = vector.broadcast %cst_142 : f32 to vector<8x1xf32>
    %427 = arith.divf %425, %426 : vector<8x1xf32>
    %428 = vector.broadcast %427 : vector<8x1xf32> to vector<8x32xf32>
    %429 = arith.subf %421, %428 : vector<8x32xf32>
    %430 = arith.mulf %429, %429 : vector<8x32xf32>
    %cst_143 = arith.constant dense<0.000000e+00> : vector<8xf32>
    %431 = vector.multi_reduction <add>, %430, %cst_143 [1] : vector<8x32xf32> to vector<8xf32>
    %432 = vector.shape_cast %431 : vector<8xf32> to vector<8x1xf32>
    %cst_144 = arith.constant 3.200000e+01 : f32
    %433 = vector.broadcast %cst_144 : f32 to vector<8x1xf32>
    %434 = arith.divf %432, %433 : vector<8x1xf32>
    %cst_145 = arith.constant 9.99999974E-6 : f32
    %435 = vector.broadcast %cst_145 : f32 to vector<8x1xf32>
    %436 = arith.addf %434, %435 : vector<8x1xf32>
    %437 = math.rsqrt %436 : vector<8x1xf32>
    %438 = vector.broadcast %437 : vector<8x1xf32> to vector<8x32xf32>
    %439 = arith.mulf %429, %438 : vector<8x32xf32>
    %440 = vector.broadcast %422 : vector<1x32xf32> to vector<8x32xf32>
    %441 = arith.mulf %439, %440 : vector<8x32xf32>
    %442 = vector.broadcast %423 : vector<1x32xf32> to vector<8x32xf32>
    %443 = arith.addf %441, %442 : vector<8x32xf32>
    %444 = arith.addf %443, %5 : vector<8x32xf32>
    %445 = vector.extract_strided_slice %325 {offsets = [0, 128], sizes = [32, 32], strides = [1, 1]} : vector<32x256xf32> to vector<32x32xf32>
    %cst_146 = arith.constant dense<0.000000e+00> : vector<8x32xf32>
    %446 = tpu.matmul %444, %445, %cst_146 {dimension_numbers = #tpu.dot_dimension_numbers<[1], [0], [0], [1], [0, 0, 1, 1], [], []>} : vector<8x32xf32>, vector<32x32xf32>, vector<8x32xf32> -> vector<8x32xf32>
    %447 = vector.extract_strided_slice %327 {offsets = [6, 0], sizes = [1, 32], strides = [1, 1]} : vector<15x32xf32> to vector<1x32xf32>
    %448 = vector.broadcast %447 : vector<1x32xf32> to vector<8x32xf32>
    %449 = arith.addf %446, %448 : vector<8x32xf32>
    %450 = vector.extract_strided_slice %325 {offsets = [0, 160], sizes = [32, 32], strides = [1, 1]} : vector<32x256xf32> to vector<32x32xf32>
    %cst_147 = arith.constant dense<0.000000e+00> : vector<18x32xf32>
    %451 = tpu.matmul %322, %450, %cst_147 {dimension_numbers = #tpu.dot_dimension_numbers<[1], [0], [0], [1], [0, 0, 1, 1], [], []>} : vector<18x32xf32>, vector<32x32xf32>, vector<18x32xf32> -> vector<18x32xf32>
    %452 = vector.extract_strided_slice %327 {offsets = [7, 0], sizes = [1, 32], strides = [1, 1]} : vector<15x32xf32> to vector<1x32xf32>
    %453 = vector.broadcast %452 : vector<1x32xf32> to vector<18x32xf32>
    %454 = arith.addf %451, %453 : vector<18x32xf32>
    %455 = vector.extract_strided_slice %325 {offsets = [0, 192], sizes = [32, 32], strides = [1, 1]} : vector<32x256xf32> to vector<32x32xf32>
    %cst_148 = arith.constant dense<0.000000e+00> : vector<18x32xf32>
    %456 = tpu.matmul %321, %455, %cst_148 {dimension_numbers = #tpu.dot_dimension_numbers<[1], [0], [0], [1], [0, 0, 1, 1], [], []>} : vector<18x32xf32>, vector<32x32xf32>, vector<18x32xf32> -> vector<18x32xf32>
    %457 = vector.extract_strided_slice %327 {offsets = [8, 0], sizes = [1, 32], strides = [1, 1]} : vector<15x32xf32> to vector<1x32xf32>
    %458 = vector.broadcast %457 : vector<1x32xf32> to vector<18x32xf32>
    %459 = arith.addf %456, %458 : vector<18x32xf32>
    %460 = vector.extract_strided_slice %325 {offsets = [0, 224], sizes = [32, 32], strides = [1, 1]} : vector<32x256xf32> to vector<32x32xf32>
    %461 = vector.extract_strided_slice %327 {offsets = [9, 0], sizes = [1, 32], strides = [1, 1]} : vector<15x32xf32> to vector<1x32xf32>
    %cst_149 = arith.constant 0.353553385 : f32
    %462 = vector.broadcast %cst_149 : f32 to vector<8x32xf32>
    %463 = arith.mulf %449, %462 : vector<8x32xf32>
    %464 = vector.extract_strided_slice %463 {offsets = [0, 0], sizes = [8, 8], strides = [1, 1]} : vector<8x32xf32> to vector<8x8xf32>
    %465 = vector.extract_strided_slice %454 {offsets = [0, 0], sizes = [18, 8], strides = [1, 1]} : vector<18x32xf32> to vector<18x8xf32>
    %cst_150 = arith.constant dense<0.000000e+00> : vector<8x18xf32>
    %466 = tpu.matmul %464, %465, %cst_150 {dimension_numbers = #tpu.dot_dimension_numbers<[1], [1], [0], [0], [0, 0, 1, 0], [], []>} : vector<8x8xf32>, vector<18x8xf32>, vector<8x18xf32> -> vector<8x18xf32>
    %cst_151 = arith.constant dense<0xFF800000> : vector<8xf32>
    %467 = vector.multi_reduction <maximumf>, %466, %cst_151 [1] : vector<8x18xf32> to vector<8xf32>
    %468 = vector.shape_cast %467 : vector<8xf32> to vector<8x1xf32>
    %469 = vector.broadcast %468 : vector<8x1xf32> to vector<8x18xf32>
    %470 = arith.subf %466, %469 : vector<8x18xf32>
    %471 = math.exp %470 : vector<8x18xf32>
    %cst_152 = arith.constant dense<0.000000e+00> : vector<8xf32>
    %472 = vector.multi_reduction <add>, %471, %cst_152 [1] : vector<8x18xf32> to vector<8xf32>
    %473 = vector.shape_cast %472 : vector<8xf32> to vector<8x1xf32>
    %474 = tpu.reciprocal %473 : vector<8x1xf32> -> vector<8x1xf32>
    %475 = vector.broadcast %474 : vector<8x1xf32> to vector<8x18xf32>
    %476 = arith.mulf %471, %475 : vector<8x18xf32>
    %477 = vector.extract_strided_slice %459 {offsets = [0, 0], sizes = [18, 8], strides = [1, 1]} : vector<18x32xf32> to vector<18x8xf32>
    %cst_153 = arith.constant dense<0.000000e+00> : vector<8x8xf32>
    %478 = tpu.matmul %476, %477, %cst_153 {dimension_numbers = #tpu.dot_dimension_numbers<[1], [0], [0], [1], [0, 0, 1, 1], [], []>} : vector<8x18xf32>, vector<18x8xf32>, vector<8x8xf32> -> vector<8x8xf32>
    %479 = vector.extract_strided_slice %460 {offsets = [0, 0], sizes = [8, 32], strides = [1, 1]} : vector<32x32xf32> to vector<8x32xf32>
    %cst_154 = arith.constant dense<0.000000e+00> : vector<8x32xf32>
    %480 = tpu.matmul %478, %479, %cst_154 {dimension_numbers = #tpu.dot_dimension_numbers<[1], [0], [0], [1], [0, 0, 1, 1], [], []>} : vector<8x8xf32>, vector<8x32xf32>, vector<8x32xf32> -> vector<8x32xf32>
    %481 = vector.broadcast %461 : vector<1x32xf32> to vector<8x32xf32>
    %482 = arith.addf %481, %480 : vector<8x32xf32>
    %483 = vector.extract_strided_slice %463 {offsets = [0, 8], sizes = [8, 8], strides = [1, 1]} : vector<8x32xf32> to vector<8x8xf32>
    %484 = vector.extract_strided_slice %454 {offsets = [0, 8], sizes = [18, 8], strides = [1, 1]} : vector<18x32xf32> to vector<18x8xf32>
    %cst_155 = arith.constant dense<0.000000e+00> : vector<8x18xf32>
    %485 = tpu.matmul %483, %484, %cst_155 {dimension_numbers = #tpu.dot_dimension_numbers<[1], [1], [0], [0], [0, 0, 1, 0], [], []>} : vector<8x8xf32>, vector<18x8xf32>, vector<8x18xf32> -> vector<8x18xf32>
    %cst_156 = arith.constant dense<0xFF800000> : vector<8xf32>
    %486 = vector.multi_reduction <maximumf>, %485, %cst_156 [1] : vector<8x18xf32> to vector<8xf32>
    %487 = vector.shape_cast %486 : vector<8xf32> to vector<8x1xf32>
    %488 = vector.broadcast %487 : vector<8x1xf32> to vector<8x18xf32>
    %489 = arith.subf %485, %488 : vector<8x18xf32>
    %490 = math.exp %489 : vector<8x18xf32>
    %cst_157 = arith.constant dense<0.000000e+00> : vector<8xf32>
    %491 = vector.multi_reduction <add>, %490, %cst_157 [1] : vector<8x18xf32> to vector<8xf32>
    %492 = vector.shape_cast %491 : vector<8xf32> to vector<8x1xf32>
    %493 = tpu.reciprocal %492 : vector<8x1xf32> -> vector<8x1xf32>
    %494 = vector.broadcast %493 : vector<8x1xf32> to vector<8x18xf32>
    %495 = arith.mulf %490, %494 : vector<8x18xf32>
    %496 = vector.extract_strided_slice %459 {offsets = [0, 8], sizes = [18, 8], strides = [1, 1]} : vector<18x32xf32> to vector<18x8xf32>
    %cst_158 = arith.constant dense<0.000000e+00> : vector<8x8xf32>
    %497 = tpu.matmul %495, %496, %cst_158 {dimension_numbers = #tpu.dot_dimension_numbers<[1], [0], [0], [1], [0, 0, 1, 1], [], []>} : vector<8x18xf32>, vector<18x8xf32>, vector<8x8xf32> -> vector<8x8xf32>
    %498 = vector.extract_strided_slice %460 {offsets = [8, 0], sizes = [8, 32], strides = [1, 1]} : vector<32x32xf32> to vector<8x32xf32>
    %cst_159 = arith.constant dense<0.000000e+00> : vector<8x32xf32>
    %499 = tpu.matmul %497, %498, %cst_159 {dimension_numbers = #tpu.dot_dimension_numbers<[1], [0], [0], [1], [0, 0, 1, 1], [], []>} : vector<8x8xf32>, vector<8x32xf32>, vector<8x32xf32> -> vector<8x32xf32>
    %500 = arith.addf %482, %499 : vector<8x32xf32>
    %501 = vector.extract_strided_slice %463 {offsets = [0, 16], sizes = [8, 8], strides = [1, 1]} : vector<8x32xf32> to vector<8x8xf32>
    %502 = vector.extract_strided_slice %454 {offsets = [0, 16], sizes = [18, 8], strides = [1, 1]} : vector<18x32xf32> to vector<18x8xf32>
    %cst_160 = arith.constant dense<0.000000e+00> : vector<8x18xf32>
    %503 = tpu.matmul %501, %502, %cst_160 {dimension_numbers = #tpu.dot_dimension_numbers<[1], [1], [0], [0], [0, 0, 1, 0], [], []>} : vector<8x8xf32>, vector<18x8xf32>, vector<8x18xf32> -> vector<8x18xf32>
    %cst_161 = arith.constant dense<0xFF800000> : vector<8xf32>
    %504 = vector.multi_reduction <maximumf>, %503, %cst_161 [1] : vector<8x18xf32> to vector<8xf32>
    %505 = vector.shape_cast %504 : vector<8xf32> to vector<8x1xf32>
    %506 = vector.broadcast %505 : vector<8x1xf32> to vector<8x18xf32>
    %507 = arith.subf %503, %506 : vector<8x18xf32>
    %508 = math.exp %507 : vector<8x18xf32>
    %cst_162 = arith.constant dense<0.000000e+00> : vector<8xf32>
    %509 = vector.multi_reduction <add>, %508, %cst_162 [1] : vector<8x18xf32> to vector<8xf32>
    %510 = vector.shape_cast %509 : vector<8xf32> to vector<8x1xf32>
    %511 = tpu.reciprocal %510 : vector<8x1xf32> -> vector<8x1xf32>
    %512 = vector.broadcast %511 : vector<8x1xf32> to vector<8x18xf32>
    %513 = arith.mulf %508, %512 : vector<8x18xf32>
    %514 = vector.extract_strided_slice %459 {offsets = [0, 16], sizes = [18, 8], strides = [1, 1]} : vector<18x32xf32> to vector<18x8xf32>
    %cst_163 = arith.constant dense<0.000000e+00> : vector<8x8xf32>
    %515 = tpu.matmul %513, %514, %cst_163 {dimension_numbers = #tpu.dot_dimension_numbers<[1], [0], [0], [1], [0, 0, 1, 1], [], []>} : vector<8x18xf32>, vector<18x8xf32>, vector<8x8xf32> -> vector<8x8xf32>
    %516 = vector.extract_strided_slice %460 {offsets = [16, 0], sizes = [8, 32], strides = [1, 1]} : vector<32x32xf32> to vector<8x32xf32>
    %cst_164 = arith.constant dense<0.000000e+00> : vector<8x32xf32>
    %517 = tpu.matmul %515, %516, %cst_164 {dimension_numbers = #tpu.dot_dimension_numbers<[1], [0], [0], [1], [0, 0, 1, 1], [], []>} : vector<8x8xf32>, vector<8x32xf32>, vector<8x32xf32> -> vector<8x32xf32>
    %518 = arith.addf %500, %517 : vector<8x32xf32>
    %519 = vector.extract_strided_slice %463 {offsets = [0, 24], sizes = [8, 8], strides = [1, 1]} : vector<8x32xf32> to vector<8x8xf32>
    %520 = vector.extract_strided_slice %454 {offsets = [0, 24], sizes = [18, 8], strides = [1, 1]} : vector<18x32xf32> to vector<18x8xf32>
    %cst_165 = arith.constant dense<0.000000e+00> : vector<8x18xf32>
    %521 = tpu.matmul %519, %520, %cst_165 {dimension_numbers = #tpu.dot_dimension_numbers<[1], [1], [0], [0], [0, 0, 1, 0], [], []>} : vector<8x8xf32>, vector<18x8xf32>, vector<8x18xf32> -> vector<8x18xf32>
    %cst_166 = arith.constant dense<0xFF800000> : vector<8xf32>
    %522 = vector.multi_reduction <maximumf>, %521, %cst_166 [1] : vector<8x18xf32> to vector<8xf32>
    %523 = vector.shape_cast %522 : vector<8xf32> to vector<8x1xf32>
    %524 = vector.broadcast %523 : vector<8x1xf32> to vector<8x18xf32>
    %525 = arith.subf %521, %524 : vector<8x18xf32>
    %526 = math.exp %525 : vector<8x18xf32>
    %cst_167 = arith.constant dense<0.000000e+00> : vector<8xf32>
    %527 = vector.multi_reduction <add>, %526, %cst_167 [1] : vector<8x18xf32> to vector<8xf32>
    %528 = vector.shape_cast %527 : vector<8xf32> to vector<8x1xf32>
    %529 = tpu.reciprocal %528 : vector<8x1xf32> -> vector<8x1xf32>
    %530 = vector.broadcast %529 : vector<8x1xf32> to vector<8x18xf32>
    %531 = arith.mulf %526, %530 : vector<8x18xf32>
    %532 = vector.extract_strided_slice %459 {offsets = [0, 24], sizes = [18, 8], strides = [1, 1]} : vector<18x32xf32> to vector<18x8xf32>
    %cst_168 = arith.constant dense<0.000000e+00> : vector<8x8xf32>
    %533 = tpu.matmul %531, %532, %cst_168 {dimension_numbers = #tpu.dot_dimension_numbers<[1], [0], [0], [1], [0, 0, 1, 1], [], []>} : vector<8x18xf32>, vector<18x8xf32>, vector<8x8xf32> -> vector<8x8xf32>
    %534 = vector.extract_strided_slice %460 {offsets = [24, 0], sizes = [8, 32], strides = [1, 1]} : vector<32x32xf32> to vector<8x32xf32>
    %cst_169 = arith.constant dense<0.000000e+00> : vector<8x32xf32>
    %535 = tpu.matmul %533, %534, %cst_169 {dimension_numbers = #tpu.dot_dimension_numbers<[1], [0], [0], [1], [0, 0, 1, 1], [], []>} : vector<8x8xf32>, vector<8x32xf32>, vector<8x32xf32> -> vector<8x32xf32>
    %536 = arith.addf %518, %535 : vector<8x32xf32>
    %537 = arith.addf %443, %536 : vector<8x32xf32>
    %538 = vector.extract_strided_slice %327 {offsets = [10, 0], sizes = [1, 32], strides = [1, 1]} : vector<15x32xf32> to vector<1x32xf32>
    %539 = vector.extract_strided_slice %327 {offsets = [11, 0], sizes = [1, 32], strides = [1, 1]} : vector<15x32xf32> to vector<1x32xf32>
    %cst_170 = arith.constant dense<0.000000e+00> : vector<8xf32>
    %540 = vector.multi_reduction <add>, %537, %cst_170 [1] : vector<8x32xf32> to vector<8xf32>
    %541 = vector.shape_cast %540 : vector<8xf32> to vector<8x1xf32>
    %cst_171 = arith.constant 3.200000e+01 : f32
    %542 = vector.broadcast %cst_171 : f32 to vector<8x1xf32>
    %543 = arith.divf %541, %542 : vector<8x1xf32>
    %544 = vector.broadcast %543 : vector<8x1xf32> to vector<8x32xf32>
    %545 = arith.subf %537, %544 : vector<8x32xf32>
    %546 = arith.mulf %545, %545 : vector<8x32xf32>
    %cst_172 = arith.constant dense<0.000000e+00> : vector<8xf32>
    %547 = vector.multi_reduction <add>, %546, %cst_172 [1] : vector<8x32xf32> to vector<8xf32>
    %548 = vector.shape_cast %547 : vector<8xf32> to vector<8x1xf32>
    %cst_173 = arith.constant 3.200000e+01 : f32
    %549 = vector.broadcast %cst_173 : f32 to vector<8x1xf32>
    %550 = arith.divf %548, %549 : vector<8x1xf32>
    %cst_174 = arith.constant 9.99999974E-6 : f32
    %551 = vector.broadcast %cst_174 : f32 to vector<8x1xf32>
    %552 = arith.addf %550, %551 : vector<8x1xf32>
    %553 = math.rsqrt %552 : vector<8x1xf32>
    %554 = vector.broadcast %553 : vector<8x1xf32> to vector<8x32xf32>
    %555 = arith.mulf %545, %554 : vector<8x32xf32>
    %556 = vector.broadcast %538 : vector<1x32xf32> to vector<8x32xf32>
    %557 = arith.mulf %555, %556 : vector<8x32xf32>
    %558 = vector.broadcast %539 : vector<1x32xf32> to vector<8x32xf32>
    %559 = arith.addf %557, %558 : vector<8x32xf32>
    %c0_175 = arith.constant 0 : index
    %c0_176 = arith.constant 0 : index
    %c0_177 = arith.constant 0 : index
    %560 = vector.load %arg10[%c0_175, %c0_176, %c0_177] : memref<2x32x64xf32, #tpu.memory_space<vmem>>, vector<1x32x64xf32>
    %561 = vector.shape_cast %560 : vector<1x32x64xf32> to vector<32x64xf32>
    %cst_178 = arith.constant dense<0.000000e+00> : vector<8x64xf32>
    %562 = tpu.matmul %559, %561, %cst_178 {dimension_numbers = #tpu.dot_dimension_numbers<[1], [0], [0], [1], [0, 0, 1, 1], [], []>} : vector<8x32xf32>, vector<32x64xf32>, vector<8x64xf32> -> vector<8x64xf32>
    %c0_179 = arith.constant 0 : index
    %c0_180 = arith.constant 0 : index
    %c0_181 = arith.constant 0 : index
    %563 = vector.load %arg13[%c0_179, %c0_180, %c0_181] : memref<2x1x64xf32, #tpu.memory_space<vmem>>, vector<1x1x64xf32>
    %564 = vector.shape_cast %563 : vector<1x1x64xf32> to vector<1x64xf32>
    %565 = vector.broadcast %564 : vector<1x64xf32> to vector<8x64xf32>
    %566 = arith.addf %562, %565 : vector<8x64xf32>
    %cst_182 = arith.constant 0.000000e+00 : f32
    %567 = vector.broadcast %cst_182 : f32 to vector<8x64xf32>
    %568 = arith.maximumf %566, %567 : vector<8x64xf32>
    %c0_183 = arith.constant 0 : index
    %c0_184 = arith.constant 0 : index
    %c0_185 = arith.constant 0 : index
    %569 = vector.load %arg11[%c0_183, %c0_184, %c0_185] : memref<2x64x32xf32, #tpu.memory_space<vmem>>, vector<1x64x32xf32>
    %570 = vector.shape_cast %569 : vector<1x64x32xf32> to vector<64x32xf32>
    %cst_186 = arith.constant dense<0.000000e+00> : vector<8x32xf32>
    %571 = tpu.matmul %568, %570, %cst_186 {dimension_numbers = #tpu.dot_dimension_numbers<[1], [0], [0], [1], [0, 0, 1, 1], [], []>} : vector<8x64xf32>, vector<64x32xf32>, vector<8x32xf32> -> vector<8x32xf32>
    %572 = vector.extract_strided_slice %327 {offsets = [12, 0], sizes = [1, 32], strides = [1, 1]} : vector<15x32xf32> to vector<1x32xf32>
    %573 = vector.broadcast %572 : vector<1x32xf32> to vector<8x32xf32>
    %574 = arith.addf %571, %573 : vector<8x32xf32>
    %575 = arith.addf %559, %574 : vector<8x32xf32>
    %576 = vector.extract_strided_slice %327 {offsets = [13, 0], sizes = [1, 32], strides = [1, 1]} : vector<15x32xf32> to vector<1x32xf32>
    %577 = vector.extract_strided_slice %327 {offsets = [14, 0], sizes = [1, 32], strides = [1, 1]} : vector<15x32xf32> to vector<1x32xf32>
    %cst_187 = arith.constant dense<0.000000e+00> : vector<8xf32>
    %578 = vector.multi_reduction <add>, %575, %cst_187 [1] : vector<8x32xf32> to vector<8xf32>
    %579 = vector.shape_cast %578 : vector<8xf32> to vector<8x1xf32>
    %cst_188 = arith.constant 3.200000e+01 : f32
    %580 = vector.broadcast %cst_188 : f32 to vector<8x1xf32>
    %581 = arith.divf %579, %580 : vector<8x1xf32>
    %582 = vector.broadcast %581 : vector<8x1xf32> to vector<8x32xf32>
    %583 = arith.subf %575, %582 : vector<8x32xf32>
    %584 = arith.mulf %583, %583 : vector<8x32xf32>
    %cst_189 = arith.constant dense<0.000000e+00> : vector<8xf32>
    %585 = vector.multi_reduction <add>, %584, %cst_189 [1] : vector<8x32xf32> to vector<8xf32>
    %586 = vector.shape_cast %585 : vector<8xf32> to vector<8x1xf32>
    %cst_190 = arith.constant 3.200000e+01 : f32
    %587 = vector.broadcast %cst_190 : f32 to vector<8x1xf32>
    %588 = arith.divf %586, %587 : vector<8x1xf32>
    %cst_191 = arith.constant 9.99999974E-6 : f32
    %589 = vector.broadcast %cst_191 : f32 to vector<8x1xf32>
    %590 = arith.addf %588, %589 : vector<8x1xf32>
    %591 = math.rsqrt %590 : vector<8x1xf32>
    %592 = vector.broadcast %591 : vector<8x1xf32> to vector<8x32xf32>
    %593 = arith.mulf %583, %592 : vector<8x32xf32>
    %594 = vector.broadcast %576 : vector<1x32xf32> to vector<8x32xf32>
    %595 = arith.mulf %593, %594 : vector<8x32xf32>
    %596 = vector.broadcast %577 : vector<1x32xf32> to vector<8x32xf32>
    %597 = arith.addf %595, %596 : vector<8x32xf32>
    %c1_192 = arith.constant 1 : index
    %c0_193 = arith.constant 0 : index
    %c0_194 = arith.constant 0 : index
    %598 = vector.load %arg9[%c1_192, %c0_193, %c0_194] : memref<2x32x256xf32, #tpu.memory_space<vmem>>, vector<1x32x256xf32>
    %599 = vector.shape_cast %598 : vector<1x32x256xf32> to vector<32x256xf32>
    %c1_195 = arith.constant 1 : index
    %c0_196 = arith.constant 0 : index
    %c0_197 = arith.constant 0 : index
    %600 = vector.load %arg12[%c1_195, %c0_196, %c0_197] : memref<2x15x32xf32, #tpu.memory_space<vmem>>, vector<1x15x32xf32>
    %601 = vector.shape_cast %600 : vector<1x15x32xf32> to vector<15x32xf32>
    %602 = arith.addf %597, %5 : vector<8x32xf32>
    %603 = vector.extract_strided_slice %599 {offsets = [0, 0], sizes = [32, 32], strides = [1, 1]} : vector<32x256xf32> to vector<32x32xf32>
    %cst_198 = arith.constant dense<0.000000e+00> : vector<8x32xf32>
    %604 = tpu.matmul %602, %603, %cst_198 {dimension_numbers = #tpu.dot_dimension_numbers<[1], [0], [0], [1], [0, 0, 1, 1], [], []>} : vector<8x32xf32>, vector<32x32xf32>, vector<8x32xf32> -> vector<8x32xf32>
    %605 = vector.extract_strided_slice %601 {offsets = [0, 0], sizes = [1, 32], strides = [1, 1]} : vector<15x32xf32> to vector<1x32xf32>
    %606 = vector.broadcast %605 : vector<1x32xf32> to vector<8x32xf32>
    %607 = arith.addf %604, %606 : vector<8x32xf32>
    %608 = vector.extract_strided_slice %599 {offsets = [0, 32], sizes = [32, 32], strides = [1, 1]} : vector<32x256xf32> to vector<32x32xf32>
    %cst_199 = arith.constant dense<0.000000e+00> : vector<8x32xf32>
    %609 = tpu.matmul %602, %608, %cst_199 {dimension_numbers = #tpu.dot_dimension_numbers<[1], [0], [0], [1], [0, 0, 1, 1], [], []>} : vector<8x32xf32>, vector<32x32xf32>, vector<8x32xf32> -> vector<8x32xf32>
    %610 = vector.extract_strided_slice %601 {offsets = [1, 0], sizes = [1, 32], strides = [1, 1]} : vector<15x32xf32> to vector<1x32xf32>
    %611 = vector.broadcast %610 : vector<1x32xf32> to vector<8x32xf32>
    %612 = arith.addf %609, %611 : vector<8x32xf32>
    %613 = vector.extract_strided_slice %599 {offsets = [0, 64], sizes = [32, 32], strides = [1, 1]} : vector<32x256xf32> to vector<32x32xf32>
    %cst_200 = arith.constant dense<0.000000e+00> : vector<8x32xf32>
    %614 = tpu.matmul %597, %613, %cst_200 {dimension_numbers = #tpu.dot_dimension_numbers<[1], [0], [0], [1], [0, 0, 1, 1], [], []>} : vector<8x32xf32>, vector<32x32xf32>, vector<8x32xf32> -> vector<8x32xf32>
    %615 = vector.extract_strided_slice %601 {offsets = [2, 0], sizes = [1, 32], strides = [1, 1]} : vector<15x32xf32> to vector<1x32xf32>
    %616 = vector.broadcast %615 : vector<1x32xf32> to vector<8x32xf32>
    %617 = arith.addf %614, %616 : vector<8x32xf32>
    %618 = vector.extract_strided_slice %599 {offsets = [0, 96], sizes = [32, 32], strides = [1, 1]} : vector<32x256xf32> to vector<32x32xf32>
    %619 = vector.extract_strided_slice %601 {offsets = [3, 0], sizes = [1, 32], strides = [1, 1]} : vector<15x32xf32> to vector<1x32xf32>
    %cst_201 = arith.constant 0.353553385 : f32
    %620 = vector.broadcast %cst_201 : f32 to vector<8x32xf32>
    %621 = arith.mulf %607, %620 : vector<8x32xf32>
    %622 = vector.extract_strided_slice %621 {offsets = [0, 0], sizes = [8, 8], strides = [1, 1]} : vector<8x32xf32> to vector<8x8xf32>
    %623 = vector.extract_strided_slice %612 {offsets = [0, 0], sizes = [8, 8], strides = [1, 1]} : vector<8x32xf32> to vector<8x8xf32>
    %cst_202 = arith.constant dense<0.000000e+00> : vector<8x8xf32>
    %624 = tpu.matmul %622, %623, %cst_202 {dimension_numbers = #tpu.dot_dimension_numbers<[1], [1], [0], [0], [0, 0, 1, 0], [], []>} : vector<8x8xf32>, vector<8x8xf32>, vector<8x8xf32> -> vector<8x8xf32>
    %cst_203 = arith.constant dense<0xFF800000> : vector<8xf32>
    %625 = vector.multi_reduction <maximumf>, %624, %cst_203 [1] : vector<8x8xf32> to vector<8xf32>
    %626 = vector.shape_cast %625 : vector<8xf32> to vector<8x1xf32>
    %627 = vector.broadcast %626 : vector<8x1xf32> to vector<8x8xf32>
    %628 = arith.subf %624, %627 : vector<8x8xf32>
    %629 = math.exp %628 : vector<8x8xf32>
    %cst_204 = arith.constant dense<0.000000e+00> : vector<8xf32>
    %630 = vector.multi_reduction <add>, %629, %cst_204 [1] : vector<8x8xf32> to vector<8xf32>
    %631 = vector.shape_cast %630 : vector<8xf32> to vector<8x1xf32>
    %632 = tpu.reciprocal %631 : vector<8x1xf32> -> vector<8x1xf32>
    %633 = vector.broadcast %632 : vector<8x1xf32> to vector<8x8xf32>
    %634 = arith.mulf %629, %633 : vector<8x8xf32>
    %635 = vector.extract_strided_slice %617 {offsets = [0, 0], sizes = [8, 8], strides = [1, 1]} : vector<8x32xf32> to vector<8x8xf32>
    %cst_205 = arith.constant dense<0.000000e+00> : vector<8x8xf32>
    %636 = tpu.matmul %634, %635, %cst_205 {dimension_numbers = #tpu.dot_dimension_numbers<[1], [0], [0], [1], [0, 0, 1, 1], [], []>} : vector<8x8xf32>, vector<8x8xf32>, vector<8x8xf32> -> vector<8x8xf32>
    %637 = vector.extract_strided_slice %618 {offsets = [0, 0], sizes = [8, 32], strides = [1, 1]} : vector<32x32xf32> to vector<8x32xf32>
    %cst_206 = arith.constant dense<0.000000e+00> : vector<8x32xf32>
    %638 = tpu.matmul %636, %637, %cst_206 {dimension_numbers = #tpu.dot_dimension_numbers<[1], [0], [0], [1], [0, 0, 1, 1], [], []>} : vector<8x8xf32>, vector<8x32xf32>, vector<8x32xf32> -> vector<8x32xf32>
    %639 = vector.broadcast %619 : vector<1x32xf32> to vector<8x32xf32>
    %640 = arith.addf %639, %638 : vector<8x32xf32>
    %641 = vector.extract_strided_slice %621 {offsets = [0, 8], sizes = [8, 8], strides = [1, 1]} : vector<8x32xf32> to vector<8x8xf32>
    %642 = vector.extract_strided_slice %612 {offsets = [0, 8], sizes = [8, 8], strides = [1, 1]} : vector<8x32xf32> to vector<8x8xf32>
    %cst_207 = arith.constant dense<0.000000e+00> : vector<8x8xf32>
    %643 = tpu.matmul %641, %642, %cst_207 {dimension_numbers = #tpu.dot_dimension_numbers<[1], [1], [0], [0], [0, 0, 1, 0], [], []>} : vector<8x8xf32>, vector<8x8xf32>, vector<8x8xf32> -> vector<8x8xf32>
    %cst_208 = arith.constant dense<0xFF800000> : vector<8xf32>
    %644 = vector.multi_reduction <maximumf>, %643, %cst_208 [1] : vector<8x8xf32> to vector<8xf32>
    %645 = vector.shape_cast %644 : vector<8xf32> to vector<8x1xf32>
    %646 = vector.broadcast %645 : vector<8x1xf32> to vector<8x8xf32>
    %647 = arith.subf %643, %646 : vector<8x8xf32>
    %648 = math.exp %647 : vector<8x8xf32>
    %cst_209 = arith.constant dense<0.000000e+00> : vector<8xf32>
    %649 = vector.multi_reduction <add>, %648, %cst_209 [1] : vector<8x8xf32> to vector<8xf32>
    %650 = vector.shape_cast %649 : vector<8xf32> to vector<8x1xf32>
    %651 = tpu.reciprocal %650 : vector<8x1xf32> -> vector<8x1xf32>
    %652 = vector.broadcast %651 : vector<8x1xf32> to vector<8x8xf32>
    %653 = arith.mulf %648, %652 : vector<8x8xf32>
    %654 = vector.extract_strided_slice %617 {offsets = [0, 8], sizes = [8, 8], strides = [1, 1]} : vector<8x32xf32> to vector<8x8xf32>
    %cst_210 = arith.constant dense<0.000000e+00> : vector<8x8xf32>
    %655 = tpu.matmul %653, %654, %cst_210 {dimension_numbers = #tpu.dot_dimension_numbers<[1], [0], [0], [1], [0, 0, 1, 1], [], []>} : vector<8x8xf32>, vector<8x8xf32>, vector<8x8xf32> -> vector<8x8xf32>
    %656 = vector.extract_strided_slice %618 {offsets = [8, 0], sizes = [8, 32], strides = [1, 1]} : vector<32x32xf32> to vector<8x32xf32>
    %cst_211 = arith.constant dense<0.000000e+00> : vector<8x32xf32>
    %657 = tpu.matmul %655, %656, %cst_211 {dimension_numbers = #tpu.dot_dimension_numbers<[1], [0], [0], [1], [0, 0, 1, 1], [], []>} : vector<8x8xf32>, vector<8x32xf32>, vector<8x32xf32> -> vector<8x32xf32>
    %658 = arith.addf %640, %657 : vector<8x32xf32>
    %659 = vector.extract_strided_slice %621 {offsets = [0, 16], sizes = [8, 8], strides = [1, 1]} : vector<8x32xf32> to vector<8x8xf32>
    %660 = vector.extract_strided_slice %612 {offsets = [0, 16], sizes = [8, 8], strides = [1, 1]} : vector<8x32xf32> to vector<8x8xf32>
    %cst_212 = arith.constant dense<0.000000e+00> : vector<8x8xf32>
    %661 = tpu.matmul %659, %660, %cst_212 {dimension_numbers = #tpu.dot_dimension_numbers<[1], [1], [0], [0], [0, 0, 1, 0], [], []>} : vector<8x8xf32>, vector<8x8xf32>, vector<8x8xf32> -> vector<8x8xf32>
    %cst_213 = arith.constant dense<0xFF800000> : vector<8xf32>
    %662 = vector.multi_reduction <maximumf>, %661, %cst_213 [1] : vector<8x8xf32> to vector<8xf32>
    %663 = vector.shape_cast %662 : vector<8xf32> to vector<8x1xf32>
    %664 = vector.broadcast %663 : vector<8x1xf32> to vector<8x8xf32>
    %665 = arith.subf %661, %664 : vector<8x8xf32>
    %666 = math.exp %665 : vector<8x8xf32>
    %cst_214 = arith.constant dense<0.000000e+00> : vector<8xf32>
    %667 = vector.multi_reduction <add>, %666, %cst_214 [1] : vector<8x8xf32> to vector<8xf32>
    %668 = vector.shape_cast %667 : vector<8xf32> to vector<8x1xf32>
    %669 = tpu.reciprocal %668 : vector<8x1xf32> -> vector<8x1xf32>
    %670 = vector.broadcast %669 : vector<8x1xf32> to vector<8x8xf32>
    %671 = arith.mulf %666, %670 : vector<8x8xf32>
    %672 = vector.extract_strided_slice %617 {offsets = [0, 16], sizes = [8, 8], strides = [1, 1]} : vector<8x32xf32> to vector<8x8xf32>
    %cst_215 = arith.constant dense<0.000000e+00> : vector<8x8xf32>
    %673 = tpu.matmul %671, %672, %cst_215 {dimension_numbers = #tpu.dot_dimension_numbers<[1], [0], [0], [1], [0, 0, 1, 1], [], []>} : vector<8x8xf32>, vector<8x8xf32>, vector<8x8xf32> -> vector<8x8xf32>
    %674 = vector.extract_strided_slice %618 {offsets = [16, 0], sizes = [8, 32], strides = [1, 1]} : vector<32x32xf32> to vector<8x32xf32>
    %cst_216 = arith.constant dense<0.000000e+00> : vector<8x32xf32>
    %675 = tpu.matmul %673, %674, %cst_216 {dimension_numbers = #tpu.dot_dimension_numbers<[1], [0], [0], [1], [0, 0, 1, 1], [], []>} : vector<8x8xf32>, vector<8x32xf32>, vector<8x32xf32> -> vector<8x32xf32>
    %676 = arith.addf %658, %675 : vector<8x32xf32>
    %677 = vector.extract_strided_slice %621 {offsets = [0, 24], sizes = [8, 8], strides = [1, 1]} : vector<8x32xf32> to vector<8x8xf32>
    %678 = vector.extract_strided_slice %612 {offsets = [0, 24], sizes = [8, 8], strides = [1, 1]} : vector<8x32xf32> to vector<8x8xf32>
    %cst_217 = arith.constant dense<0.000000e+00> : vector<8x8xf32>
    %679 = tpu.matmul %677, %678, %cst_217 {dimension_numbers = #tpu.dot_dimension_numbers<[1], [1], [0], [0], [0, 0, 1, 0], [], []>} : vector<8x8xf32>, vector<8x8xf32>, vector<8x8xf32> -> vector<8x8xf32>
    %cst_218 = arith.constant dense<0xFF800000> : vector<8xf32>
    %680 = vector.multi_reduction <maximumf>, %679, %cst_218 [1] : vector<8x8xf32> to vector<8xf32>
    %681 = vector.shape_cast %680 : vector<8xf32> to vector<8x1xf32>
    %682 = vector.broadcast %681 : vector<8x1xf32> to vector<8x8xf32>
    %683 = arith.subf %679, %682 : vector<8x8xf32>
    %684 = math.exp %683 : vector<8x8xf32>
    %cst_219 = arith.constant dense<0.000000e+00> : vector<8xf32>
    %685 = vector.multi_reduction <add>, %684, %cst_219 [1] : vector<8x8xf32> to vector<8xf32>
    %686 = vector.shape_cast %685 : vector<8xf32> to vector<8x1xf32>
    %687 = tpu.reciprocal %686 : vector<8x1xf32> -> vector<8x1xf32>
    %688 = vector.broadcast %687 : vector<8x1xf32> to vector<8x8xf32>
    %689 = arith.mulf %684, %688 : vector<8x8xf32>
    %690 = vector.extract_strided_slice %617 {offsets = [0, 24], sizes = [8, 8], strides = [1, 1]} : vector<8x32xf32> to vector<8x8xf32>
    %cst_220 = arith.constant dense<0.000000e+00> : vector<8x8xf32>
    %691 = tpu.matmul %689, %690, %cst_220 {dimension_numbers = #tpu.dot_dimension_numbers<[1], [0], [0], [1], [0, 0, 1, 1], [], []>} : vector<8x8xf32>, vector<8x8xf32>, vector<8x8xf32> -> vector<8x8xf32>
    %692 = vector.extract_strided_slice %618 {offsets = [24, 0], sizes = [8, 32], strides = [1, 1]} : vector<32x32xf32> to vector<8x32xf32>
    %cst_221 = arith.constant dense<0.000000e+00> : vector<8x32xf32>
    %693 = tpu.matmul %691, %692, %cst_221 {dimension_numbers = #tpu.dot_dimension_numbers<[1], [0], [0], [1], [0, 0, 1, 1], [], []>} : vector<8x8xf32>, vector<8x32xf32>, vector<8x32xf32> -> vector<8x32xf32>
    %694 = arith.addf %676, %693 : vector<8x32xf32>
    %695 = arith.addf %597, %694 : vector<8x32xf32>
    %696 = vector.extract_strided_slice %601 {offsets = [4, 0], sizes = [1, 32], strides = [1, 1]} : vector<15x32xf32> to vector<1x32xf32>
    %697 = vector.extract_strided_slice %601 {offsets = [5, 0], sizes = [1, 32], strides = [1, 1]} : vector<15x32xf32> to vector<1x32xf32>
    %cst_222 = arith.constant dense<0.000000e+00> : vector<8xf32>
    %698 = vector.multi_reduction <add>, %695, %cst_222 [1] : vector<8x32xf32> to vector<8xf32>
    %699 = vector.shape_cast %698 : vector<8xf32> to vector<8x1xf32>
    %cst_223 = arith.constant 3.200000e+01 : f32
    %700 = vector.broadcast %cst_223 : f32 to vector<8x1xf32>
    %701 = arith.divf %699, %700 : vector<8x1xf32>
    %702 = vector.broadcast %701 : vector<8x1xf32> to vector<8x32xf32>
    %703 = arith.subf %695, %702 : vector<8x32xf32>
    %704 = arith.mulf %703, %703 : vector<8x32xf32>
    %cst_224 = arith.constant dense<0.000000e+00> : vector<8xf32>
    %705 = vector.multi_reduction <add>, %704, %cst_224 [1] : vector<8x32xf32> to vector<8xf32>
    %706 = vector.shape_cast %705 : vector<8xf32> to vector<8x1xf32>
    %cst_225 = arith.constant 3.200000e+01 : f32
    %707 = vector.broadcast %cst_225 : f32 to vector<8x1xf32>
    %708 = arith.divf %706, %707 : vector<8x1xf32>
    %cst_226 = arith.constant 9.99999974E-6 : f32
    %709 = vector.broadcast %cst_226 : f32 to vector<8x1xf32>
    %710 = arith.addf %708, %709 : vector<8x1xf32>
    %711 = math.rsqrt %710 : vector<8x1xf32>
    %712 = vector.broadcast %711 : vector<8x1xf32> to vector<8x32xf32>
    %713 = arith.mulf %703, %712 : vector<8x32xf32>
    %714 = vector.broadcast %696 : vector<1x32xf32> to vector<8x32xf32>
    %715 = arith.mulf %713, %714 : vector<8x32xf32>
    %716 = vector.broadcast %697 : vector<1x32xf32> to vector<8x32xf32>
    %717 = arith.addf %715, %716 : vector<8x32xf32>
    %718 = arith.addf %717, %5 : vector<8x32xf32>
    %719 = vector.extract_strided_slice %599 {offsets = [0, 128], sizes = [32, 32], strides = [1, 1]} : vector<32x256xf32> to vector<32x32xf32>
    %cst_227 = arith.constant dense<0.000000e+00> : vector<8x32xf32>
    %720 = tpu.matmul %718, %719, %cst_227 {dimension_numbers = #tpu.dot_dimension_numbers<[1], [0], [0], [1], [0, 0, 1, 1], [], []>} : vector<8x32xf32>, vector<32x32xf32>, vector<8x32xf32> -> vector<8x32xf32>
    %721 = vector.extract_strided_slice %601 {offsets = [6, 0], sizes = [1, 32], strides = [1, 1]} : vector<15x32xf32> to vector<1x32xf32>
    %722 = vector.broadcast %721 : vector<1x32xf32> to vector<8x32xf32>
    %723 = arith.addf %720, %722 : vector<8x32xf32>
    %724 = vector.extract_strided_slice %599 {offsets = [0, 160], sizes = [32, 32], strides = [1, 1]} : vector<32x256xf32> to vector<32x32xf32>
    %cst_228 = arith.constant dense<0.000000e+00> : vector<18x32xf32>
    %725 = tpu.matmul %322, %724, %cst_228 {dimension_numbers = #tpu.dot_dimension_numbers<[1], [0], [0], [1], [0, 0, 1, 1], [], []>} : vector<18x32xf32>, vector<32x32xf32>, vector<18x32xf32> -> vector<18x32xf32>
    %726 = vector.extract_strided_slice %601 {offsets = [7, 0], sizes = [1, 32], strides = [1, 1]} : vector<15x32xf32> to vector<1x32xf32>
    %727 = vector.broadcast %726 : vector<1x32xf32> to vector<18x32xf32>
    %728 = arith.addf %725, %727 : vector<18x32xf32>
    %729 = vector.extract_strided_slice %599 {offsets = [0, 192], sizes = [32, 32], strides = [1, 1]} : vector<32x256xf32> to vector<32x32xf32>
    %cst_229 = arith.constant dense<0.000000e+00> : vector<18x32xf32>
    %730 = tpu.matmul %321, %729, %cst_229 {dimension_numbers = #tpu.dot_dimension_numbers<[1], [0], [0], [1], [0, 0, 1, 1], [], []>} : vector<18x32xf32>, vector<32x32xf32>, vector<18x32xf32> -> vector<18x32xf32>
    %731 = vector.extract_strided_slice %601 {offsets = [8, 0], sizes = [1, 32], strides = [1, 1]} : vector<15x32xf32> to vector<1x32xf32>
    %732 = vector.broadcast %731 : vector<1x32xf32> to vector<18x32xf32>
    %733 = arith.addf %730, %732 : vector<18x32xf32>
    %734 = vector.extract_strided_slice %599 {offsets = [0, 224], sizes = [32, 32], strides = [1, 1]} : vector<32x256xf32> to vector<32x32xf32>
    %735 = vector.extract_strided_slice %601 {offsets = [9, 0], sizes = [1, 32], strides = [1, 1]} : vector<15x32xf32> to vector<1x32xf32>
    %cst_230 = arith.constant 0.353553385 : f32
    %736 = vector.broadcast %cst_230 : f32 to vector<8x32xf32>
    %737 = arith.mulf %723, %736 : vector<8x32xf32>
    %738 = vector.extract_strided_slice %737 {offsets = [0, 0], sizes = [8, 8], strides = [1, 1]} : vector<8x32xf32> to vector<8x8xf32>
    %739 = vector.extract_strided_slice %728 {offsets = [0, 0], sizes = [18, 8], strides = [1, 1]} : vector<18x32xf32> to vector<18x8xf32>
    %cst_231 = arith.constant dense<0.000000e+00> : vector<8x18xf32>
    %740 = tpu.matmul %738, %739, %cst_231 {dimension_numbers = #tpu.dot_dimension_numbers<[1], [1], [0], [0], [0, 0, 1, 0], [], []>} : vector<8x8xf32>, vector<18x8xf32>, vector<8x18xf32> -> vector<8x18xf32>
    %cst_232 = arith.constant dense<0xFF800000> : vector<8xf32>
    %741 = vector.multi_reduction <maximumf>, %740, %cst_232 [1] : vector<8x18xf32> to vector<8xf32>
    %742 = vector.shape_cast %741 : vector<8xf32> to vector<8x1xf32>
    %743 = vector.broadcast %742 : vector<8x1xf32> to vector<8x18xf32>
    %744 = arith.subf %740, %743 : vector<8x18xf32>
    %745 = math.exp %744 : vector<8x18xf32>
    %cst_233 = arith.constant dense<0.000000e+00> : vector<8xf32>
    %746 = vector.multi_reduction <add>, %745, %cst_233 [1] : vector<8x18xf32> to vector<8xf32>
    %747 = vector.shape_cast %746 : vector<8xf32> to vector<8x1xf32>
    %748 = tpu.reciprocal %747 : vector<8x1xf32> -> vector<8x1xf32>
    %749 = vector.broadcast %748 : vector<8x1xf32> to vector<8x18xf32>
    %750 = arith.mulf %745, %749 : vector<8x18xf32>
    %751 = vector.extract_strided_slice %733 {offsets = [0, 0], sizes = [18, 8], strides = [1, 1]} : vector<18x32xf32> to vector<18x8xf32>
    %cst_234 = arith.constant dense<0.000000e+00> : vector<8x8xf32>
    %752 = tpu.matmul %750, %751, %cst_234 {dimension_numbers = #tpu.dot_dimension_numbers<[1], [0], [0], [1], [0, 0, 1, 1], [], []>} : vector<8x18xf32>, vector<18x8xf32>, vector<8x8xf32> -> vector<8x8xf32>
    %753 = vector.extract_strided_slice %734 {offsets = [0, 0], sizes = [8, 32], strides = [1, 1]} : vector<32x32xf32> to vector<8x32xf32>
    %cst_235 = arith.constant dense<0.000000e+00> : vector<8x32xf32>
    %754 = tpu.matmul %752, %753, %cst_235 {dimension_numbers = #tpu.dot_dimension_numbers<[1], [0], [0], [1], [0, 0, 1, 1], [], []>} : vector<8x8xf32>, vector<8x32xf32>, vector<8x32xf32> -> vector<8x32xf32>
    %755 = vector.broadcast %735 : vector<1x32xf32> to vector<8x32xf32>
    %756 = arith.addf %755, %754 : vector<8x32xf32>
    %757 = vector.extract_strided_slice %737 {offsets = [0, 8], sizes = [8, 8], strides = [1, 1]} : vector<8x32xf32> to vector<8x8xf32>
    %758 = vector.extract_strided_slice %728 {offsets = [0, 8], sizes = [18, 8], strides = [1, 1]} : vector<18x32xf32> to vector<18x8xf32>
    %cst_236 = arith.constant dense<0.000000e+00> : vector<8x18xf32>
    %759 = tpu.matmul %757, %758, %cst_236 {dimension_numbers = #tpu.dot_dimension_numbers<[1], [1], [0], [0], [0, 0, 1, 0], [], []>} : vector<8x8xf32>, vector<18x8xf32>, vector<8x18xf32> -> vector<8x18xf32>
    %cst_237 = arith.constant dense<0xFF800000> : vector<8xf32>
    %760 = vector.multi_reduction <maximumf>, %759, %cst_237 [1] : vector<8x18xf32> to vector<8xf32>
    %761 = vector.shape_cast %760 : vector<8xf32> to vector<8x1xf32>
    %762 = vector.broadcast %761 : vector<8x1xf32> to vector<8x18xf32>
    %763 = arith.subf %759, %762 : vector<8x18xf32>
    %764 = math.exp %763 : vector<8x18xf32>
    %cst_238 = arith.constant dense<0.000000e+00> : vector<8xf32>
    %765 = vector.multi_reduction <add>, %764, %cst_238 [1] : vector<8x18xf32> to vector<8xf32>
    %766 = vector.shape_cast %765 : vector<8xf32> to vector<8x1xf32>
    %767 = tpu.reciprocal %766 : vector<8x1xf32> -> vector<8x1xf32>
    %768 = vector.broadcast %767 : vector<8x1xf32> to vector<8x18xf32>
    %769 = arith.mulf %764, %768 : vector<8x18xf32>
    %770 = vector.extract_strided_slice %733 {offsets = [0, 8], sizes = [18, 8], strides = [1, 1]} : vector<18x32xf32> to vector<18x8xf32>
    %cst_239 = arith.constant dense<0.000000e+00> : vector<8x8xf32>
    %771 = tpu.matmul %769, %770, %cst_239 {dimension_numbers = #tpu.dot_dimension_numbers<[1], [0], [0], [1], [0, 0, 1, 1], [], []>} : vector<8x18xf32>, vector<18x8xf32>, vector<8x8xf32> -> vector<8x8xf32>
    %772 = vector.extract_strided_slice %734 {offsets = [8, 0], sizes = [8, 32], strides = [1, 1]} : vector<32x32xf32> to vector<8x32xf32>
    %cst_240 = arith.constant dense<0.000000e+00> : vector<8x32xf32>
    %773 = tpu.matmul %771, %772, %cst_240 {dimension_numbers = #tpu.dot_dimension_numbers<[1], [0], [0], [1], [0, 0, 1, 1], [], []>} : vector<8x8xf32>, vector<8x32xf32>, vector<8x32xf32> -> vector<8x32xf32>
    %774 = arith.addf %756, %773 : vector<8x32xf32>
    %775 = vector.extract_strided_slice %737 {offsets = [0, 16], sizes = [8, 8], strides = [1, 1]} : vector<8x32xf32> to vector<8x8xf32>
    %776 = vector.extract_strided_slice %728 {offsets = [0, 16], sizes = [18, 8], strides = [1, 1]} : vector<18x32xf32> to vector<18x8xf32>
    %cst_241 = arith.constant dense<0.000000e+00> : vector<8x18xf32>
    %777 = tpu.matmul %775, %776, %cst_241 {dimension_numbers = #tpu.dot_dimension_numbers<[1], [1], [0], [0], [0, 0, 1, 0], [], []>} : vector<8x8xf32>, vector<18x8xf32>, vector<8x18xf32> -> vector<8x18xf32>
    %cst_242 = arith.constant dense<0xFF800000> : vector<8xf32>
    %778 = vector.multi_reduction <maximumf>, %777, %cst_242 [1] : vector<8x18xf32> to vector<8xf32>
    %779 = vector.shape_cast %778 : vector<8xf32> to vector<8x1xf32>
    %780 = vector.broadcast %779 : vector<8x1xf32> to vector<8x18xf32>
    %781 = arith.subf %777, %780 : vector<8x18xf32>
    %782 = math.exp %781 : vector<8x18xf32>
    %cst_243 = arith.constant dense<0.000000e+00> : vector<8xf32>
    %783 = vector.multi_reduction <add>, %782, %cst_243 [1] : vector<8x18xf32> to vector<8xf32>
    %784 = vector.shape_cast %783 : vector<8xf32> to vector<8x1xf32>
    %785 = tpu.reciprocal %784 : vector<8x1xf32> -> vector<8x1xf32>
    %786 = vector.broadcast %785 : vector<8x1xf32> to vector<8x18xf32>
    %787 = arith.mulf %782, %786 : vector<8x18xf32>
    %788 = vector.extract_strided_slice %733 {offsets = [0, 16], sizes = [18, 8], strides = [1, 1]} : vector<18x32xf32> to vector<18x8xf32>
    %cst_244 = arith.constant dense<0.000000e+00> : vector<8x8xf32>
    %789 = tpu.matmul %787, %788, %cst_244 {dimension_numbers = #tpu.dot_dimension_numbers<[1], [0], [0], [1], [0, 0, 1, 1], [], []>} : vector<8x18xf32>, vector<18x8xf32>, vector<8x8xf32> -> vector<8x8xf32>
    %790 = vector.extract_strided_slice %734 {offsets = [16, 0], sizes = [8, 32], strides = [1, 1]} : vector<32x32xf32> to vector<8x32xf32>
    %cst_245 = arith.constant dense<0.000000e+00> : vector<8x32xf32>
    %791 = tpu.matmul %789, %790, %cst_245 {dimension_numbers = #tpu.dot_dimension_numbers<[1], [0], [0], [1], [0, 0, 1, 1], [], []>} : vector<8x8xf32>, vector<8x32xf32>, vector<8x32xf32> -> vector<8x32xf32>
    %792 = arith.addf %774, %791 : vector<8x32xf32>
    %793 = vector.extract_strided_slice %737 {offsets = [0, 24], sizes = [8, 8], strides = [1, 1]} : vector<8x32xf32> to vector<8x8xf32>
    %794 = vector.extract_strided_slice %728 {offsets = [0, 24], sizes = [18, 8], strides = [1, 1]} : vector<18x32xf32> to vector<18x8xf32>
    %cst_246 = arith.constant dense<0.000000e+00> : vector<8x18xf32>
    %795 = tpu.matmul %793, %794, %cst_246 {dimension_numbers = #tpu.dot_dimension_numbers<[1], [1], [0], [0], [0, 0, 1, 0], [], []>} : vector<8x8xf32>, vector<18x8xf32>, vector<8x18xf32> -> vector<8x18xf32>
    %cst_247 = arith.constant dense<0xFF800000> : vector<8xf32>
    %796 = vector.multi_reduction <maximumf>, %795, %cst_247 [1] : vector<8x18xf32> to vector<8xf32>
    %797 = vector.shape_cast %796 : vector<8xf32> to vector<8x1xf32>
    %798 = vector.broadcast %797 : vector<8x1xf32> to vector<8x18xf32>
    %799 = arith.subf %795, %798 : vector<8x18xf32>
    %800 = math.exp %799 : vector<8x18xf32>
    %cst_248 = arith.constant dense<0.000000e+00> : vector<8xf32>
    %801 = vector.multi_reduction <add>, %800, %cst_248 [1] : vector<8x18xf32> to vector<8xf32>
    %802 = vector.shape_cast %801 : vector<8xf32> to vector<8x1xf32>
    %803 = tpu.reciprocal %802 : vector<8x1xf32> -> vector<8x1xf32>
    %804 = vector.broadcast %803 : vector<8x1xf32> to vector<8x18xf32>
    %805 = arith.mulf %800, %804 : vector<8x18xf32>
    %806 = vector.extract_strided_slice %733 {offsets = [0, 24], sizes = [18, 8], strides = [1, 1]} : vector<18x32xf32> to vector<18x8xf32>
    %cst_249 = arith.constant dense<0.000000e+00> : vector<8x8xf32>
    %807 = tpu.matmul %805, %806, %cst_249 {dimension_numbers = #tpu.dot_dimension_numbers<[1], [0], [0], [1], [0, 0, 1, 1], [], []>} : vector<8x18xf32>, vector<18x8xf32>, vector<8x8xf32> -> vector<8x8xf32>
    %808 = vector.extract_strided_slice %734 {offsets = [24, 0], sizes = [8, 32], strides = [1, 1]} : vector<32x32xf32> to vector<8x32xf32>
    %cst_250 = arith.constant dense<0.000000e+00> : vector<8x32xf32>
    %809 = tpu.matmul %807, %808, %cst_250 {dimension_numbers = #tpu.dot_dimension_numbers<[1], [0], [0], [1], [0, 0, 1, 1], [], []>} : vector<8x8xf32>, vector<8x32xf32>, vector<8x32xf32> -> vector<8x32xf32>
    %810 = arith.addf %792, %809 : vector<8x32xf32>
    %811 = arith.addf %717, %810 : vector<8x32xf32>
    %812 = vector.extract_strided_slice %601 {offsets = [10, 0], sizes = [1, 32], strides = [1, 1]} : vector<15x32xf32> to vector<1x32xf32>
    %813 = vector.extract_strided_slice %601 {offsets = [11, 0], sizes = [1, 32], strides = [1, 1]} : vector<15x32xf32> to vector<1x32xf32>
    %cst_251 = arith.constant dense<0.000000e+00> : vector<8xf32>
    %814 = vector.multi_reduction <add>, %811, %cst_251 [1] : vector<8x32xf32> to vector<8xf32>
    %815 = vector.shape_cast %814 : vector<8xf32> to vector<8x1xf32>
    %cst_252 = arith.constant 3.200000e+01 : f32
    %816 = vector.broadcast %cst_252 : f32 to vector<8x1xf32>
    %817 = arith.divf %815, %816 : vector<8x1xf32>
    %818 = vector.broadcast %817 : vector<8x1xf32> to vector<8x32xf32>
    %819 = arith.subf %811, %818 : vector<8x32xf32>
    %820 = arith.mulf %819, %819 : vector<8x32xf32>
    %cst_253 = arith.constant dense<0.000000e+00> : vector<8xf32>
    %821 = vector.multi_reduction <add>, %820, %cst_253 [1] : vector<8x32xf32> to vector<8xf32>
    %822 = vector.shape_cast %821 : vector<8xf32> to vector<8x1xf32>
    %cst_254 = arith.constant 3.200000e+01 : f32
    %823 = vector.broadcast %cst_254 : f32 to vector<8x1xf32>
    %824 = arith.divf %822, %823 : vector<8x1xf32>
    %cst_255 = arith.constant 9.99999974E-6 : f32
    %825 = vector.broadcast %cst_255 : f32 to vector<8x1xf32>
    %826 = arith.addf %824, %825 : vector<8x1xf32>
    %827 = math.rsqrt %826 : vector<8x1xf32>
    %828 = vector.broadcast %827 : vector<8x1xf32> to vector<8x32xf32>
    %829 = arith.mulf %819, %828 : vector<8x32xf32>
    %830 = vector.broadcast %812 : vector<1x32xf32> to vector<8x32xf32>
    %831 = arith.mulf %829, %830 : vector<8x32xf32>
    %832 = vector.broadcast %813 : vector<1x32xf32> to vector<8x32xf32>
    %833 = arith.addf %831, %832 : vector<8x32xf32>
    %c1_256 = arith.constant 1 : index
    %c0_257 = arith.constant 0 : index
    %c0_258 = arith.constant 0 : index
    %834 = vector.load %arg10[%c1_256, %c0_257, %c0_258] : memref<2x32x64xf32, #tpu.memory_space<vmem>>, vector<1x32x64xf32>
    %835 = vector.shape_cast %834 : vector<1x32x64xf32> to vector<32x64xf32>
    %cst_259 = arith.constant dense<0.000000e+00> : vector<8x64xf32>
    %836 = tpu.matmul %833, %835, %cst_259 {dimension_numbers = #tpu.dot_dimension_numbers<[1], [0], [0], [1], [0, 0, 1, 1], [], []>} : vector<8x32xf32>, vector<32x64xf32>, vector<8x64xf32> -> vector<8x64xf32>
    %c1_260 = arith.constant 1 : index
    %c0_261 = arith.constant 0 : index
    %c0_262 = arith.constant 0 : index
    %837 = vector.load %arg13[%c1_260, %c0_261, %c0_262] : memref<2x1x64xf32, #tpu.memory_space<vmem>>, vector<1x1x64xf32>
    %838 = vector.shape_cast %837 : vector<1x1x64xf32> to vector<1x64xf32>
    %839 = vector.broadcast %838 : vector<1x64xf32> to vector<8x64xf32>
    %840 = arith.addf %836, %839 : vector<8x64xf32>
    %cst_263 = arith.constant 0.000000e+00 : f32
    %841 = vector.broadcast %cst_263 : f32 to vector<8x64xf32>
    %842 = arith.maximumf %840, %841 : vector<8x64xf32>
    %c1_264 = arith.constant 1 : index
    %c0_265 = arith.constant 0 : index
    %c0_266 = arith.constant 0 : index
    %843 = vector.load %arg11[%c1_264, %c0_265, %c0_266] : memref<2x64x32xf32, #tpu.memory_space<vmem>>, vector<1x64x32xf32>
    %844 = vector.shape_cast %843 : vector<1x64x32xf32> to vector<64x32xf32>
    %cst_267 = arith.constant dense<0.000000e+00> : vector<8x32xf32>
    %845 = tpu.matmul %842, %844, %cst_267 {dimension_numbers = #tpu.dot_dimension_numbers<[1], [0], [0], [1], [0, 0, 1, 1], [], []>} : vector<8x64xf32>, vector<64x32xf32>, vector<8x32xf32> -> vector<8x32xf32>
    %846 = vector.extract_strided_slice %601 {offsets = [12, 0], sizes = [1, 32], strides = [1, 1]} : vector<15x32xf32> to vector<1x32xf32>
    %847 = vector.broadcast %846 : vector<1x32xf32> to vector<8x32xf32>
    %848 = arith.addf %845, %847 : vector<8x32xf32>
    %849 = arith.addf %833, %848 : vector<8x32xf32>
    %850 = vector.extract_strided_slice %601 {offsets = [13, 0], sizes = [1, 32], strides = [1, 1]} : vector<15x32xf32> to vector<1x32xf32>
    %851 = vector.extract_strided_slice %601 {offsets = [14, 0], sizes = [1, 32], strides = [1, 1]} : vector<15x32xf32> to vector<1x32xf32>
    %cst_268 = arith.constant dense<0.000000e+00> : vector<8xf32>
    %852 = vector.multi_reduction <add>, %849, %cst_268 [1] : vector<8x32xf32> to vector<8xf32>
    %853 = vector.shape_cast %852 : vector<8xf32> to vector<8x1xf32>
    %cst_269 = arith.constant 3.200000e+01 : f32
    %854 = vector.broadcast %cst_269 : f32 to vector<8x1xf32>
    %855 = arith.divf %853, %854 : vector<8x1xf32>
    %856 = vector.broadcast %855 : vector<8x1xf32> to vector<8x32xf32>
    %857 = arith.subf %849, %856 : vector<8x32xf32>
    %858 = arith.mulf %857, %857 : vector<8x32xf32>
    %cst_270 = arith.constant dense<0.000000e+00> : vector<8xf32>
    %859 = vector.multi_reduction <add>, %858, %cst_270 [1] : vector<8x32xf32> to vector<8xf32>
    %860 = vector.shape_cast %859 : vector<8xf32> to vector<8x1xf32>
    %cst_271 = arith.constant 3.200000e+01 : f32
    %861 = vector.broadcast %cst_271 : f32 to vector<8x1xf32>
    %862 = arith.divf %860, %861 : vector<8x1xf32>
    %cst_272 = arith.constant 9.99999974E-6 : f32
    %863 = vector.broadcast %cst_272 : f32 to vector<8x1xf32>
    %864 = arith.addf %862, %863 : vector<8x1xf32>
    %865 = math.rsqrt %864 : vector<8x1xf32>
    %866 = vector.broadcast %865 : vector<8x1xf32> to vector<8x32xf32>
    %867 = arith.mulf %857, %866 : vector<8x32xf32>
    %868 = vector.broadcast %850 : vector<1x32xf32> to vector<8x32xf32>
    %869 = arith.mulf %867, %868 : vector<8x32xf32>
    %870 = vector.broadcast %851 : vector<1x32xf32> to vector<8x32xf32>
    %871 = arith.addf %869, %870 : vector<8x32xf32>
    %c0_273 = arith.constant 0 : index
    %c0_274 = arith.constant 0 : index
    %872 = vector.load %arg14[%c0_273, %c0_274] : memref<2x32xf32, #tpu.memory_space<vmem>>, vector<2x32xf32>
    %873 = vector.extract_strided_slice %872 {offsets = [0, 0], sizes = [1, 32], strides = [1, 1]} : vector<2x32xf32> to vector<1x32xf32>
    %874 = vector.extract_strided_slice %872 {offsets = [1, 0], sizes = [1, 32], strides = [1, 1]} : vector<2x32xf32> to vector<1x32xf32>
    %cst_275 = arith.constant dense<0.000000e+00> : vector<8xf32>
    %875 = vector.multi_reduction <add>, %871, %cst_275 [1] : vector<8x32xf32> to vector<8xf32>
    %876 = vector.shape_cast %875 : vector<8xf32> to vector<8x1xf32>
    %cst_276 = arith.constant 3.200000e+01 : f32
    %877 = vector.broadcast %cst_276 : f32 to vector<8x1xf32>
    %878 = arith.divf %876, %877 : vector<8x1xf32>
    %879 = vector.broadcast %878 : vector<8x1xf32> to vector<8x32xf32>
    %880 = arith.subf %871, %879 : vector<8x32xf32>
    %881 = arith.mulf %880, %880 : vector<8x32xf32>
    %cst_277 = arith.constant dense<0.000000e+00> : vector<8xf32>
    %882 = vector.multi_reduction <add>, %881, %cst_277 [1] : vector<8x32xf32> to vector<8xf32>
    %883 = vector.shape_cast %882 : vector<8xf32> to vector<8x1xf32>
    %cst_278 = arith.constant 3.200000e+01 : f32
    %884 = vector.broadcast %cst_278 : f32 to vector<8x1xf32>
    %885 = arith.divf %883, %884 : vector<8x1xf32>
    %cst_279 = arith.constant 9.99999974E-6 : f32
    %886 = vector.broadcast %cst_279 : f32 to vector<8x1xf32>
    %887 = arith.addf %885, %886 : vector<8x1xf32>
    %888 = math.rsqrt %887 : vector<8x1xf32>
    %889 = vector.broadcast %888 : vector<8x1xf32> to vector<8x32xf32>
    %890 = arith.mulf %880, %889 : vector<8x32xf32>
    %891 = vector.broadcast %873 : vector<1x32xf32> to vector<8x32xf32>
    %892 = arith.mulf %890, %891 : vector<8x32xf32>
    %893 = vector.broadcast %874 : vector<1x32xf32> to vector<8x32xf32>
    %894 = arith.addf %892, %893 : vector<8x32xf32>
    %c0_280 = arith.constant 0 : index
    %c0_281 = arith.constant 0 : index
    %c0_282 = arith.constant 0 : index
    %895 = vector.load %arg15[%c0_280, %c0_281, %c0_282] : memref<1x8x32xf32, #tpu.memory_space<vmem>>, vector<1x8x32xf32>
    %896 = vector.shape_cast %895 : vector<1x8x32xf32> to vector<8x32xf32>
    %897 = vector.shape_cast %894 : vector<8x32xf32> to vector<1x8x32xf32>
    tpu.vector_store %arg15[%c0_280, %c0_281, %c0_282], %897 {strides = array<i32>} : memref<1x8x32xf32, #tpu.memory_space<vmem>>, vector<1x8x32xf32>,
    return
  }
  func.func @transform_0(%arg0: i32) -> (i32, i32, i32) {
    %c0_i32 = arith.constant 0 : i32
    %c0_i32_0 = arith.constant 0 : i32
    %c0_i32_1 = arith.constant 0 : i32
    return %arg0, %c0_i32, %c0_i32_0 : i32, i32, i32
  }
  func.func @transform_1(%arg0: i32) -> (i32, i32, i32) {
    %c0_i32 = arith.constant 0 : i32
    %c0_i32_0 = arith.constant 0 : i32
    %c0_i32_1 = arith.constant 0 : i32
    %c0_i32_2 = arith.constant 0 : i32
    return %c0_i32, %c0_i32_0, %c0_i32_1 : i32, i32, i32
  }
  func.func @transform_2(%arg0: i32) -> (i32, i32, i32) {
    %c0_i32 = arith.constant 0 : i32
    %c0_i32_0 = arith.constant 0 : i32
    %c0_i32_1 = arith.constant 0 : i32
    %c0_i32_2 = arith.constant 0 : i32
    return %c0_i32, %c0_i32_0, %c0_i32_1 : i32, i32, i32
  }
  func.func @transform_3(%arg0: i32) -> (i32, i32, i32) {
    %c0_i32 = arith.constant 0 : i32
    %c0_i32_0 = arith.constant 0 : i32
    %c0_i32_1 = arith.constant 0 : i32
    %c0_i32_2 = arith.constant 0 : i32
    return %c0_i32, %c0_i32_0, %c0_i32_1 : i32, i32, i32
  }
  func.func @transform_4(%arg0: i32) -> (i32, i32, i32) {
    %c0_i32 = arith.constant 0 : i32
    %c0_i32_0 = arith.constant 0 : i32
    %c0_i32_1 = arith.constant 0 : i32
    %c0_i32_2 = arith.constant 0 : i32
    return %c0_i32, %c0_i32_0, %c0_i32_1 : i32, i32, i32
  }
  func.func @transform_5(%arg0: i32) -> (i32, i32, i32) {
    %c0_i32 = arith.constant 0 : i32
    %c0_i32_0 = arith.constant 0 : i32
    %c0_i32_1 = arith.constant 0 : i32
    %c0_i32_2 = arith.constant 0 : i32
    return %c0_i32, %c0_i32_0, %c0_i32_1 : i32, i32, i32
  }
  func.func @transform_6(%arg0: i32) -> (i32, i32, i32) {
    %c0_i32 = arith.constant 0 : i32
    %c0_i32_0 = arith.constant 0 : i32
    %c0_i32_1 = arith.constant 0 : i32
    %c0_i32_2 = arith.constant 0 : i32
    return %c0_i32, %c0_i32_0, %c0_i32_1 : i32, i32, i32
  }
  func.func @transform_7(%arg0: i32) -> (i32, i32, i32) {
    %c0_i32 = arith.constant 0 : i32
    %c0_i32_0 = arith.constant 0 : i32
    %c0_i32_1 = arith.constant 0 : i32
    %c0_i32_2 = arith.constant 0 : i32
    return %c0_i32, %c0_i32_0, %c0_i32_1 : i32, i32, i32
  }
  func.func @transform_8(%arg0: i32) -> (i32, i32, i32) {
    %c0_i32 = arith.constant 0 : i32
    %c0_i32_0 = arith.constant 0 : i32
    %c0_i32_1 = arith.constant 0 : i32
    %c0_i32_2 = arith.constant 0 : i32
    return %c0_i32, %c0_i32_0, %c0_i32_1 : i32, i32, i32
  }
  func.func @transform_9(%arg0: i32) -> (i32, i32, i32) {
    %c0_i32 = arith.constant 0 : i32
    %c0_i32_0 = arith.constant 0 : i32
    %c0_i32_1 = arith.constant 0 : i32
    %c0_i32_2 = arith.constant 0 : i32
    return %c0_i32, %c0_i32_0, %c0_i32_1 : i32, i32, i32
  }
  func.func @transform_10(%arg0: i32) -> (i32, i32, i32) {
    %c0_i32 = arith.constant 0 : i32
    %c0_i32_0 = arith.constant 0 : i32
    %c0_i32_1 = arith.constant 0 : i32
    %c0_i32_2 = arith.constant 0 : i32
    return %c0_i32, %c0_i32_0, %c0_i32_1 : i32, i32, i32
  }
  func.func @transform_11(%arg0: i32) -> (i32, i32, i32) {
    %c0_i32 = arith.constant 0 : i32
    %c0_i32_0 = arith.constant 0 : i32
    %c0_i32_1 = arith.constant 0 : i32
    %c0_i32_2 = arith.constant 0 : i32
    return %c0_i32, %c0_i32_0, %c0_i32_1 : i32, i32, i32
  }
  func.func @transform_12(%arg0: i32) -> (i32, i32, i32) {
    %c0_i32 = arith.constant 0 : i32
    %c0_i32_0 = arith.constant 0 : i32
    %c0_i32_1 = arith.constant 0 : i32
    %c0_i32_2 = arith.constant 0 : i32
    return %c0_i32, %c0_i32_0, %c0_i32_1 : i32, i32, i32
  }
  func.func @transform_13(%arg0: i32) -> (i32, i32) {
    %c0_i32 = arith.constant 0 : i32
    %c0_i32_0 = arith.constant 0 : i32
    %c0_i32_1 = arith.constant 0 : i32
    return %c0_i32, %c0_i32_0 : i32, i32
  }
  func.func @transform_14(%arg0: i32) -> (i32, i32, i32) {
    %c0_i32 = arith.constant 0 : i32
    %c0_i32_0 = arith.constant 0 : i32
    %c0_i32_1 = arith.constant 0 : i32
    return %arg0, %c0_i32, %c0_i32_0 : i32, i32, i32
  }
}

</mosaic_0001>

<llo_original>
// kernel: transformer_forward.1
$region0: #{transformer_forward.1}
  #allocation0 [shape = 'u32[]', space=smem, size = 0x4, offset = 0x4, fixed_abs, tag = 'smem constant byte address 0x4 - core index']
  #allocation1 [shape = 'u32[72,128]{1,0:T(1,128)}', space=vmem, size = 0x9000, scoped, tag = 'internal scratch']
  %s0 = inlined_call_operand.vmem [shape: f32[2,18,32], index: 0, kind: input, shape index: {}]
  %s1 = inlined_call_operand.vmem [shape: f32[1,18,32], index: 1, kind: input, shape index: {}]
  %s2 = inlined_call_operand.vmem [shape: f32[1,8,32], index: 2, kind: input, shape index: {}]
  %s3 = inlined_call_operand.vmem [shape: f32[2,32,128], index: 3, kind: input, shape index: {}]
  %s4 = inlined_call_operand.vmem [shape: f32[2,32,64], index: 4, kind: input, shape index: {}]
  %s5 = inlined_call_operand.vmem [shape: f32[2,64,32], index: 5, kind: input, shape index: {}]
  %s6 = inlined_call_operand.vmem [shape: f32[2,9,32], index: 6, kind: input, shape index: {}]
  %s7 = inlined_call_operand.vmem [shape: f32[2,1,64], index: 7, kind: input, shape index: {}]
  %s8 = inlined_call_operand.vmem [shape: f32[2,32,256], index: 8, kind: input, shape index: {}]
  %s9 = inlined_call_operand.vmem [shape: f32[2,32,64], index: 9, kind: input, shape index: {}]
  %s10 = inlined_call_operand.vmem [shape: f32[2,64,32], index: 10, kind: input, shape index: {}]
  %s11 = inlined_call_operand.vmem [shape: f32[2,15,32], index: 11, kind: input, shape index: {}]
  %s12 = inlined_call_operand.vmem [shape: f32[2,1,64], index: 12, kind: input, shape index: {}]
  %s13 = inlined_call_operand.vmem [shape: f32[2,32], index: 13, kind: input, shape index: {}]
  %s14 = inlined_call_operand.hbm [shape: f32[2,8,32], index: 14, kind: output, shape index: {}]
  %s15 = sld [smem:[#allocation0]]
  $region89: #{transformer_forward.1} parent=0
    _
  %s17 = ssub.s32 1, %s15
  %s18 = scalar_select 0, %s17, %s15
  $region1: #{transformer_forward.1} parent=0
    #allocation2 [shape = 'u8[8192]{0}', space=vmem, size = 0x2000, scoped, tag = 'output window, operand 0']
    #allocation3 [shape = 's32[2]{0}', space=sflag, size = 0x8, scoped, tag = 'scoped memory for transformer_forward.1']
    %19 = vsyncpa [#allocation3], 0
    %s20 = scalar_lea.sflag [#allocation3], 1
    %21 = vsyncpa %s20, 0
    loop: start=0, step=1, limit=4
    $region2: #{transformer_forward.1} parent=1 // loop_pre_header
      _
    $region3: #{transformer_forward.1} parent=1 // loop_header
      %s23 = sphi 0, %s27
      %p24 = scmp.ge.s32.totalorder %s23, 4
      %s33 = sphi 0, %s35
      %s36 = sphi 0, %s33
      %s37 = sphi 0, %s36
      %s53 = sphi 0, %s37
      %s57 = sphi 0, %s57
      %s59 = sphi 0, %s57
      %s60 = sphi 0, %s59
      %s74 = sphi 0, %s60
      %s78 = sphi 0, %s78
      %s80 = sphi 0, %s78
      %s81 = sphi 0, %s80
      %s95 = sphi 0, %s81
      %s99 = sphi 0, %s99
      %s101 = sphi 0, %s99
      %s102 = sphi 0, %s101
      %s116 = sphi 0, %s102
      %s120 = sphi 0, %s120
      %s122 = sphi 0, %s120
      %s123 = sphi 0, %s122
      %s137 = sphi 0, %s123
      %s141 = sphi 0, %s141
      %s143 = sphi 0, %s141
      %s144 = sphi 0, %s143
      %s158 = sphi 0, %s144
      %s162 = sphi 0, %s162
      %s164 = sphi 0, %s162
      %s165 = sphi 0, %s164
      %s179 = sphi 0, %s165
      %s183 = sphi 0, %s183
      %s185 = sphi 0, %s183
      %s186 = sphi 0, %s185
      %s200 = sphi 0, %s186
      %s204 = sphi 0, %s204
      %s206 = sphi 0, %s204
      %s207 = sphi 0, %s206
      %s221 = sphi 0, %s207
      %s225 = sphi 0, %s225
      %s227 = sphi 0, %s225
      %s228 = sphi 0, %s227
      %s242 = sphi 0, %s228
      %s246 = sphi 0, %s246
      %s248 = sphi 0, %s246
      %s249 = sphi 0, %s248
      %s263 = sphi 0, %s249
      %s267 = sphi 0, %s267
      %s269 = sphi 0, %s267
      %s270 = sphi 0, %s269
      %s284 = sphi 0, %s270
      %s288 = sphi 0, %s288
      %s290 = sphi 0, %s288
      %s291 = sphi 0, %s290
      %s305 = sphi 0, %s291
      %s309 = sphi 0, %s309
      %s311 = sphi 0, %s309
      %s312 = sphi 0, %s311
      %s326 = sphi 0, %s312
      %s332 = sphi 0, %s334
      %s335 = sphi 0, %s332
      %s336 = sphi 0, %s335
      %s352 = sphi 0, %s336
    $region4: #{transformer_forward.1} parent=1 // loop_header_branch
      %26 = sbr.rel (%p24) target = $region8
    $region5: #{transformer_forward.1} parent=1 // loop_body
      %s28 = ssub.s32 %s23, 1
      %s29 = ssub.s32 %s23, 2
      %s30 = sadd.s32 %s23, 1
      %s31 = ssub.s32 %s23, %s30
      %p32 = scmp.eq.s32.totalorder %s31, 0
      %s34 = sadd.s32 %s33, 1
      %s35 = scalar_select %p32, %s33, %s34
      %p38 = pneg %p32
      %p39 = scmp.eq.s32.totalorder %s23, 1
      %p40 = por %p38, %p39
      %p41 = scmp.ne.s32.totalorder %s33, %s36
      %p42 = scmp.eq.s32.totalorder %s23, 0
      %p43 = por %p41, %p42
      %p44 = scmp.ne.s32.totalorder %s33, %s36
      %p45 = scmp.eq.s32.totalorder %s28, 1
      %p46 = por %p44, %p45
      %p47 = scmp.ne.s32.totalorder %s36, %s37
      %p48 = scmp.eq.s32.totalorder %s28, 0
      %p49 = por %p47, %p48
      %p50 = scmp.ne.s32.totalorder %s36, %s37
      %p51 = scmp.eq.s32.totalorder %s29, 1
      %p52 = por %p50, %p51
      %p54 = scmp.ne.s32.totalorder %s37, %s53
      %p55 = scmp.eq.s32.totalorder %s29, 0
      %p56 = por %p54, %p55
      %s58 = sadd.s32 %s57, 1
      %p61 = scmp.eq.s32.totalorder %s23, 1
      %p62 = scmp.ne.s32.totalorder %s57, %s59
      %p63 = scmp.eq.s32.totalorder %s23, 0
      %p64 = por %p62, %p63
      %p65 = scmp.ne.s32.totalorder %s57, %s59
      %p66 = scmp.eq.s32.totalorder %s28, 1
      %p67 = por %p65, %p66
      %p68 = scmp.ne.s32.totalorder %s59, %s60
      %p69 = scmp.eq.s32.totalorder %s28, 0
      %p70 = por %p68, %p69
      %p71 = scmp.ne.s32.totalorder %s59, %s60
      %p72 = scmp.eq.s32.totalorder %s29, 1
      %p73 = por %p71, %p72
      %p75 = scmp.ne.s32.totalorder %s60, %s74
      %p76 = scmp.eq.s32.totalorder %s29, 0
      %p77 = por %p75, %p76
      %s79 = sadd.s32 %s78, 1
      %p82 = scmp.eq.s32.totalorder %s23, 1
      %p83 = scmp.ne.s32.totalorder %s78, %s80
      %p84 = scmp.eq.s32.totalorder %s23, 0
      %p85 = por %p83, %p84
      %p86 = scmp.ne.s32.totalorder %s78, %s80
      %p87 = scmp.eq.s32.totalorder %s28, 1
      %p88 = por %p86, %p87
      %p89 = scmp.ne.s32.totalorder %s80, %s81
      %p90 = scmp.eq.s32.totalorder %s28, 0
      %p91 = por %p89, %p90
      %p92 = scmp.ne.s32.totalorder %s80, %s81
      %p93 = scmp.eq.s32.totalorder %s29, 1
      %p94 = por %p92, %p93
      %p96 = scmp.ne.s32.totalorder %s81, %s95
      %p97 = scmp.eq.s32.totalorder %s29, 0
      %p98 = por %p96, %p97
      %s100 = sadd.s32 %s99, 1
      %p103 = scmp.eq.s32.totalorder %s23, 1
      %p104 = scmp.ne.s32.totalorder %s99, %s101
      %p105 = scmp.eq.s32.totalorder %s23, 0
      %p106 = por %p104, %p105
      %p107 = scmp.ne.s32.totalorder %s99, %s101
      %p108 = scmp.eq.s32.totalorder %s28, 1
      %p109 = por %p107, %p108
      %p110 = scmp.ne.s32.totalorder %s101, %s102
      %p111 = scmp.eq.s32.totalorder %s28, 0
      %p112 = por %p110, %p111
      %p113 = scmp.ne.s32.totalorder %s101, %s102
      %p114 = scmp.eq.s32.totalorder %s29, 1
      %p115 = por %p113, %p114
      %p117 = scmp.ne.s32.totalorder %s102, %s116
      %p118 = scmp.eq.s32.totalorder %s29, 0
      %p119 = por %p117, %p118
      %s121 = sadd.s32 %s120, 1
      %p124 = scmp.eq.s32.totalorder %s23, 1
      %p125 = scmp.ne.s32.totalorder %s120, %s122
      %p126 = scmp.eq.s32.totalorder %s23, 0
      %p127 = por %p125, %p126
      %p128 = scmp.ne.s32.totalorder %s120, %s122
      %p129 = scmp.eq.s32.totalorder %s28, 1
      %p130 = por %p128, %p129
      %p131 = scmp.ne.s32.totalorder %s122, %s123
      %p132 = scmp.eq.s32.totalorder %s28, 0
      %p133 = por %p131, %p132
      %p134 = scmp.ne.s32.totalorder %s122, %s123
      %p135 = scmp.eq.s32.totalorder %s29, 1
      %p136 = por %p134, %p135
      %p138 = scmp.ne.s32.totalorder %s123, %s137
      %p139 = scmp.eq.s32.totalorder %s29, 0
      %p140 = por %p138, %p139
      %s142 = sadd.s32 %s141, 1
      %p145 = scmp.eq.s32.totalorder %s23, 1
      %p146 = scmp.ne.s32.totalorder %s141, %s143
      %p147 = scmp.eq.s32.totalorder %s23, 0
      %p148 = por %p146, %p147
      %p149 = scmp.ne.s32.totalorder %s141, %s143
      %p150 = scmp.eq.s32.totalorder %s28, 1
      %p151 = por %p149, %p150
      %p152 = scmp.ne.s32.totalorder %s143, %s144
      %p153 = scmp.eq.s32.totalorder %s28, 0
      %p154 = por %p152, %p153
      %p155 = scmp.ne.s32.totalorder %s143, %s144
      %p156 = scmp.eq.s32.totalorder %s29, 1
      %p157 = por %p155, %p156
      %p159 = scmp.ne.s32.totalorder %s144, %s158
      %p160 = scmp.eq.s32.totalorder %s29, 0
      %p161 = por %p159, %p160
      %s163 = sadd.s32 %s162, 1
      %p166 = scmp.eq.s32.totalorder %s23, 1
      %p167 = scmp.ne.s32.totalorder %s162, %s164
      %p168 = scmp.eq.s32.totalorder %s23, 0
      %p169 = por %p167, %p168
      %p170 = scmp.ne.s32.totalorder %s162, %s164
      %p171 = scmp.eq.s32.totalorder %s28, 1
      %p172 = por %p170, %p171
      %p173 = scmp.ne.s32.totalorder %s164, %s165
      %p174 = scmp.eq.s32.totalorder %s28, 0
      %p175 = por %p173, %p174
      %p176 = scmp.ne.s32.totalorder %s164, %s165
      %p177 = scmp.eq.s32.totalorder %s29, 1
      %p178 = por %p176, %p177
      %p180 = scmp.ne.s32.totalorder %s165, %s179
      %p181 = scmp.eq.s32.totalorder %s29, 0
      %p182 = por %p180, %p181
      %s184 = sadd.s32 %s183, 1
      %p187 = scmp.eq.s32.totalorder %s23, 1
      %p188 = scmp.ne.s32.totalorder %s183, %s185
      %p189 = scmp.eq.s32.totalorder %s23, 0
      %p190 = por %p188, %p189
      %p191 = scmp.ne.s32.totalorder %s183, %s185
      %p192 = scmp.eq.s32.totalorder %s28, 1
      %p193 = por %p191, %p192
      %p194 = scmp.ne.s32.totalorder %s185, %s186
      %p195 = scmp.eq.s32.totalorder %s28, 0
      %p196 = por %p194, %p195
      %p197 = scmp.ne.s32.totalorder %s185, %s186
      %p198 = scmp.eq.s32.totalorder %s29, 1
      %p199 = por %p197, %p198
      %p201 = scmp.ne.s32.totalorder %s186, %s200
      %p202 = scmp.eq.s32.totalorder %s29, 0
      %p203 = por %p201, %p202
      %s205 = sadd.s32 %s204, 1
      %p208 = scmp.eq.s32.totalorder %s23, 1
      %p209 = scmp.ne.s32.totalorder %s204, %s206
      %p210 = scmp.eq.s32.totalorder %s23, 0
      %p211 = por %p209, %p210
      %p212 = scmp.ne.s32.totalorder %s204, %s206
      %p213 = scmp.eq.s32.totalorder %s28, 1
      %p214 = por %p212, %p213
      %p215 = scmp.ne.s32.totalorder %s206, %s207
      %p216 = scmp.eq.s32.totalorder %s28, 0
      %p217 = por %p215, %p216
      %p218 = scmp.ne.s32.totalorder %s206, %s207
      %p219 = scmp.eq.s32.totalorder %s29, 1
      %p220 = por %p218, %p219
      %p222 = scmp.ne.s32.totalorder %s207, %s221
      %p223 = scmp.eq.s32.totalorder %s29, 0
      %p224 = por %p222, %p223
      %s226 = sadd.s32 %s225, 1
      %p229 = scmp.eq.s32.totalorder %s23, 1
      %p230 = scmp.ne.s32.totalorder %s225, %s227
      %p231 = scmp.eq.s32.totalorder %s23, 0
      %p232 = por %p230, %p231
      %p233 = scmp.ne.s32.totalorder %s225, %s227
      %p234 = scmp.eq.s32.totalorder %s28, 1
      %p235 = por %p233, %p234
      %p236 = scmp.ne.s32.totalorder %s227, %s228
      %p237 = scmp.eq.s32.totalorder %s28, 0
      %p238 = por %p236, %p237
      %p239 = scmp.ne.s32.totalorder %s227, %s228
      %p240 = scmp.eq.s32.totalorder %s29, 1
      %p241 = por %p239, %p240
      %p243 = scmp.ne.s32.totalorder %s228, %s242
      %p244 = scmp.eq.s32.totalorder %s29, 0
      %p245 = por %p243, %p244
      %s247 = sadd.s32 %s246, 1
      %p250 = scmp.eq.s32.totalorder %s23, 1
      %p251 = scmp.ne.s32.totalorder %s246, %s248
      %p252 = scmp.eq.s32.totalorder %s23, 0
      %p253 = por %p251, %p252
      %p254 = scmp.ne.s32.totalorder %s246, %s248
      %p255 = scmp.eq.s32.totalorder %s28, 1
      %p256 = por %p254, %p255
      %p257 = scmp.ne.s32.totalorder %s248, %s249
      %p258 = scmp.eq.s32.totalorder %s28, 0
      %p259 = por %p257, %p258
      %p260 = scmp.ne.s32.totalorder %s248, %s249
      %p261 = scmp.eq.s32.totalorder %s29, 1
      %p262 = por %p260, %p261
      %p264 = scmp.ne.s32.totalorder %s249, %s263
      %p265 = scmp.eq.s32.totalorder %s29, 0
      %p266 = por %p264, %p265
      %s268 = sadd.s32 %s267, 1
      %p271 = scmp.eq.s32.totalorder %s23, 1
      %p272 = scmp.ne.s32.totalorder %s267, %s269
      %p273 = scmp.eq.s32.totalorder %s23, 0
      %p274 = por %p272, %p273
      %p275 = scmp.ne.s32.totalorder %s267, %s269
      %p276 = scmp.eq.s32.totalorder %s28, 1
      %p277 = por %p275, %p276
      %p278 = scmp.ne.s32.totalorder %s269, %s270
      %p279 = scmp.eq.s32.totalorder %s28, 0
      %p280 = por %p278, %p279
      %p281 = scmp.ne.s32.totalorder %s269, %s270
      %p282 = scmp.eq.s32.totalorder %s29, 1
      %p283 = por %p281, %p282
      %p285 = scmp.ne.s32.totalorder %s270, %s284
      %p286 = scmp.eq.s32.totalorder %s29, 0
      %p287 = por %p285, %p286
      %s289 = sadd.s32 %s288, 1
      %p292 = scmp.eq.s32.totalorder %s23, 1
      %p293 = scmp.ne.s32.totalorder %s288, %s290
      %p294 = scmp.eq.s32.totalorder %s23, 0
      %p295 = por %p293, %p294
      %p296 = scmp.ne.s32.totalorder %s288, %s290
      %p297 = scmp.eq.s32.totalorder %s28, 1
      %p298 = por %p296, %p297
      %p299 = scmp.ne.s32.totalorder %s290, %s291
      %p300 = scmp.eq.s32.totalorder %s28, 0
      %p301 = por %p299, %p300
      %p302 = scmp.ne.s32.totalorder %s290, %s291
      %p303 = scmp.eq.s32.totalorder %s29, 1
      %p304 = por %p302, %p303
      %p306 = scmp.ne.s32.totalorder %s291, %s305
      %p307 = scmp.eq.s32.totalorder %s29, 0
      %p308 = por %p306, %p307
      %s310 = sadd.s32 %s309, 1
      %p313 = scmp.eq.s32.totalorder %s23, 1
      %p314 = scmp.ne.s32.totalorder %s309, %s311
      %p315 = scmp.eq.s32.totalorder %s23, 0
      %p316 = por %p314, %p315
      %p317 = scmp.ne.s32.totalorder %s309, %s311
      %p318 = scmp.eq.s32.totalorder %s28, 1
      %p319 = por %p317, %p318
      %p320 = scmp.ne.s32.totalorder %s311, %s312
      %p321 = scmp.eq.s32.totalorder %s28, 0
      %p322 = por %p320, %p321
      %p323 = scmp.ne.s32.totalorder %s311, %s312
      %p324 = scmp.eq.s32.totalorder %s29, 1
      %p325 = por %p323, %p324
      %p327 = scmp.ne.s32.totalorder %s312, %s326
      %p328 = scmp.eq.s32.totalorder %s29, 0
      %p329 = por %p327, %p328
      %s330 = ssub.s32 %s23, %s30
      %p331 = scmp.eq.s32.totalorder %s330, 0
      %s333 = sadd.s32 %s332, 1
      %s334 = scalar_select %p331, %s332, %s333
      %p337 = pneg %p331
      %p338 = scmp.eq.s32.totalorder %s23, 1
      %p339 = por %p337, %p338
      %p340 = scmp.ne.s32.totalorder %s332, %s335
      %p341 = scmp.eq.s32.totalorder %s23, 0
      %p342 = por %p340, %p341
      %p343 = scmp.ne.s32.totalorder %s332, %s335
      %p344 = scmp.eq.s32.totalorder %s28, 1
      %p345 = por %p343, %p344
      %p346 = scmp.ne.s32.totalorder %s335, %s336
      %p347 = scmp.eq.s32.totalorder %s28, 0
      %p348 = por %p346, %p347
      %p349 = scmp.ne.s32.totalorder %s335, %s336
      %p350 = scmp.eq.s32.totalorder %s29, 1
      %p351 = por %p349, %p350
      %p353 = scmp.ne.s32.totalorder %s336, %s352
      %p354 = scmp.eq.s32.totalorder %s29, 0
      %p355 = por %p353, %p354
      %p356 = scmp.le.s32.totalorder 1, %s23
      %p357 = scmp.lt.s32.totalorder %s23, 3
      %p358 = pnand %p356, %p357
      %p359 = pneg %p358
      // Predicated region
      $region9: #{transformer_forward.1} parent=5 // pred_check
        _
      $region10: #{transformer_forward.1} parent=5 // pred_check_branch
        %361 = sbr.rel (%p358) target = $region12
      $region11: #{transformer_forward.1} parent=5 // pred_region
        %s362 = ssub.s32 %s23, 1
        // Predicated region
        $region13: #{transformer_forward.1} parent=11 // pred_check
          %p363 = pneg %p70
        $region14: #{transformer_forward.1} parent=11 // pred_check_branch
          %365 = sbr.rel (%p363) target = $region16
        $region15: #{transformer_forward.1} parent=11 // pred_region
          _
        $region16: #{transformer_forward.1} parent=11 // pred_fallthru
          _
        // Predicated region
        $region17: #{transformer_forward.1} parent=11 // pred_check
          %p366 = pneg %p91
        $region18: #{transformer_forward.1} parent=11 // pred_check_branch
          %368 = sbr.rel (%p366) target = $region20
        $region19: #{transformer_forward.1} parent=11 // pred_region
          _
        $region20: #{transformer_forward.1} parent=11 // pred_fallthru
          _
        // Predicated region
        $region21: #{transformer_forward.1} parent=11 // pred_check
          %p369 = pneg %p112
        $region22: #{transformer_forward.1} parent=11 // pred_check_branch
          %371 = sbr.rel (%p369) target = $region24
        $region23: #{transformer_forward.1} parent=11 // pred_region
          _
        $region24: #{transformer_forward.1} parent=11 // pred_fallthru
          _
        // Predicated region
        $region25: #{transformer_forward.1} parent=11 // pred_check
          %p372 = pneg %p133
        $region26: #{transformer_forward.1} parent=11 // pred_check_branch
          %374 = sbr.rel (%p372) target = $region28
        $region27: #{transformer_forward.1} parent=11 // pred_region
          _
        $region28: #{transformer_forward.1} parent=11 // pred_fallthru
          _
        // Predicated region
        $region29: #{transformer_forward.1} parent=11 // pred_check
          %p375 = pneg %p154
        $region30: #{transformer_forward.1} parent=11 // pred_check_branch
          %377 = sbr.rel (%p375) target = $region32
        $region31: #{transformer_forward.1} parent=11 // pred_region
          _
        $region32: #{transformer_forward.1} parent=11 // pred_fallthru
          _
        // Predicated region
        $region33: #{transformer_forward.1} parent=11 // pred_check
          %p378 = pneg %p175
        $region34: #{transformer_forward.1} parent=11 // pred_check_branch
          %380 = sbr.rel (%p378) target = $region36
        $region35: #{transformer_forward.1} parent=11 // pred_region
          _
        $region36: #{transformer_forward.1} parent=11 // pred_fallthru
          _
        // Predicated region
        $region37: #{transformer_forward.1} parent=11 // pred_check
          %p381 = pneg %p196
        $region38: #{transformer_forward.1} parent=11 // pred_check_branch
          %383 = sbr.rel (%p381) target = $region40
        $region39: #{transformer_forward.1} parent=11 // pred_region
          _
        $region40: #{transformer_forward.1} parent=11 // pred_fallthru
          _
        // Predicated region
        $region41: #{transformer_forward.1} parent=11 // pred_check
          %p384 = pneg %p217
        $region42: #{transformer_forward.1} parent=11 // pred_check_branch
          %386 = sbr.rel (%p384) target = $region44
        $region43: #{transformer_forward.1} parent=11 // pred_region
          _
        $region44: #{transformer_forward.1} parent=11 // pred_fallthru
          _
        // Predicated region
        $region45: #{transformer_forward.1} parent=11 // pred_check
          %p387 = pneg %p238
        $region46: #{transformer_forward.1} parent=11 // pred_check_branch
          %389 = sbr.rel (%p387) target = $region48
        $region47: #{transformer_forward.1} parent=11 // pred_region
          _
        $region48: #{transformer_forward.1} parent=11 // pred_fallthru
          _
        // Predicated region
        $region49: #{transformer_forward.1} parent=11 // pred_check
          %p390 = pneg %p259
        $region50: #{transformer_forward.1} parent=11 // pred_check_branch
          %392 = sbr.rel (%p390) target = $region52
        $region51: #{transformer_forward.1} parent=11 // pred_region
          _
        $region52: #{transformer_forward.1} parent=11 // pred_fallthru
          _
        // Predicated region
        $region53: #{transformer_forward.1} parent=11 // pred_check
          %p393 = pneg %p280
        $region54: #{transformer_forward.1} parent=11 // pred_check_branch
          %395 = sbr.rel (%p393) target = $region56
        $region55: #{transformer_forward.1} parent=11 // pred_region
          _
        $region56: #{transformer_forward.1} parent=11 // pred_fallthru
          _
        // Predicated region
        $region57: #{transformer_forward.1} parent=11 // pred_check
          %p396 = pneg %p301
        $region58: #{transformer_forward.1} parent=11 // pred_check_branch
          %398 = sbr.rel (%p396) target = $region60
        $region59: #{transformer_forward.1} parent=11 // pred_region
          _
        $region60: #{transformer_forward.1} parent=11 // pred_fallthru
          _
        // Predicated region
        $region61: #{transformer_forward.1} parent=11 // pred_check
          %p399 = pneg %p322
        $region62: #{transformer_forward.1} parent=11 // pred_check_branch
          %401 = sbr.rel (%p399) target = $region64
        $region63: #{transformer_forward.1} parent=11 // pred_region
          _
        $region64: #{transformer_forward.1} parent=11 // pred_fallthru
          _
      $region12: #{transformer_forward.1} parent=5 // pred_fallthru
        _
      %p402 = scmp.lt.s32.totalorder %s23, 2
      // Predicated region
      $region65: #{transformer_forward.1} parent=5 // pred_check
        %p403 = pneg %p402
      $region66: #{transformer_forward.1} parent=5 // pred_check_branch
        %405 = sbr.rel (%p403) target = $region68
      $region67: #{transformer_forward.1} parent=5 // pred_region
        // Predicated region
        $region69: #{transformer_forward.1} parent=67 // pred_check
          %p406 = pneg %p43
        $region70: #{transformer_forward.1} parent=67 // pred_check_branch
          %408 = sbr.rel (%p406) target = $region72
        $region71: #{transformer_forward.1} parent=67 // pred_region
          %p409 = scmp.lt.s32.totalorder %s23, 1
          %s410 = scalar_select %p409, %s23, 1
          %s411 = smul.addr %s410, 3
          %s412 = smul.addr %s411, 8
          %s413 = scalar_lea.vmem %s0, %s412
        $region72: #{transformer_forward.1} parent=67 // pred_fallthru
          _
      $region68: #{transformer_forward.1} parent=5 // pred_fallthru
        _
      %p414 = scmp.le.s32.totalorder 1, %s23
      %p415 = scmp.lt.s32.totalorder %s23, 3
      %p416 = pnand %p414, %p415
      %p417 = pneg %p416
      // Predicated region
      $region73: #{transformer_forward.1} parent=5 // pred_check
        _
      $region74: #{transformer_forward.1} parent=5 // pred_check_branch
        %419 = sbr.rel (%p416) target = $region76
      $region75: #{transformer_forward.1} parent=5 // pred_region
        %s420 = ssub.s32 %s23, 1
        %p421 = scmp.lt.s32.totalorder %s28, 1
        %s422 = scalar_select %p421, %s28, 1
        %s423 = smul.addr %s422, 3
        %s424 = smul.addr %s423, 8
        %s425 = scalar_lea.vmem %s0, %s424
        %p426 = pneg %p49
        %p427 = pneg %p46
        %p428 = pneg %p70
        %p429 = pneg %p67
        %p430 = pneg %p91
        %p431 = pneg %p88
        %p432 = pneg %p112
        %p433 = pneg %p109
        %p434 = pneg %p133
        %p435 = pneg %p130
        %p436 = pneg %p154
        %p437 = pneg %p151
        %p438 = pneg %p175
        %p439 = pneg %p172
        %p440 = pneg %p196
        %p441 = pneg %p193
        %p442 = pneg %p217
        %p443 = pneg %p214
        %p444 = pneg %p238
        %p445 = pneg %p235
        %p446 = pneg %p259
        %p447 = pneg %p256
        %p448 = pneg %p280
        %p449 = pneg %p277
        %p450 = pneg %p301
        %p451 = pneg %p298
        %p452 = pneg %p322
        %p453 = pneg %p319
        %p454 = pneg %p348
        %p455 = pneg %p345
        %s456 = sand.u32 %s335, 1
        %s457 = scalar_lea.sflag [#allocation3], %s456
        %s458 = sand.u32 %s335, 1
        %s459 = smul.addr %s458, 8
        %s460 = scalar_lea.vmem [#allocation2], %s459
        %p461 = scmp.lt.s32.totalorder %s28, 1
        %s462 = scalar_select %p461, %s28, 1
        %s463 = smul.addr %s462, 3
        %s464 = smul.addr %s463, 8
        %s465 = scalar_lea.vmem %s0, %s464
        %v466 = vld [vmem:[%s465] sm:$0xff]
        %v467 = vld [vmem:[%s465 + $0x8] sm:$0xff]
        %v468 = vld [vmem:[%s465 + $0x10] sm:$0x3]
        %v469 = vld [vmem:[%s1] sm:$0xff]
        %v470 = vld [vmem:[%s1 + $0x8] sm:$0xff]
        %v471 = vld [vmem:[%s1 + $0x10] sm:$0x3]
        %v472 = vld [vmem:[%s2] sm:$0xff]
        %v473 = vld [vmem:[%s3] sm:$0xff]
        %v474 = vld [vmem:[%s3 + $0x8] sm:$0xff]
        %v475 = vld [vmem:[%s3 + $0x10] sm:$0xff]
        %v476 = vld [vmem:[%s3 + $0x18] sm:$0xff]
        %v477 = vld [vmem:[%s6] sm:$0xff]
        %v478 = vld [vmem:[%s6 + $0x8] sm:$0x1]
        %v479 = vadd.f32 %v466, %v469
        %v480 = vadd.f32 %v467, %v470
        %v481 = vadd.f32 %v468, %v471
        %v482 = vperm.slane %v477, 0
        %vm483 = vcmask 261120
        %v485 = vsel %vm483, %v479, 0
        %v488 = vsel %vm483, %v480, 0
        %v491 = vsel %vm483, %v481, 0
        %493 = vmatpush.msra.mxu0 0.0
        %494 = vmatpush.msra.mxu0 0.0
        %495 = vmatpush.msra.mxu0 0.0
        %496 = vmatpush.msra.mxu0 0.0
        %497 = vmatpush.msra.mxu0 0.0
        %498 = vmatpush.msra.mxu0 0.0
        %499 = vmatpush.msra.mxu0 0.0
        %500 = vmatpush.msra.mxu0 0.0
        %501 = vmatpush.msra.mxu0 0.0
        %502 = vmatpush.msra.mxu0 0.0
        %503 = vmatpush.msra.mxu0 0.0
        %504 = vmatpush.msra.mxu0 0.0
        %505 = vmatpush.msra.mxu0 %v476
        %506 = vmatpush.msra.mxu0 %v475
        %507 = vmatpush.msra.mxu0 %v474
        %508 = vmatpush.msra.mxu0 %v473
        %509 = vmatmul.f32.gmra.mxu0 %v485
        %v510 = vpop.f32.mrf.mxu0
        %v511 = vadd.f32 %v482, %v510
        %512 = vmatmul.f32.gmra.mxu0 %v488
        %v513 = vpop.f32.mrf.mxu0
        %v514 = vadd.f32 %v482, %v513
        %515 = vmatmul.f32.gmra.mxu0 %v491
        %v516 = vpop.f32.mrf.mxu0
        %v517 = vadd.f32 %v482, %v516
        %518 = vdwg.mxu0
        %v519 = vperm.slane %v477, 1
        %524 = vrot.lane.b32.xlu0 %v473, 96
        %v525 = vpop.permute.xlu0 %524
        %526 = vrot.lane.b32.xlu0 %v474, 96
        %v527 = vpop.permute.xlu0 %526
        %528 = vrot.lane.b32.xlu0 %v475, 96
        %v529 = vpop.permute.xlu0 %528
        %530 = vrot.lane.b32.xlu0 %v476, 96
        %v531 = vpop.permute.xlu0 %530
        %536 = vmatpush.msra.mxu0 0.0
        %537 = vmatpush.msra.mxu0 0.0
        %538 = vmatpush.msra.mxu0 0.0
        %539 = vmatpush.msra.mxu0 0.0
        %540 = vmatpush.msra.mxu0 0.0
        %541 = vmatpush.msra.mxu0 0.0
        %542 = vmatpush.msra.mxu0 0.0
        %543 = vmatpush.msra.mxu0 0.0
        %544 = vmatpush.msra.mxu0 0.0
        %545 = vmatpush.msra.mxu0 0.0
        %546 = vmatpush.msra.mxu0 0.0
        %547 = vmatpush.msra.mxu0 0.0
        %548 = vmatpush.msra.mxu0 %v531
        %549 = vmatpush.msra.mxu0 %v529
        %550 = vmatpush.msra.mxu0 %v527
        %551 = vmatpush.msra.mxu0 %v525
        %552 = vmatmul.f32.gmra.mxu0 %v485
        %v553 = vpop.f32.mrf.mxu0
        %v554 = vadd.f32 %v519, %v553
        %555 = vmatmul.f32.gmra.mxu0 %v488
        %v556 = vpop.f32.mrf.mxu0
        %v557 = vadd.f32 %v519, %v556
        %558 = vmatmul.f32.gmra.mxu0 %v491
        %v559 = vpop.f32.mrf.mxu0
        %v560 = vadd.f32 %v519, %v559
        %561 = vdwg.mxu0
        %v562 = vperm.slane %v477, 2
        %563 = vrot.lane.b32.xlu0 %v473, 64
        %v564 = vpop.permute.xlu0 %563
        %565 = vrot.lane.b32.xlu0 %v474, 64
        %v566 = vpop.permute.xlu0 %565
        %567 = vrot.lane.b32.xlu0 %v475, 64
        %v568 = vpop.permute.xlu0 %567
        %569 = vrot.lane.b32.xlu0 %v476, 64
        %v570 = vpop.permute.xlu0 %569
        %v576 = vsel %vm483, %v466, 0
        %v579 = vsel %vm483, %v467, 0
        %v582 = vsel %vm483, %v468, 0
        %584 = vmatpush.msra.mxu0 0.0
        %585 = vmatpush.msra.mxu0 0.0
        %586 = vmatpush.msra.mxu0 0.0
        %587 = vmatpush.msra.mxu0 0.0
        %588 = vmatpush.msra.mxu0 0.0
        %589 = vmatpush.msra.mxu0 0.0
        %590 = vmatpush.msra.mxu0 0.0
        %591 = vmatpush.msra.mxu0 0.0
        %592 = vmatpush.msra.mxu0 0.0
        %593 = vmatpush.msra.mxu0 0.0
        %594 = vmatpush.msra.mxu0 0.0
        %595 = vmatpush.msra.mxu0 0.0
        %596 = vmatpush.msra.mxu0 %v570
        %597 = vmatpush.msra.mxu0 %v568
        %598 = vmatpush.msra.mxu0 %v566
        %599 = vmatpush.msra.mxu0 %v564
        %600 = vmatmul.f32.gmra.mxu0 %v576
        %v601 = vpop.f32.mrf.mxu0
        %v602 = vadd.f32 %v562, %v601
        %603 = vmatmul.f32.gmra.mxu0 %v579
        %v604 = vpop.f32.mrf.mxu0
        %v605 = vadd.f32 %v562, %v604
        %606 = vmatmul.f32.gmra.mxu0 %v582
        %v607 = vpop.f32.mrf.mxu0
        %v608 = vadd.f32 %v562, %v607
        %609 = vdwg.mxu0
        %v610 = vmul.f32 %v511, 0.35355338
        %v611 = vmul.f32 %v514, 0.35355338
        %v612 = vmul.f32 %v517, 0.35355338
        %vm613 = vcmask 64512
        %v615 = vsel %vm613, %v610, 0
        %v618 = vsel %vm613, %v611, 0
        %v621 = vsel %vm613, %v612, 0
        %v624 = vsel %vm613, %v554, 0
        %v627 = vsel %vm613, %v557, 0
        %v630 = vsel %vm613, %v560, 0
        %632 = vmatpush.xpose.msra.mxu0 0.0
        %633 = vmatpush.xpose.msra.mxu0 0.0
        %634 = vmatpush.xpose.msra.mxu0 0.0
        %635 = vmatpush.xpose.msra.mxu0 0.0
        %636 = vmatpush.xpose.msra.mxu0 0.0
        %637 = vmatpush.xpose.msra.mxu0 0.0
        %638 = vmatpush.xpose.msra.mxu0 0.0
        %639 = vmatpush.xpose.msra.mxu0 0.0
        %640 = vmatpush.xpose.msra.mxu0 0.0
        %641 = vmatpush.xpose.msra.mxu0 0.0
        %642 = vmatpush.xpose.msra.mxu0 0.0
        %643 = vmatpush.xpose.msra.mxu0 0.0
        %644 = vmatpush.xpose.msra.mxu0 0.0
        %645 = vmatpush.xpose.msra.mxu0 %v630
        %646 = vmatpush.xpose.msra.mxu0 %v627
        %647 = vmatpush.xpose.msra.mxu0 %v624
        %648 = vmatmul.f32.gmra.mxu0 %v615
        %v649 = vpop.f32.mrf.mxu0
        %v650 = vadd.f32 0.0, %v649
        %651 = vmatmul.f32.gmra.mxu0 %v618
        %v652 = vpop.f32.mrf.mxu0
        %v653 = vadd.f32 0.0, %v652
        %654 = vmatmul.f32.gmra.mxu0 %v621
        %v655 = vpop.f32.mrf.mxu0
        %v656 = vadd.f32 0.0, %v655
        %657 = vdwg.mxu0
        %vm658 = vcmask 146432
        %v659 = vsel %vm658, %v650, -inf
        %660 = vmax.xlane.f32.xlu0 %v659
        %v661 = vpop.xlane.xlu0 %660
        %v662 = vsel %vm658, %v653, -inf
        %663 = vmax.xlane.f32.xlu0 %v662
        %v664 = vpop.xlane.xlu0 %663
        %vm665 = vcmask 140288
        %v666 = vsel %vm665, %v656, -inf
        %667 = vmax.xlane.f32.xlu0 %v666
        %v668 = vpop.xlane.xlu0 %667
        %v669 = vsub.f32 %v650, %v661
        %v670 = vsub.f32 %v653, %v664
        %v671 = vsub.f32 %v656, %v668
        %v672 = vmul.f32 %v669, 1.442695
        %v673 = vpow.pop %v672
        %v674 = vmul.f32 %v670, 1.442695
        %v675 = vpow.pop %v674
        %v676 = vmul.f32 %v671, 1.442695
        %v677 = vpow.pop %v676
        %v678 = vsel %vm658, %v673, 0.0
        %679 = vadd.xlane.f32.xlu0 %v678
        %v680 = vpop.xlane.xlu0 %679
        %v681 = vsel %vm658, %v675, 0.0
        %682 = vadd.xlane.f32.xlu0 %v681
        %v683 = vpop.xlane.xlu0 %682
        %v684 = vsel %vm665, %v677, 0.0
        %685 = vadd.xlane.f32.xlu0 %v684
        %v686 = vpop.xlane.xlu0 %685
        %v687 = vrcp.pop %v680
        %v688 = vmul.f32 %v680, %v687
        %v689 = vsub.f32 1.0, %v688
        %v690 = vmul.f32 %v687, %v689
        %v691 = vadd.f32 %v687, %v690
        %vm692 = vweird.f32 %v680
        %vm693 = vweird.f32 %v687
        %vm694 = vmor %vm692, %vm693
        %v695 = vsel %vm694, %v687, %v691
        %v696 = vand.u32 2147483647, %v680
        %vm697 = vcmp.eq.f32.partialorder %v696, 8.507059e+37
        %v698 = vand.u32 %v680, 2147483648
        %v699 = vor.u32 1.1754944e-38, %v698
        %v700 = vsel %vm697, %v699, %v695
        %v701 = vrcp.pop %v683
        %v702 = vmul.f32 %v683, %v701
        %v703 = vsub.f32 1.0, %v702
        %v704 = vmul.f32 %v701, %v703
        %v705 = vadd.f32 %v701, %v704
        %vm706 = vweird.f32 %v683
        %vm707 = vweird.f32 %v701
        %vm708 = vmor %vm706, %vm707
        %v709 = vsel %vm708, %v701, %v705
        %v710 = vand.u32 2147483647, %v683
        %vm711 = vcmp.eq.f32.partialorder %v710, 8.507059e+37
        %v712 = vand.u32 %v683, 2147483648
        %v713 = vor.u32 1.1754944e-38, %v712
        %v714 = vsel %vm711, %v713, %v709
        %v715 = vrcp.pop %v686
        %v716 = vmul.f32 %v686, %v715
        %v717 = vsub.f32 1.0, %v716
        %v718 = vmul.f32 %v715, %v717
        %v719 = vadd.f32 %v715, %v718
        %vm720 = vweird.f32 %v686
        %vm721 = vweird.f32 %v715
        %vm722 = vmor %vm720, %vm721
        %v723 = vsel %vm722, %v715, %v719
        %v724 = vand.u32 2147483647, %v686
        %vm725 = vcmp.eq.f32.partialorder %v724, 8.507059e+37
        %v726 = vand.u32 %v686, 2147483648
        %v727 = vor.u32 1.1754944e-38, %v726
        %v728 = vsel %vm725, %v727, %v723
        %v729 = vmul.f32 %v673, %v700
        %v730 = vmul.f32 %v675, %v714
        %v731 = vmul.f32 %v677, %v728
        %v733 = vsel %vm658, %v729, 0
        %v736 = vsel %vm658, %v730, 0
        %v739 = vsel %vm658, %v731, 0
        %vm741 = vcmask 1041408
        %v743 = vsel %vm741, %v608, 0
        %745 = vmatpush.msra.mxu0 0.0
        %746 = vmatpush.msra.mxu0 0.0
        %747 = vmatpush.msra.mxu0 0.0
        %748 = vmatpush.msra.mxu0 0.0
        %749 = vmatpush.msra.mxu0 0.0
        %750 = vmatpush.msra.mxu0 0.0
        %751 = vmatpush.msra.mxu0 0.0
        %752 = vmatpush.msra.mxu0 0.0
        %753 = vmatpush.msra.mxu0 0.0
        %754 = vmatpush.msra.mxu0 0.0
        %755 = vmatpush.msra.mxu0 0.0
        %756 = vmatpush.msra.mxu0 0.0
        %757 = vmatpush.msra.mxu0 0.0
        %758 = vmatpush.msra.mxu0 %v743
        %759 = vmatpush.msra.mxu0 %v605
        %760 = vmatpush.msra.mxu0 %v602
        %761 = vmatmul.f32.gmra.mxu0 %v733
        %v762 = vpop.f32.mrf.mxu0
        %v763 = vadd.f32 0.0, %v762
        %764 = vmatmul.f32.gmra.mxu0 %v736
        %v765 = vpop.f32.mrf.mxu0
        %v766 = vadd.f32 0.0, %v765
        %767 = vmatmul.f32.gmra.mxu0 %v739
        %v768 = vpop.f32.mrf.mxu0
        %v769 = vadd.f32 0.0, %v768
        %770 = vdwg.mxu0
        %771 = vrot.lane.b32.xlu0 %v473, 32
        %v772 = vpop.permute.xlu0 %771
        %v775 = vsel %vm613, %v763, 0
        %v778 = vsel %vm613, %v766, 0
        %v781 = vsel %vm613, %v769, 0
        %783 = vmatpush.msra.mxu0 0.0
        %784 = vmatpush.msra.mxu0 0.0
        %785 = vmatpush.msra.mxu0 0.0
        %786 = vmatpush.msra.mxu0 0.0
        %787 = vmatpush.msra.mxu0 0.0
        %788 = vmatpush.msra.mxu0 0.0
        %789 = vmatpush.msra.mxu0 0.0
        %790 = vmatpush.msra.mxu0 0.0
        %791 = vmatpush.msra.mxu0 0.0
        %792 = vmatpush.msra.mxu0 0.0
        %793 = vmatpush.msra.mxu0 0.0
        %794 = vmatpush.msra.mxu0 0.0
        %795 = vmatpush.msra.mxu0 0.0
        %796 = vmatpush.msra.mxu0 0.0
        %797 = vmatpush.msra.mxu0 0.0
        %798 = vmatpush.msra.mxu0 %v772
        %799 = vmatmul.f32.gmra.mxu0 %v775
        %v800 = vpop.f32.mrf.mxu0
        %v801 = vadd.f32 0.0, %v800
        %802 = vmatmul.f32.gmra.mxu0 %v778
        %v803 = vpop.f32.mrf.mxu0
        %v804 = vadd.f32 0.0, %v803
        %805 = vmatmul.f32.gmra.mxu0 %v781
        %v806 = vpop.f32.mrf.mxu0
        %v807 = vadd.f32 0.0, %v806
        %808 = vdwg.mxu0
        %v809 = vperm.slane %v477, 3
        %v810 = vadd.f32 %v809, %v801
        %v811 = vadd.f32 %v809, %v804
        %v812 = vadd.f32 %v809, %v807
        %813 = vrot.lane.b32.xlu0 %v610, 120
        %v814 = vpop.permute.xlu0 %813
        %815 = vrot.lane.b32.xlu0 %v611, 120
        %v816 = vpop.permute.xlu0 %815
        %817 = vrot.lane.b32.xlu0 %v612, 120
        %v818 = vpop.permute.xlu0 %817
        %819 = vrot.lane.b32.xlu0 %v554, 120
        %v820 = vpop.permute.xlu0 %819
        %821 = vrot.lane.b32.xlu0 %v557, 120
        %v822 = vpop.permute.xlu0 %821
        %823 = vrot.lane.b32.xlu0 %v560, 120
        %v824 = vpop.permute.xlu0 %823
        %v825 = vsel %vm613, %v814, 0
        %v827 = vsel %vm613, %v816, 0
        %v829 = vsel %vm613, %v818, 0
        %v831 = vsel %vm613, %v820, 0
        %v833 = vsel %vm613, %v822, 0
        %v835 = vsel %vm613, %v824, 0
        %837 = vmatpush.xpose.msra.mxu0 0.0
        %838 = vmatpush.xpose.msra.mxu0 0.0
        %839 = vmatpush.xpose.msra.mxu0 0.0
        %840 = vmatpush.xpose.msra.mxu0 0.0
        %841 = vmatpush.xpose.msra.mxu0 0.0
        %842 = vmatpush.xpose.msra.mxu0 0.0
        %843 = vmatpush.xpose.msra.mxu0 0.0
        %844 = vmatpush.xpose.msra.mxu0 0.0
        %845 = vmatpush.xpose.msra.mxu0 0.0
        %846 = vmatpush.xpose.msra.mxu0 0.0
        %847 = vmatpush.xpose.msra.mxu0 0.0
        %848 = vmatpush.xpose.msra.mxu0 0.0
        %849 = vmatpush.xpose.msra.mxu0 0.0
        %850 = vmatpush.xpose.msra.mxu0 %v835
        %851 = vmatpush.xpose.msra.mxu0 %v833
        %852 = vmatpush.xpose.msra.mxu0 %v831
        %853 = vmatmul.f32.gmra.mxu0 %v825
        %v854 = vpop.f32.mrf.mxu0
        %v855 = vadd.f32 0.0, %v854
        %856 = vmatmul.f32.gmra.mxu0 %v827
        %v857 = vpop.f32.mrf.mxu0
        %v858 = vadd.f32 0.0, %v857
        %859 = vmatmul.f32.gmra.mxu0 %v829
        %v860 = vpop.f32.mrf.mxu0
        %v861 = vadd.f32 0.0, %v860
        %862 = vdwg.mxu0
        %v863 = vsel %vm658, %v855, -inf
        %864 = vmax.xlane.f32.xlu0 %v863
        %v865 = vpop.xlane.xlu0 %864
        %v866 = vsel %vm658, %v858, -inf
        %867 = vmax.xlane.f32.xlu0 %v866
        %v868 = vpop.xlane.xlu0 %867
        %v869 = vsel %vm665, %v861, -inf
        %870 = vmax.xlane.f32.xlu0 %v869
        %v871 = vpop.xlane.xlu0 %870
        %v872 = vsub.f32 %v855, %v865
        %v873 = vsub.f32 %v858, %v868
        %v874 = vsub.f32 %v861, %v871
        %v875 = vmul.f32 %v872, 1.442695
        %v876 = vpow.pop %v875
        %v877 = vmul.f32 %v873, 1.442695
        %v878 = vpow.pop %v877
        %v879 = vmul.f32 %v874, 1.442695
        %v880 = vpow.pop %v879
        %v881 = vsel %vm658, %v876, 0.0
        %882 = vadd.xlane.f32.xlu0 %v881
        %v883 = vpop.xlane.xlu0 %882
        %v884 = vsel %vm658, %v878, 0.0
        %885 = vadd.xlane.f32.xlu0 %v884
        %v886 = vpop.xlane.xlu0 %885
        %v887 = vsel %vm665, %v880, 0.0
        %888 = vadd.xlane.f32.xlu0 %v887
        %v889 = vpop.xlane.xlu0 %888
        %v890 = vrcp.pop %v883
        %v891 = vmul.f32 %v883, %v890
        %v892 = vsub.f32 1.0, %v891
        %v893 = vmul.f32 %v890, %v892
        %v894 = vadd.f32 %v890, %v893
        %vm895 = vweird.f32 %v883
        %vm896 = vweird.f32 %v890
        %vm897 = vmor %vm895, %vm896
        %v898 = vsel %vm897, %v890, %v894
        %v899 = vand.u32 2147483647, %v883
        %vm900 = vcmp.eq.f32.partialorder %v899, 8.507059e+37
        %v901 = vand.u32 %v883, 2147483648
        %v902 = vor.u32 1.1754944e-38, %v901
        %v903 = vsel %vm900, %v902, %v898
        %v904 = vrcp.pop %v886
        %v905 = vmul.f32 %v886, %v904
        %v906 = vsub.f32 1.0, %v905
        %v907 = vmul.f32 %v904, %v906
        %v908 = vadd.f32 %v904, %v907
        %vm909 = vweird.f32 %v886
        %vm910 = vweird.f32 %v904
        %vm911 = vmor %vm909, %vm910
        %v912 = vsel %vm911, %v904, %v908
        %v913 = vand.u32 2147483647, %v886
        %vm914 = vcmp.eq.f32.partialorder %v913, 8.507059e+37
        %v915 = vand.u32 %v886, 2147483648
        %v916 = vor.u32 1.1754944e-38, %v915
        %v917 = vsel %vm914, %v916, %v912
        %v918 = vrcp.pop %v889
        %v919 = vmul.f32 %v889, %v918
        %v920 = vsub.f32 1.0, %v919
        %v921 = vmul.f32 %v918, %v920
        %v922 = vadd.f32 %v918, %v921
        %vm923 = vweird.f32 %v889
        %vm924 = vweird.f32 %v918
        %vm925 = vmor %vm923, %vm924
        %v926 = vsel %vm925, %v918, %v922
        %v927 = vand.u32 2147483647, %v889
        %vm928 = vcmp.eq.f32.partialorder %v927, 8.507059e+37
        %v929 = vand.u32 %v889, 2147483648
        %v930 = vor.u32 1.1754944e-38, %v929
        %v931 = vsel %vm928, %v930, %v926
        %v932 = vmul.f32 %v876, %v903
        %v933 = vmul.f32 %v878, %v917
        %v934 = vmul.f32 %v880, %v931
        %937 = vrot.lane.b32.xlu0 %v602, 120
        %v938 = vpop.permute.xlu0 %937
        %939 = vrot.lane.b32.xlu0 %v605, 120
        %v940 = vpop.permute.xlu0 %939
        %941 = vrot.lane.b32.xlu0 %v608, 120
        %v942 = vpop.permute.xlu0 %941
        %v946 = vsel %vm658, %v932, 0
        %v949 = vsel %vm658, %v933, 0
        %v952 = vsel %vm658, %v934, 0
        %v954 = vsel %vm741, %v942, 0
        %956 = vmatpush.msra.mxu0 0.0
        %957 = vmatpush.msra.mxu0 0.0
        %958 = vmatpush.msra.mxu0 0.0
        %959 = vmatpush.msra.mxu0 0.0
        %960 = vmatpush.msra.mxu0 0.0
        %961 = vmatpush.msra.mxu0 0.0
        %962 = vmatpush.msra.mxu0 0.0
        %963 = vmatpush.msra.mxu0 0.0
        %964 = vmatpush.msra.mxu0 0.0
        %965 = vmatpush.msra.mxu0 0.0
        %966 = vmatpush.msra.mxu0 0.0
        %967 = vmatpush.msra.mxu0 0.0
        %968 = vmatpush.msra.mxu0 0.0
        %969 = vmatpush.msra.mxu0 %v954
        %970 = vmatpush.msra.mxu0 %v940
        %971 = vmatpush.msra.mxu0 %v938
        %972 = vmatmul.f32.gmra.mxu0 %v946
        %v973 = vpop.f32.mrf.mxu0
        %v974 = vadd.f32 0.0, %v973
        %975 = vmatmul.f32.gmra.mxu0 %v949
        %v976 = vpop.f32.mrf.mxu0
        %v977 = vadd.f32 0.0, %v976
        %978 = vmatmul.f32.gmra.mxu0 %v952
        %v979 = vpop.f32.mrf.mxu0
        %v980 = vadd.f32 0.0, %v979
        %981 = vdwg.mxu0
        %982 = vrot.lane.b32.xlu0 %v474, 32
        %v983 = vpop.permute.xlu0 %982
        %v986 = vsel %vm613, %v974, 0
        %v989 = vsel %vm613, %v977, 0
        %v992 = vsel %vm613, %v980, 0
        %994 = vmatpush.msra.mxu0 0.0
        %995 = vmatpush.msra.mxu0 0.0
        %996 = vmatpush.msra.mxu0 0.0
        %997 = vmatpush.msra.mxu0 0.0
        %998 = vmatpush.msra.mxu0 0.0
        %999 = vmatpush.msra.mxu0 0.0
        %1000 = vmatpush.msra.mxu0 0.0
        %1001 = vmatpush.msra.mxu0 0.0
        %1002 = vmatpush.msra.mxu0 0.0
        %1003 = vmatpush.msra.mxu0 0.0
        %1004 = vmatpush.msra.mxu0 0.0
        %1005 = vmatpush.msra.mxu0 0.0
        %1006 = vmatpush.msra.mxu0 0.0
        %1007 = vmatpush.msra.mxu0 0.0
        %1008 = vmatpush.msra.mxu0 0.0
        %1009 = vmatpush.msra.mxu0 %v983
        %1010 = vmatmul.f32.gmra.mxu0 %v986
        %v1011 = vpop.f32.mrf.mxu0
        %v1012 = vadd.f32 0.0, %v1011
        %1013 = vmatmul.f32.gmra.mxu0 %v989
        %v1014 = vpop.f32.mrf.mxu0
        %v1015 = vadd.f32 0.0, %v1014
        %1016 = vmatmul.f32.gmra.mxu0 %v992
        %v1017 = vpop.f32.mrf.mxu0
        %v1018 = vadd.f32 0.0, %v1017
        %1019 = vdwg.mxu0
        %v1020 = vadd.f32 %v810, %v1012
        %v1021 = vadd.f32 %v811, %v1015
        %v1022 = vadd.f32 %v812, %v1018
        %1023 = vrot.lane.b32.xlu0 %v610, 112
        %v1024 = vpop.permute.xlu0 %1023
        %1025 = vrot.lane.b32.xlu0 %v611, 112
        %v1026 = vpop.permute.xlu0 %1025
        %1027 = vrot.lane.b32.xlu0 %v612, 112
        %v1028 = vpop.permute.xlu0 %1027
        %1029 = vrot.lane.b32.xlu0 %v554, 112
        %v1030 = vpop.permute.xlu0 %1029
        %1031 = vrot.lane.b32.xlu0 %v557, 112
        %v1032 = vpop.permute.xlu0 %1031
        %1033 = vrot.lane.b32.xlu0 %v560, 112
        %v1034 = vpop.permute.xlu0 %1033
        %v1035 = vsel %vm613, %v1024, 0
        %v1037 = vsel %vm613, %v1026, 0
        %v1039 = vsel %vm613, %v1028, 0
        %v1041 = vsel %vm613, %v1030, 0
        %v1043 = vsel %vm613, %v1032, 0
        %v1045 = vsel %vm613, %v1034, 0
        %1047 = vmatpush.xpose.msra.mxu0 0.0
        %1048 = vmatpush.xpose.msra.mxu0 0.0
        %1049 = vmatpush.xpose.msra.mxu0 0.0
        %1050 = vmatpush.xpose.msra.mxu0 0.0
        %1051 = vmatpush.xpose.msra.mxu0 0.0
        %1052 = vmatpush.xpose.msra.mxu0 0.0
        %1053 = vmatpush.xpose.msra.mxu0 0.0
        %1054 = vmatpush.xpose.msra.mxu0 0.0
        %1055 = vmatpush.xpose.msra.mxu0 0.0
        %1056 = vmatpush.xpose.msra.mxu0 0.0
        %1057 = vmatpush.xpose.msra.mxu0 0.0
        %1058 = vmatpush.xpose.msra.mxu0 0.0
        %1059 = vmatpush.xpose.msra.mxu0 0.0
        %1060 = vmatpush.xpose.msra.mxu0 %v1045
        %1061 = vmatpush.xpose.msra.mxu0 %v1043
        %1062 = vmatpush.xpose.msra.mxu0 %v1041
        %1063 = vmatmul.f32.gmra.mxu0 %v1035
        %v1064 = vpop.f32.mrf.mxu0
        %v1065 = vadd.f32 0.0, %v1064
        %1066 = vmatmul.f32.gmra.mxu0 %v1037
        %v1067 = vpop.f32.mrf.mxu0
        %v1068 = vadd.f32 0.0, %v1067
        %1069 = vmatmul.f32.gmra.mxu0 %v1039
        %v1070 = vpop.f32.mrf.mxu0
        %v1071 = vadd.f32 0.0, %v1070
        %1072 = vdwg.mxu0
        %v1073 = vsel %vm658, %v1065, -inf
        %1074 = vmax.xlane.f32.xlu0 %v1073
        %v1075 = vpop.xlane.xlu0 %1074
        %v1076 = vsel %vm658, %v1068, -inf
        %1077 = vmax.xlane.f32.xlu0 %v1076
        %v1078 = vpop.xlane.xlu0 %1077
        %v1079 = vsel %vm665, %v1071, -inf
        %1080 = vmax.xlane.f32.xlu0 %v1079
        %v1081 = vpop.xlane.xlu0 %1080
        %v1082 = vsub.f32 %v1065, %v1075
        %v1083 = vsub.f32 %v1068, %v1078
        %v1084 = vsub.f32 %v1071, %v1081
        %v1085 = vmul.f32 %v1082, 1.442695
        %v1086 = vpow.pop %v1085
        %v1087 = vmul.f32 %v1083, 1.442695
        %v1088 = vpow.pop %v1087
        %v1089 = vmul.f32 %v1084, 1.442695
        %v1090 = vpow.pop %v1089
        %v1091 = vsel %vm658, %v1086, 0.0
        %1092 = vadd.xlane.f32.xlu0 %v1091
        %v1093 = vpop.xlane.xlu0 %1092
        %v1094 = vsel %vm658, %v1088, 0.0
        %1095 = vadd.xlane.f32.xlu0 %v1094
        %v1096 = vpop.xlane.xlu0 %1095
        %v1097 = vsel %vm665, %v1090, 0.0
        %1098 = vadd.xlane.f32.xlu0 %v1097
        %v1099 = vpop.xlane.xlu0 %1098
        %v1100 = vrcp.pop %v1093
        %v1101 = vmul.f32 %v1093, %v1100
        %v1102 = vsub.f32 1.0, %v1101
        %v1103 = vmul.f32 %v1100, %v1102
        %v1104 = vadd.f32 %v1100, %v1103
        %vm1105 = vweird.f32 %v1093
        %vm1106 = vweird.f32 %v1100
        %vm1107 = vmor %vm1105, %vm1106
        %v1108 = vsel %vm1107, %v1100, %v1104
        %v1109 = vand.u32 2147483647, %v1093
        %vm1110 = vcmp.eq.f32.partialorder %v1109, 8.507059e+37
        %v1111 = vand.u32 %v1093, 2147483648
        %v1112 = vor.u32 1.1754944e-38, %v1111
        %v1113 = vsel %vm1110, %v1112, %v1108
        %v1114 = vrcp.pop %v1096
        %v1115 = vmul.f32 %v1096, %v1114
        %v1116 = vsub.f32 1.0, %v1115
        %v1117 = vmul.f32 %v1114, %v1116
        %v1118 = vadd.f32 %v1114, %v1117
        %vm1119 = vweird.f32 %v1096
        %vm1120 = vweird.f32 %v1114
        %vm1121 = vmor %vm1119, %vm1120
        %v1122 = vsel %vm1121, %v1114, %v1118
        %v1123 = vand.u32 2147483647, %v1096
        %vm1124 = vcmp.eq.f32.partialorder %v1123, 8.507059e+37
        %v1125 = vand.u32 %v1096, 2147483648
        %v1126 = vor.u32 1.1754944e-38, %v1125
        %v1127 = vsel %vm1124, %v1126, %v1122
        %v1128 = vrcp.pop %v1099
        %v1129 = vmul.f32 %v1099, %v1128
        %v1130 = vsub.f32 1.0, %v1129
        %v1131 = vmul.f32 %v1128, %v1130
        %v1132 = vadd.f32 %v1128, %v1131
        %vm1133 = vweird.f32 %v1099
        %vm1134 = vweird.f32 %v1128
        %vm1135 = vmor %vm1133, %vm1134
        %v1136 = vsel %vm1135, %v1128, %v1132
        %v1137 = vand.u32 2147483647, %v1099
        %vm1138 = vcmp.eq.f32.partialorder %v1137, 8.507059e+37
        %v1139 = vand.u32 %v1099, 2147483648
        %v1140 = vor.u32 1.1754944e-38, %v1139
        %v1141 = vsel %vm1138, %v1140, %v1136
        %v1142 = vmul.f32 %v1086, %v1113
        %v1143 = vmul.f32 %v1088, %v1127
        %v1144 = vmul.f32 %v1090, %v1141
        %1145 = vrot.lane.b32.xlu0 %v602, 112
        %v1146 = vpop.permute.xlu0 %1145
        %1147 = vrot.lane.b32.xlu0 %v605, 112
        %v1148 = vpop.permute.xlu0 %1147
        %1149 = vrot.lane.b32.xlu0 %v608, 112
        %v1150 = vpop.permute.xlu0 %1149
        %v1154 = vsel %vm658, %v1142, 0
        %v1157 = vsel %vm658, %v1143, 0
        %v1160 = vsel %vm658, %v1144, 0
        %v1162 = vsel %vm741, %v1150, 0
        %1164 = vmatpush.msra.mxu0 0.0
        %1165 = vmatpush.msra.mxu0 0.0
        %1166 = vmatpush.msra.mxu0 0.0
        %1167 = vmatpush.msra.mxu0 0.0
        %1168 = vmatpush.msra.mxu0 0.0
        %1169 = vmatpush.msra.mxu0 0.0
        %1170 = vmatpush.msra.mxu0 0.0
        %1171 = vmatpush.msra.mxu0 0.0
        %1172 = vmatpush.msra.mxu0 0.0
        %1173 = vmatpush.msra.mxu0 0.0
        %1174 = vmatpush.msra.mxu0 0.0
        %1175 = vmatpush.msra.mxu0 0.0
        %1176 = vmatpush.msra.mxu0 0.0
        %1177 = vmatpush.msra.mxu0 %v1162
        %1178 = vmatpush.msra.mxu0 %v1148
        %1179 = vmatpush.msra.mxu0 %v1146
        %1180 = vmatmul.f32.gmra.mxu0 %v1154
        %v1181 = vpop.f32.mrf.mxu0
        %v1182 = vadd.f32 0.0, %v1181
        %1183 = vmatmul.f32.gmra.mxu0 %v1157
        %v1184 = vpop.f32.mrf.mxu0
        %v1185 = vadd.f32 0.0, %v1184
        %1186 = vmatmul.f32.gmra.mxu0 %v1160
        %v1187 = vpop.f32.mrf.mxu0
        %v1188 = vadd.f32 0.0, %v1187
        %1189 = vdwg.mxu0
        %1190 = vrot.lane.b32.xlu0 %v475, 32
        %v1191 = vpop.permute.xlu0 %1190
        %v1194 = vsel %vm613, %v1182, 0
        %v1197 = vsel %vm613, %v1185, 0
        %v1200 = vsel %vm613, %v1188, 0
        %1202 = vmatpush.msra.mxu0 0.0
        %1203 = vmatpush.msra.mxu0 0.0
        %1204 = vmatpush.msra.mxu0 0.0
        %1205 = vmatpush.msra.mxu0 0.0
        %1206 = vmatpush.msra.mxu0 0.0
        %1207 = vmatpush.msra.mxu0 0.0
        %1208 = vmatpush.msra.mxu0 0.0
        %1209 = vmatpush.msra.mxu0 0.0
        %1210 = vmatpush.msra.mxu0 0.0
        %1211 = vmatpush.msra.mxu0 0.0
        %1212 = vmatpush.msra.mxu0 0.0
        %1213 = vmatpush.msra.mxu0 0.0
        %1214 = vmatpush.msra.mxu0 0.0
        %1215 = vmatpush.msra.mxu0 0.0
        %1216 = vmatpush.msra.mxu0 0.0
        %1217 = vmatpush.msra.mxu0 %v1191
        %1218 = vmatmul.f32.gmra.mxu0 %v1194
        %v1219 = vpop.f32.mrf.mxu0
        %v1220 = vadd.f32 0.0, %v1219
        %1221 = vmatmul.f32.gmra.mxu0 %v1197
        %v1222 = vpop.f32.mrf.mxu0
        %v1223 = vadd.f32 0.0, %v1222
        %1224 = vmatmul.f32.gmra.mxu0 %v1200
        %v1225 = vpop.f32.mrf.mxu0
        %v1226 = vadd.f32 0.0, %v1225
        %1227 = vdwg.mxu0
        %v1228 = vadd.f32 %v1020, %v1220
        %v1229 = vadd.f32 %v1021, %v1223
        %v1230 = vadd.f32 %v1022, %v1226
        %1231 = vrot.lane.b32.xlu0 %v610, 104
        %v1232 = vpop.permute.xlu0 %1231
        %1233 = vrot.lane.b32.xlu0 %v611, 104
        %v1234 = vpop.permute.xlu0 %1233
        %1235 = vrot.lane.b32.xlu0 %v612, 104
        %v1236 = vpop.permute.xlu0 %1235
        %1237 = vrot.lane.b32.xlu0 %v554, 104
        %v1238 = vpop.permute.xlu0 %1237
        %1239 = vrot.lane.b32.xlu0 %v557, 104
        %v1240 = vpop.permute.xlu0 %1239
        %1241 = vrot.lane.b32.xlu0 %v560, 104
        %v1242 = vpop.permute.xlu0 %1241
        %v1243 = vsel %vm613, %v1232, 0
        %v1245 = vsel %vm613, %v1234, 0
        %v1247 = vsel %vm613, %v1236, 0
        %v1249 = vsel %vm613, %v1238, 0
        %v1251 = vsel %vm613, %v1240, 0
        %v1253 = vsel %vm613, %v1242, 0
        %1255 = vmatpush.xpose.msra.mxu0 0.0
        %1256 = vmatpush.xpose.msra.mxu0 0.0
        %1257 = vmatpush.xpose.msra.mxu0 0.0
        %1258 = vmatpush.xpose.msra.mxu0 0.0
        %1259 = vmatpush.xpose.msra.mxu0 0.0
        %1260 = vmatpush.xpose.msra.mxu0 0.0
        %1261 = vmatpush.xpose.msra.mxu0 0.0
        %1262 = vmatpush.xpose.msra.mxu0 0.0
        %1263 = vmatpush.xpose.msra.mxu0 0.0
        %1264 = vmatpush.xpose.msra.mxu0 0.0
        %1265 = vmatpush.xpose.msra.mxu0 0.0
        %1266 = vmatpush.xpose.msra.mxu0 0.0
        %1267 = vmatpush.xpose.msra.mxu0 0.0
        %1268 = vmatpush.xpose.msra.mxu0 %v1253
        %1269 = vmatpush.xpose.msra.mxu0 %v1251
        %1270 = vmatpush.xpose.msra.mxu0 %v1249
        %1271 = vmatmul.f32.gmra.mxu0 %v1243
        %v1272 = vpop.f32.mrf.mxu0
        %v1273 = vadd.f32 0.0, %v1272
        %1274 = vmatmul.f32.gmra.mxu0 %v1245
        %v1275 = vpop.f32.mrf.mxu0
        %v1276 = vadd.f32 0.0, %v1275
        %1277 = vmatmul.f32.gmra.mxu0 %v1247
        %v1278 = vpop.f32.mrf.mxu0
        %v1279 = vadd.f32 0.0, %v1278
        %1280 = vdwg.mxu0
        %v1281 = vsel %vm658, %v1273, -inf
        %1282 = vmax.xlane.f32.xlu0 %v1281
        %v1283 = vpop.xlane.xlu0 %1282
        %v1284 = vsel %vm658, %v1276, -inf
        %1285 = vmax.xlane.f32.xlu0 %v1284
        %v1286 = vpop.xlane.xlu0 %1285
        %v1287 = vsel %vm665, %v1279, -inf
        %1288 = vmax.xlane.f32.xlu0 %v1287
        %v1289 = vpop.xlane.xlu0 %1288
        %v1290 = vsub.f32 %v1273, %v1283
        %v1291 = vsub.f32 %v1276, %v1286
        %v1292 = vsub.f32 %v1279, %v1289
        %v1293 = vmul.f32 %v1290, 1.442695
        %v1294 = vpow.pop %v1293
        %v1295 = vmul.f32 %v1291, 1.442695
        %v1296 = vpow.pop %v1295
        %v1297 = vmul.f32 %v1292, 1.442695
        %v1298 = vpow.pop %v1297
        %v1299 = vsel %vm658, %v1294, 0.0
        %1300 = vadd.xlane.f32.xlu0 %v1299
        %v1301 = vpop.xlane.xlu0 %1300
        %v1302 = vsel %vm658, %v1296, 0.0
        %1303 = vadd.xlane.f32.xlu0 %v1302
        %v1304 = vpop.xlane.xlu0 %1303
        %v1305 = vsel %vm665, %v1298, 0.0
        %1306 = vadd.xlane.f32.xlu0 %v1305
        %v1307 = vpop.xlane.xlu0 %1306
        %v1308 = vrcp.pop %v1301
        %v1309 = vmul.f32 %v1301, %v1308
        %v1310 = vsub.f32 1.0, %v1309
        %v1311 = vmul.f32 %v1308, %v1310
        %v1312 = vadd.f32 %v1308, %v1311
        %vm1313 = vweird.f32 %v1301
        %vm1314 = vweird.f32 %v1308
        %vm1315 = vmor %vm1313, %vm1314
        %v1316 = vsel %vm1315, %v1308, %v1312
        %v1317 = vand.u32 2147483647, %v1301
        %vm1318 = vcmp.eq.f32.partialorder %v1317, 8.507059e+37
        %v1319 = vand.u32 %v1301, 2147483648
        %v1320 = vor.u32 1.1754944e-38, %v1319
        %v1321 = vsel %vm1318, %v1320, %v1316
        %v1322 = vrcp.pop %v1304
        %v1323 = vmul.f32 %v1304, %v1322
        %v1324 = vsub.f32 1.0, %v1323
        %v1325 = vmul.f32 %v1322, %v1324
        %v1326 = vadd.f32 %v1322, %v1325
        %vm1327 = vweird.f32 %v1304
        %vm1328 = vweird.f32 %v1322
        %vm1329 = vmor %vm1327, %vm1328
        %v1330 = vsel %vm1329, %v1322, %v1326
        %v1331 = vand.u32 2147483647, %v1304
        %vm1332 = vcmp.eq.f32.partialorder %v1331, 8.507059e+37
        %v1333 = vand.u32 %v1304, 2147483648
        %v1334 = vor.u32 1.1754944e-38, %v1333
        %v1335 = vsel %vm1332, %v1334, %v1330
        %v1336 = vrcp.pop %v1307
        %v1337 = vmul.f32 %v1307, %v1336
        %v1338 = vsub.f32 1.0, %v1337
        %v1339 = vmul.f32 %v1336, %v1338
        %v1340 = vadd.f32 %v1336, %v1339
        %vm1341 = vweird.f32 %v1307
        %vm1342 = vweird.f32 %v1336
        %vm1343 = vmor %vm1341, %vm1342
        %v1344 = vsel %vm1343, %v1336, %v1340
        %v1345 = vand.u32 2147483647, %v1307
        %vm1346 = vcmp.eq.f32.partialorder %v1345, 8.507059e+37
        %v1347 = vand.u32 %v1307, 2147483648
        %v1348 = vor.u32 1.1754944e-38, %v1347
        %v1349 = vsel %vm1346, %v1348, %v1344
        %v1350 = vmul.f32 %v1294, %v1321
        %v1351 = vmul.f32 %v1296, %v1335
        %v1352 = vmul.f32 %v1298, %v1349
        %1353 = vrot.lane.b32.xlu0 %v602, 104
        %v1354 = vpop.permute.xlu0 %1353
        %1355 = vrot.lane.b32.xlu0 %v605, 104
        %v1356 = vpop.permute.xlu0 %1355
        %1357 = vrot.lane.b32.xlu0 %v608, 104
        %v1358 = vpop.permute.xlu0 %1357
        %v1362 = vsel %vm658, %v1350, 0
        %v1365 = vsel %vm658, %v1351, 0
        %v1368 = vsel %vm658, %v1352, 0
        %v1370 = vsel %vm741, %v1358, 0
        %1372 = vmatpush.msra.mxu0 0.0
        %1373 = vmatpush.msra.mxu0 0.0
        %1374 = vmatpush.msra.mxu0 0.0
        %1375 = vmatpush.msra.mxu0 0.0
        %1376 = vmatpush.msra.mxu0 0.0
        %1377 = vmatpush.msra.mxu0 0.0
        %1378 = vmatpush.msra.mxu0 0.0
        %1379 = vmatpush.msra.mxu0 0.0
        %1380 = vmatpush.msra.mxu0 0.0
        %1381 = vmatpush.msra.mxu0 0.0
        %1382 = vmatpush.msra.mxu0 0.0
        %1383 = vmatpush.msra.mxu0 0.0
        %1384 = vmatpush.msra.mxu0 0.0
        %1385 = vmatpush.msra.mxu0 %v1370
        %1386 = vmatpush.msra.mxu0 %v1356
        %1387 = vmatpush.msra.mxu0 %v1354
        %1388 = vmatmul.f32.gmra.mxu0 %v1362
        %v1389 = vpop.f32.mrf.mxu0
        %v1390 = vadd.f32 0.0, %v1389
        %1391 = vmatmul.f32.gmra.mxu0 %v1365
        %v1392 = vpop.f32.mrf.mxu0
        %v1393 = vadd.f32 0.0, %v1392
        %1394 = vmatmul.f32.gmra.mxu0 %v1368
        %v1395 = vpop.f32.mrf.mxu0
        %v1396 = vadd.f32 0.0, %v1395
        %1397 = vdwg.mxu0
        %1398 = vrot.lane.b32.xlu0 %v476, 32
        %v1399 = vpop.permute.xlu0 %1398
        %v1402 = vsel %vm613, %v1390, 0
        %v1405 = vsel %vm613, %v1393, 0
        %v1408 = vsel %vm613, %v1396, 0
        %1410 = vmatpush.msra.mxu0 0.0
        %1411 = vmatpush.msra.mxu0 0.0
        %1412 = vmatpush.msra.mxu0 0.0
        %1413 = vmatpush.msra.mxu0 0.0
        %1414 = vmatpush.msra.mxu0 0.0
        %1415 = vmatpush.msra.mxu0 0.0
        %1416 = vmatpush.msra.mxu0 0.0
        %1417 = vmatpush.msra.mxu0 0.0
        %1418 = vmatpush.msra.mxu0 0.0
        %1419 = vmatpush.msra.mxu0 0.0
        %1420 = vmatpush.msra.mxu0 0.0
        %1421 = vmatpush.msra.mxu0 0.0
        %1422 = vmatpush.msra.mxu0 0.0
        %1423 = vmatpush.msra.mxu0 0.0
        %1424 = vmatpush.msra.mxu0 0.0
        %1425 = vmatpush.msra.mxu0 %v1399
        %1426 = vmatmul.f32.gmra.mxu0 %v1402
        %v1427 = vpop.f32.mrf.mxu0
        %v1428 = vadd.f32 0.0, %v1427
        %1429 = vmatmul.f32.gmra.mxu0 %v1405
        %v1430 = vpop.f32.mrf.mxu0
        %v1431 = vadd.f32 0.0, %v1430
        %1432 = vmatmul.f32.gmra.mxu0 %v1408
        %v1433 = vpop.f32.mrf.mxu0
        %v1434 = vadd.f32 0.0, %v1433
        %1435 = vdwg.mxu0
        %v1436 = vadd.f32 %v1228, %v1428
        %v1437 = vadd.f32 %v1229, %v1431
        %v1438 = vadd.f32 %v1230, %v1434
        %v1439 = vadd.f32 %v466, %v1436
        %v1440 = vadd.f32 %v467, %v1437
        %v1441 = vadd.f32 %v468, %v1438
        %v1442 = vsel %vm483, %v1439, 0.0
        %1443 = vadd.xlane.f32.xlu0 %v1442
        %v1444 = vpop.xlane.xlu0 %1443
        %v1445 = vsel %vm483, %v1440, 0.0
        %1446 = vadd.xlane.f32.xlu0 %v1445
        %v1447 = vpop.xlane.xlu0 %1446
        %vm1448 = vcmask 254976
        %v1449 = vsel %vm1448, %v1441, 0.0
        %1450 = vadd.xlane.f32.xlu0 %v1449
        %v1451 = vpop.xlane.xlu0 %1450
        %v1452 = vrcp.pop 32.0
        %v1453 = vmul.f32 32.0, %v1452
        %v1454 = vsub.f32 1.0, %v1453
        %v1455 = vmul.f32 %v1452, %v1454
        %v1456 = vadd.f32 %v1452, %v1455
        %vm1457 = vweird.f32 %v1452
        %v1458 = vsel %vm1457, %v1452, %v1456
        %v1459 = vmul.f32 %v1444, %v1458
        %v1460 = vmul.f32 %v1447, %v1458
        %v1461 = vmul.f32 %v1451, %v1458
        %v1462 = vsub.f32 %v1439, %v1459
        %v1463 = vsub.f32 %v1440, %v1460
        %v1464 = vsub.f32 %v1441, %v1461
        %v1465 = vmul.f32 %v1462, %v1462
        %v1466 = vmul.f32 %v1463, %v1463
        %v1467 = vmul.f32 %v1464, %v1464
        %v1468 = vsel %vm483, %v1465, 0.0
        %1469 = vadd.xlane.f32.xlu0 %v1468
        %v1470 = vpop.xlane.xlu0 %1469
        %v1471 = vsel %vm483, %v1466, 0.0
        %1472 = vadd.xlane.f32.xlu0 %v1471
        %v1473 = vpop.xlane.xlu0 %1472
        %v1474 = vsel %vm1448, %v1467, 0.0
        %1475 = vadd.xlane.f32.xlu0 %v1474
        %v1476 = vpop.xlane.xlu0 %1475
        %v1477 = vmul.f32 %v1470, %v1458
        %v1478 = vmul.f32 %v1473, %v1458
        %v1479 = vmul.f32 %v1476, %v1458
        %v1480 = vadd.f32 %v1477, 1e-05
        %v1481 = vadd.f32 %v1478, 1e-05
        %v1482 = vadd.f32 %v1479, 1e-05
        %v1483 = vrsqrt.pop %v1480
        %v1484 = vmul.f32 %v1483, %v1480
        %v1485 = vmul.f32 %v1484, %v1483
        %v1486 = vmul.f32 0.5, %v1485
        %v1487 = vsub.f32 1.5, %v1486
        %v1488 = vmul.f32 %v1483, %v1487
        %vm1489 = vweird.f32 %v1480
        %vm1490 = vweird.f32 %v1483
        %vm1491 = vmor %vm1489, %vm1490
        %v1492 = vsel %vm1491, %v1483, %v1488
        %v1493 = vrsqrt.pop %v1481
        %v1494 = vmul.f32 %v1493, %v1481
        %v1495 = vmul.f32 %v1494, %v1493
        %v1496 = vmul.f32 0.5, %v1495
        %v1497 = vsub.f32 1.5, %v1496
        %v1498 = vmul.f32 %v1493, %v1497
        %vm1499 = vweird.f32 %v1481
        %vm1500 = vweird.f32 %v1493
        %vm1501 = vmor %vm1499, %vm1500
        %v1502 = vsel %vm1501, %v1493, %v1498
        %v1503 = vrsqrt.pop %v1482
        %v1504 = vmul.f32 %v1503, %v1482
        %v1505 = vmul.f32 %v1504, %v1503
        %v1506 = vmul.f32 0.5, %v1505
        %v1507 = vsub.f32 1.5, %v1506
        %v1508 = vmul.f32 %v1503, %v1507
        %vm1509 = vweird.f32 %v1482
        %vm1510 = vweird.f32 %v1503
        %vm1511 = vmor %vm1509, %vm1510
        %v1512 = vsel %vm1511, %v1503, %v1508
        %v1513 = vmul.f32 %v1462, %v1492
        %v1514 = vmul.f32 %v1463, %v1502
        %v1515 = vmul.f32 %v1464, %v1512
        %v1516 = vperm.slane %v477, 4
        %v1517 = vmul.f32 %v1513, %v1516
        %v1518 = vmul.f32 %v1514, %v1516
        %v1519 = vmul.f32 %v1515, %v1516
        %v1520 = vperm.slane %v477, 5
        %v1521 = vadd.f32 %v1517, %v1520
        %v1522 = vadd.f32 %v1518, %v1520
        %v1523 = vadd.f32 %v1519, %v1520
        %v1524 = vld [vmem:[%s4] sm:$0xff]
        %v1525 = vld [vmem:[%s4 + $0x8] sm:$0xff]
        %v1526 = vld [vmem:[%s4 + $0x10] sm:$0xff]
        %v1527 = vld [vmem:[%s4 + $0x18] sm:$0xff]
        %v1528 = vld [vmem:[%s7] sm:$0x1]
        %v1530 = vperm.slane %v1528, 0
        %v1533 = vsel %vm483, %v1521, 0
        %v1536 = vsel %vm483, %v1522, 0
        %v1539 = vsel %vm483, %v1523, 0
        %1541 = vmatpush.msra.mxu0 0.0
        %1542 = vmatpush.msra.mxu0 0.0
        %1543 = vmatpush.msra.mxu0 0.0
        %1544 = vmatpush.msra.mxu0 0.0
        %1545 = vmatpush.msra.mxu0 0.0
        %1546 = vmatpush.msra.mxu0 0.0
        %1547 = vmatpush.msra.mxu0 0.0
        %1548 = vmatpush.msra.mxu0 0.0
        %1549 = vmatpush.msra.mxu0 0.0
        %1550 = vmatpush.msra.mxu0 0.0
        %1551 = vmatpush.msra.mxu0 0.0
        %1552 = vmatpush.msra.mxu0 0.0
        %1553 = vmatpush.msra.mxu0 %v1527
        %1554 = vmatpush.msra.mxu0 %v1526
        %1555 = vmatpush.msra.mxu0 %v1525
        %1556 = vmatpush.msra.mxu0 %v1524
        %1557 = vmatmul.f32.gmra.mxu0 %v1533
        %v1558 = vpop.f32.mrf.mxu0
        %v1559 = vadd.f32 %v1530, %v1558
        %1560 = vmatmul.f32.gmra.mxu0 %v1536
        %v1561 = vpop.f32.mrf.mxu0
        %v1562 = vadd.f32 %v1530, %v1561
        %1563 = vmatmul.f32.gmra.mxu0 %v1539
        %v1564 = vpop.f32.mrf.mxu0
        %v1565 = vadd.f32 %v1530, %v1564
        %1566 = vdwg.mxu0
        %v1567 = vmax.f32 %v1559, 0.0
        %v1568 = vmax.f32 %v1562, 0.0
        %v1569 = vmax.f32 %v1565, 0.0
        %v1570 = vld [vmem:[%s5] sm:$0xff]
        %v1571 = vld [vmem:[%s5 + $0x8] sm:$0xff]
        %v1572 = vld [vmem:[%s5 + $0x10] sm:$0xff]
        %v1573 = vld [vmem:[%s5 + $0x18] sm:$0xff]
        %v1574 = vld [vmem:[%s5 + $0x20] sm:$0xff]
        %v1575 = vld [vmem:[%s5 + $0x28] sm:$0xff]
        %v1576 = vld [vmem:[%s5 + $0x30] sm:$0xff]
        %v1577 = vld [vmem:[%s5 + $0x38] sm:$0xff]
        %v1578 = vperm.slane %v477, 6
        %vm1579 = vcmask 523264
        %v1581 = vsel %vm1579, %v1567, 0
        %v1584 = vsel %vm1579, %v1568, 0
        %v1587 = vsel %vm1579, %v1569, 0
        %1589 = vmatpush.msra.mxu0 0.0
        %1590 = vmatpush.msra.mxu0 0.0
        %1591 = vmatpush.msra.mxu0 0.0
        %1592 = vmatpush.msra.mxu0 0.0
        %1593 = vmatpush.msra.mxu0 0.0
        %1594 = vmatpush.msra.mxu0 0.0
        %1595 = vmatpush.msra.mxu0 0.0
        %1596 = vmatpush.msra.mxu0 0.0
        %1597 = vmatpush.msra.mxu0 %v1577
        %1598 = vmatpush.msra.mxu0 %v1576
        %1599 = vmatpush.msra.mxu0 %v1575
        %1600 = vmatpush.msra.mxu0 %v1574
        %1601 = vmatpush.msra.mxu0 %v1573
        %1602 = vmatpush.msra.mxu0 %v1572
        %1603 = vmatpush.msra.mxu0 %v1571
        %1604 = vmatpush.msra.mxu0 %v1570
        %1605 = vmatmul.f32.gmra.mxu0 %v1581
        %v1606 = vpop.f32.mrf.mxu0
        %v1607 = vadd.f32 %v1578, %v1606
        %1608 = vmatmul.f32.gmra.mxu0 %v1584
        %v1609 = vpop.f32.mrf.mxu0
        %v1610 = vadd.f32 %v1578, %v1609
        %1611 = vmatmul.f32.gmra.mxu0 %v1587
        %v1612 = vpop.f32.mrf.mxu0
        %v1613 = vadd.f32 %v1578, %v1612
        %1614 = vdwg.mxu0
        %v1615 = vadd.f32 %v1521, %v1607
        %v1616 = vadd.f32 %v1522, %v1610
        %v1617 = vadd.f32 %v1523, %v1613
        %v1618 = vsel %vm483, %v1615, 0.0
        %1619 = vadd.xlane.f32.xlu0 %v1618
        %v1620 = vpop.xlane.xlu0 %1619
        %v1621 = vsel %vm483, %v1616, 0.0
        %1622 = vadd.xlane.f32.xlu0 %v1621
        %v1623 = vpop.xlane.xlu0 %1622
        %v1624 = vsel %vm1448, %v1617, 0.0
        %1625 = vadd.xlane.f32.xlu0 %v1624
        %v1626 = vpop.xlane.xlu0 %1625
        %v1627 = vmul.f32 %v1620, %v1458
        %v1628 = vmul.f32 %v1623, %v1458
        %v1629 = vmul.f32 %v1626, %v1458
        %v1630 = vsub.f32 %v1615, %v1627
        %v1631 = vsub.f32 %v1616, %v1628
        %v1632 = vsub.f32 %v1617, %v1629
        %v1633 = vmul.f32 %v1630, %v1630
        %v1634 = vmul.f32 %v1631, %v1631
        %v1635 = vmul.f32 %v1632, %v1632
        %v1636 = vsel %vm483, %v1633, 0.0
        %1637 = vadd.xlane.f32.xlu0 %v1636
        %v1638 = vpop.xlane.xlu0 %1637
        %v1639 = vsel %vm483, %v1634, 0.0
        %1640 = vadd.xlane.f32.xlu0 %v1639
        %v1641 = vpop.xlane.xlu0 %1640
        %v1642 = vsel %vm1448, %v1635, 0.0
        %1643 = vadd.xlane.f32.xlu0 %v1642
        %v1644 = vpop.xlane.xlu0 %1643
        %v1645 = vmul.f32 %v1638, %v1458
        %v1646 = vmul.f32 %v1641, %v1458
        %v1647 = vmul.f32 %v1644, %v1458
        %v1648 = vadd.f32 %v1645, 1e-05
        %v1649 = vadd.f32 %v1646, 1e-05
        %v1650 = vadd.f32 %v1647, 1e-05
        %v1651 = vrsqrt.pop %v1648
        %v1652 = vmul.f32 %v1651, %v1648
        %v1653 = vmul.f32 %v1652, %v1651
        %v1654 = vmul.f32 0.5, %v1653
        %v1655 = vsub.f32 1.5, %v1654
        %v1656 = vmul.f32 %v1651, %v1655
        %vm1657 = vweird.f32 %v1648
        %vm1658 = vweird.f32 %v1651
        %vm1659 = vmor %vm1657, %vm1658
        %v1660 = vsel %vm1659, %v1651, %v1656
        %v1661 = vrsqrt.pop %v1649
        %v1662 = vmul.f32 %v1661, %v1649
        %v1663 = vmul.f32 %v1662, %v1661
        %v1664 = vmul.f32 0.5, %v1663
        %v1665 = vsub.f32 1.5, %v1664
        %v1666 = vmul.f32 %v1661, %v1665
        %vm1667 = vweird.f32 %v1649
        %vm1668 = vweird.f32 %v1661
        %vm1669 = vmor %vm1667, %vm1668
        %v1670 = vsel %vm1669, %v1661, %v1666
        %v1671 = vrsqrt.pop %v1650
        %v1672 = vmul.f32 %v1671, %v1650
        %v1673 = vmul.f32 %v1672, %v1671
        %v1674 = vmul.f32 0.5, %v1673
        %v1675 = vsub.f32 1.5, %v1674
        %v1676 = vmul.f32 %v1671, %v1675
        %vm1677 = vweird.f32 %v1650
        %vm1678 = vweird.f32 %v1671
        %vm1679 = vmor %vm1677, %vm1678
        %v1680 = vsel %vm1679, %v1671, %v1676
        %v1681 = vmul.f32 %v1630, %v1660
        %v1682 = vmul.f32 %v1631, %v1670
        %v1683 = vmul.f32 %v1632, %v1680
        %v1684 = vperm.slane %v477, 7
        %v1685 = vmul.f32 %v1681, %v1684
        %v1686 = vmul.f32 %v1682, %v1684
        %v1687 = vmul.f32 %v1683, %v1684
        %v1688 = vperm.slane %v478, 0
        %v1689 = vadd.f32 %v1685, %v1688
        %v1690 = vadd.f32 %v1686, %v1688
        %v1691 = vadd.f32 %v1687, %v1688
        %s1692 = scalar_lea.vmem %s3, 32
        %v1693 = vld [vmem:[%s1692] sm:$0xff]
        %v1694 = vld [vmem:[%s1692 + $0x8] sm:$0xff]
        %v1695 = vld [vmem:[%s1692 + $0x10] sm:$0xff]
        %v1696 = vld [vmem:[%s1692 + $0x18] sm:$0xff]
        %s1697 = scalar_lea.vmem %s6, 16
        %v1698 = vld [vmem:[%s1697] sm:$0xff]
        %v1699 = vld [vmem:[%s1697 + $0x8] sm:$0x1]
        %v1700 = vadd.f32 %v1689, %v469
        %v1701 = vadd.f32 %v1690, %v470
        %v1702 = vadd.f32 %v1691, %v471
        %v1703 = vperm.slane %v1698, 0
        %v1705 = vsel %vm483, %v1700, 0
        %v1708 = vsel %vm483, %v1701, 0
        %v1711 = vsel %vm483, %v1702, 0
        %1713 = vmatpush.msra.mxu0 0.0
        %1714 = vmatpush.msra.mxu0 0.0
        %1715 = vmatpush.msra.mxu0 0.0
        %1716 = vmatpush.msra.mxu0 0.0
        %1717 = vmatpush.msra.mxu0 0.0
        %1718 = vmatpush.msra.mxu0 0.0
        %1719 = vmatpush.msra.mxu0 0.0
        %1720 = vmatpush.msra.mxu0 0.0
        %1721 = vmatpush.msra.mxu0 0.0
        %1722 = vmatpush.msra.mxu0 0.0
        %1723 = vmatpush.msra.mxu0 0.0
        %1724 = vmatpush.msra.mxu0 0.0
        %1725 = vmatpush.msra.mxu0 %v1696
        %1726 = vmatpush.msra.mxu0 %v1695
        %1727 = vmatpush.msra.mxu0 %v1694
        %1728 = vmatpush.msra.mxu0 %v1693
        %1729 = vmatmul.f32.gmra.mxu0 %v1705
        %v1730 = vpop.f32.mrf.mxu0
        %v1731 = vadd.f32 %v1703, %v1730
        %1732 = vmatmul.f32.gmra.mxu0 %v1708
        %v1733 = vpop.f32.mrf.mxu0
        %v1734 = vadd.f32 %v1703, %v1733
        %1735 = vmatmul.f32.gmra.mxu0 %v1711
        %v1736 = vpop.f32.mrf.mxu0
        %v1737 = vadd.f32 %v1703, %v1736
        %1738 = vdwg.mxu0
        %v1739 = vperm.slane %v1698, 1
        %1744 = vrot.lane.b32.xlu0 %v1693, 96
        %v1745 = vpop.permute.xlu0 %1744
        %1746 = vrot.lane.b32.xlu0 %v1694, 96
        %v1747 = vpop.permute.xlu0 %1746
        %1748 = vrot.lane.b32.xlu0 %v1695, 96
        %v1749 = vpop.permute.xlu0 %1748
        %1750 = vrot.lane.b32.xlu0 %v1696, 96
        %v1751 = vpop.permute.xlu0 %1750
        %1756 = vmatpush.msra.mxu0 0.0
        %1757 = vmatpush.msra.mxu0 0.0
        %1758 = vmatpush.msra.mxu0 0.0
        %1759 = vmatpush.msra.mxu0 0.0
        %1760 = vmatpush.msra.mxu0 0.0
        %1761 = vmatpush.msra.mxu0 0.0
        %1762 = vmatpush.msra.mxu0 0.0
        %1763 = vmatpush.msra.mxu0 0.0
        %1764 = vmatpush.msra.mxu0 0.0
        %1765 = vmatpush.msra.mxu0 0.0
        %1766 = vmatpush.msra.mxu0 0.0
        %1767 = vmatpush.msra.mxu0 0.0
        %1768 = vmatpush.msra.mxu0 %v1751
        %1769 = vmatpush.msra.mxu0 %v1749
        %1770 = vmatpush.msra.mxu0 %v1747
        %1771 = vmatpush.msra.mxu0 %v1745
        %1772 = vmatmul.f32.gmra.mxu0 %v1705
        %v1773 = vpop.f32.mrf.mxu0
        %v1774 = vadd.f32 %v1739, %v1773
        %1775 = vmatmul.f32.gmra.mxu0 %v1708
        %v1776 = vpop.f32.mrf.mxu0
        %v1777 = vadd.f32 %v1739, %v1776
        %1778 = vmatmul.f32.gmra.mxu0 %v1711
        %v1779 = vpop.f32.mrf.mxu0
        %v1780 = vadd.f32 %v1739, %v1779
        %1781 = vdwg.mxu0
        %v1782 = vperm.slane %v1698, 2
        %1783 = vrot.lane.b32.xlu0 %v1693, 64
        %v1784 = vpop.permute.xlu0 %1783
        %1785 = vrot.lane.b32.xlu0 %v1694, 64
        %v1786 = vpop.permute.xlu0 %1785
        %1787 = vrot.lane.b32.xlu0 %v1695, 64
        %v1788 = vpop.permute.xlu0 %1787
        %1789 = vrot.lane.b32.xlu0 %v1696, 64
        %v1790 = vpop.permute.xlu0 %1789
        %v1796 = vsel %vm483, %v1689, 0
        %v1799 = vsel %vm483, %v1690, 0
        %v1802 = vsel %vm483, %v1691, 0
        %1804 = vmatpush.msra.mxu0 0.0
        %1805 = vmatpush.msra.mxu0 0.0
        %1806 = vmatpush.msra.mxu0 0.0
        %1807 = vmatpush.msra.mxu0 0.0
        %1808 = vmatpush.msra.mxu0 0.0
        %1809 = vmatpush.msra.mxu0 0.0
        %1810 = vmatpush.msra.mxu0 0.0
        %1811 = vmatpush.msra.mxu0 0.0
        %1812 = vmatpush.msra.mxu0 0.0
        %1813 = vmatpush.msra.mxu0 0.0
        %1814 = vmatpush.msra.mxu0 0.0
        %1815 = vmatpush.msra.mxu0 0.0
        %1816 = vmatpush.msra.mxu0 %v1790
        %1817 = vmatpush.msra.mxu0 %v1788
        %1818 = vmatpush.msra.mxu0 %v1786
        %1819 = vmatpush.msra.mxu0 %v1784
        %1820 = vmatmul.f32.gmra.mxu0 %v1796
        %v1821 = vpop.f32.mrf.mxu0
        %v1822 = vadd.f32 %v1782, %v1821
        %1823 = vmatmul.f32.gmra.mxu0 %v1799
        %v1824 = vpop.f32.mrf.mxu0
        %v1825 = vadd.f32 %v1782, %v1824
        %1826 = vmatmul.f32.gmra.mxu0 %v1802
        %v1827 = vpop.f32.mrf.mxu0
        %v1828 = vadd.f32 %v1782, %v1827
        %1829 = vdwg.mxu0
        %v1830 = vmul.f32 %v1731, 0.35355338
        %v1831 = vmul.f32 %v1734, 0.35355338
        %v1832 = vmul.f32 %v1737, 0.35355338
        %v1834 = vsel %vm613, %v1830, 0
        %v1837 = vsel %vm613, %v1831, 0
        %v1840 = vsel %vm613, %v1832, 0
        %v1843 = vsel %vm613, %v1774, 0
        %v1846 = vsel %vm613, %v1777, 0
        %v1849 = vsel %vm613, %v1780, 0
        %1851 = vmatpush.xpose.msra.mxu0 0.0
        %1852 = vmatpush.xpose.msra.mxu0 0.0
        %1853 = vmatpush.xpose.msra.mxu0 0.0
        %1854 = vmatpush.xpose.msra.mxu0 0.0
        %1855 = vmatpush.xpose.msra.mxu0 0.0
        %1856 = vmatpush.xpose.msra.mxu0 0.0
        %1857 = vmatpush.xpose.msra.mxu0 0.0
        %1858 = vmatpush.xpose.msra.mxu0 0.0
        %1859 = vmatpush.xpose.msra.mxu0 0.0
        %1860 = vmatpush.xpose.msra.mxu0 0.0
        %1861 = vmatpush.xpose.msra.mxu0 0.0
        %1862 = vmatpush.xpose.msra.mxu0 0.0
        %1863 = vmatpush.xpose.msra.mxu0 0.0
        %1864 = vmatpush.xpose.msra.mxu0 %v1849
        %1865 = vmatpush.xpose.msra.mxu0 %v1846
        %1866 = vmatpush.xpose.msra.mxu0 %v1843
        %1867 = vmatmul.f32.gmra.mxu0 %v1834
        %v1868 = vpop.f32.mrf.mxu0
        %v1869 = vadd.f32 0.0, %v1868
        %1870 = vmatmul.f32.gmra.mxu0 %v1837
        %v1871 = vpop.f32.mrf.mxu0
        %v1872 = vadd.f32 0.0, %v1871
        %1873 = vmatmul.f32.gmra.mxu0 %v1840
        %v1874 = vpop.f32.mrf.mxu0
        %v1875 = vadd.f32 0.0, %v1874
        %1876 = vdwg.mxu0
        %v1877 = vsel %vm658, %v1869, -inf
        %1878 = vmax.xlane.f32.xlu0 %v1877
        %v1879 = vpop.xlane.xlu0 %1878
        %v1880 = vsel %vm658, %v1872, -inf
        %1881 = vmax.xlane.f32.xlu0 %v1880
        %v1882 = vpop.xlane.xlu0 %1881
        %v1883 = vsel %vm665, %v1875, -inf
        %1884 = vmax.xlane.f32.xlu0 %v1883
        %v1885 = vpop.xlane.xlu0 %1884
        %v1886 = vsub.f32 %v1869, %v1879
        %v1887 = vsub.f32 %v1872, %v1882
        %v1888 = vsub.f32 %v1875, %v1885
        %v1889 = vmul.f32 %v1886, 1.442695
        %v1890 = vpow.pop %v1889
        %v1891 = vmul.f32 %v1887, 1.442695
        %v1892 = vpow.pop %v1891
        %v1893 = vmul.f32 %v1888, 1.442695
        %v1894 = vpow.pop %v1893
        %v1895 = vsel %vm658, %v1890, 0.0
        %1896 = vadd.xlane.f32.xlu0 %v1895
        %v1897 = vpop.xlane.xlu0 %1896
        %v1898 = vsel %vm658, %v1892, 0.0
        %1899 = vadd.xlane.f32.xlu0 %v1898
        %v1900 = vpop.xlane.xlu0 %1899
        %v1901 = vsel %vm665, %v1894, 0.0
        %1902 = vadd.xlane.f32.xlu0 %v1901
        %v1903 = vpop.xlane.xlu0 %1902
        %v1904 = vrcp.pop %v1897
        %v1905 = vmul.f32 %v1897, %v1904
        %v1906 = vsub.f32 1.0, %v1905
        %v1907 = vmul.f32 %v1904, %v1906
        %v1908 = vadd.f32 %v1904, %v1907
        %vm1909 = vweird.f32 %v1897
        %vm1910 = vweird.f32 %v1904
        %vm1911 = vmor %vm1909, %vm1910
        %v1912 = vsel %vm1911, %v1904, %v1908
        %v1913 = vand.u32 2147483647, %v1897
        %vm1914 = vcmp.eq.f32.partialorder %v1913, 8.507059e+37
        %v1915 = vand.u32 %v1897, 2147483648
        %v1916 = vor.u32 1.1754944e-38, %v1915
        %v1917 = vsel %vm1914, %v1916, %v1912
        %v1918 = vrcp.pop %v1900
        %v1919 = vmul.f32 %v1900, %v1918
        %v1920 = vsub.f32 1.0, %v1919
        %v1921 = vmul.f32 %v1918, %v1920
        %v1922 = vadd.f32 %v1918, %v1921
        %vm1923 = vweird.f32 %v1900
        %vm1924 = vweird.f32 %v1918
        %vm1925 = vmor %vm1923, %vm1924
        %v1926 = vsel %vm1925, %v1918, %v1922
        %v1927 = vand.u32 2147483647, %v1900
        %vm1928 = vcmp.eq.f32.partialorder %v1927, 8.507059e+37
        %v1929 = vand.u32 %v1900, 2147483648
        %v1930 = vor.u32 1.1754944e-38, %v1929
        %v1931 = vsel %vm1928, %v1930, %v1926
        %v1932 = vrcp.pop %v1903
        %v1933 = vmul.f32 %v1903, %v1932
        %v1934 = vsub.f32 1.0, %v1933
        %v1935 = vmul.f32 %v1932, %v1934
        %v1936 = vadd.f32 %v1932, %v1935
        %vm1937 = vweird.f32 %v1903
        %vm1938 = vweird.f32 %v1932
        %vm1939 = vmor %vm1937, %vm1938
        %v1940 = vsel %vm1939, %v1932, %v1936
        %v1941 = vand.u32 2147483647, %v1903
        %vm1942 = vcmp.eq.f32.partialorder %v1941, 8.507059e+37
        %v1943 = vand.u32 %v1903, 2147483648
        %v1944 = vor.u32 1.1754944e-38, %v1943
        %v1945 = vsel %vm1942, %v1944, %v1940
        %v1946 = vmul.f32 %v1890, %v1917
        %v1947 = vmul.f32 %v1892, %v1931
        %v1948 = vmul.f32 %v1894, %v1945
        %v1950 = vsel %vm658, %v1946, 0
        %v1953 = vsel %vm658, %v1947, 0
        %v1956 = vsel %vm658, %v1948, 0
        %v1959 = vsel %vm741, %v1828, 0
        %1961 = vmatpush.msra.mxu0 0.0
        %1962 = vmatpush.msra.mxu0 0.0
        %1963 = vmatpush.msra.mxu0 0.0
        %1964 = vmatpush.msra.mxu0 0.0
        %1965 = vmatpush.msra.mxu0 0.0
        %1966 = vmatpush.msra.mxu0 0.0
        %1967 = vmatpush.msra.mxu0 0.0
        %1968 = vmatpush.msra.mxu0 0.0
        %1969 = vmatpush.msra.mxu0 0.0
        %1970 = vmatpush.msra.mxu0 0.0
        %1971 = vmatpush.msra.mxu0 0.0
        %1972 = vmatpush.msra.mxu0 0.0
        %1973 = vmatpush.msra.mxu0 0.0
        %1974 = vmatpush.msra.mxu0 %v1959
        %1975 = vmatpush.msra.mxu0 %v1825
        %1976 = vmatpush.msra.mxu0 %v1822
        %1977 = vmatmul.f32.gmra.mxu0 %v1950
        %v1978 = vpop.f32.mrf.mxu0
        %v1979 = vadd.f32 0.0, %v1978
        %1980 = vmatmul.f32.gmra.mxu0 %v1953
        %v1981 = vpop.f32.mrf.mxu0
        %v1982 = vadd.f32 0.0, %v1981
        %1983 = vmatmul.f32.gmra.mxu0 %v1956
        %v1984 = vpop.f32.mrf.mxu0
        %v1985 = vadd.f32 0.0, %v1984
        %1986 = vdwg.mxu0
        %1987 = vrot.lane.b32.xlu0 %v1693, 32
        %v1988 = vpop.permute.xlu0 %1987
        %v1991 = vsel %vm613, %v1979, 0
        %v1994 = vsel %vm613, %v1982, 0
        %v1997 = vsel %vm613, %v1985, 0
        %1999 = vmatpush.msra.mxu0 0.0
        %2000 = vmatpush.msra.mxu0 0.0
        %2001 = vmatpush.msra.mxu0 0.0
        %2002 = vmatpush.msra.mxu0 0.0
        %2003 = vmatpush.msra.mxu0 0.0
        %2004 = vmatpush.msra.mxu0 0.0
        %2005 = vmatpush.msra.mxu0 0.0
        %2006 = vmatpush.msra.mxu0 0.0
        %2007 = vmatpush.msra.mxu0 0.0
        %2008 = vmatpush.msra.mxu0 0.0
        %2009 = vmatpush.msra.mxu0 0.0
        %2010 = vmatpush.msra.mxu0 0.0
        %2011 = vmatpush.msra.mxu0 0.0
        %2012 = vmatpush.msra.mxu0 0.0
        %2013 = vmatpush.msra.mxu0 0.0
        %2014 = vmatpush.msra.mxu0 %v1988
        %2015 = vmatmul.f32.gmra.mxu0 %v1991
        %v2016 = vpop.f32.mrf.mxu0
        %v2017 = vadd.f32 0.0, %v2016
        %2018 = vmatmul.f32.gmra.mxu0 %v1994
        %v2019 = vpop.f32.mrf.mxu0
        %v2020 = vadd.f32 0.0, %v2019
        %2021 = vmatmul.f32.gmra.mxu0 %v1997
        %v2022 = vpop.f32.mrf.mxu0
        %v2023 = vadd.f32 0.0, %v2022
        %2024 = vdwg.mxu0
        %v2025 = vperm.slane %v1698, 3
        %v2026 = vadd.f32 %v2025, %v2017
        %v2027 = vadd.f32 %v2025, %v2020
        %v2028 = vadd.f32 %v2025, %v2023
        %2029 = vrot.lane.b32.xlu0 %v1830, 120
        %v2030 = vpop.permute.xlu0 %2029
        %2031 = vrot.lane.b32.xlu0 %v1831, 120
        %v2032 = vpop.permute.xlu0 %2031
        %2033 = vrot.lane.b32.xlu0 %v1832, 120
        %v2034 = vpop.permute.xlu0 %2033
        %2035 = vrot.lane.b32.xlu0 %v1774, 120
        %v2036 = vpop.permute.xlu0 %2035
        %2037 = vrot.lane.b32.xlu0 %v1777, 120
        %v2038 = vpop.permute.xlu0 %2037
        %2039 = vrot.lane.b32.xlu0 %v1780, 120
        %v2040 = vpop.permute.xlu0 %2039
        %v2041 = vsel %vm613, %v2030, 0
        %v2043 = vsel %vm613, %v2032, 0
        %v2045 = vsel %vm613, %v2034, 0
        %v2047 = vsel %vm613, %v2036, 0
        %v2049 = vsel %vm613, %v2038, 0
        %v2051 = vsel %vm613, %v2040, 0
        %2053 = vmatpush.xpose.msra.mxu0 0.0
        %2054 = vmatpush.xpose.msra.mxu0 0.0
        %2055 = vmatpush.xpose.msra.mxu0 0.0
        %2056 = vmatpush.xpose.msra.mxu0 0.0
        %2057 = vmatpush.xpose.msra.mxu0 0.0
        %2058 = vmatpush.xpose.msra.mxu0 0.0
        %2059 = vmatpush.xpose.msra.mxu0 0.0
        %2060 = vmatpush.xpose.msra.mxu0 0.0
        %2061 = vmatpush.xpose.msra.mxu0 0.0
        %2062 = vmatpush.xpose.msra.mxu0 0.0
        %2063 = vmatpush.xpose.msra.mxu0 0.0
        %2064 = vmatpush.xpose.msra.mxu0 0.0
        %2065 = vmatpush.xpose.msra.mxu0 0.0
        %2066 = vmatpush.xpose.msra.mxu0 %v2051
        %2067 = vmatpush.xpose.msra.mxu0 %v2049
        %2068 = vmatpush.xpose.msra.mxu0 %v2047
        %2069 = vmatmul.f32.gmra.mxu0 %v2041
        %v2070 = vpop.f32.mrf.mxu0
        %v2071 = vadd.f32 0.0, %v2070
        %2072 = vmatmul.f32.gmra.mxu0 %v2043
        %v2073 = vpop.f32.mrf.mxu0
        %v2074 = vadd.f32 0.0, %v2073
        %2075 = vmatmul.f32.gmra.mxu0 %v2045
        %v2076 = vpop.f32.mrf.mxu0
        %v2077 = vadd.f32 0.0, %v2076
        %2078 = vdwg.mxu0
        %v2079 = vsel %vm658, %v2071, -inf
        %2080 = vmax.xlane.f32.xlu0 %v2079
        %v2081 = vpop.xlane.xlu0 %2080
        %v2082 = vsel %vm658, %v2074, -inf
        %2083 = vmax.xlane.f32.xlu0 %v2082
        %v2084 = vpop.xlane.xlu0 %2083
        %v2085 = vsel %vm665, %v2077, -inf
        %2086 = vmax.xlane.f32.xlu0 %v2085
        %v2087 = vpop.xlane.xlu0 %2086
        %v2088 = vsub.f32 %v2071, %v2081
        %v2089 = vsub.f32 %v2074, %v2084
        %v2090 = vsub.f32 %v2077, %v2087
        %v2091 = vmul.f32 %v2088, 1.442695
        %v2092 = vpow.pop %v2091
        %v2093 = vmul.f32 %v2089, 1.442695
        %v2094 = vpow.pop %v2093
        %v2095 = vmul.f32 %v2090, 1.442695
        %v2096 = vpow.pop %v2095
        %v2097 = vsel %vm658, %v2092, 0.0
        %2098 = vadd.xlane.f32.xlu0 %v2097
        %v2099 = vpop.xlane.xlu0 %2098
        %v2100 = vsel %vm658, %v2094, 0.0
        %2101 = vadd.xlane.f32.xlu0 %v2100
        %v2102 = vpop.xlane.xlu0 %2101
        %v2103 = vsel %vm665, %v2096, 0.0
        %2104 = vadd.xlane.f32.xlu0 %v2103
        %v2105 = vpop.xlane.xlu0 %2104
        %v2106 = vrcp.pop %v2099
        %v2107 = vmul.f32 %v2099, %v2106
        %v2108 = vsub.f32 1.0, %v2107
        %v2109 = vmul.f32 %v2106, %v2108
        %v2110 = vadd.f32 %v2106, %v2109
        %vm2111 = vweird.f32 %v2099
        %vm2112 = vweird.f32 %v2106
        %vm2113 = vmor %vm2111, %vm2112
        %v2114 = vsel %vm2113, %v2106, %v2110
        %v2115 = vand.u32 2147483647, %v2099
        %vm2116 = vcmp.eq.f32.partialorder %v2115, 8.507059e+37
        %v2117 = vand.u32 %v2099, 2147483648
        %v2118 = vor.u32 1.1754944e-38, %v2117
        %v2119 = vsel %vm2116, %v2118, %v2114
        %v2120 = vrcp.pop %v2102
        %v2121 = vmul.f32 %v2102, %v2120
        %v2122 = vsub.f32 1.0, %v2121
        %v2123 = vmul.f32 %v2120, %v2122
        %v2124 = vadd.f32 %v2120, %v2123
        %vm2125 = vweird.f32 %v2102
        %vm2126 = vweird.f32 %v2120
        %vm2127 = vmor %vm2125, %vm2126
        %v2128 = vsel %vm2127, %v2120, %v2124
        %v2129 = vand.u32 2147483647, %v2102
        %vm2130 = vcmp.eq.f32.partialorder %v2129, 8.507059e+37
        %v2131 = vand.u32 %v2102, 2147483648
        %v2132 = vor.u32 1.1754944e-38, %v2131
        %v2133 = vsel %vm2130, %v2132, %v2128
        %v2134 = vrcp.pop %v2105
        %v2135 = vmul.f32 %v2105, %v2134
        %v2136 = vsub.f32 1.0, %v2135
        %v2137 = vmul.f32 %v2134, %v2136
        %v2138 = vadd.f32 %v2134, %v2137
        %vm2139 = vweird.f32 %v2105
        %vm2140 = vweird.f32 %v2134
        %vm2141 = vmor %vm2139, %vm2140
        %v2142 = vsel %vm2141, %v2134, %v2138
        %v2143 = vand.u32 2147483647, %v2105
        %vm2144 = vcmp.eq.f32.partialorder %v2143, 8.507059e+37
        %v2145 = vand.u32 %v2105, 2147483648
        %v2146 = vor.u32 1.1754944e-38, %v2145
        %v2147 = vsel %vm2144, %v2146, %v2142
        %v2148 = vmul.f32 %v2092, %v2119
        %v2149 = vmul.f32 %v2094, %v2133
        %v2150 = vmul.f32 %v2096, %v2147
        %2153 = vrot.lane.b32.xlu0 %v1822, 120
        %v2154 = vpop.permute.xlu0 %2153
        %2155 = vrot.lane.b32.xlu0 %v1825, 120
        %v2156 = vpop.permute.xlu0 %2155
        %2157 = vrot.lane.b32.xlu0 %v1828, 120
        %v2158 = vpop.permute.xlu0 %2157
        %v2162 = vsel %vm658, %v2148, 0
        %v2165 = vsel %vm658, %v2149, 0
        %v2168 = vsel %vm658, %v2150, 0
        %v2170 = vsel %vm741, %v2158, 0
        %2172 = vmatpush.msra.mxu0 0.0
        %2173 = vmatpush.msra.mxu0 0.0
        %2174 = vmatpush.msra.mxu0 0.0
        %2175 = vmatpush.msra.mxu0 0.0
        %2176 = vmatpush.msra.mxu0 0.0
        %2177 = vmatpush.msra.mxu0 0.0
        %2178 = vmatpush.msra.mxu0 0.0
        %2179 = vmatpush.msra.mxu0 0.0
        %2180 = vmatpush.msra.mxu0 0.0
        %2181 = vmatpush.msra.mxu0 0.0
        %2182 = vmatpush.msra.mxu0 0.0
        %2183 = vmatpush.msra.mxu0 0.0
        %2184 = vmatpush.msra.mxu0 0.0
        %2185 = vmatpush.msra.mxu0 %v2170
        %2186 = vmatpush.msra.mxu0 %v2156
        %2187 = vmatpush.msra.mxu0 %v2154
        %2188 = vmatmul.f32.gmra.mxu0 %v2162
        %v2189 = vpop.f32.mrf.mxu0
        %v2190 = vadd.f32 0.0, %v2189
        %2191 = vmatmul.f32.gmra.mxu0 %v2165
        %v2192 = vpop.f32.mrf.mxu0
        %v2193 = vadd.f32 0.0, %v2192
        %2194 = vmatmul.f32.gmra.mxu0 %v2168
        %v2195 = vpop.f32.mrf.mxu0
        %v2196 = vadd.f32 0.0, %v2195
        %2197 = vdwg.mxu0
        %2198 = vrot.lane.b32.xlu0 %v1694, 32
        %v2199 = vpop.permute.xlu0 %2198
        %v2202 = vsel %vm613, %v2190, 0
        %v2205 = vsel %vm613, %v2193, 0
        %v2208 = vsel %vm613, %v2196, 0
        %2210 = vmatpush.msra.mxu0 0.0
        %2211 = vmatpush.msra.mxu0 0.0
        %2212 = vmatpush.msra.mxu0 0.0
        %2213 = vmatpush.msra.mxu0 0.0
        %2214 = vmatpush.msra.mxu0 0.0
        %2215 = vmatpush.msra.mxu0 0.0
        %2216 = vmatpush.msra.mxu0 0.0
        %2217 = vmatpush.msra.mxu0 0.0
        %2218 = vmatpush.msra.mxu0 0.0
        %2219 = vmatpush.msra.mxu0 0.0
        %2220 = vmatpush.msra.mxu0 0.0
        %2221 = vmatpush.msra.mxu0 0.0
        %2222 = vmatpush.msra.mxu0 0.0
        %2223 = vmatpush.msra.mxu0 0.0
        %2224 = vmatpush.msra.mxu0 0.0
        %2225 = vmatpush.msra.mxu0 %v2199
        %2226 = vmatmul.f32.gmra.mxu0 %v2202
        %v2227 = vpop.f32.mrf.mxu0
        %v2228 = vadd.f32 0.0, %v2227
        %2229 = vmatmul.f32.gmra.mxu0 %v2205
        %v2230 = vpop.f32.mrf.mxu0
        %v2231 = vadd.f32 0.0, %v2230
        %2232 = vmatmul.f32.gmra.mxu0 %v2208
        %v2233 = vpop.f32.mrf.mxu0
        %v2234 = vadd.f32 0.0, %v2233
        %2235 = vdwg.mxu0
        %v2236 = vadd.f32 %v2026, %v2228
        %v2237 = vadd.f32 %v2027, %v2231
        %v2238 = vadd.f32 %v2028, %v2234
        %2239 = vrot.lane.b32.xlu0 %v1830, 112
        %v2240 = vpop.permute.xlu0 %2239
        %2241 = vrot.lane.b32.xlu0 %v1831, 112
        %v2242 = vpop.permute.xlu0 %2241
        %2243 = vrot.lane.b32.xlu0 %v1832, 112
        %v2244 = vpop.permute.xlu0 %2243
        %2245 = vrot.lane.b32.xlu0 %v1774, 112
        %v2246 = vpop.permute.xlu0 %2245
        %2247 = vrot.lane.b32.xlu0 %v1777, 112
        %v2248 = vpop.permute.xlu0 %2247
        %2249 = vrot.lane.b32.xlu0 %v1780, 112
        %v2250 = vpop.permute.xlu0 %2249
        %v2251 = vsel %vm613, %v2240, 0
        %v2253 = vsel %vm613, %v2242, 0
        %v2255 = vsel %vm613, %v2244, 0
        %v2257 = vsel %vm613, %v2246, 0
        %v2259 = vsel %vm613, %v2248, 0
        %v2261 = vsel %vm613, %v2250, 0
        %2263 = vmatpush.xpose.msra.mxu0 0.0
        %2264 = vmatpush.xpose.msra.mxu0 0.0
        %2265 = vmatpush.xpose.msra.mxu0 0.0
        %2266 = vmatpush.xpose.msra.mxu0 0.0
        %2267 = vmatpush.xpose.msra.mxu0 0.0
        %2268 = vmatpush.xpose.msra.mxu0 0.0
        %2269 = vmatpush.xpose.msra.mxu0 0.0
        %2270 = vmatpush.xpose.msra.mxu0 0.0
        %2271 = vmatpush.xpose.msra.mxu0 0.0
        %2272 = vmatpush.xpose.msra.mxu0 0.0
        %2273 = vmatpush.xpose.msra.mxu0 0.0
        %2274 = vmatpush.xpose.msra.mxu0 0.0
        %2275 = vmatpush.xpose.msra.mxu0 0.0
        %2276 = vmatpush.xpose.msra.mxu0 %v2261
        %2277 = vmatpush.xpose.msra.mxu0 %v2259
        %2278 = vmatpush.xpose.msra.mxu0 %v2257
        %2279 = vmatmul.f32.gmra.mxu0 %v2251
        %v2280 = vpop.f32.mrf.mxu0
        %v2281 = vadd.f32 0.0, %v2280
        %2282 = vmatmul.f32.gmra.mxu0 %v2253
        %v2283 = vpop.f32.mrf.mxu0
        %v2284 = vadd.f32 0.0, %v2283
        %2285 = vmatmul.f32.gmra.mxu0 %v2255
        %v2286 = vpop.f32.mrf.mxu0
        %v2287 = vadd.f32 0.0, %v2286
        %2288 = vdwg.mxu0
        %v2289 = vsel %vm658, %v2281, -inf
        %2290 = vmax.xlane.f32.xlu0 %v2289
        %v2291 = vpop.xlane.xlu0 %2290
        %v2292 = vsel %vm658, %v2284, -inf
        %2293 = vmax.xlane.f32.xlu0 %v2292
        %v2294 = vpop.xlane.xlu0 %2293
        %v2295 = vsel %vm665, %v2287, -inf
        %2296 = vmax.xlane.f32.xlu0 %v2295
        %v2297 = vpop.xlane.xlu0 %2296
        %v2298 = vsub.f32 %v2281, %v2291
        %v2299 = vsub.f32 %v2284, %v2294
        %v2300 = vsub.f32 %v2287, %v2297
        %v2301 = vmul.f32 %v2298, 1.442695
        %v2302 = vpow.pop %v2301
        %v2303 = vmul.f32 %v2299, 1.442695
        %v2304 = vpow.pop %v2303
        %v2305 = vmul.f32 %v2300, 1.442695
        %v2306 = vpow.pop %v2305
        %v2307 = vsel %vm658, %v2302, 0.0
        %2308 = vadd.xlane.f32.xlu0 %v2307
        %v2309 = vpop.xlane.xlu0 %2308
        %v2310 = vsel %vm658, %v2304, 0.0
        %2311 = vadd.xlane.f32.xlu0 %v2310
        %v2312 = vpop.xlane.xlu0 %2311
        %v2313 = vsel %vm665, %v2306, 0.0
        %2314 = vadd.xlane.f32.xlu0 %v2313
        %v2315 = vpop.xlane.xlu0 %2314
        %v2316 = vrcp.pop %v2309
        %v2317 = vmul.f32 %v2309, %v2316
        %v2318 = vsub.f32 1.0, %v2317
        %v2319 = vmul.f32 %v2316, %v2318
        %v2320 = vadd.f32 %v2316, %v2319
        %vm2321 = vweird.f32 %v2309
        %vm2322 = vweird.f32 %v2316
        %vm2323 = vmor %vm2321, %vm2322
        %v2324 = vsel %vm2323, %v2316, %v2320
        %v2325 = vand.u32 2147483647, %v2309
        %vm2326 = vcmp.eq.f32.partialorder %v2325, 8.507059e+37
        %v2327 = vand.u32 %v2309, 2147483648
        %v2328 = vor.u32 1.1754944e-38, %v2327
        %v2329 = vsel %vm2326, %v2328, %v2324
        %v2330 = vrcp.pop %v2312
        %v2331 = vmul.f32 %v2312, %v2330
        %v2332 = vsub.f32 1.0, %v2331
        %v2333 = vmul.f32 %v2330, %v2332
        %v2334 = vadd.f32 %v2330, %v2333
        %vm2335 = vweird.f32 %v2312
        %vm2336 = vweird.f32 %v2330
        %vm2337 = vmor %vm2335, %vm2336
        %v2338 = vsel %vm2337, %v2330, %v2334
        %v2339 = vand.u32 2147483647, %v2312
        %vm2340 = vcmp.eq.f32.partialorder %v2339, 8.507059e+37
        %v2341 = vand.u32 %v2312, 2147483648
        %v2342 = vor.u32 1.1754944e-38, %v2341
        %v2343 = vsel %vm2340, %v2342, %v2338
        %v2344 = vrcp.pop %v2315
        %v2345 = vmul.f32 %v2315, %v2344
        %v2346 = vsub.f32 1.0, %v2345
        %v2347 = vmul.f32 %v2344, %v2346
        %v2348 = vadd.f32 %v2344, %v2347
        %vm2349 = vweird.f32 %v2315
        %vm2350 = vweird.f32 %v2344
        %vm2351 = vmor %vm2349, %vm2350
        %v2352 = vsel %vm2351, %v2344, %v2348
        %v2353 = vand.u32 2147483647, %v2315
        %vm2354 = vcmp.eq.f32.partialorder %v2353, 8.507059e+37
        %v2355 = vand.u32 %v2315, 2147483648
        %v2356 = vor.u32 1.1754944e-38, %v2355
        %v2357 = vsel %vm2354, %v2356, %v2352
        %v2358 = vmul.f32 %v2302, %v2329
        %v2359 = vmul.f32 %v2304, %v2343
        %v2360 = vmul.f32 %v2306, %v2357
        %2361 = vrot.lane.b32.xlu0 %v1822, 112
        %v2362 = vpop.permute.xlu0 %2361
        %2363 = vrot.lane.b32.xlu0 %v1825, 112
        %v2364 = vpop.permute.xlu0 %2363
        %2365 = vrot.lane.b32.xlu0 %v1828, 112
        %v2366 = vpop.permute.xlu0 %2365
        %v2370 = vsel %vm658, %v2358, 0
        %v2373 = vsel %vm658, %v2359, 0
        %v2376 = vsel %vm658, %v2360, 0
        %v2378 = vsel %vm741, %v2366, 0
        %2380 = vmatpush.msra.mxu0 0.0
        %2381 = vmatpush.msra.mxu0 0.0
        %2382 = vmatpush.msra.mxu0 0.0
        %2383 = vmatpush.msra.mxu0 0.0
        %2384 = vmatpush.msra.mxu0 0.0
        %2385 = vmatpush.msra.mxu0 0.0
        %2386 = vmatpush.msra.mxu0 0.0
        %2387 = vmatpush.msra.mxu0 0.0
        %2388 = vmatpush.msra.mxu0 0.0
        %2389 = vmatpush.msra.mxu0 0.0
        %2390 = vmatpush.msra.mxu0 0.0
        %2391 = vmatpush.msra.mxu0 0.0
        %2392 = vmatpush.msra.mxu0 0.0
        %2393 = vmatpush.msra.mxu0 %v2378
        %2394 = vmatpush.msra.mxu0 %v2364
        %2395 = vmatpush.msra.mxu0 %v2362
        %2396 = vmatmul.f32.gmra.mxu0 %v2370
        %v2397 = vpop.f32.mrf.mxu0
        %v2398 = vadd.f32 0.0, %v2397
        %2399 = vmatmul.f32.gmra.mxu0 %v2373
        %v2400 = vpop.f32.mrf.mxu0
        %v2401 = vadd.f32 0.0, %v2400
        %2402 = vmatmul.f32.gmra.mxu0 %v2376
        %v2403 = vpop.f32.mrf.mxu0
        %v2404 = vadd.f32 0.0, %v2403
        %2405 = vdwg.mxu0
        %2406 = vrot.lane.b32.xlu0 %v1695, 32
        %v2407 = vpop.permute.xlu0 %2406
        %v2410 = vsel %vm613, %v2398, 0
        %v2413 = vsel %vm613, %v2401, 0
        %v2416 = vsel %vm613, %v2404, 0
        %2418 = vmatpush.msra.mxu0 0.0
        %2419 = vmatpush.msra.mxu0 0.0
        %2420 = vmatpush.msra.mxu0 0.0
        %2421 = vmatpush.msra.mxu0 0.0
        %2422 = vmatpush.msra.mxu0 0.0
        %2423 = vmatpush.msra.mxu0 0.0
        %2424 = vmatpush.msra.mxu0 0.0
        %2425 = vmatpush.msra.mxu0 0.0
        %2426 = vmatpush.msra.mxu0 0.0
        %2427 = vmatpush.msra.mxu0 0.0
        %2428 = vmatpush.msra.mxu0 0.0
        %2429 = vmatpush.msra.mxu0 0.0
        %2430 = vmatpush.msra.mxu0 0.0
        %2431 = vmatpush.msra.mxu0 0.0
        %2432 = vmatpush.msra.mxu0 0.0
        %2433 = vmatpush.msra.mxu0 %v2407
        %2434 = vmatmul.f32.gmra.mxu0 %v2410
        %v2435 = vpop.f32.mrf.mxu0
        %v2436 = vadd.f32 0.0, %v2435
        %2437 = vmatmul.f32.gmra.mxu0 %v2413
        %v2438 = vpop.f32.mrf.mxu0
        %v2439 = vadd.f32 0.0, %v2438
        %2440 = vmatmul.f32.gmra.mxu0 %v2416
        %v2441 = vpop.f32.mrf.mxu0
        %v2442 = vadd.f32 0.0, %v2441
        %2443 = vdwg.mxu0
        %v2444 = vadd.f32 %v2236, %v2436
        %v2445 = vadd.f32 %v2237, %v2439
        %v2446 = vadd.f32 %v2238, %v2442
        %2447 = vrot.lane.b32.xlu0 %v1830, 104
        %v2448 = vpop.permute.xlu0 %2447
        %2449 = vrot.lane.b32.xlu0 %v1831, 104
        %v2450 = vpop.permute.xlu0 %2449
        %2451 = vrot.lane.b32.xlu0 %v1832, 104
        %v2452 = vpop.permute.xlu0 %2451
        %2453 = vrot.lane.b32.xlu0 %v1774, 104
        %v2454 = vpop.permute.xlu0 %2453
        %2455 = vrot.lane.b32.xlu0 %v1777, 104
        %v2456 = vpop.permute.xlu0 %2455
        %2457 = vrot.lane.b32.xlu0 %v1780, 104
        %v2458 = vpop.permute.xlu0 %2457
        %v2459 = vsel %vm613, %v2448, 0
        %v2461 = vsel %vm613, %v2450, 0
        %v2463 = vsel %vm613, %v2452, 0
        %v2465 = vsel %vm613, %v2454, 0
        %v2467 = vsel %vm613, %v2456, 0
        %v2469 = vsel %vm613, %v2458, 0
        %2471 = vmatpush.xpose.msra.mxu0 0.0
        %2472 = vmatpush.xpose.msra.mxu0 0.0
        %2473 = vmatpush.xpose.msra.mxu0 0.0
        %2474 = vmatpush.xpose.msra.mxu0 0.0
        %2475 = vmatpush.xpose.msra.mxu0 0.0
        %2476 = vmatpush.xpose.msra.mxu0 0.0
        %2477 = vmatpush.xpose.msra.mxu0 0.0
        %2478 = vmatpush.xpose.msra.mxu0 0.0
        %2479 = vmatpush.xpose.msra.mxu0 0.0
        %2480 = vmatpush.xpose.msra.mxu0 0.0
        %2481 = vmatpush.xpose.msra.mxu0 0.0
        %2482 = vmatpush.xpose.msra.mxu0 0.0
        %2483 = vmatpush.xpose.msra.mxu0 0.0
        %2484 = vmatpush.xpose.msra.mxu0 %v2469
        %2485 = vmatpush.xpose.msra.mxu0 %v2467
        %2486 = vmatpush.xpose.msra.mxu0 %v2465
        %2487 = vmatmul.f32.gmra.mxu0 %v2459
        %v2488 = vpop.f32.mrf.mxu0
        %v2489 = vadd.f32 0.0, %v2488
        %2490 = vmatmul.f32.gmra.mxu0 %v2461
        %v2491 = vpop.f32.mrf.mxu0
        %v2492 = vadd.f32 0.0, %v2491
        %2493 = vmatmul.f32.gmra.mxu0 %v2463
        %v2494 = vpop.f32.mrf.mxu0
        %v2495 = vadd.f32 0.0, %v2494
        %2496 = vdwg.mxu0
        %v2497 = vsel %vm658, %v2489, -inf
        %2498 = vmax.xlane.f32.xlu0 %v2497
        %v2499 = vpop.xlane.xlu0 %2498
        %v2500 = vsel %vm658, %v2492, -inf
        %2501 = vmax.xlane.f32.xlu0 %v2500
        %v2502 = vpop.xlane.xlu0 %2501
        %v2503 = vsel %vm665, %v2495, -inf
        %2504 = vmax.xlane.f32.xlu0 %v2503
        %v2505 = vpop.xlane.xlu0 %2504
        %v2506 = vsub.f32 %v2489, %v2499
        %v2507 = vsub.f32 %v2492, %v2502
        %v2508 = vsub.f32 %v2495, %v2505
        %v2509 = vmul.f32 %v2506, 1.442695
        %v2510 = vpow.pop %v2509
        %v2511 = vmul.f32 %v2507, 1.442695
        %v2512 = vpow.pop %v2511
        %v2513 = vmul.f32 %v2508, 1.442695
        %v2514 = vpow.pop %v2513
        %v2515 = vsel %vm658, %v2510, 0.0
        %2516 = vadd.xlane.f32.xlu0 %v2515
        %v2517 = vpop.xlane.xlu0 %2516
        %v2518 = vsel %vm658, %v2512, 0.0
        %2519 = vadd.xlane.f32.xlu0 %v2518
        %v2520 = vpop.xlane.xlu0 %2519
        %v2521 = vsel %vm665, %v2514, 0.0
        %2522 = vadd.xlane.f32.xlu0 %v2521
        %v2523 = vpop.xlane.xlu0 %2522
        %v2524 = vrcp.pop %v2517
        %v2525 = vmul.f32 %v2517, %v2524
        %v2526 = vsub.f32 1.0, %v2525
        %v2527 = vmul.f32 %v2524, %v2526
        %v2528 = vadd.f32 %v2524, %v2527
        %vm2529 = vweird.f32 %v2517
        %vm2530 = vweird.f32 %v2524
        %vm2531 = vmor %vm2529, %vm2530
        %v2532 = vsel %vm2531, %v2524, %v2528
        %v2533 = vand.u32 2147483647, %v2517
        %vm2534 = vcmp.eq.f32.partialorder %v2533, 8.507059e+37
        %v2535 = vand.u32 %v2517, 2147483648
        %v2536 = vor.u32 1.1754944e-38, %v2535
        %v2537 = vsel %vm2534, %v2536, %v2532
        %v2538 = vrcp.pop %v2520
        %v2539 = vmul.f32 %v2520, %v2538
        %v2540 = vsub.f32 1.0, %v2539
        %v2541 = vmul.f32 %v2538, %v2540
        %v2542 = vadd.f32 %v2538, %v2541
        %vm2543 = vweird.f32 %v2520
        %vm2544 = vweird.f32 %v2538
        %vm2545 = vmor %vm2543, %vm2544
        %v2546 = vsel %vm2545, %v2538, %v2542
        %v2547 = vand.u32 2147483647, %v2520
        %vm2548 = vcmp.eq.f32.partialorder %v2547, 8.507059e+37
        %v2549 = vand.u32 %v2520, 2147483648
        %v2550 = vor.u32 1.1754944e-38, %v2549
        %v2551 = vsel %vm2548, %v2550, %v2546
        %v2552 = vrcp.pop %v2523
        %v2553 = vmul.f32 %v2523, %v2552
        %v2554 = vsub.f32 1.0, %v2553
        %v2555 = vmul.f32 %v2552, %v2554
        %v2556 = vadd.f32 %v2552, %v2555
        %vm2557 = vweird.f32 %v2523
        %vm2558 = vweird.f32 %v2552
        %vm2559 = vmor %vm2557, %vm2558
        %v2560 = vsel %vm2559, %v2552, %v2556
        %v2561 = vand.u32 2147483647, %v2523
        %vm2562 = vcmp.eq.f32.partialorder %v2561, 8.507059e+37
        %v2563 = vand.u32 %v2523, 2147483648
        %v2564 = vor.u32 1.1754944e-38, %v2563
        %v2565 = vsel %vm2562, %v2564, %v2560
        %v2566 = vmul.f32 %v2510, %v2537
        %v2567 = vmul.f32 %v2512, %v2551
        %v2568 = vmul.f32 %v2514, %v2565
        %2569 = vrot.lane.b32.xlu0 %v1822, 104
        %v2570 = vpop.permute.xlu0 %2569
        %2571 = vrot.lane.b32.xlu0 %v1825, 104
        %v2572 = vpop.permute.xlu0 %2571
        %2573 = vrot.lane.b32.xlu0 %v1828, 104
        %v2574 = vpop.permute.xlu0 %2573
        %v2578 = vsel %vm658, %v2566, 0
        %v2581 = vsel %vm658, %v2567, 0
        %v2584 = vsel %vm658, %v2568, 0
        %v2586 = vsel %vm741, %v2574, 0
        %2588 = vmatpush.msra.mxu0 0.0
        %2589 = vmatpush.msra.mxu0 0.0
        %2590 = vmatpush.msra.mxu0 0.0
        %2591 = vmatpush.msra.mxu0 0.0
        %2592 = vmatpush.msra.mxu0 0.0
        %2593 = vmatpush.msra.mxu0 0.0
        %2594 = vmatpush.msra.mxu0 0.0
        %2595 = vmatpush.msra.mxu0 0.0
        %2596 = vmatpush.msra.mxu0 0.0
        %2597 = vmatpush.msra.mxu0 0.0
        %2598 = vmatpush.msra.mxu0 0.0
        %2599 = vmatpush.msra.mxu0 0.0
        %2600 = vmatpush.msra.mxu0 0.0
        %2601 = vmatpush.msra.mxu0 %v2586
        %2602 = vmatpush.msra.mxu0 %v2572
        %2603 = vmatpush.msra.mxu0 %v2570
        %2604 = vmatmul.f32.gmra.mxu0 %v2578
        %v2605 = vpop.f32.mrf.mxu0
        %v2606 = vadd.f32 0.0, %v2605
        %2607 = vmatmul.f32.gmra.mxu0 %v2581
        %v2608 = vpop.f32.mrf.mxu0
        %v2609 = vadd.f32 0.0, %v2608
        %2610 = vmatmul.f32.gmra.mxu0 %v2584
        %v2611 = vpop.f32.mrf.mxu0
        %v2612 = vadd.f32 0.0, %v2611
        %2613 = vdwg.mxu0
        %2614 = vrot.lane.b32.xlu0 %v1696, 32
        %v2615 = vpop.permute.xlu0 %2614
        %v2618 = vsel %vm613, %v2606, 0
        %v2621 = vsel %vm613, %v2609, 0
        %v2624 = vsel %vm613, %v2612, 0
        %2626 = vmatpush.msra.mxu0 0.0
        %2627 = vmatpush.msra.mxu0 0.0
        %2628 = vmatpush.msra.mxu0 0.0
        %2629 = vmatpush.msra.mxu0 0.0
        %2630 = vmatpush.msra.mxu0 0.0
        %2631 = vmatpush.msra.mxu0 0.0
        %2632 = vmatpush.msra.mxu0 0.0
        %2633 = vmatpush.msra.mxu0 0.0
        %2634 = vmatpush.msra.mxu0 0.0
        %2635 = vmatpush.msra.mxu0 0.0
        %2636 = vmatpush.msra.mxu0 0.0
        %2637 = vmatpush.msra.mxu0 0.0
        %2638 = vmatpush.msra.mxu0 0.0
        %2639 = vmatpush.msra.mxu0 0.0
        %2640 = vmatpush.msra.mxu0 0.0
        %2641 = vmatpush.msra.mxu0 %v2615
        %2642 = vmatmul.f32.gmra.mxu0 %v2618
        %v2643 = vpop.f32.mrf.mxu0
        %v2644 = vadd.f32 0.0, %v2643
        %2645 = vmatmul.f32.gmra.mxu0 %v2621
        %v2646 = vpop.f32.mrf.mxu0
        %v2647 = vadd.f32 0.0, %v2646
        %2648 = vmatmul.f32.gmra.mxu0 %v2624
        %v2649 = vpop.f32.mrf.mxu0
        %v2650 = vadd.f32 0.0, %v2649
        %2651 = vdwg.mxu0
        %v2652 = vadd.f32 %v2444, %v2644
        %v2653 = vadd.f32 %v2445, %v2647
        %v2654 = vadd.f32 %v2446, %v2650
        %v2655 = vadd.f32 %v1689, %v2652
        %v2656 = vadd.f32 %v1690, %v2653
        %v2657 = vadd.f32 %v1691, %v2654
        %v2658 = vsel %vm483, %v2655, 0.0
        %2659 = vadd.xlane.f32.xlu0 %v2658
        %v2660 = vpop.xlane.xlu0 %2659
        %v2661 = vsel %vm483, %v2656, 0.0
        %2662 = vadd.xlane.f32.xlu0 %v2661
        %v2663 = vpop.xlane.xlu0 %2662
        %v2664 = vsel %vm1448, %v2657, 0.0
        %2665 = vadd.xlane.f32.xlu0 %v2664
        %v2666 = vpop.xlane.xlu0 %2665
        %v2667 = vmul.f32 %v2660, %v1458
        %v2668 = vmul.f32 %v2663, %v1458
        %v2669 = vmul.f32 %v2666, %v1458
        %v2670 = vsub.f32 %v2655, %v2667
        %v2671 = vsub.f32 %v2656, %v2668
        %v2672 = vsub.f32 %v2657, %v2669
        %v2673 = vmul.f32 %v2670, %v2670
        %v2674 = vmul.f32 %v2671, %v2671
        %v2675 = vmul.f32 %v2672, %v2672
        %v2676 = vsel %vm483, %v2673, 0.0
        %2677 = vadd.xlane.f32.xlu0 %v2676
        %v2678 = vpop.xlane.xlu0 %2677
        %v2679 = vsel %vm483, %v2674, 0.0
        %2680 = vadd.xlane.f32.xlu0 %v2679
        %v2681 = vpop.xlane.xlu0 %2680
        %v2682 = vsel %vm1448, %v2675, 0.0
        %2683 = vadd.xlane.f32.xlu0 %v2682
        %v2684 = vpop.xlane.xlu0 %2683
        %v2685 = vmul.f32 %v2678, %v1458
        %v2686 = vmul.f32 %v2681, %v1458
        %v2687 = vmul.f32 %v2684, %v1458
        %v2688 = vadd.f32 %v2685, 1e-05
        %v2689 = vadd.f32 %v2686, 1e-05
        %v2690 = vadd.f32 %v2687, 1e-05
        %v2691 = vrsqrt.pop %v2688
        %v2692 = vmul.f32 %v2691, %v2688
        %v2693 = vmul.f32 %v2692, %v2691
        %v2694 = vmul.f32 0.5, %v2693
        %v2695 = vsub.f32 1.5, %v2694
        %v2696 = vmul.f32 %v2691, %v2695
        %vm2697 = vweird.f32 %v2688
        %vm2698 = vweird.f32 %v2691
        %vm2699 = vmor %vm2697, %vm2698
        %v2700 = vsel %vm2699, %v2691, %v2696
        %v2701 = vrsqrt.pop %v2689
        %v2702 = vmul.f32 %v2701, %v2689
        %v2703 = vmul.f32 %v2702, %v2701
        %v2704 = vmul.f32 0.5, %v2703
        %v2705 = vsub.f32 1.5, %v2704
        %v2706 = vmul.f32 %v2701, %v2705
        %vm2707 = vweird.f32 %v2689
        %vm2708 = vweird.f32 %v2701
        %vm2709 = vmor %vm2707, %vm2708
        %v2710 = vsel %vm2709, %v2701, %v2706
        %v2711 = vrsqrt.pop %v2690
        %v2712 = vmul.f32 %v2711, %v2690
        %v2713 = vmul.f32 %v2712, %v2711
        %v2714 = vmul.f32 0.5, %v2713
        %v2715 = vsub.f32 1.5, %v2714
        %v2716 = vmul.f32 %v2711, %v2715
        %vm2717 = vweird.f32 %v2690
        %vm2718 = vweird.f32 %v2711
        %vm2719 = vmor %vm2717, %vm2718
        %v2720 = vsel %vm2719, %v2711, %v2716
        %v2721 = vmul.f32 %v2670, %v2700
        %v2722 = vmul.f32 %v2671, %v2710
        %v2723 = vmul.f32 %v2672, %v2720
        %v2724 = vperm.slane %v1698, 4
        %v2725 = vmul.f32 %v2721, %v2724
        %v2726 = vmul.f32 %v2722, %v2724
        %v2727 = vmul.f32 %v2723, %v2724
        %v2728 = vperm.slane %v1698, 5
        %v2729 = vadd.f32 %v2725, %v2728
        %v2730 = vadd.f32 %v2726, %v2728
        %v2731 = vadd.f32 %v2727, %v2728
        %s2732 = scalar_lea.vmem %s4, 32
        %v2733 = vld [vmem:[%s2732] sm:$0xff]
        %v2734 = vld [vmem:[%s2732 + $0x8] sm:$0xff]
        %v2735 = vld [vmem:[%s2732 + $0x10] sm:$0xff]
        %v2736 = vld [vmem:[%s2732 + $0x18] sm:$0xff]
        %s2737 = scalar_lea.vmem %s7, 1
        %v2738 = vld [vmem:[%s2737] sm:$0x1]
        %v2740 = vperm.slane %v2738, 0
        %v2743 = vsel %vm483, %v2729, 0
        %v2746 = vsel %vm483, %v2730, 0
        %v2749 = vsel %vm483, %v2731, 0
        %2751 = vmatpush.msra.mxu0 0.0
        %2752 = vmatpush.msra.mxu0 0.0
        %2753 = vmatpush.msra.mxu0 0.0
        %2754 = vmatpush.msra.mxu0 0.0
        %2755 = vmatpush.msra.mxu0 0.0
        %2756 = vmatpush.msra.mxu0 0.0
        %2757 = vmatpush.msra.mxu0 0.0
        %2758 = vmatpush.msra.mxu0 0.0
        %2759 = vmatpush.msra.mxu0 0.0
        %2760 = vmatpush.msra.mxu0 0.0
        %2761 = vmatpush.msra.mxu0 0.0
        %2762 = vmatpush.msra.mxu0 0.0
        %2763 = vmatpush.msra.mxu0 %v2736
        %2764 = vmatpush.msra.mxu0 %v2735
        %2765 = vmatpush.msra.mxu0 %v2734
        %2766 = vmatpush.msra.mxu0 %v2733
        %2767 = vmatmul.f32.gmra.mxu0 %v2743
        %v2768 = vpop.f32.mrf.mxu0
        %v2769 = vadd.f32 %v2740, %v2768
        %2770 = vmatmul.f32.gmra.mxu0 %v2746
        %v2771 = vpop.f32.mrf.mxu0
        %v2772 = vadd.f32 %v2740, %v2771
        %2773 = vmatmul.f32.gmra.mxu0 %v2749
        %v2774 = vpop.f32.mrf.mxu0
        %v2775 = vadd.f32 %v2740, %v2774
        %2776 = vdwg.mxu0
        %v2777 = vmax.f32 %v2769, 0.0
        %v2778 = vmax.f32 %v2772, 0.0
        %v2779 = vmax.f32 %v2775, 0.0
        %s2780 = scalar_lea.vmem %s5, 64
        %v2781 = vld [vmem:[%s2780] sm:$0xff]
        %v2782 = vld [vmem:[%s2780 + $0x8] sm:$0xff]
        %v2783 = vld [vmem:[%s2780 + $0x10] sm:$0xff]
        %v2784 = vld [vmem:[%s2780 + $0x18] sm:$0xff]
        %v2785 = vld [vmem:[%s2780 + $0x20] sm:$0xff]
        %v2786 = vld [vmem:[%s2780 + $0x28] sm:$0xff]
        %v2787 = vld [vmem:[%s2780 + $0x30] sm:$0xff]
        %v2788 = vld [vmem:[%s2780 + $0x38] sm:$0xff]
        %v2789 = vperm.slane %v1698, 6
        %v2791 = vsel %vm1579, %v2777, 0
        %v2794 = vsel %vm1579, %v2778, 0
        %v2797 = vsel %vm1579, %v2779, 0
        %2799 = vmatpush.msra.mxu0 0.0
        %2800 = vmatpush.msra.mxu0 0.0
        %2801 = vmatpush.msra.mxu0 0.0
        %2802 = vmatpush.msra.mxu0 0.0
        %2803 = vmatpush.msra.mxu0 0.0
        %2804 = vmatpush.msra.mxu0 0.0
        %2805 = vmatpush.msra.mxu0 0.0
        %2806 = vmatpush.msra.mxu0 0.0
        %2807 = vmatpush.msra.mxu0 %v2788
        %2808 = vmatpush.msra.mxu0 %v2787
        %2809 = vmatpush.msra.mxu0 %v2786
        %2810 = vmatpush.msra.mxu0 %v2785
        %2811 = vmatpush.msra.mxu0 %v2784
        %2812 = vmatpush.msra.mxu0 %v2783
        %2813 = vmatpush.msra.mxu0 %v2782
        %2814 = vmatpush.msra.mxu0 %v2781
        %2815 = vmatmul.f32.gmra.mxu0 %v2791
        %v2816 = vpop.f32.mrf.mxu0
        %v2817 = vadd.f32 %v2789, %v2816
        %2818 = vmatmul.f32.gmra.mxu0 %v2794
        %v2819 = vpop.f32.mrf.mxu0
        %v2820 = vadd.f32 %v2789, %v2819
        %2821 = vmatmul.f32.gmra.mxu0 %v2797
        %v2822 = vpop.f32.mrf.mxu0
        %v2823 = vadd.f32 %v2789, %v2822
        %2824 = vdwg.mxu0
        %v2825 = vadd.f32 %v2729, %v2817
        %v2826 = vadd.f32 %v2730, %v2820
        %v2827 = vadd.f32 %v2731, %v2823
        %v2828 = vsel %vm483, %v2825, 0.0
        %2829 = vadd.xlane.f32.xlu0 %v2828
        %v2830 = vpop.xlane.xlu0 %2829
        %v2831 = vsel %vm483, %v2826, 0.0
        %2832 = vadd.xlane.f32.xlu0 %v2831
        %v2833 = vpop.xlane.xlu0 %2832
        %v2834 = vsel %vm1448, %v2827, 0.0
        %2835 = vadd.xlane.f32.xlu0 %v2834
        %v2836 = vpop.xlane.xlu0 %2835
        %v2837 = vmul.f32 %v2830, %v1458
        %v2838 = vmul.f32 %v2833, %v1458
        %v2839 = vmul.f32 %v2836, %v1458
        %v2840 = vsub.f32 %v2825, %v2837
        %v2841 = vsub.f32 %v2826, %v2838
        %v2842 = vsub.f32 %v2827, %v2839
        %v2843 = vmul.f32 %v2840, %v2840
        %v2844 = vmul.f32 %v2841, %v2841
        %v2845 = vmul.f32 %v2842, %v2842
        %v2846 = vsel %vm483, %v2843, 0.0
        %2847 = vadd.xlane.f32.xlu0 %v2846
        %v2848 = vpop.xlane.xlu0 %2847
        %v2849 = vsel %vm483, %v2844, 0.0
        %2850 = vadd.xlane.f32.xlu0 %v2849
        %v2851 = vpop.xlane.xlu0 %2850
        %v2852 = vsel %vm1448, %v2845, 0.0
        %2853 = vadd.xlane.f32.xlu0 %v2852
        %v2854 = vpop.xlane.xlu0 %2853
        %v2855 = vmul.f32 %v2848, %v1458
        %v2856 = vmul.f32 %v2851, %v1458
        %v2857 = vmul.f32 %v2854, %v1458
        %v2858 = vadd.f32 %v2855, 1e-05
        %v2859 = vadd.f32 %v2856, 1e-05
        %v2860 = vadd.f32 %v2857, 1e-05
        %v2861 = vrsqrt.pop %v2858
        %v2862 = vmul.f32 %v2861, %v2858
        %v2863 = vmul.f32 %v2862, %v2861
        %v2864 = vmul.f32 0.5, %v2863
        %v2865 = vsub.f32 1.5, %v2864
        %v2866 = vmul.f32 %v2861, %v2865
        %vm2867 = vweird.f32 %v2858
        %vm2868 = vweird.f32 %v2861
        %vm2869 = vmor %vm2867, %vm2868
        %v2870 = vsel %vm2869, %v2861, %v2866
        %v2871 = vrsqrt.pop %v2859
        %v2872 = vmul.f32 %v2871, %v2859
        %v2873 = vmul.f32 %v2872, %v2871
        %v2874 = vmul.f32 0.5, %v2873
        %v2875 = vsub.f32 1.5, %v2874
        %v2876 = vmul.f32 %v2871, %v2875
        %vm2877 = vweird.f32 %v2859
        %vm2878 = vweird.f32 %v2871
        %vm2879 = vmor %vm2877, %vm2878
        %v2880 = vsel %vm2879, %v2871, %v2876
        %v2881 = vrsqrt.pop %v2860
        %v2882 = vmul.f32 %v2881, %v2860
        %v2883 = vmul.f32 %v2882, %v2881
        %v2884 = vmul.f32 0.5, %v2883
        %v2885 = vsub.f32 1.5, %v2884
        %v2886 = vmul.f32 %v2881, %v2885
        %vm2887 = vweird.f32 %v2860
        %vm2888 = vweird.f32 %v2881
        %vm2889 = vmor %vm2887, %vm2888
        %v2890 = vsel %vm2889, %v2881, %v2886
        %v2891 = vmul.f32 %v2840, %v2870
        %v2892 = vmul.f32 %v2841, %v2880
        %v2893 = vmul.f32 %v2842, %v2890
        %v2894 = vperm.slane %v1698, 7
        %v2895 = vmul.f32 %v2891, %v2894
        %v2896 = vmul.f32 %v2892, %v2894
        %v2897 = vmul.f32 %v2893, %v2894
        %v2898 = vperm.slane %v1699, 0
        %v2899 = vadd.f32 %v2895, %v2898
        %v2900 = vadd.f32 %v2896, %v2898
        %v2901 = vadd.f32 %v2897, %v2898
        %v2902 = vadd.f32 %v2899, %v469
        %v2903 = vadd.f32 %v2900, %v470
        %v2904 = vadd.f32 %v2901, %v471
        %v2905 = vld [vmem:[%s8] sm:$0xff]
        %v2906 = vld [vmem:[%s8 + $0x8] sm:$0xff]
        %v2907 = vld [vmem:[%s8 + $0x10] sm:$0xff]
        %v2908 = vld [vmem:[%s8 + $0x18] sm:$0xff]
        %v2909 = vld [vmem:[%s8 + $0x20] sm:$0xff]
        %v2910 = vld [vmem:[%s8 + $0x28] sm:$0xff]
        %v2911 = vld [vmem:[%s8 + $0x30] sm:$0xff]
        %v2912 = vld [vmem:[%s8 + $0x38] sm:$0xff]
        %v2913 = vld [vmem:[%s11] sm:$0xff]
        %v2914 = vld [vmem:[%s11 + $0x8] sm:$0x7f]
        %v2915 = vadd.f32 %v472, 0.0
        %v2916 = vperm.slane %v2913, 0
        %v2918 = vsel %vm483, %v2915, 0
        %2920 = vmatpush.msra.mxu0 0.0
        %2921 = vmatpush.msra.mxu0 0.0
        %2922 = vmatpush.msra.mxu0 0.0
        %2923 = vmatpush.msra.mxu0 0.0
        %2924 = vmatpush.msra.mxu0 0.0
        %2925 = vmatpush.msra.mxu0 0.0
        %2926 = vmatpush.msra.mxu0 0.0
        %2927 = vmatpush.msra.mxu0 0.0
        %2928 = vmatpush.msra.mxu0 0.0
        %2929 = vmatpush.msra.mxu0 0.0
        %2930 = vmatpush.msra.mxu0 0.0
        %2931 = vmatpush.msra.mxu0 0.0
        %2932 = vmatpush.msra.mxu0 %v2911
        %2933 = vmatpush.msra.mxu0 %v2909
        %2934 = vmatpush.msra.mxu0 %v2907
        %2935 = vmatpush.msra.mxu0 %v2905
        %2936 = vmatmul.f32.gmra.mxu0 %v2918
        %v2937 = vpop.f32.mrf.mxu0
        %v2938 = vadd.f32 %v2916, %v2937
        %2939 = vdwg.mxu0
        %v2940 = vperm.slane %v2913, 1
        %2945 = vrot.lane.b32.xlu0 %v2905, 96
        %v2946 = vpop.permute.xlu0 %2945
        %2947 = vrot.lane.b32.xlu0 %v2907, 96
        %v2948 = vpop.permute.xlu0 %2947
        %2949 = vrot.lane.b32.xlu0 %v2909, 96
        %v2950 = vpop.permute.xlu0 %2949
        %2951 = vrot.lane.b32.xlu0 %v2911, 96
        %v2952 = vpop.permute.xlu0 %2951
        %2957 = vmatpush.msra.mxu0 0.0
        %2958 = vmatpush.msra.mxu0 0.0
        %2959 = vmatpush.msra.mxu0 0.0
        %2960 = vmatpush.msra.mxu0 0.0
        %2961 = vmatpush.msra.mxu0 0.0
        %2962 = vmatpush.msra.mxu0 0.0
        %2963 = vmatpush.msra.mxu0 0.0
        %2964 = vmatpush.msra.mxu0 0.0
        %2965 = vmatpush.msra.mxu0 0.0
        %2966 = vmatpush.msra.mxu0 0.0
        %2967 = vmatpush.msra.mxu0 0.0
        %2968 = vmatpush.msra.mxu0 0.0
        %2969 = vmatpush.msra.mxu0 %v2952
        %2970 = vmatpush.msra.mxu0 %v2950
        %2971 = vmatpush.msra.mxu0 %v2948
        %2972 = vmatpush.msra.mxu0 %v2946
        %2973 = vmatmul.f32.gmra.mxu0 %v2918
        %v2974 = vpop.f32.mrf.mxu0
        %v2975 = vadd.f32 %v2940, %v2974
        %2976 = vdwg.mxu0
        %v2977 = vperm.slane %v2913, 2
        %2978 = vrot.lane.b32.xlu0 %v2905, 64
        %v2979 = vpop.permute.xlu0 %2978
        %2980 = vrot.lane.b32.xlu0 %v2907, 64
        %v2981 = vpop.permute.xlu0 %2980
        %2982 = vrot.lane.b32.xlu0 %v2909, 64
        %v2983 = vpop.permute.xlu0 %2982
        %2984 = vrot.lane.b32.xlu0 %v2911, 64
        %v2985 = vpop.permute.xlu0 %2984
        %v2991 = vsel %vm483, 0.0, 0
        %2993 = vmatpush.msra.mxu0 0.0
        %2994 = vmatpush.msra.mxu0 0.0
        %2995 = vmatpush.msra.mxu0 0.0
        %2996 = vmatpush.msra.mxu0 0.0
        %2997 = vmatpush.msra.mxu0 0.0
        %2998 = vmatpush.msra.mxu0 0.0
        %2999 = vmatpush.msra.mxu0 0.0
        %3000 = vmatpush.msra.mxu0 0.0
        %3001 = vmatpush.msra.mxu0 0.0
        %3002 = vmatpush.msra.mxu0 0.0
        %3003 = vmatpush.msra.mxu0 0.0
        %3004 = vmatpush.msra.mxu0 0.0
        %3005 = vmatpush.msra.mxu0 %v2985
        %3006 = vmatpush.msra.mxu0 %v2983
        %3007 = vmatpush.msra.mxu0 %v2981
        %3008 = vmatpush.msra.mxu0 %v2979
        %3009 = vmatmul.f32.gmra.mxu0 %v2991
        %v3010 = vpop.f32.mrf.mxu0
        %v3011 = vadd.f32 %v2977, %v3010
        %3012 = vdwg.mxu0
        %v3013 = vmul.f32 %v2938, 0.35355338
        %v3015 = vsel %vm613, %v3013, 0
        %v3018 = vsel %vm613, %v2975, 0
        %3020 = vmatpush.xpose.msra.mxu0 0.0
        %3021 = vmatpush.xpose.msra.mxu0 0.0
        %3022 = vmatpush.xpose.msra.mxu0 0.0
        %3023 = vmatpush.xpose.msra.mxu0 0.0
        %3024 = vmatpush.xpose.msra.mxu0 0.0
        %3025 = vmatpush.xpose.msra.mxu0 0.0
        %3026 = vmatpush.xpose.msra.mxu0 0.0
        %3027 = vmatpush.xpose.msra.mxu0 0.0
        %3028 = vmatpush.xpose.msra.mxu0 0.0
        %3029 = vmatpush.xpose.msra.mxu0 0.0
        %3030 = vmatpush.xpose.msra.mxu0 0.0
        %3031 = vmatpush.xpose.msra.mxu0 0.0
        %3032 = vmatpush.xpose.msra.mxu0 0.0
        %3033 = vmatpush.xpose.msra.mxu0 0.0
        %3034 = vmatpush.xpose.msra.mxu0 0.0
        %3035 = vmatpush.xpose.msra.mxu0 %v3018
        %3036 = vmatmul.f32.gmra.mxu0 %v3015
        %v3037 = vpop.f32.mrf.mxu0
        %v3038 = vadd.f32 0.0, %v3037
        %3039 = vdwg.mxu0
        %v3040 = vsel %vm613, %v3038, -inf
        %3041 = vmax.xlane.f32.xlu0 %v3040
        %v3042 = vpop.xlane.xlu0 %3041
        %v3043 = vsub.f32 %v3038, %v3042
        %v3044 = vmul.f32 %v3043, 1.442695
        %v3045 = vpow.pop %v3044
        %v3046 = vsel %vm613, %v3045, 0.0
        %3047 = vadd.xlane.f32.xlu0 %v3046
        %v3048 = vpop.xlane.xlu0 %3047
        %v3049 = vrcp.pop %v3048
        %v3050 = vmul.f32 %v3048, %v3049
        %v3051 = vsub.f32 1.0, %v3050
        %v3052 = vmul.f32 %v3049, %v3051
        %v3053 = vadd.f32 %v3049, %v3052
        %vm3054 = vweird.f32 %v3048
        %vm3055 = vweird.f32 %v3049
        %vm3056 = vmor %vm3054, %vm3055
        %v3057 = vsel %vm3056, %v3049, %v3053
        %v3058 = vand.u32 2147483647, %v3048
        %vm3059 = vcmp.eq.f32.partialorder %v3058, 8.507059e+37
        %v3060 = vand.u32 %v3048, 2147483648
        %v3061 = vor.u32 1.1754944e-38, %v3060
        %v3062 = vsel %vm3059, %v3061, %v3057
        %v3063 = vmul.f32 %v3045, %v3062
        %v3065 = vsel %vm613, %v3063, 0
        %3067 = vmatpush.msra.mxu0 0.0
        %3068 = vmatpush.msra.mxu0 0.0
        %3069 = vmatpush.msra.mxu0 0.0
        %3070 = vmatpush.msra.mxu0 0.0
        %3071 = vmatpush.msra.mxu0 0.0
        %3072 = vmatpush.msra.mxu0 0.0
        %3073 = vmatpush.msra.mxu0 0.0
        %3074 = vmatpush.msra.mxu0 0.0
        %3075 = vmatpush.msra.mxu0 0.0
        %3076 = vmatpush.msra.mxu0 0.0
        %3077 = vmatpush.msra.mxu0 0.0
        %3078 = vmatpush.msra.mxu0 0.0
        %3079 = vmatpush.msra.mxu0 0.0
        %3080 = vmatpush.msra.mxu0 0.0
        %3081 = vmatpush.msra.mxu0 0.0
        %3082 = vmatpush.msra.mxu0 %v3011
        %3083 = vmatmul.f32.gmra.mxu0 %v3065
        %v3084 = vpop.f32.mrf.mxu0
        %v3085 = vadd.f32 0.0, %v3084
        %3086 = vdwg.mxu0
        %3087 = vrot.lane.b32.xlu0 %v2905, 32
        %v3088 = vpop.permute.xlu0 %3087
        %v3091 = vsel %vm613, %v3085, 0
        %3093 = vmatpush.msra.mxu0 0.0
        %3094 = vmatpush.msra.mxu0 0.0
        %3095 = vmatpush.msra.mxu0 0.0
        %3096 = vmatpush.msra.mxu0 0.0
        %3097 = vmatpush.msra.mxu0 0.0
        %3098 = vmatpush.msra.mxu0 0.0
        %3099 = vmatpush.msra.mxu0 0.0
        %3100 = vmatpush.msra.mxu0 0.0
        %3101 = vmatpush.msra.mxu0 0.0
        %3102 = vmatpush.msra.mxu0 0.0
        %3103 = vmatpush.msra.mxu0 0.0
        %3104 = vmatpush.msra.mxu0 0.0
        %3105 = vmatpush.msra.mxu0 0.0
        %3106 = vmatpush.msra.mxu0 0.0
        %3107 = vmatpush.msra.mxu0 0.0
        %3108 = vmatpush.msra.mxu0 %v3088
        %3109 = vmatmul.f32.gmra.mxu0 %v3091
        %v3110 = vpop.f32.mrf.mxu0
        %v3111 = vadd.f32 0.0, %v3110
        %3112 = vdwg.mxu0
        %v3113 = vperm.slane %v2913, 3
        %v3114 = vadd.f32 %v3113, %v3111
        %3115 = vrot.lane.b32.xlu0 %v3013, 120
        %v3116 = vpop.permute.xlu0 %3115
        %3117 = vrot.lane.b32.xlu0 %v2975, 120
        %v3118 = vpop.permute.xlu0 %3117
        %v3119 = vsel %vm613, %v3116, 0
        %v3121 = vsel %vm613, %v3118, 0
        %3123 = vmatpush.xpose.msra.mxu0 0.0
        %3124 = vmatpush.xpose.msra.mxu0 0.0
        %3125 = vmatpush.xpose.msra.mxu0 0.0
        %3126 = vmatpush.xpose.msra.mxu0 0.0
        %3127 = vmatpush.xpose.msra.mxu0 0.0
        %3128 = vmatpush.xpose.msra.mxu0 0.0
        %3129 = vmatpush.xpose.msra.mxu0 0.0
        %3130 = vmatpush.xpose.msra.mxu0 0.0
        %3131 = vmatpush.xpose.msra.mxu0 0.0
        %3132 = vmatpush.xpose.msra.mxu0 0.0
        %3133 = vmatpush.xpose.msra.mxu0 0.0
        %3134 = vmatpush.xpose.msra.mxu0 0.0
        %3135 = vmatpush.xpose.msra.mxu0 0.0
        %3136 = vmatpush.xpose.msra.mxu0 0.0
        %3137 = vmatpush.xpose.msra.mxu0 0.0
        %3138 = vmatpush.xpose.msra.mxu0 %v3121
        %3139 = vmatmul.f32.gmra.mxu0 %v3119
        %v3140 = vpop.f32.mrf.mxu0
        %v3141 = vadd.f32 0.0, %v3140
        %3142 = vdwg.mxu0
        %v3143 = vsel %vm613, %v3141, -inf
        %3144 = vmax.xlane.f32.xlu0 %v3143
        %v3145 = vpop.xlane.xlu0 %3144
        %v3146 = vsub.f32 %v3141, %v3145
        %v3147 = vmul.f32 %v3146, 1.442695
        %v3148 = vpow.pop %v3147
        %v3149 = vsel %vm613, %v3148, 0.0
        %3150 = vadd.xlane.f32.xlu0 %v3149
        %v3151 = vpop.xlane.xlu0 %3150
        %v3152 = vrcp.pop %v3151
        %v3153 = vmul.f32 %v3151, %v3152
        %v3154 = vsub.f32 1.0, %v3153
        %v3155 = vmul.f32 %v3152, %v3154
        %v3156 = vadd.f32 %v3152, %v3155
        %vm3157 = vweird.f32 %v3151
        %vm3158 = vweird.f32 %v3152
        %vm3159 = vmor %vm3157, %vm3158
        %v3160 = vsel %vm3159, %v3152, %v3156
        %v3161 = vand.u32 2147483647, %v3151
        %vm3162 = vcmp.eq.f32.partialorder %v3161, 8.507059e+37
        %v3163 = vand.u32 %v3151, 2147483648
        %v3164 = vor.u32 1.1754944e-38, %v3163
        %v3165 = vsel %vm3162, %v3164, %v3160
        %v3166 = vmul.f32 %v3148, %v3165
        %3168 = vrot.lane.b32.xlu0 %v3011, 120
        %v3169 = vpop.permute.xlu0 %3168
        %v3172 = vsel %vm613, %v3166, 0
        %3174 = vmatpush.msra.mxu0 0.0
        %3175 = vmatpush.msra.mxu0 0.0
        %3176 = vmatpush.msra.mxu0 0.0
        %3177 = vmatpush.msra.mxu0 0.0
        %3178 = vmatpush.msra.mxu0 0.0
        %3179 = vmatpush.msra.mxu0 0.0
        %3180 = vmatpush.msra.mxu0 0.0
        %3181 = vmatpush.msra.mxu0 0.0
        %3182 = vmatpush.msra.mxu0 0.0
        %3183 = vmatpush.msra.mxu0 0.0
        %3184 = vmatpush.msra.mxu0 0.0
        %3185 = vmatpush.msra.mxu0 0.0
        %3186 = vmatpush.msra.mxu0 0.0
        %3187 = vmatpush.msra.mxu0 0.0
        %3188 = vmatpush.msra.mxu0 0.0
        %3189 = vmatpush.msra.mxu0 %v3169
        %3190 = vmatmul.f32.gmra.mxu0 %v3172
        %v3191 = vpop.f32.mrf.mxu0
        %v3192 = vadd.f32 0.0, %v3191
        %3193 = vdwg.mxu0
        %3194 = vrot.lane.b32.xlu0 %v2907, 32
        %v3195 = vpop.permute.xlu0 %3194
        %v3198 = vsel %vm613, %v3192, 0
        %3200 = vmatpush.msra.mxu0 0.0
        %3201 = vmatpush.msra.mxu0 0.0
        %3202 = vmatpush.msra.mxu0 0.0
        %3203 = vmatpush.msra.mxu0 0.0
        %3204 = vmatpush.msra.mxu0 0.0
        %3205 = vmatpush.msra.mxu0 0.0
        %3206 = vmatpush.msra.mxu0 0.0
        %3207 = vmatpush.msra.mxu0 0.0
        %3208 = vmatpush.msra.mxu0 0.0
        %3209 = vmatpush.msra.mxu0 0.0
        %3210 = vmatpush.msra.mxu0 0.0
        %3211 = vmatpush.msra.mxu0 0.0
        %3212 = vmatpush.msra.mxu0 0.0
        %3213 = vmatpush.msra.mxu0 0.0
        %3214 = vmatpush.msra.mxu0 0.0
        %3215 = vmatpush.msra.mxu0 %v3195
        %3216 = vmatmul.f32.gmra.mxu0 %v3198
        %v3217 = vpop.f32.mrf.mxu0
        %v3218 = vadd.f32 0.0, %v3217
        %3219 = vdwg.mxu0
        %v3220 = vadd.f32 %v3114, %v3218
        %3221 = vrot.lane.b32.xlu0 %v3013, 112
        %v3222 = vpop.permute.xlu0 %3221
        %3223 = vrot.lane.b32.xlu0 %v2975, 112
        %v3224 = vpop.permute.xlu0 %3223
        %v3225 = vsel %vm613, %v3222, 0
        %v3227 = vsel %vm613, %v3224, 0
        %3229 = vmatpush.xpose.msra.mxu0 0.0
        %3230 = vmatpush.xpose.msra.mxu0 0.0
        %3231 = vmatpush.xpose.msra.mxu0 0.0
        %3232 = vmatpush.xpose.msra.mxu0 0.0
        %3233 = vmatpush.xpose.msra.mxu0 0.0
        %3234 = vmatpush.xpose.msra.mxu0 0.0
        %3235 = vmatpush.xpose.msra.mxu0 0.0
        %3236 = vmatpush.xpose.msra.mxu0 0.0
        %3237 = vmatpush.xpose.msra.mxu0 0.0
        %3238 = vmatpush.xpose.msra.mxu0 0.0
        %3239 = vmatpush.xpose.msra.mxu0 0.0
        %3240 = vmatpush.xpose.msra.mxu0 0.0
        %3241 = vmatpush.xpose.msra.mxu0 0.0
        %3242 = vmatpush.xpose.msra.mxu0 0.0
        %3243 = vmatpush.xpose.msra.mxu0 0.0
        %3244 = vmatpush.xpose.msra.mxu0 %v3227
        %3245 = vmatmul.f32.gmra.mxu0 %v3225
        %v3246 = vpop.f32.mrf.mxu0
        %v3247 = vadd.f32 0.0, %v3246
        %3248 = vdwg.mxu0
        %v3249 = vsel %vm613, %v3247, -inf
        %3250 = vmax.xlane.f32.xlu0 %v3249
        %v3251 = vpop.xlane.xlu0 %3250
        %v3252 = vsub.f32 %v3247, %v3251
        %v3253 = vmul.f32 %v3252, 1.442695
        %v3254 = vpow.pop %v3253
        %v3255 = vsel %vm613, %v3254, 0.0
        %3256 = vadd.xlane.f32.xlu0 %v3255
        %v3257 = vpop.xlane.xlu0 %3256
        %v3258 = vrcp.pop %v3257
        %v3259 = vmul.f32 %v3257, %v3258
        %v3260 = vsub.f32 1.0, %v3259
        %v3261 = vmul.f32 %v3258, %v3260
        %v3262 = vadd.f32 %v3258, %v3261
        %vm3263 = vweird.f32 %v3257
        %vm3264 = vweird.f32 %v3258
        %vm3265 = vmor %vm3263, %vm3264
        %v3266 = vsel %vm3265, %v3258, %v3262
        %v3267 = vand.u32 2147483647, %v3257
        %vm3268 = vcmp.eq.f32.partialorder %v3267, 8.507059e+37
        %v3269 = vand.u32 %v3257, 2147483648
        %v3270 = vor.u32 1.1754944e-38, %v3269
        %v3271 = vsel %vm3268, %v3270, %v3266
        %v3272 = vmul.f32 %v3254, %v3271
        %3273 = vrot.lane.b32.xlu0 %v3011, 112
        %v3274 = vpop.permute.xlu0 %3273
        %v3277 = vsel %vm613, %v3272, 0
        %3279 = vmatpush.msra.mxu0 0.0
        %3280 = vmatpush.msra.mxu0 0.0
        %3281 = vmatpush.msra.mxu0 0.0
        %3282 = vmatpush.msra.mxu0 0.0
        %3283 = vmatpush.msra.mxu0 0.0
        %3284 = vmatpush.msra.mxu0 0.0
        %3285 = vmatpush.msra.mxu0 0.0
        %3286 = vmatpush.msra.mxu0 0.0
        %3287 = vmatpush.msra.mxu0 0.0
        %3288 = vmatpush.msra.mxu0 0.0
        %3289 = vmatpush.msra.mxu0 0.0
        %3290 = vmatpush.msra.mxu0 0.0
        %3291 = vmatpush.msra.mxu0 0.0
        %3292 = vmatpush.msra.mxu0 0.0
        %3293 = vmatpush.msra.mxu0 0.0
        %3294 = vmatpush.msra.mxu0 %v3274
        %3295 = vmatmul.f32.gmra.mxu0 %v3277
        %v3296 = vpop.f32.mrf.mxu0
        %v3297 = vadd.f32 0.0, %v3296
        %3298 = vdwg.mxu0
        %3299 = vrot.lane.b32.xlu0 %v2909, 32
        %v3300 = vpop.permute.xlu0 %3299
        %v3303 = vsel %vm613, %v3297, 0
        %3305 = vmatpush.msra.mxu0 0.0
        %3306 = vmatpush.msra.mxu0 0.0
        %3307 = vmatpush.msra.mxu0 0.0
        %3308 = vmatpush.msra.mxu0 0.0
        %3309 = vmatpush.msra.mxu0 0.0
        %3310 = vmatpush.msra.mxu0 0.0
        %3311 = vmatpush.msra.mxu0 0.0
        %3312 = vmatpush.msra.mxu0 0.0
        %3313 = vmatpush.msra.mxu0 0.0
        %3314 = vmatpush.msra.mxu0 0.0
        %3315 = vmatpush.msra.mxu0 0.0
        %3316 = vmatpush.msra.mxu0 0.0
        %3317 = vmatpush.msra.mxu0 0.0
        %3318 = vmatpush.msra.mxu0 0.0
        %3319 = vmatpush.msra.mxu0 0.0
        %3320 = vmatpush.msra.mxu0 %v3300
        %3321 = vmatmul.f32.gmra.mxu0 %v3303
        %v3322 = vpop.f32.mrf.mxu0
        %v3323 = vadd.f32 0.0, %v3322
        %3324 = vdwg.mxu0
        %v3325 = vadd.f32 %v3220, %v3323
        %3326 = vrot.lane.b32.xlu0 %v3013, 104
        %v3327 = vpop.permute.xlu0 %3326
        %3328 = vrot.lane.b32.xlu0 %v2975, 104
        %v3329 = vpop.permute.xlu0 %3328
        %v3330 = vsel %vm613, %v3327, 0
        %v3332 = vsel %vm613, %v3329, 0
        %3334 = vmatpush.xpose.msra.mxu0 0.0
        %3335 = vmatpush.xpose.msra.mxu0 0.0
        %3336 = vmatpush.xpose.msra.mxu0 0.0
        %3337 = vmatpush.xpose.msra.mxu0 0.0
        %3338 = vmatpush.xpose.msra.mxu0 0.0
        %3339 = vmatpush.xpose.msra.mxu0 0.0
        %3340 = vmatpush.xpose.msra.mxu0 0.0
        %3341 = vmatpush.xpose.msra.mxu0 0.0
        %3342 = vmatpush.xpose.msra.mxu0 0.0
        %3343 = vmatpush.xpose.msra.mxu0 0.0
        %3344 = vmatpush.xpose.msra.mxu0 0.0
        %3345 = vmatpush.xpose.msra.mxu0 0.0
        %3346 = vmatpush.xpose.msra.mxu0 0.0
        %3347 = vmatpush.xpose.msra.mxu0 0.0
        %3348 = vmatpush.xpose.msra.mxu0 0.0
        %3349 = vmatpush.xpose.msra.mxu0 %v3332
        %3350 = vmatmul.f32.gmra.mxu0 %v3330
        %v3351 = vpop.f32.mrf.mxu0
        %v3352 = vadd.f32 0.0, %v3351
        %3353 = vdwg.mxu0
        %v3354 = vsel %vm613, %v3352, -inf
        %3355 = vmax.xlane.f32.xlu0 %v3354
        %v3356 = vpop.xlane.xlu0 %3355
        %v3357 = vsub.f32 %v3352, %v3356
        %v3358 = vmul.f32 %v3357, 1.442695
        %v3359 = vpow.pop %v3358
        %v3360 = vsel %vm613, %v3359, 0.0
        %3361 = vadd.xlane.f32.xlu0 %v3360
        %v3362 = vpop.xlane.xlu0 %3361
        %v3363 = vrcp.pop %v3362
        %v3364 = vmul.f32 %v3362, %v3363
        %v3365 = vsub.f32 1.0, %v3364
        %v3366 = vmul.f32 %v3363, %v3365
        %v3367 = vadd.f32 %v3363, %v3366
        %vm3368 = vweird.f32 %v3362
        %vm3369 = vweird.f32 %v3363
        %vm3370 = vmor %vm3368, %vm3369
        %v3371 = vsel %vm3370, %v3363, %v3367
        %v3372 = vand.u32 2147483647, %v3362
        %vm3373 = vcmp.eq.f32.partialorder %v3372, 8.507059e+37
        %v3374 = vand.u32 %v3362, 2147483648
        %v3375 = vor.u32 1.1754944e-38, %v3374
        %v3376 = vsel %vm3373, %v3375, %v3371
        %v3377 = vmul.f32 %v3359, %v3376
        %3378 = vrot.lane.b32.xlu0 %v3011, 104
        %v3379 = vpop.permute.xlu0 %3378
        %v3382 = vsel %vm613, %v3377, 0
        %3384 = vmatpush.msra.mxu0 0.0
        %3385 = vmatpush.msra.mxu0 0.0
        %3386 = vmatpush.msra.mxu0 0.0
        %3387 = vmatpush.msra.mxu0 0.0
        %3388 = vmatpush.msra.mxu0 0.0
        %3389 = vmatpush.msra.mxu0 0.0
        %3390 = vmatpush.msra.mxu0 0.0
        %3391 = vmatpush.msra.mxu0 0.0
        %3392 = vmatpush.msra.mxu0 0.0
        %3393 = vmatpush.msra.mxu0 0.0
        %3394 = vmatpush.msra.mxu0 0.0
        %3395 = vmatpush.msra.mxu0 0.0
        %3396 = vmatpush.msra.mxu0 0.0
        %3397 = vmatpush.msra.mxu0 0.0
        %3398 = vmatpush.msra.mxu0 0.0
        %3399 = vmatpush.msra.mxu0 %v3379
        %3400 = vmatmul.f32.gmra.mxu0 %v3382
        %v3401 = vpop.f32.mrf.mxu0
        %v3402 = vadd.f32 0.0, %v3401
        %3403 = vdwg.mxu0
        %3404 = vrot.lane.b32.xlu0 %v2911, 32
        %v3405 = vpop.permute.xlu0 %3404
        %v3408 = vsel %vm613, %v3402, 0
        %3410 = vmatpush.msra.mxu0 0.0
        %3411 = vmatpush.msra.mxu0 0.0
        %3412 = vmatpush.msra.mxu0 0.0
        %3413 = vmatpush.msra.mxu0 0.0
        %3414 = vmatpush.msra.mxu0 0.0
        %3415 = vmatpush.msra.mxu0 0.0
        %3416 = vmatpush.msra.mxu0 0.0
        %3417 = vmatpush.msra.mxu0 0.0
        %3418 = vmatpush.msra.mxu0 0.0
        %3419 = vmatpush.msra.mxu0 0.0
        %3420 = vmatpush.msra.mxu0 0.0
        %3421 = vmatpush.msra.mxu0 0.0
        %3422 = vmatpush.msra.mxu0 0.0
        %3423 = vmatpush.msra.mxu0 0.0
        %3424 = vmatpush.msra.mxu0 0.0
        %3425 = vmatpush.msra.mxu0 %v3405
        %3426 = vmatmul.f32.gmra.mxu0 %v3408
        %v3427 = vpop.f32.mrf.mxu0
        %v3428 = vadd.f32 0.0, %v3427
        %3429 = vdwg.mxu0
        %v3430 = vadd.f32 %v3325, %v3428
        %v3431 = vadd.f32 %v3430, 0.0
        %v3432 = vsel %vm483, %v3431, 0.0
        %3433 = vadd.xlane.f32.xlu0 %v3432
        %v3434 = vpop.xlane.xlu0 %3433
        %v3435 = vmul.f32 %v3434, %v1458
        %v3436 = vsub.f32 %v3431, %v3435
        %v3437 = vmul.f32 %v3436, %v3436
        %v3438 = vsel %vm483, %v3437, 0.0
        %3439 = vadd.xlane.f32.xlu0 %v3438
        %v3440 = vpop.xlane.xlu0 %3439
        %v3441 = vmul.f32 %v3440, %v1458
        %v3442 = vadd.f32 %v3441, 1e-05
        %v3443 = vrsqrt.pop %v3442
        %v3444 = vmul.f32 %v3443, %v3442
        %v3445 = vmul.f32 %v3444, %v3443
        %v3446 = vmul.f32 0.5, %v3445
        %v3447 = vsub.f32 1.5, %v3446
        %v3448 = vmul.f32 %v3443, %v3447
        %vm3449 = vweird.f32 %v3442
        %vm3450 = vweird.f32 %v3443
        %vm3451 = vmor %vm3449, %vm3450
        %v3452 = vsel %vm3451, %v3443, %v3448
        %v3453 = vmul.f32 %v3436, %v3452
        %v3454 = vperm.slane %v2913, 4
        %v3455 = vmul.f32 %v3453, %v3454
        %v3456 = vperm.slane %v2913, 5
        %v3457 = vadd.f32 %v3455, %v3456
        %v3458 = vadd.f32 %v3457, %v472
        %v3459 = vperm.slane %v2913, 6
        %v3461 = vsel %vm483, %v3458, 0
        %3463 = vmatpush.msra.mxu0 0.0
        %3464 = vmatpush.msra.mxu0 0.0
        %3465 = vmatpush.msra.mxu0 0.0
        %3466 = vmatpush.msra.mxu0 0.0
        %3467 = vmatpush.msra.mxu0 0.0
        %3468 = vmatpush.msra.mxu0 0.0
        %3469 = vmatpush.msra.mxu0 0.0
        %3470 = vmatpush.msra.mxu0 0.0
        %3471 = vmatpush.msra.mxu0 0.0
        %3472 = vmatpush.msra.mxu0 0.0
        %3473 = vmatpush.msra.mxu0 0.0
        %3474 = vmatpush.msra.mxu0 0.0
        %3475 = vmatpush.msra.mxu0 %v2912
        %3476 = vmatpush.msra.mxu0 %v2910
        %3477 = vmatpush.msra.mxu0 %v2908
        %3478 = vmatpush.msra.mxu0 %v2906
        %3479 = vmatmul.f32.gmra.mxu0 %v3461
        %v3480 = vpop.f32.mrf.mxu0
        %v3481 = vadd.f32 %v3459, %v3480
        %3482 = vdwg.mxu0
        %v3483 = vperm.slane %v2913, 7
        %3488 = vrot.lane.b32.xlu0 %v2906, 96
        %v3489 = vpop.permute.xlu0 %3488
        %3490 = vrot.lane.b32.xlu0 %v2908, 96
        %v3491 = vpop.permute.xlu0 %3490
        %3492 = vrot.lane.b32.xlu0 %v2910, 96
        %v3493 = vpop.permute.xlu0 %3492
        %3494 = vrot.lane.b32.xlu0 %v2912, 96
        %v3495 = vpop.permute.xlu0 %3494
        %v3501 = vsel %vm483, %v2902, 0
        %v3504 = vsel %vm483, %v2903, 0
        %v3507 = vsel %vm483, %v2904, 0
        %3509 = vmatpush.msra.mxu0 0.0
        %3510 = vmatpush.msra.mxu0 0.0
        %3511 = vmatpush.msra.mxu0 0.0
        %3512 = vmatpush.msra.mxu0 0.0
        %3513 = vmatpush.msra.mxu0 0.0
        %3514 = vmatpush.msra.mxu0 0.0
        %3515 = vmatpush.msra.mxu0 0.0
        %3516 = vmatpush.msra.mxu0 0.0
        %3517 = vmatpush.msra.mxu0 0.0
        %3518 = vmatpush.msra.mxu0 0.0
        %3519 = vmatpush.msra.mxu0 0.0
        %3520 = vmatpush.msra.mxu0 0.0
        %3521 = vmatpush.msra.mxu0 %v3495
        %3522 = vmatpush.msra.mxu0 %v3493
        %3523 = vmatpush.msra.mxu0 %v3491
        %3524 = vmatpush.msra.mxu0 %v3489
        %3525 = vmatmul.f32.gmra.mxu0 %v3501
        %v3526 = vpop.f32.mrf.mxu0
        %v3527 = vadd.f32 %v3483, %v3526
        %3528 = vmatmul.f32.gmra.mxu0 %v3504
        %v3529 = vpop.f32.mrf.mxu0
        %v3530 = vadd.f32 %v3483, %v3529
        %3531 = vmatmul.f32.gmra.mxu0 %v3507
        %v3532 = vpop.f32.mrf.mxu0
        %v3533 = vadd.f32 %v3483, %v3532
        %3534 = vdwg.mxu0
        %v3535 = vperm.slane %v2914, 0
        %3536 = vrot.lane.b32.xlu0 %v2906, 64
        %v3537 = vpop.permute.xlu0 %3536
        %3538 = vrot.lane.b32.xlu0 %v2908, 64
        %v3539 = vpop.permute.xlu0 %3538
        %3540 = vrot.lane.b32.xlu0 %v2910, 64
        %v3541 = vpop.permute.xlu0 %3540
        %3542 = vrot.lane.b32.xlu0 %v2912, 64
        %v3543 = vpop.permute.xlu0 %3542
        %v3549 = vsel %vm483, %v2899, 0
        %v3552 = vsel %vm483, %v2900, 0
        %v3555 = vsel %vm483, %v2901, 0
        %3557 = vmatpush.msra.mxu0 0.0
        %3558 = vmatpush.msra.mxu0 0.0
        %3559 = vmatpush.msra.mxu0 0.0
        %3560 = vmatpush.msra.mxu0 0.0
        %3561 = vmatpush.msra.mxu0 0.0
        %3562 = vmatpush.msra.mxu0 0.0
        %3563 = vmatpush.msra.mxu0 0.0
        %3564 = vmatpush.msra.mxu0 0.0
        %3565 = vmatpush.msra.mxu0 0.0
        %3566 = vmatpush.msra.mxu0 0.0
        %3567 = vmatpush.msra.mxu0 0.0
        %3568 = vmatpush.msra.mxu0 0.0
        %3569 = vmatpush.msra.mxu0 %v3543
        %3570 = vmatpush.msra.mxu0 %v3541
        %3571 = vmatpush.msra.mxu0 %v3539
        %3572 = vmatpush.msra.mxu0 %v3537
        %3573 = vmatmul.f32.gmra.mxu0 %v3549
        %v3574 = vpop.f32.mrf.mxu0
        %v3575 = vadd.f32 %v3535, %v3574
        %3576 = vmatmul.f32.gmra.mxu0 %v3552
        %v3577 = vpop.f32.mrf.mxu0
        %v3578 = vadd.f32 %v3535, %v3577
        %3579 = vmatmul.f32.gmra.mxu0 %v3555
        %v3580 = vpop.f32.mrf.mxu0
        %v3581 = vadd.f32 %v3535, %v3580
        %3582 = vdwg.mxu0
        %v3583 = vmul.f32 %v3481, 0.35355338
        %v3585 = vsel %vm613, %v3583, 0
        %v3588 = vsel %vm613, %v3527, 0
        %v3591 = vsel %vm613, %v3530, 0
        %v3594 = vsel %vm613, %v3533, 0
        %3596 = vmatpush.xpose.msra.mxu0 0.0
        %3597 = vmatpush.xpose.msra.mxu0 0.0
        %3598 = vmatpush.xpose.msra.mxu0 0.0
        %3599 = vmatpush.xpose.msra.mxu0 0.0
        %3600 = vmatpush.xpose.msra.mxu0 0.0
        %3601 = vmatpush.xpose.msra.mxu0 0.0
        %3602 = vmatpush.xpose.msra.mxu0 0.0
        %3603 = vmatpush.xpose.msra.mxu0 0.0
        %3604 = vmatpush.xpose.msra.mxu0 0.0
        %3605 = vmatpush.xpose.msra.mxu0 0.0
        %3606 = vmatpush.xpose.msra.mxu0 0.0
        %3607 = vmatpush.xpose.msra.mxu0 0.0
        %3608 = vmatpush.xpose.msra.mxu0 0.0
        %3609 = vmatpush.xpose.msra.mxu0 %v3594
        %3610 = vmatpush.xpose.msra.mxu0 %v3591
        %3611 = vmatpush.xpose.msra.mxu0 %v3588
        %3612 = vmatmul.f32.gmra.mxu0 %v3585
        %v3613 = vpop.f32.mrf.mxu0
        %v3614 = vadd.f32 0.0, %v3613
        %3615 = vdwg.mxu0
        %v3616 = vsel %vm658, %v3614, -inf
        %3617 = vmax.xlane.f32.xlu0 %v3616
        %v3618 = vpop.xlane.xlu0 %3617
        %v3619 = vsub.f32 %v3614, %v3618
        %v3620 = vmul.f32 %v3619, 1.442695
        %v3621 = vpow.pop %v3620
        %v3622 = vsel %vm658, %v3621, 0.0
        %3623 = vadd.xlane.f32.xlu0 %v3622
        %v3624 = vpop.xlane.xlu0 %3623
        %v3625 = vrcp.pop %v3624
        %v3626 = vmul.f32 %v3624, %v3625
        %v3627 = vsub.f32 1.0, %v3626
        %v3628 = vmul.f32 %v3625, %v3627
        %v3629 = vadd.f32 %v3625, %v3628
        %vm3630 = vweird.f32 %v3624
        %vm3631 = vweird.f32 %v3625
        %vm3632 = vmor %vm3630, %vm3631
        %v3633 = vsel %vm3632, %v3625, %v3629
        %v3634 = vand.u32 2147483647, %v3624
        %vm3635 = vcmp.eq.f32.partialorder %v3634, 8.507059e+37
        %v3636 = vand.u32 %v3624, 2147483648
        %v3637 = vor.u32 1.1754944e-38, %v3636
        %v3638 = vsel %vm3635, %v3637, %v3633
        %v3639 = vmul.f32 %v3621, %v3638
        %v3641 = vsel %vm658, %v3639, 0
        %v3644 = vsel %vm741, %v3581, 0
        %3646 = vmatpush.msra.mxu0 0.0
        %3647 = vmatpush.msra.mxu0 0.0
        %3648 = vmatpush.msra.mxu0 0.0
        %3649 = vmatpush.msra.mxu0 0.0
        %3650 = vmatpush.msra.mxu0 0.0
        %3651 = vmatpush.msra.mxu0 0.0
        %3652 = vmatpush.msra.mxu0 0.0
        %3653 = vmatpush.msra.mxu0 0.0
        %3654 = vmatpush.msra.mxu0 0.0
        %3655 = vmatpush.msra.mxu0 0.0
        %3656 = vmatpush.msra.mxu0 0.0
        %3657 = vmatpush.msra.mxu0 0.0
        %3658 = vmatpush.msra.mxu0 0.0
        %3659 = vmatpush.msra.mxu0 %v3644
        %3660 = vmatpush.msra.mxu0 %v3578
        %3661 = vmatpush.msra.mxu0 %v3575
        %3662 = vmatmul.f32.gmra.mxu0 %v3641
        %v3663 = vpop.f32.mrf.mxu0
        %v3664 = vadd.f32 0.0, %v3663
        %3665 = vdwg.mxu0
        %3666 = vrot.lane.b32.xlu0 %v2906, 32
        %v3667 = vpop.permute.xlu0 %3666
        %v3670 = vsel %vm613, %v3664, 0
        %3672 = vmatpush.msra.mxu0 0.0
        %3673 = vmatpush.msra.mxu0 0.0
        %3674 = vmatpush.msra.mxu0 0.0
        %3675 = vmatpush.msra.mxu0 0.0
        %3676 = vmatpush.msra.mxu0 0.0
        %3677 = vmatpush.msra.mxu0 0.0
        %3678 = vmatpush.msra.mxu0 0.0
        %3679 = vmatpush.msra.mxu0 0.0
        %3680 = vmatpush.msra.mxu0 0.0
        %3681 = vmatpush.msra.mxu0 0.0
        %3682 = vmatpush.msra.mxu0 0.0
        %3683 = vmatpush.msra.mxu0 0.0
        %3684 = vmatpush.msra.mxu0 0.0
        %3685 = vmatpush.msra.mxu0 0.0
        %3686 = vmatpush.msra.mxu0 0.0
        %3687 = vmatpush.msra.mxu0 %v3667
        %3688 = vmatmul.f32.gmra.mxu0 %v3670
        %v3689 = vpop.f32.mrf.mxu0
        %v3690 = vadd.f32 0.0, %v3689
        %3691 = vdwg.mxu0
        %v3692 = vperm.slane %v2914, 1
        %v3693 = vadd.f32 %v3692, %v3690
        %3694 = vrot.lane.b32.xlu0 %v3583, 120
        %v3695 = vpop.permute.xlu0 %3694
        %3696 = vrot.lane.b32.xlu0 %v3527, 120
        %v3697 = vpop.permute.xlu0 %3696
        %3698 = vrot.lane.b32.xlu0 %v3530, 120
        %v3699 = vpop.permute.xlu0 %3698
        %3700 = vrot.lane.b32.xlu0 %v3533, 120
        %v3701 = vpop.permute.xlu0 %3700
        %v3702 = vsel %vm613, %v3695, 0
        %v3704 = vsel %vm613, %v3697, 0
        %v3706 = vsel %vm613, %v3699, 0
        %v3708 = vsel %vm613, %v3701, 0
        %3710 = vmatpush.xpose.msra.mxu0 0.0
        %3711 = vmatpush.xpose.msra.mxu0 0.0
        %3712 = vmatpush.xpose.msra.mxu0 0.0
        %3713 = vmatpush.xpose.msra.mxu0 0.0
        %3714 = vmatpush.xpose.msra.mxu0 0.0
        %3715 = vmatpush.xpose.msra.mxu0 0.0
        %3716 = vmatpush.xpose.msra.mxu0 0.0
        %3717 = vmatpush.xpose.msra.mxu0 0.0
        %3718 = vmatpush.xpose.msra.mxu0 0.0
        %3719 = vmatpush.xpose.msra.mxu0 0.0
        %3720 = vmatpush.xpose.msra.mxu0 0.0
        %3721 = vmatpush.xpose.msra.mxu0 0.0
        %3722 = vmatpush.xpose.msra.mxu0 0.0
        %3723 = vmatpush.xpose.msra.mxu0 %v3708
        %3724 = vmatpush.xpose.msra.mxu0 %v3706
        %3725 = vmatpush.xpose.msra.mxu0 %v3704
        %3726 = vmatmul.f32.gmra.mxu0 %v3702
        %v3727 = vpop.f32.mrf.mxu0
        %v3728 = vadd.f32 0.0, %v3727
        %3729 = vdwg.mxu0
        %v3730 = vsel %vm658, %v3728, -inf
        %3731 = vmax.xlane.f32.xlu0 %v3730
        %v3732 = vpop.xlane.xlu0 %3731
        %v3733 = vsub.f32 %v3728, %v3732
        %v3734 = vmul.f32 %v3733, 1.442695
        %v3735 = vpow.pop %v3734
        %v3736 = vsel %vm658, %v3735, 0.0
        %3737 = vadd.xlane.f32.xlu0 %v3736
        %v3738 = vpop.xlane.xlu0 %3737
        %v3739 = vrcp.pop %v3738
        %v3740 = vmul.f32 %v3738, %v3739
        %v3741 = vsub.f32 1.0, %v3740
        %v3742 = vmul.f32 %v3739, %v3741
        %v3743 = vadd.f32 %v3739, %v3742
        %vm3744 = vweird.f32 %v3738
        %vm3745 = vweird.f32 %v3739
        %vm3746 = vmor %vm3744, %vm3745
        %v3747 = vsel %vm3746, %v3739, %v3743
        %v3748 = vand.u32 2147483647, %v3738
        %vm3749 = vcmp.eq.f32.partialorder %v3748, 8.507059e+37
        %v3750 = vand.u32 %v3738, 2147483648
        %v3751 = vor.u32 1.1754944e-38, %v3750
        %v3752 = vsel %vm3749, %v3751, %v3747
        %v3753 = vmul.f32 %v3735, %v3752
        %3756 = vrot.lane.b32.xlu0 %v3575, 120
        %v3757 = vpop.permute.xlu0 %3756
        %3758 = vrot.lane.b32.xlu0 %v3578, 120
        %v3759 = vpop.permute.xlu0 %3758
        %3760 = vrot.lane.b32.xlu0 %v3581, 120
        %v3761 = vpop.permute.xlu0 %3760
        %v3765 = vsel %vm658, %v3753, 0
        %v3767 = vsel %vm741, %v3761, 0
        %3769 = vmatpush.msra.mxu0 0.0
        %3770 = vmatpush.msra.mxu0 0.0
        %3771 = vmatpush.msra.mxu0 0.0
        %3772 = vmatpush.msra.mxu0 0.0
        %3773 = vmatpush.msra.mxu0 0.0
        %3774 = vmatpush.msra.mxu0 0.0
        %3775 = vmatpush.msra.mxu0 0.0
        %3776 = vmatpush.msra.mxu0 0.0
        %3777 = vmatpush.msra.mxu0 0.0
        %3778 = vmatpush.msra.mxu0 0.0
        %3779 = vmatpush.msra.mxu0 0.0
        %3780 = vmatpush.msra.mxu0 0.0
        %3781 = vmatpush.msra.mxu0 0.0
        %3782 = vmatpush.msra.mxu0 %v3767
        %3783 = vmatpush.msra.mxu0 %v3759
        %3784 = vmatpush.msra.mxu0 %v3757
        %3785 = vmatmul.f32.gmra.mxu0 %v3765
        %v3786 = vpop.f32.mrf.mxu0
        %v3787 = vadd.f32 0.0, %v3786
        %3788 = vdwg.mxu0
        %3789 = vrot.lane.b32.xlu0 %v2908, 32
        %v3790 = vpop.permute.xlu0 %3789
        %v3793 = vsel %vm613, %v3787, 0
        %3795 = vmatpush.msra.mxu0 0.0
        %3796 = vmatpush.msra.mxu0 0.0
        %3797 = vmatpush.msra.mxu0 0.0
        %3798 = vmatpush.msra.mxu0 0.0
        %3799 = vmatpush.msra.mxu0 0.0
        %3800 = vmatpush.msra.mxu0 0.0
        %3801 = vmatpush.msra.mxu0 0.0
        %3802 = vmatpush.msra.mxu0 0.0
        %3803 = vmatpush.msra.mxu0 0.0
        %3804 = vmatpush.msra.mxu0 0.0
        %3805 = vmatpush.msra.mxu0 0.0
        %3806 = vmatpush.msra.mxu0 0.0
        %3807 = vmatpush.msra.mxu0 0.0
        %3808 = vmatpush.msra.mxu0 0.0
        %3809 = vmatpush.msra.mxu0 0.0
        %3810 = vmatpush.msra.mxu0 %v3790
        %3811 = vmatmul.f32.gmra.mxu0 %v3793
        %v3812 = vpop.f32.mrf.mxu0
        %v3813 = vadd.f32 0.0, %v3812
        %3814 = vdwg.mxu0
        %v3815 = vadd.f32 %v3693, %v3813
        %3816 = vrot.lane.b32.xlu0 %v3583, 112
        %v3817 = vpop.permute.xlu0 %3816
        %3818 = vrot.lane.b32.xlu0 %v3527, 112
        %v3819 = vpop.permute.xlu0 %3818
        %3820 = vrot.lane.b32.xlu0 %v3530, 112
        %v3821 = vpop.permute.xlu0 %3820
        %3822 = vrot.lane.b32.xlu0 %v3533, 112
        %v3823 = vpop.permute.xlu0 %3822
        %v3824 = vsel %vm613, %v3817, 0
        %v3826 = vsel %vm613, %v3819, 0
        %v3828 = vsel %vm613, %v3821, 0
        %v3830 = vsel %vm613, %v3823, 0
        %3832 = vmatpush.xpose.msra.mxu0 0.0
        %3833 = vmatpush.xpose.msra.mxu0 0.0
        %3834 = vmatpush.xpose.msra.mxu0 0.0
        %3835 = vmatpush.xpose.msra.mxu0 0.0
        %3836 = vmatpush.xpose.msra.mxu0 0.0
        %3837 = vmatpush.xpose.msra.mxu0 0.0
        %3838 = vmatpush.xpose.msra.mxu0 0.0
        %3839 = vmatpush.xpose.msra.mxu0 0.0
        %3840 = vmatpush.xpose.msra.mxu0 0.0
        %3841 = vmatpush.xpose.msra.mxu0 0.0
        %3842 = vmatpush.xpose.msra.mxu0 0.0
        %3843 = vmatpush.xpose.msra.mxu0 0.0
        %3844 = vmatpush.xpose.msra.mxu0 0.0
        %3845 = vmatpush.xpose.msra.mxu0 %v3830
        %3846 = vmatpush.xpose.msra.mxu0 %v3828
        %3847 = vmatpush.xpose.msra.mxu0 %v3826
        %3848 = vmatmul.f32.gmra.mxu0 %v3824
        %v3849 = vpop.f32.mrf.mxu0
        %v3850 = vadd.f32 0.0, %v3849
        %3851 = vdwg.mxu0
        %v3852 = vsel %vm658, %v3850, -inf
        %3853 = vmax.xlane.f32.xlu0 %v3852
        %v3854 = vpop.xlane.xlu0 %3853
        %v3855 = vsub.f32 %v3850, %v3854
        %v3856 = vmul.f32 %v3855, 1.442695
        %v3857 = vpow.pop %v3856
        %v3858 = vsel %vm658, %v3857, 0.0
        %3859 = vadd.xlane.f32.xlu0 %v3858
        %v3860 = vpop.xlane.xlu0 %3859
        %v3861 = vrcp.pop %v3860
        %v3862 = vmul.f32 %v3860, %v3861
        %v3863 = vsub.f32 1.0, %v3862
        %v3864 = vmul.f32 %v3861, %v3863
        %v3865 = vadd.f32 %v3861, %v3864
        %vm3866 = vweird.f32 %v3860
        %vm3867 = vweird.f32 %v3861
        %vm3868 = vmor %vm3866, %vm3867
        %v3869 = vsel %vm3868, %v3861, %v3865
        %v3870 = vand.u32 2147483647, %v3860
        %vm3871 = vcmp.eq.f32.partialorder %v3870, 8.507059e+37
        %v3872 = vand.u32 %v3860, 2147483648
        %v3873 = vor.u32 1.1754944e-38, %v3872
        %v3874 = vsel %vm3871, %v3873, %v3869
        %v3875 = vmul.f32 %v3857, %v3874
        %3876 = vrot.lane.b32.xlu0 %v3575, 112
        %v3877 = vpop.permute.xlu0 %3876
        %3878 = vrot.lane.b32.xlu0 %v3578, 112
        %v3879 = vpop.permute.xlu0 %3878
        %3880 = vrot.lane.b32.xlu0 %v3581, 112
        %v3881 = vpop.permute.xlu0 %3880
        %v3885 = vsel %vm658, %v3875, 0
        %v3887 = vsel %vm741, %v3881, 0
        %3889 = vmatpush.msra.mxu0 0.0
        %3890 = vmatpush.msra.mxu0 0.0
        %3891 = vmatpush.msra.mxu0 0.0
        %3892 = vmatpush.msra.mxu0 0.0
        %3893 = vmatpush.msra.mxu0 0.0
        %3894 = vmatpush.msra.mxu0 0.0
        %3895 = vmatpush.msra.mxu0 0.0
        %3896 = vmatpush.msra.mxu0 0.0
        %3897 = vmatpush.msra.mxu0 0.0
        %3898 = vmatpush.msra.mxu0 0.0
        %3899 = vmatpush.msra.mxu0 0.0
        %3900 = vmatpush.msra.mxu0 0.0
        %3901 = vmatpush.msra.mxu0 0.0
        %3902 = vmatpush.msra.mxu0 %v3887
        %3903 = vmatpush.msra.mxu0 %v3879
        %3904 = vmatpush.msra.mxu0 %v3877
        %3905 = vmatmul.f32.gmra.mxu0 %v3885
        %v3906 = vpop.f32.mrf.mxu0
        %v3907 = vadd.f32 0.0, %v3906
        %3908 = vdwg.mxu0
        %3909 = vrot.lane.b32.xlu0 %v2910, 32
        %v3910 = vpop.permute.xlu0 %3909
        %v3913 = vsel %vm613, %v3907, 0
        %3915 = vmatpush.msra.mxu0 0.0
        %3916 = vmatpush.msra.mxu0 0.0
        %3917 = vmatpush.msra.mxu0 0.0
        %3918 = vmatpush.msra.mxu0 0.0
        %3919 = vmatpush.msra.mxu0 0.0
        %3920 = vmatpush.msra.mxu0 0.0
        %3921 = vmatpush.msra.mxu0 0.0
        %3922 = vmatpush.msra.mxu0 0.0
        %3923 = vmatpush.msra.mxu0 0.0
        %3924 = vmatpush.msra.mxu0 0.0
        %3925 = vmatpush.msra.mxu0 0.0
        %3926 = vmatpush.msra.mxu0 0.0
        %3927 = vmatpush.msra.mxu0 0.0
        %3928 = vmatpush.msra.mxu0 0.0
        %3929 = vmatpush.msra.mxu0 0.0
        %3930 = vmatpush.msra.mxu0 %v3910
        %3931 = vmatmul.f32.gmra.mxu0 %v3913
        %v3932 = vpop.f32.mrf.mxu0
        %v3933 = vadd.f32 0.0, %v3932
        %3934 = vdwg.mxu0
        %v3935 = vadd.f32 %v3815, %v3933
        %3936 = vrot.lane.b32.xlu0 %v3583, 104
        %v3937 = vpop.permute.xlu0 %3936
        %3938 = vrot.lane.b32.xlu0 %v3527, 104
        %v3939 = vpop.permute.xlu0 %3938
        %3940 = vrot.lane.b32.xlu0 %v3530, 104
        %v3941 = vpop.permute.xlu0 %3940
        %3942 = vrot.lane.b32.xlu0 %v3533, 104
        %v3943 = vpop.permute.xlu0 %3942
        %v3944 = vsel %vm613, %v3937, 0
        %v3946 = vsel %vm613, %v3939, 0
        %v3948 = vsel %vm613, %v3941, 0
        %v3950 = vsel %vm613, %v3943, 0
        %3952 = vmatpush.xpose.msra.mxu0 0.0
        %3953 = vmatpush.xpose.msra.mxu0 0.0
        %3954 = vmatpush.xpose.msra.mxu0 0.0
        %3955 = vmatpush.xpose.msra.mxu0 0.0
        %3956 = vmatpush.xpose.msra.mxu0 0.0
        %3957 = vmatpush.xpose.msra.mxu0 0.0
        %3958 = vmatpush.xpose.msra.mxu0 0.0
        %3959 = vmatpush.xpose.msra.mxu0 0.0
        %3960 = vmatpush.xpose.msra.mxu0 0.0
        %3961 = vmatpush.xpose.msra.mxu0 0.0
        %3962 = vmatpush.xpose.msra.mxu0 0.0
        %3963 = vmatpush.xpose.msra.mxu0 0.0
        %3964 = vmatpush.xpose.msra.mxu0 0.0
        %3965 = vmatpush.xpose.msra.mxu0 %v3950
        %3966 = vmatpush.xpose.msra.mxu0 %v3948
        %3967 = vmatpush.xpose.msra.mxu0 %v3946
        %3968 = vmatmul.f32.gmra.mxu0 %v3944
        %v3969 = vpop.f32.mrf.mxu0
        %v3970 = vadd.f32 0.0, %v3969
        %3971 = vdwg.mxu0
        %v3972 = vsel %vm658, %v3970, -inf
        %3973 = vmax.xlane.f32.xlu0 %v3972
        %v3974 = vpop.xlane.xlu0 %3973
        %v3975 = vsub.f32 %v3970, %v3974
        %v3976 = vmul.f32 %v3975, 1.442695
        %v3977 = vpow.pop %v3976
        %v3978 = vsel %vm658, %v3977, 0.0
        %3979 = vadd.xlane.f32.xlu0 %v3978
        %v3980 = vpop.xlane.xlu0 %3979
        %v3981 = vrcp.pop %v3980
        %v3982 = vmul.f32 %v3980, %v3981
        %v3983 = vsub.f32 1.0, %v3982
        %v3984 = vmul.f32 %v3981, %v3983
        %v3985 = vadd.f32 %v3981, %v3984
        %vm3986 = vweird.f32 %v3980
        %vm3987 = vweird.f32 %v3981
        %vm3988 = vmor %vm3986, %vm3987
        %v3989 = vsel %vm3988, %v3981, %v3985
        %v3990 = vand.u32 2147483647, %v3980
        %vm3991 = vcmp.eq.f32.partialorder %v3990, 8.507059e+37
        %v3992 = vand.u32 %v3980, 2147483648
        %v3993 = vor.u32 1.1754944e-38, %v3992
        %v3994 = vsel %vm3991, %v3993, %v3989
        %v3995 = vmul.f32 %v3977, %v3994
        %3996 = vrot.lane.b32.xlu0 %v3575, 104
        %v3997 = vpop.permute.xlu0 %3996
        %3998 = vrot.lane.b32.xlu0 %v3578, 104
        %v3999 = vpop.permute.xlu0 %3998
        %4000 = vrot.lane.b32.xlu0 %v3581, 104
        %v4001 = vpop.permute.xlu0 %4000
        %v4005 = vsel %vm658, %v3995, 0
        %v4007 = vsel %vm741, %v4001, 0
        %4009 = vmatpush.msra.mxu0 0.0
        %4010 = vmatpush.msra.mxu0 0.0
        %4011 = vmatpush.msra.mxu0 0.0
        %4012 = vmatpush.msra.mxu0 0.0
        %4013 = vmatpush.msra.mxu0 0.0
        %4014 = vmatpush.msra.mxu0 0.0
        %4015 = vmatpush.msra.mxu0 0.0
        %4016 = vmatpush.msra.mxu0 0.0
        %4017 = vmatpush.msra.mxu0 0.0
        %4018 = vmatpush.msra.mxu0 0.0
        %4019 = vmatpush.msra.mxu0 0.0
        %4020 = vmatpush.msra.mxu0 0.0
        %4021 = vmatpush.msra.mxu0 0.0
        %4022 = vmatpush.msra.mxu0 %v4007
        %4023 = vmatpush.msra.mxu0 %v3999
        %4024 = vmatpush.msra.mxu0 %v3997
        %4025 = vmatmul.f32.gmra.mxu0 %v4005
        %v4026 = vpop.f32.mrf.mxu0
        %v4027 = vadd.f32 0.0, %v4026
        %4028 = vdwg.mxu0
        %4029 = vrot.lane.b32.xlu0 %v2912, 32
        %v4030 = vpop.permute.xlu0 %4029
        %v4033 = vsel %vm613, %v4027, 0
        %4035 = vmatpush.msra.mxu0 0.0
        %4036 = vmatpush.msra.mxu0 0.0
        %4037 = vmatpush.msra.mxu0 0.0
        %4038 = vmatpush.msra.mxu0 0.0
        %4039 = vmatpush.msra.mxu0 0.0
        %4040 = vmatpush.msra.mxu0 0.0
        %4041 = vmatpush.msra.mxu0 0.0
        %4042 = vmatpush.msra.mxu0 0.0
        %4043 = vmatpush.msra.mxu0 0.0
        %4044 = vmatpush.msra.mxu0 0.0
        %4045 = vmatpush.msra.mxu0 0.0
        %4046 = vmatpush.msra.mxu0 0.0
        %4047 = vmatpush.msra.mxu0 0.0
        %4048 = vmatpush.msra.mxu0 0.0
        %4049 = vmatpush.msra.mxu0 0.0
        %4050 = vmatpush.msra.mxu0 %v4030
        %4051 = vmatmul.f32.gmra.mxu0 %v4033
        %v4052 = vpop.f32.mrf.mxu0
        %v4053 = vadd.f32 0.0, %v4052
        %4054 = vdwg.mxu0
        %v4055 = vadd.f32 %v3935, %v4053
        %v4056 = vadd.f32 %v3457, %v4055
        %v4057 = vsel %vm483, %v4056, 0.0
        %4058 = vadd.xlane.f32.xlu0 %v4057
        %v4059 = vpop.xlane.xlu0 %4058
        %v4060 = vmul.f32 %v4059, %v1458
        %v4061 = vsub.f32 %v4056, %v4060
        %v4062 = vmul.f32 %v4061, %v4061
        %v4063 = vsel %vm483, %v4062, 0.0
        %4064 = vadd.xlane.f32.xlu0 %v4063
        %v4065 = vpop.xlane.xlu0 %4064
        %v4066 = vmul.f32 %v4065, %v1458
        %v4067 = vadd.f32 %v4066, 1e-05
        %v4068 = vrsqrt.pop %v4067
        %v4069 = vmul.f32 %v4068, %v4067
        %v4070 = vmul.f32 %v4069, %v4068
        %v4071 = vmul.f32 0.5, %v4070
        %v4072 = vsub.f32 1.5, %v4071
        %v4073 = vmul.f32 %v4068, %v4072
        %vm4074 = vweird.f32 %v4067
        %vm4075 = vweird.f32 %v4068
        %vm4076 = vmor %vm4074, %vm4075
        %v4077 = vsel %vm4076, %v4068, %v4073
        %v4078 = vmul.f32 %v4061, %v4077
        %v4079 = vperm.slane %v2914, 2
        %v4080 = vmul.f32 %v4078, %v4079
        %v4081 = vperm.slane %v2914, 3
        %v4082 = vadd.f32 %v4080, %v4081
        %v4083 = vld [vmem:[%s9] sm:$0xff]
        %v4084 = vld [vmem:[%s9 + $0x8] sm:$0xff]
        %v4085 = vld [vmem:[%s9 + $0x10] sm:$0xff]
        %v4086 = vld [vmem:[%s9 + $0x18] sm:$0xff]
        %v4087 = vld [vmem:[%s12] sm:$0x1]
        %v4089 = vperm.slane %v4087, 0
        %v4092 = vsel %vm483, %v4082, 0
        %4094 = vmatpush.msra.mxu0 0.0
        %4095 = vmatpush.msra.mxu0 0.0
        %4096 = vmatpush.msra.mxu0 0.0
        %4097 = vmatpush.msra.mxu0 0.0
        %4098 = vmatpush.msra.mxu0 0.0
        %4099 = vmatpush.msra.mxu0 0.0
        %4100 = vmatpush.msra.mxu0 0.0
        %4101 = vmatpush.msra.mxu0 0.0
        %4102 = vmatpush.msra.mxu0 0.0
        %4103 = vmatpush.msra.mxu0 0.0
        %4104 = vmatpush.msra.mxu0 0.0
        %4105 = vmatpush.msra.mxu0 0.0
        %4106 = vmatpush.msra.mxu0 %v4086
        %4107 = vmatpush.msra.mxu0 %v4085
        %4108 = vmatpush.msra.mxu0 %v4084
        %4109 = vmatpush.msra.mxu0 %v4083
        %4110 = vmatmul.f32.gmra.mxu0 %v4092
        %v4111 = vpop.f32.mrf.mxu0
        %v4112 = vadd.f32 %v4089, %v4111
        %4113 = vdwg.mxu0
        %v4114 = vmax.f32 %v4112, 0.0
        %v4115 = vld [vmem:[%s10] sm:$0xff]
        %v4116 = vld [vmem:[%s10 + $0x8] sm:$0xff]
        %v4117 = vld [vmem:[%s10 + $0x10] sm:$0xff]
        %v4118 = vld [vmem:[%s10 + $0x18] sm:$0xff]
        %v4119 = vld [vmem:[%s10 + $0x20] sm:$0xff]
        %v4120 = vld [vmem:[%s10 + $0x28] sm:$0xff]
        %v4121 = vld [vmem:[%s10 + $0x30] sm:$0xff]
        %v4122 = vld [vmem:[%s10 + $0x38] sm:$0xff]
        %v4123 = vperm.slane %v2914, 4
        %v4125 = vsel %vm1579, %v4114, 0
        %4127 = vmatpush.msra.mxu0 0.0
        %4128 = vmatpush.msra.mxu0 0.0
        %4129 = vmatpush.msra.mxu0 0.0
        %4130 = vmatpush.msra.mxu0 0.0
        %4131 = vmatpush.msra.mxu0 0.0
        %4132 = vmatpush.msra.mxu0 0.0
        %4133 = vmatpush.msra.mxu0 0.0
        %4134 = vmatpush.msra.mxu0 0.0
        %4135 = vmatpush.msra.mxu0 %v4122
        %4136 = vmatpush.msra.mxu0 %v4121
        %4137 = vmatpush.msra.mxu0 %v4120
        %4138 = vmatpush.msra.mxu0 %v4119
        %4139 = vmatpush.msra.mxu0 %v4118
        %4140 = vmatpush.msra.mxu0 %v4117
        %4141 = vmatpush.msra.mxu0 %v4116
        %4142 = vmatpush.msra.mxu0 %v4115
        %4143 = vmatmul.f32.gmra.mxu0 %v4125
        %v4144 = vpop.f32.mrf.mxu0
        %v4145 = vadd.f32 %v4123, %v4144
        %4146 = vdwg.mxu0
        %v4147 = vadd.f32 %v4082, %v4145
        %v4148 = vsel %vm483, %v4147, 0.0
        %4149 = vadd.xlane.f32.xlu0 %v4148
        %v4150 = vpop.xlane.xlu0 %4149
        %v4151 = vmul.f32 %v4150, %v1458
        %v4152 = vsub.f32 %v4147, %v4151
        %v4153 = vmul.f32 %v4152, %v4152
        %v4154 = vsel %vm483, %v4153, 0.0
        %4155 = vadd.xlane.f32.xlu0 %v4154
        %v4156 = vpop.xlane.xlu0 %4155
        %v4157 = vmul.f32 %v4156, %v1458
        %v4158 = vadd.f32 %v4157, 1e-05
        %v4159 = vrsqrt.pop %v4158
        %v4160 = vmul.f32 %v4159, %v4158
        %v4161 = vmul.f32 %v4160, %v4159
        %v4162 = vmul.f32 0.5, %v4161
        %v4163 = vsub.f32 1.5, %v4162
        %v4164 = vmul.f32 %v4159, %v4163
        %vm4165 = vweird.f32 %v4158
        %vm4166 = vweird.f32 %v4159
        %vm4167 = vmor %vm4165, %vm4166
        %v4168 = vsel %vm4167, %v4159, %v4164
        %v4169 = vmul.f32 %v4152, %v4168
        %v4170 = vperm.slane %v2914, 5
        %v4171 = vmul.f32 %v4169, %v4170
        %v4172 = vperm.slane %v2914, 6
        %v4173 = vadd.f32 %v4171, %v4172
        %s4174 = scalar_lea.vmem %s8, 64
        %v4175 = vld [vmem:[%s4174] sm:$0xff]
        %v4176 = vld [vmem:[%s4174 + $0x8] sm:$0xff]
        %v4177 = vld [vmem:[%s4174 + $0x10] sm:$0xff]
        %v4178 = vld [vmem:[%s4174 + $0x18] sm:$0xff]
        %v4179 = vld [vmem:[%s4174 + $0x20] sm:$0xff]
        %v4180 = vld [vmem:[%s4174 + $0x28] sm:$0xff]
        %v4181 = vld [vmem:[%s4174 + $0x30] sm:$0xff]
        %v4182 = vld [vmem:[%s4174 + $0x38] sm:$0xff]
        %s4183 = scalar_lea.vmem %s11, 16
        %v4184 = vld [vmem:[%s4183] sm:$0xff]
        %v4185 = vld [vmem:[%s4183 + $0x8] sm:$0x7f]
        %v4186 = vadd.f32 %v4173, %v472
        %v4187 = vperm.slane %v4184, 0
        %v4189 = vsel %vm483, %v4186, 0
        %4191 = vmatpush.msra.mxu0 0.0
        %4192 = vmatpush.msra.mxu0 0.0
        %4193 = vmatpush.msra.mxu0 0.0
        %4194 = vmatpush.msra.mxu0 0.0
        %4195 = vmatpush.msra.mxu0 0.0
        %4196 = vmatpush.msra.mxu0 0.0
        %4197 = vmatpush.msra.mxu0 0.0
        %4198 = vmatpush.msra.mxu0 0.0
        %4199 = vmatpush.msra.mxu0 0.0
        %4200 = vmatpush.msra.mxu0 0.0
        %4201 = vmatpush.msra.mxu0 0.0
        %4202 = vmatpush.msra.mxu0 0.0
        %4203 = vmatpush.msra.mxu0 %v4181
        %4204 = vmatpush.msra.mxu0 %v4179
        %4205 = vmatpush.msra.mxu0 %v4177
        %4206 = vmatpush.msra.mxu0 %v4175
        %4207 = vmatmul.f32.gmra.mxu0 %v4189
        %v4208 = vpop.f32.mrf.mxu0
        %v4209 = vadd.f32 %v4187, %v4208
        %4210 = vdwg.mxu0
        %v4211 = vperm.slane %v4184, 1
        %4216 = vrot.lane.b32.xlu0 %v4175, 96
        %v4217 = vpop.permute.xlu0 %4216
        %4218 = vrot.lane.b32.xlu0 %v4177, 96
        %v4219 = vpop.permute.xlu0 %4218
        %4220 = vrot.lane.b32.xlu0 %v4179, 96
        %v4221 = vpop.permute.xlu0 %4220
        %4222 = vrot.lane.b32.xlu0 %v4181, 96
        %v4223 = vpop.permute.xlu0 %4222
        %4228 = vmatpush.msra.mxu0 0.0
        %4229 = vmatpush.msra.mxu0 0.0
        %4230 = vmatpush.msra.mxu0 0.0
        %4231 = vmatpush.msra.mxu0 0.0
        %4232 = vmatpush.msra.mxu0 0.0
        %4233 = vmatpush.msra.mxu0 0.0
        %4234 = vmatpush.msra.mxu0 0.0
        %4235 = vmatpush.msra.mxu0 0.0
        %4236 = vmatpush.msra.mxu0 0.0
        %4237 = vmatpush.msra.mxu0 0.0
        %4238 = vmatpush.msra.mxu0 0.0
        %4239 = vmatpush.msra.mxu0 0.0
        %4240 = vmatpush.msra.mxu0 %v4223
        %4241 = vmatpush.msra.mxu0 %v4221
        %4242 = vmatpush.msra.mxu0 %v4219
        %4243 = vmatpush.msra.mxu0 %v4217
        %4244 = vmatmul.f32.gmra.mxu0 %v4189
        %v4245 = vpop.f32.mrf.mxu0
        %v4246 = vadd.f32 %v4211, %v4245
        %4247 = vdwg.mxu0
        %v4248 = vperm.slane %v4184, 2
        %4249 = vrot.lane.b32.xlu0 %v4175, 64
        %v4250 = vpop.permute.xlu0 %4249
        %4251 = vrot.lane.b32.xlu0 %v4177, 64
        %v4252 = vpop.permute.xlu0 %4251
        %4253 = vrot.lane.b32.xlu0 %v4179, 64
        %v4254 = vpop.permute.xlu0 %4253
        %4255 = vrot.lane.b32.xlu0 %v4181, 64
        %v4256 = vpop.permute.xlu0 %4255
        %v4262 = vsel %vm483, %v4173, 0
        %4264 = vmatpush.msra.mxu0 0.0
        %4265 = vmatpush.msra.mxu0 0.0
        %4266 = vmatpush.msra.mxu0 0.0
        %4267 = vmatpush.msra.mxu0 0.0
        %4268 = vmatpush.msra.mxu0 0.0
        %4269 = vmatpush.msra.mxu0 0.0
        %4270 = vmatpush.msra.mxu0 0.0
        %4271 = vmatpush.msra.mxu0 0.0
        %4272 = vmatpush.msra.mxu0 0.0
        %4273 = vmatpush.msra.mxu0 0.0
        %4274 = vmatpush.msra.mxu0 0.0
        %4275 = vmatpush.msra.mxu0 0.0
        %4276 = vmatpush.msra.mxu0 %v4256
        %4277 = vmatpush.msra.mxu0 %v4254
        %4278 = vmatpush.msra.mxu0 %v4252
        %4279 = vmatpush.msra.mxu0 %v4250
        %4280 = vmatmul.f32.gmra.mxu0 %v4262
        %v4281 = vpop.f32.mrf.mxu0
        %v4282 = vadd.f32 %v4248, %v4281
        %4283 = vdwg.mxu0
        %v4284 = vmul.f32 %v4209, 0.35355338
        %v4286 = vsel %vm613, %v4284, 0
        %v4289 = vsel %vm613, %v4246, 0
        %4291 = vmatpush.xpose.msra.mxu0 0.0
        %4292 = vmatpush.xpose.msra.mxu0 0.0
        %4293 = vmatpush.xpose.msra.mxu0 0.0
        %4294 = vmatpush.xpose.msra.mxu0 0.0
        %4295 = vmatpush.xpose.msra.mxu0 0.0
        %4296 = vmatpush.xpose.msra.mxu0 0.0
        %4297 = vmatpush.xpose.msra.mxu0 0.0
        %4298 = vmatpush.xpose.msra.mxu0 0.0
        %4299 = vmatpush.xpose.msra.mxu0 0.0
        %4300 = vmatpush.xpose.msra.mxu0 0.0
        %4301 = vmatpush.xpose.msra.mxu0 0.0
        %4302 = vmatpush.xpose.msra.mxu0 0.0
        %4303 = vmatpush.xpose.msra.mxu0 0.0
        %4304 = vmatpush.xpose.msra.mxu0 0.0
        %4305 = vmatpush.xpose.msra.mxu0 0.0
        %4306 = vmatpush.xpose.msra.mxu0 %v4289
        %4307 = vmatmul.f32.gmra.mxu0 %v4286
        %v4308 = vpop.f32.mrf.mxu0
        %v4309 = vadd.f32 0.0, %v4308
        %4310 = vdwg.mxu0
        %v4311 = vsel %vm613, %v4309, -inf
        %4312 = vmax.xlane.f32.xlu0 %v4311
        %v4313 = vpop.xlane.xlu0 %4312
        %v4314 = vsub.f32 %v4309, %v4313
        %v4315 = vmul.f32 %v4314, 1.442695
        %v4316 = vpow.pop %v4315
        %v4317 = vsel %vm613, %v4316, 0.0
        %4318 = vadd.xlane.f32.xlu0 %v4317
        %v4319 = vpop.xlane.xlu0 %4318
        %v4320 = vrcp.pop %v4319
        %v4321 = vmul.f32 %v4319, %v4320
        %v4322 = vsub.f32 1.0, %v4321
        %v4323 = vmul.f32 %v4320, %v4322
        %v4324 = vadd.f32 %v4320, %v4323
        %vm4325 = vweird.f32 %v4319
        %vm4326 = vweird.f32 %v4320
        %vm4327 = vmor %vm4325, %vm4326
        %v4328 = vsel %vm4327, %v4320, %v4324
        %v4329 = vand.u32 2147483647, %v4319
        %vm4330 = vcmp.eq.f32.partialorder %v4329, 8.507059e+37
        %v4331 = vand.u32 %v4319, 2147483648
        %v4332 = vor.u32 1.1754944e-38, %v4331
        %v4333 = vsel %vm4330, %v4332, %v4328
        %v4334 = vmul.f32 %v4316, %v4333
        %v4336 = vsel %vm613, %v4334, 0
        %4338 = vmatpush.msra.mxu0 0.0
        %4339 = vmatpush.msra.mxu0 0.0
        %4340 = vmatpush.msra.mxu0 0.0
        %4341 = vmatpush.msra.mxu0 0.0
        %4342 = vmatpush.msra.mxu0 0.0
        %4343 = vmatpush.msra.mxu0 0.0
        %4344 = vmatpush.msra.mxu0 0.0
        %4345 = vmatpush.msra.mxu0 0.0
        %4346 = vmatpush.msra.mxu0 0.0
        %4347 = vmatpush.msra.mxu0 0.0
        %4348 = vmatpush.msra.mxu0 0.0
        %4349 = vmatpush.msra.mxu0 0.0
        %4350 = vmatpush.msra.mxu0 0.0
        %4351 = vmatpush.msra.mxu0 0.0
        %4352 = vmatpush.msra.mxu0 0.0
        %4353 = vmatpush.msra.mxu0 %v4282
        %4354 = vmatmul.f32.gmra.mxu0 %v4336
        %v4355 = vpop.f32.mrf.mxu0
        %v4356 = vadd.f32 0.0, %v4355
        %4357 = vdwg.mxu0
        %4358 = vrot.lane.b32.xlu0 %v4175, 32
        %v4359 = vpop.permute.xlu0 %4358
        %v4362 = vsel %vm613, %v4356, 0
        %4364 = vmatpush.msra.mxu0 0.0
        %4365 = vmatpush.msra.mxu0 0.0
        %4366 = vmatpush.msra.mxu0 0.0
        %4367 = vmatpush.msra.mxu0 0.0
        %4368 = vmatpush.msra.mxu0 0.0
        %4369 = vmatpush.msra.mxu0 0.0
        %4370 = vmatpush.msra.mxu0 0.0
        %4371 = vmatpush.msra.mxu0 0.0
        %4372 = vmatpush.msra.mxu0 0.0
        %4373 = vmatpush.msra.mxu0 0.0
        %4374 = vmatpush.msra.mxu0 0.0
        %4375 = vmatpush.msra.mxu0 0.0
        %4376 = vmatpush.msra.mxu0 0.0
        %4377 = vmatpush.msra.mxu0 0.0
        %4378 = vmatpush.msra.mxu0 0.0
        %4379 = vmatpush.msra.mxu0 %v4359
        %4380 = vmatmul.f32.gmra.mxu0 %v4362
        %v4381 = vpop.f32.mrf.mxu0
        %v4382 = vadd.f32 0.0, %v4381
        %4383 = vdwg.mxu0
        %v4384 = vperm.slane %v4184, 3
        %v4385 = vadd.f32 %v4384, %v4382
        %4386 = vrot.lane.b32.xlu0 %v4284, 120
        %v4387 = vpop.permute.xlu0 %4386
        %4388 = vrot.lane.b32.xlu0 %v4246, 120
        %v4389 = vpop.permute.xlu0 %4388
        %v4390 = vsel %vm613, %v4387, 0
        %v4392 = vsel %vm613, %v4389, 0
        %4394 = vmatpush.xpose.msra.mxu0 0.0
        %4395 = vmatpush.xpose.msra.mxu0 0.0
        %4396 = vmatpush.xpose.msra.mxu0 0.0
        %4397 = vmatpush.xpose.msra.mxu0 0.0
        %4398 = vmatpush.xpose.msra.mxu0 0.0
        %4399 = vmatpush.xpose.msra.mxu0 0.0
        %4400 = vmatpush.xpose.msra.mxu0 0.0
        %4401 = vmatpush.xpose.msra.mxu0 0.0
        %4402 = vmatpush.xpose.msra.mxu0 0.0
        %4403 = vmatpush.xpose.msra.mxu0 0.0
        %4404 = vmatpush.xpose.msra.mxu0 0.0
        %4405 = vmatpush.xpose.msra.mxu0 0.0
        %4406 = vmatpush.xpose.msra.mxu0 0.0
        %4407 = vmatpush.xpose.msra.mxu0 0.0
        %4408 = vmatpush.xpose.msra.mxu0 0.0
        %4409 = vmatpush.xpose.msra.mxu0 %v4392
        %4410 = vmatmul.f32.gmra.mxu0 %v4390
        %v4411 = vpop.f32.mrf.mxu0
        %v4412 = vadd.f32 0.0, %v4411
        %4413 = vdwg.mxu0
        %v4414 = vsel %vm613, %v4412, -inf
        %4415 = vmax.xlane.f32.xlu0 %v4414
        %v4416 = vpop.xlane.xlu0 %4415
        %v4417 = vsub.f32 %v4412, %v4416
        %v4418 = vmul.f32 %v4417, 1.442695
        %v4419 = vpow.pop %v4418
        %v4420 = vsel %vm613, %v4419, 0.0
        %4421 = vadd.xlane.f32.xlu0 %v4420
        %v4422 = vpop.xlane.xlu0 %4421
        %v4423 = vrcp.pop %v4422
        %v4424 = vmul.f32 %v4422, %v4423
        %v4425 = vsub.f32 1.0, %v4424
        %v4426 = vmul.f32 %v4423, %v4425
        %v4427 = vadd.f32 %v4423, %v4426
        %vm4428 = vweird.f32 %v4422
        %vm4429 = vweird.f32 %v4423
        %vm4430 = vmor %vm4428, %vm4429
        %v4431 = vsel %vm4430, %v4423, %v4427
        %v4432 = vand.u32 2147483647, %v4422
        %vm4433 = vcmp.eq.f32.partialorder %v4432, 8.507059e+37
        %v4434 = vand.u32 %v4422, 2147483648
        %v4435 = vor.u32 1.1754944e-38, %v4434
        %v4436 = vsel %vm4433, %v4435, %v4431
        %v4437 = vmul.f32 %v4419, %v4436
        %4439 = vrot.lane.b32.xlu0 %v4282, 120
        %v4440 = vpop.permute.xlu0 %4439
        %v4443 = vsel %vm613, %v4437, 0
        %4445 = vmatpush.msra.mxu0 0.0
        %4446 = vmatpush.msra.mxu0 0.0
        %4447 = vmatpush.msra.mxu0 0.0
        %4448 = vmatpush.msra.mxu0 0.0
        %4449 = vmatpush.msra.mxu0 0.0
        %4450 = vmatpush.msra.mxu0 0.0
        %4451 = vmatpush.msra.mxu0 0.0
        %4452 = vmatpush.msra.mxu0 0.0
        %4453 = vmatpush.msra.mxu0 0.0
        %4454 = vmatpush.msra.mxu0 0.0
        %4455 = vmatpush.msra.mxu0 0.0
        %4456 = vmatpush.msra.mxu0 0.0
        %4457 = vmatpush.msra.mxu0 0.0
        %4458 = vmatpush.msra.mxu0 0.0
        %4459 = vmatpush.msra.mxu0 0.0
        %4460 = vmatpush.msra.mxu0 %v4440
        %4461 = vmatmul.f32.gmra.mxu0 %v4443
        %v4462 = vpop.f32.mrf.mxu0
        %v4463 = vadd.f32 0.0, %v4462
        %4464 = vdwg.mxu0
        %4465 = vrot.lane.b32.xlu0 %v4177, 32
        %v4466 = vpop.permute.xlu0 %4465
        %v4469 = vsel %vm613, %v4463, 0
        %4471 = vmatpush.msra.mxu0 0.0
        %4472 = vmatpush.msra.mxu0 0.0
        %4473 = vmatpush.msra.mxu0 0.0
        %4474 = vmatpush.msra.mxu0 0.0
        %4475 = vmatpush.msra.mxu0 0.0
        %4476 = vmatpush.msra.mxu0 0.0
        %4477 = vmatpush.msra.mxu0 0.0
        %4478 = vmatpush.msra.mxu0 0.0
        %4479 = vmatpush.msra.mxu0 0.0
        %4480 = vmatpush.msra.mxu0 0.0
        %4481 = vmatpush.msra.mxu0 0.0
        %4482 = vmatpush.msra.mxu0 0.0
        %4483 = vmatpush.msra.mxu0 0.0
        %4484 = vmatpush.msra.mxu0 0.0
        %4485 = vmatpush.msra.mxu0 0.0
        %4486 = vmatpush.msra.mxu0 %v4466
        %4487 = vmatmul.f32.gmra.mxu0 %v4469
        %v4488 = vpop.f32.mrf.mxu0
        %v4489 = vadd.f32 0.0, %v4488
        %4490 = vdwg.mxu0
        %v4491 = vadd.f32 %v4385, %v4489
        %4492 = vrot.lane.b32.xlu0 %v4284, 112
        %v4493 = vpop.permute.xlu0 %4492
        %4494 = vrot.lane.b32.xlu0 %v4246, 112
        %v4495 = vpop.permute.xlu0 %4494
        %v4496 = vsel %vm613, %v4493, 0
        %v4498 = vsel %vm613, %v4495, 0
        %4500 = vmatpush.xpose.msra.mxu0 0.0
        %4501 = vmatpush.xpose.msra.mxu0 0.0
        %4502 = vmatpush.xpose.msra.mxu0 0.0
        %4503 = vmatpush.xpose.msra.mxu0 0.0
        %4504 = vmatpush.xpose.msra.mxu0 0.0
        %4505 = vmatpush.xpose.msra.mxu0 0.0
        %4506 = vmatpush.xpose.msra.mxu0 0.0
        %4507 = vmatpush.xpose.msra.mxu0 0.0
        %4508 = vmatpush.xpose.msra.mxu0 0.0
        %4509 = vmatpush.xpose.msra.mxu0 0.0
        %4510 = vmatpush.xpose.msra.mxu0 0.0
        %4511 = vmatpush.xpose.msra.mxu0 0.0
        %4512 = vmatpush.xpose.msra.mxu0 0.0
        %4513 = vmatpush.xpose.msra.mxu0 0.0
        %4514 = vmatpush.xpose.msra.mxu0 0.0
        %4515 = vmatpush.xpose.msra.mxu0 %v4498
        %4516 = vmatmul.f32.gmra.mxu0 %v4496
        %v4517 = vpop.f32.mrf.mxu0
        %v4518 = vadd.f32 0.0, %v4517
        %4519 = vdwg.mxu0
        %v4520 = vsel %vm613, %v4518, -inf
        %4521 = vmax.xlane.f32.xlu0 %v4520
        %v4522 = vpop.xlane.xlu0 %4521
        %v4523 = vsub.f32 %v4518, %v4522
        %v4524 = vmul.f32 %v4523, 1.442695
        %v4525 = vpow.pop %v4524
        %v4526 = vsel %vm613, %v4525, 0.0
        %4527 = vadd.xlane.f32.xlu0 %v4526
        %v4528 = vpop.xlane.xlu0 %4527
        %v4529 = vrcp.pop %v4528
        %v4530 = vmul.f32 %v4528, %v4529
        %v4531 = vsub.f32 1.0, %v4530
        %v4532 = vmul.f32 %v4529, %v4531
        %v4533 = vadd.f32 %v4529, %v4532
        %vm4534 = vweird.f32 %v4528
        %vm4535 = vweird.f32 %v4529
        %vm4536 = vmor %vm4534, %vm4535
        %v4537 = vsel %vm4536, %v4529, %v4533
        %v4538 = vand.u32 2147483647, %v4528
        %vm4539 = vcmp.eq.f32.partialorder %v4538, 8.507059e+37
        %v4540 = vand.u32 %v4528, 2147483648
        %v4541 = vor.u32 1.1754944e-38, %v4540
        %v4542 = vsel %vm4539, %v4541, %v4537
        %v4543 = vmul.f32 %v4525, %v4542
        %4544 = vrot.lane.b32.xlu0 %v4282, 112
        %v4545 = vpop.permute.xlu0 %4544
        %v4548 = vsel %vm613, %v4543, 0
        %4550 = vmatpush.msra.mxu0 0.0
        %4551 = vmatpush.msra.mxu0 0.0
        %4552 = vmatpush.msra.mxu0 0.0
        %4553 = vmatpush.msra.mxu0 0.0
        %4554 = vmatpush.msra.mxu0 0.0
        %4555 = vmatpush.msra.mxu0 0.0
        %4556 = vmatpush.msra.mxu0 0.0
        %4557 = vmatpush.msra.mxu0 0.0
        %4558 = vmatpush.msra.mxu0 0.0
        %4559 = vmatpush.msra.mxu0 0.0
        %4560 = vmatpush.msra.mxu0 0.0
        %4561 = vmatpush.msra.mxu0 0.0
        %4562 = vmatpush.msra.mxu0 0.0
        %4563 = vmatpush.msra.mxu0 0.0
        %4564 = vmatpush.msra.mxu0 0.0
        %4565 = vmatpush.msra.mxu0 %v4545
        %4566 = vmatmul.f32.gmra.mxu0 %v4548
        %v4567 = vpop.f32.mrf.mxu0
        %v4568 = vadd.f32 0.0, %v4567
        %4569 = vdwg.mxu0
        %4570 = vrot.lane.b32.xlu0 %v4179, 32
        %v4571 = vpop.permute.xlu0 %4570
        %v4574 = vsel %vm613, %v4568, 0
        %4576 = vmatpush.msra.mxu0 0.0
        %4577 = vmatpush.msra.mxu0 0.0
        %4578 = vmatpush.msra.mxu0 0.0
        %4579 = vmatpush.msra.mxu0 0.0
        %4580 = vmatpush.msra.mxu0 0.0
        %4581 = vmatpush.msra.mxu0 0.0
        %4582 = vmatpush.msra.mxu0 0.0
        %4583 = vmatpush.msra.mxu0 0.0
        %4584 = vmatpush.msra.mxu0 0.0
        %4585 = vmatpush.msra.mxu0 0.0
        %4586 = vmatpush.msra.mxu0 0.0
        %4587 = vmatpush.msra.mxu0 0.0
        %4588 = vmatpush.msra.mxu0 0.0
        %4589 = vmatpush.msra.mxu0 0.0
        %4590 = vmatpush.msra.mxu0 0.0
        %4591 = vmatpush.msra.mxu0 %v4571
        %4592 = vmatmul.f32.gmra.mxu0 %v4574
        %v4593 = vpop.f32.mrf.mxu0
        %v4594 = vadd.f32 0.0, %v4593
        %4595 = vdwg.mxu0
        %v4596 = vadd.f32 %v4491, %v4594
        %4597 = vrot.lane.b32.xlu0 %v4284, 104
        %v4598 = vpop.permute.xlu0 %4597
        %4599 = vrot.lane.b32.xlu0 %v4246, 104
        %v4600 = vpop.permute.xlu0 %4599
        %v4601 = vsel %vm613, %v4598, 0
        %v4603 = vsel %vm613, %v4600, 0
        %4605 = vmatpush.xpose.msra.mxu0 0.0
        %4606 = vmatpush.xpose.msra.mxu0 0.0
        %4607 = vmatpush.xpose.msra.mxu0 0.0
        %4608 = vmatpush.xpose.msra.mxu0 0.0
        %4609 = vmatpush.xpose.msra.mxu0 0.0
        %4610 = vmatpush.xpose.msra.mxu0 0.0
        %4611 = vmatpush.xpose.msra.mxu0 0.0
        %4612 = vmatpush.xpose.msra.mxu0 0.0
        %4613 = vmatpush.xpose.msra.mxu0 0.0
        %4614 = vmatpush.xpose.msra.mxu0 0.0
        %4615 = vmatpush.xpose.msra.mxu0 0.0
        %4616 = vmatpush.xpose.msra.mxu0 0.0
        %4617 = vmatpush.xpose.msra.mxu0 0.0
        %4618 = vmatpush.xpose.msra.mxu0 0.0
        %4619 = vmatpush.xpose.msra.mxu0 0.0
        %4620 = vmatpush.xpose.msra.mxu0 %v4603
        %4621 = vmatmul.f32.gmra.mxu0 %v4601
        %v4622 = vpop.f32.mrf.mxu0
        %v4623 = vadd.f32 0.0, %v4622
        %4624 = vdwg.mxu0
        %v4625 = vsel %vm613, %v4623, -inf
        %4626 = vmax.xlane.f32.xlu0 %v4625
        %v4627 = vpop.xlane.xlu0 %4626
        %v4628 = vsub.f32 %v4623, %v4627
        %v4629 = vmul.f32 %v4628, 1.442695
        %v4630 = vpow.pop %v4629
        %v4631 = vsel %vm613, %v4630, 0.0
        %4632 = vadd.xlane.f32.xlu0 %v4631
        %v4633 = vpop.xlane.xlu0 %4632
        %v4634 = vrcp.pop %v4633
        %v4635 = vmul.f32 %v4633, %v4634
        %v4636 = vsub.f32 1.0, %v4635
        %v4637 = vmul.f32 %v4634, %v4636
        %v4638 = vadd.f32 %v4634, %v4637
        %vm4639 = vweird.f32 %v4633
        %vm4640 = vweird.f32 %v4634
        %vm4641 = vmor %vm4639, %vm4640
        %v4642 = vsel %vm4641, %v4634, %v4638
        %v4643 = vand.u32 2147483647, %v4633
        %vm4644 = vcmp.eq.f32.partialorder %v4643, 8.507059e+37
        %v4645 = vand.u32 %v4633, 2147483648
        %v4646 = vor.u32 1.1754944e-38, %v4645
        %v4647 = vsel %vm4644, %v4646, %v4642
        %v4648 = vmul.f32 %v4630, %v4647
        %4649 = vrot.lane.b32.xlu0 %v4282, 104
        %v4650 = vpop.permute.xlu0 %4649
        %v4653 = vsel %vm613, %v4648, 0
        %4655 = vmatpush.msra.mxu0 0.0
        %4656 = vmatpush.msra.mxu0 0.0
        %4657 = vmatpush.msra.mxu0 0.0
        %4658 = vmatpush.msra.mxu0 0.0
        %4659 = vmatpush.msra.mxu0 0.0
        %4660 = vmatpush.msra.mxu0 0.0
        %4661 = vmatpush.msra.mxu0 0.0
        %4662 = vmatpush.msra.mxu0 0.0
        %4663 = vmatpush.msra.mxu0 0.0
        %4664 = vmatpush.msra.mxu0 0.0
        %4665 = vmatpush.msra.mxu0 0.0
        %4666 = vmatpush.msra.mxu0 0.0
        %4667 = vmatpush.msra.mxu0 0.0
        %4668 = vmatpush.msra.mxu0 0.0
        %4669 = vmatpush.msra.mxu0 0.0
        %4670 = vmatpush.msra.mxu0 %v4650
        %4671 = vmatmul.f32.gmra.mxu0 %v4653
        %v4672 = vpop.f32.mrf.mxu0
        %v4673 = vadd.f32 0.0, %v4672
        %4674 = vdwg.mxu0
        %4675 = vrot.lane.b32.xlu0 %v4181, 32
        %v4676 = vpop.permute.xlu0 %4675
        %v4679 = vsel %vm613, %v4673, 0
        %4681 = vmatpush.msra.mxu0 0.0
        %4682 = vmatpush.msra.mxu0 0.0
        %4683 = vmatpush.msra.mxu0 0.0
        %4684 = vmatpush.msra.mxu0 0.0
        %4685 = vmatpush.msra.mxu0 0.0
        %4686 = vmatpush.msra.mxu0 0.0
        %4687 = vmatpush.msra.mxu0 0.0
        %4688 = vmatpush.msra.mxu0 0.0
        %4689 = vmatpush.msra.mxu0 0.0
        %4690 = vmatpush.msra.mxu0 0.0
        %4691 = vmatpush.msra.mxu0 0.0
        %4692 = vmatpush.msra.mxu0 0.0
        %4693 = vmatpush.msra.mxu0 0.0
        %4694 = vmatpush.msra.mxu0 0.0
        %4695 = vmatpush.msra.mxu0 0.0
        %4696 = vmatpush.msra.mxu0 %v4676
        %4697 = vmatmul.f32.gmra.mxu0 %v4679
        %v4698 = vpop.f32.mrf.mxu0
        %v4699 = vadd.f32 0.0, %v4698
        %4700 = vdwg.mxu0
        %v4701 = vadd.f32 %v4596, %v4699
        %v4702 = vadd.f32 %v4173, %v4701
        %v4703 = vsel %vm483, %v4702, 0.0
        %4704 = vadd.xlane.f32.xlu0 %v4703
        %v4705 = vpop.xlane.xlu0 %4704
        %v4706 = vmul.f32 %v4705, %v1458
        %v4707 = vsub.f32 %v4702, %v4706
        %v4708 = vmul.f32 %v4707, %v4707
        %v4709 = vsel %vm483, %v4708, 0.0
        %4710 = vadd.xlane.f32.xlu0 %v4709
        %v4711 = vpop.xlane.xlu0 %4710
        %v4712 = vmul.f32 %v4711, %v1458
        %v4713 = vadd.f32 %v4712, 1e-05
        %v4714 = vrsqrt.pop %v4713
        %v4715 = vmul.f32 %v4714, %v4713
        %v4716 = vmul.f32 %v4715, %v4714
        %v4717 = vmul.f32 0.5, %v4716
        %v4718 = vsub.f32 1.5, %v4717
        %v4719 = vmul.f32 %v4714, %v4718
        %vm4720 = vweird.f32 %v4713
        %vm4721 = vweird.f32 %v4714
        %vm4722 = vmor %vm4720, %vm4721
        %v4723 = vsel %vm4722, %v4714, %v4719
        %v4724 = vmul.f32 %v4707, %v4723
        %v4725 = vperm.slane %v4184, 4
        %v4726 = vmul.f32 %v4724, %v4725
        %v4727 = vperm.slane %v4184, 5
        %v4728 = vadd.f32 %v4726, %v4727
        %v4729 = vadd.f32 %v4728, %v472
        %v4730 = vperm.slane %v4184, 6
        %v4732 = vsel %vm483, %v4729, 0
        %4734 = vmatpush.msra.mxu0 0.0
        %4735 = vmatpush.msra.mxu0 0.0
        %4736 = vmatpush.msra.mxu0 0.0
        %4737 = vmatpush.msra.mxu0 0.0
        %4738 = vmatpush.msra.mxu0 0.0
        %4739 = vmatpush.msra.mxu0 0.0
        %4740 = vmatpush.msra.mxu0 0.0
        %4741 = vmatpush.msra.mxu0 0.0
        %4742 = vmatpush.msra.mxu0 0.0
        %4743 = vmatpush.msra.mxu0 0.0
        %4744 = vmatpush.msra.mxu0 0.0
        %4745 = vmatpush.msra.mxu0 0.0
        %4746 = vmatpush.msra.mxu0 %v4182
        %4747 = vmatpush.msra.mxu0 %v4180
        %4748 = vmatpush.msra.mxu0 %v4178
        %4749 = vmatpush.msra.mxu0 %v4176
        %4750 = vmatmul.f32.gmra.mxu0 %v4732
        %v4751 = vpop.f32.mrf.mxu0
        %v4752 = vadd.f32 %v4730, %v4751
        %4753 = vdwg.mxu0
        %v4754 = vperm.slane %v4184, 7
        %4759 = vrot.lane.b32.xlu0 %v4176, 96
        %v4760 = vpop.permute.xlu0 %4759
        %4761 = vrot.lane.b32.xlu0 %v4178, 96
        %v4762 = vpop.permute.xlu0 %4761
        %4763 = vrot.lane.b32.xlu0 %v4180, 96
        %v4764 = vpop.permute.xlu0 %4763
        %4765 = vrot.lane.b32.xlu0 %v4182, 96
        %v4766 = vpop.permute.xlu0 %4765
        %4771 = vmatpush.msra.mxu0 0.0
        %4772 = vmatpush.msra.mxu0 0.0
        %4773 = vmatpush.msra.mxu0 0.0
        %4774 = vmatpush.msra.mxu0 0.0
        %4775 = vmatpush.msra.mxu0 0.0
        %4776 = vmatpush.msra.mxu0 0.0
        %4777 = vmatpush.msra.mxu0 0.0
        %4778 = vmatpush.msra.mxu0 0.0
        %4779 = vmatpush.msra.mxu0 0.0
        %4780 = vmatpush.msra.mxu0 0.0
        %4781 = vmatpush.msra.mxu0 0.0
        %4782 = vmatpush.msra.mxu0 0.0
        %4783 = vmatpush.msra.mxu0 %v4766
        %4784 = vmatpush.msra.mxu0 %v4764
        %4785 = vmatpush.msra.mxu0 %v4762
        %4786 = vmatpush.msra.mxu0 %v4760
        %4787 = vmatmul.f32.gmra.mxu0 %v3501
        %v4788 = vpop.f32.mrf.mxu0
        %v4789 = vadd.f32 %v4754, %v4788
        %4790 = vmatmul.f32.gmra.mxu0 %v3504
        %v4791 = vpop.f32.mrf.mxu0
        %v4792 = vadd.f32 %v4754, %v4791
        %4793 = vmatmul.f32.gmra.mxu0 %v3507
        %v4794 = vpop.f32.mrf.mxu0
        %v4795 = vadd.f32 %v4754, %v4794
        %4796 = vdwg.mxu0
        %v4797 = vperm.slane %v4185, 0
        %4798 = vrot.lane.b32.xlu0 %v4176, 64
        %v4799 = vpop.permute.xlu0 %4798
        %4800 = vrot.lane.b32.xlu0 %v4178, 64
        %v4801 = vpop.permute.xlu0 %4800
        %4802 = vrot.lane.b32.xlu0 %v4180, 64
        %v4803 = vpop.permute.xlu0 %4802
        %4804 = vrot.lane.b32.xlu0 %v4182, 64
        %v4805 = vpop.permute.xlu0 %4804
        %4810 = vmatpush.msra.mxu0 0.0
        %4811 = vmatpush.msra.mxu0 0.0
        %4812 = vmatpush.msra.mxu0 0.0
        %4813 = vmatpush.msra.mxu0 0.0
        %4814 = vmatpush.msra.mxu0 0.0
        %4815 = vmatpush.msra.mxu0 0.0
        %4816 = vmatpush.msra.mxu0 0.0
        %4817 = vmatpush.msra.mxu0 0.0
        %4818 = vmatpush.msra.mxu0 0.0
        %4819 = vmatpush.msra.mxu0 0.0
        %4820 = vmatpush.msra.mxu0 0.0
        %4821 = vmatpush.msra.mxu0 0.0
        %4822 = vmatpush.msra.mxu0 %v4805
        %4823 = vmatpush.msra.mxu0 %v4803
        %4824 = vmatpush.msra.mxu0 %v4801
        %4825 = vmatpush.msra.mxu0 %v4799
        %4826 = vmatmul.f32.gmra.mxu0 %v3549
        %v4827 = vpop.f32.mrf.mxu0
        %v4828 = vadd.f32 %v4797, %v4827
        %4829 = vmatmul.f32.gmra.mxu0 %v3552
        %v4830 = vpop.f32.mrf.mxu0
        %v4831 = vadd.f32 %v4797, %v4830
        %4832 = vmatmul.f32.gmra.mxu0 %v3555
        %v4833 = vpop.f32.mrf.mxu0
        %v4834 = vadd.f32 %v4797, %v4833
        %4835 = vdwg.mxu0
        %v4836 = vmul.f32 %v4752, 0.35355338
        %v4838 = vsel %vm613, %v4836, 0
        %v4841 = vsel %vm613, %v4789, 0
        %v4844 = vsel %vm613, %v4792, 0
        %v4847 = vsel %vm613, %v4795, 0
        %4849 = vmatpush.xpose.msra.mxu0 0.0
        %4850 = vmatpush.xpose.msra.mxu0 0.0
        %4851 = vmatpush.xpose.msra.mxu0 0.0
        %4852 = vmatpush.xpose.msra.mxu0 0.0
        %4853 = vmatpush.xpose.msra.mxu0 0.0
        %4854 = vmatpush.xpose.msra.mxu0 0.0
        %4855 = vmatpush.xpose.msra.mxu0 0.0
        %4856 = vmatpush.xpose.msra.mxu0 0.0
        %4857 = vmatpush.xpose.msra.mxu0 0.0
        %4858 = vmatpush.xpose.msra.mxu0 0.0
        %4859 = vmatpush.xpose.msra.mxu0 0.0
        %4860 = vmatpush.xpose.msra.mxu0 0.0
        %4861 = vmatpush.xpose.msra.mxu0 0.0
        %4862 = vmatpush.xpose.msra.mxu0 %v4847
        %4863 = vmatpush.xpose.msra.mxu0 %v4844
        %4864 = vmatpush.xpose.msra.mxu0 %v4841
        %4865 = vmatmul.f32.gmra.mxu0 %v4838
        %v4866 = vpop.f32.mrf.mxu0
        %v4867 = vadd.f32 0.0, %v4866
        %4868 = vdwg.mxu0
        %v4869 = vsel %vm658, %v4867, -inf
        %4870 = vmax.xlane.f32.xlu0 %v4869
        %v4871 = vpop.xlane.xlu0 %4870
        %v4872 = vsub.f32 %v4867, %v4871
        %v4873 = vmul.f32 %v4872, 1.442695
        %v4874 = vpow.pop %v4873
        %v4875 = vsel %vm658, %v4874, 0.0
        %4876 = vadd.xlane.f32.xlu0 %v4875
        %v4877 = vpop.xlane.xlu0 %4876
        %v4878 = vrcp.pop %v4877
        %v4879 = vmul.f32 %v4877, %v4878
        %v4880 = vsub.f32 1.0, %v4879
        %v4881 = vmul.f32 %v4878, %v4880
        %v4882 = vadd.f32 %v4878, %v4881
        %vm4883 = vweird.f32 %v4877
        %vm4884 = vweird.f32 %v4878
        %vm4885 = vmor %vm4883, %vm4884
        %v4886 = vsel %vm4885, %v4878, %v4882
        %v4887 = vand.u32 2147483647, %v4877
        %vm4888 = vcmp.eq.f32.partialorder %v4887, 8.507059e+37
        %v4889 = vand.u32 %v4877, 2147483648
        %v4890 = vor.u32 1.1754944e-38, %v4889
        %v4891 = vsel %vm4888, %v4890, %v4886
        %v4892 = vmul.f32 %v4874, %v4891
        %v4894 = vsel %vm658, %v4892, 0
        %v4897 = vsel %vm741, %v4834, 0
        %4899 = vmatpush.msra.mxu0 0.0
        %4900 = vmatpush.msra.mxu0 0.0
        %4901 = vmatpush.msra.mxu0 0.0
        %4902 = vmatpush.msra.mxu0 0.0
        %4903 = vmatpush.msra.mxu0 0.0
        %4904 = vmatpush.msra.mxu0 0.0
        %4905 = vmatpush.msra.mxu0 0.0
        %4906 = vmatpush.msra.mxu0 0.0
        %4907 = vmatpush.msra.mxu0 0.0
        %4908 = vmatpush.msra.mxu0 0.0
        %4909 = vmatpush.msra.mxu0 0.0
        %4910 = vmatpush.msra.mxu0 0.0
        %4911 = vmatpush.msra.mxu0 0.0
        %4912 = vmatpush.msra.mxu0 %v4897
        %4913 = vmatpush.msra.mxu0 %v4831
        %4914 = vmatpush.msra.mxu0 %v4828
        %4915 = vmatmul.f32.gmra.mxu0 %v4894
        %v4916 = vpop.f32.mrf.mxu0
        %v4917 = vadd.f32 0.0, %v4916
        %4918 = vdwg.mxu0
        %4919 = vrot.lane.b32.xlu0 %v4176, 32
        %v4920 = vpop.permute.xlu0 %4919
        %v4923 = vsel %vm613, %v4917, 0
        %4925 = vmatpush.msra.mxu0 0.0
        %4926 = vmatpush.msra.mxu0 0.0
        %4927 = vmatpush.msra.mxu0 0.0
        %4928 = vmatpush.msra.mxu0 0.0
        %4929 = vmatpush.msra.mxu0 0.0
        %4930 = vmatpush.msra.mxu0 0.0
        %4931 = vmatpush.msra.mxu0 0.0
        %4932 = vmatpush.msra.mxu0 0.0
        %4933 = vmatpush.msra.mxu0 0.0
        %4934 = vmatpush.msra.mxu0 0.0
        %4935 = vmatpush.msra.mxu0 0.0
        %4936 = vmatpush.msra.mxu0 0.0
        %4937 = vmatpush.msra.mxu0 0.0
        %4938 = vmatpush.msra.mxu0 0.0
        %4939 = vmatpush.msra.mxu0 0.0
        %4940 = vmatpush.msra.mxu0 %v4920
        %4941 = vmatmul.f32.gmra.mxu0 %v4923
        %v4942 = vpop.f32.mrf.mxu0
        %v4943 = vadd.f32 0.0, %v4942
        %4944 = vdwg.mxu0
        %v4945 = vperm.slane %v4185, 1
        %v4946 = vadd.f32 %v4945, %v4943
        %4947 = vrot.lane.b32.xlu0 %v4836, 120
        %v4948 = vpop.permute.xlu0 %4947
        %4949 = vrot.lane.b32.xlu0 %v4789, 120
        %v4950 = vpop.permute.xlu0 %4949
        %4951 = vrot.lane.b32.xlu0 %v4792, 120
        %v4952 = vpop.permute.xlu0 %4951
        %4953 = vrot.lane.b32.xlu0 %v4795, 120
        %v4954 = vpop.permute.xlu0 %4953
        %v4955 = vsel %vm613, %v4948, 0
        %v4957 = vsel %vm613, %v4950, 0
        %v4959 = vsel %vm613, %v4952, 0
        %v4961 = vsel %vm613, %v4954, 0
        %4963 = vmatpush.xpose.msra.mxu0 0.0
        %4964 = vmatpush.xpose.msra.mxu0 0.0
        %4965 = vmatpush.xpose.msra.mxu0 0.0
        %4966 = vmatpush.xpose.msra.mxu0 0.0
        %4967 = vmatpush.xpose.msra.mxu0 0.0
        %4968 = vmatpush.xpose.msra.mxu0 0.0
        %4969 = vmatpush.xpose.msra.mxu0 0.0
        %4970 = vmatpush.xpose.msra.mxu0 0.0
        %4971 = vmatpush.xpose.msra.mxu0 0.0
        %4972 = vmatpush.xpose.msra.mxu0 0.0
        %4973 = vmatpush.xpose.msra.mxu0 0.0
        %4974 = vmatpush.xpose.msra.mxu0 0.0
        %4975 = vmatpush.xpose.msra.mxu0 0.0
        %4976 = vmatpush.xpose.msra.mxu0 %v4961
        %4977 = vmatpush.xpose.msra.mxu0 %v4959
        %4978 = vmatpush.xpose.msra.mxu0 %v4957
        %4979 = vmatmul.f32.gmra.mxu0 %v4955
        %v4980 = vpop.f32.mrf.mxu0
        %v4981 = vadd.f32 0.0, %v4980
        %4982 = vdwg.mxu0
        %v4983 = vsel %vm658, %v4981, -inf
        %4984 = vmax.xlane.f32.xlu0 %v4983
        %v4985 = vpop.xlane.xlu0 %4984
        %v4986 = vsub.f32 %v4981, %v4985
        %v4987 = vmul.f32 %v4986, 1.442695
        %v4988 = vpow.pop %v4987
        %v4989 = vsel %vm658, %v4988, 0.0
        %4990 = vadd.xlane.f32.xlu0 %v4989
        %v4991 = vpop.xlane.xlu0 %4990
        %v4992 = vrcp.pop %v4991
        %v4993 = vmul.f32 %v4991, %v4992
        %v4994 = vsub.f32 1.0, %v4993
        %v4995 = vmul.f32 %v4992, %v4994
        %v4996 = vadd.f32 %v4992, %v4995
        %vm4997 = vweird.f32 %v4991
        %vm4998 = vweird.f32 %v4992
        %vm4999 = vmor %vm4997, %vm4998
        %v5000 = vsel %vm4999, %v4992, %v4996
        %v5001 = vand.u32 2147483647, %v4991
        %vm5002 = vcmp.eq.f32.partialorder %v5001, 8.507059e+37
        %v5003 = vand.u32 %v4991, 2147483648
        %v5004 = vor.u32 1.1754944e-38, %v5003
        %v5005 = vsel %vm5002, %v5004, %v5000
        %v5006 = vmul.f32 %v4988, %v5005
        %5009 = vrot.lane.b32.xlu0 %v4828, 120
        %v5010 = vpop.permute.xlu0 %5009
        %5011 = vrot.lane.b32.xlu0 %v4831, 120
        %v5012 = vpop.permute.xlu0 %5011
        %5013 = vrot.lane.b32.xlu0 %v4834, 120
        %v5014 = vpop.permute.xlu0 %5013
        %v5018 = vsel %vm658, %v5006, 0
        %v5020 = vsel %vm741, %v5014, 0
        %5022 = vmatpush.msra.mxu0 0.0
        %5023 = vmatpush.msra.mxu0 0.0
        %5024 = vmatpush.msra.mxu0 0.0
        %5025 = vmatpush.msra.mxu0 0.0
        %5026 = vmatpush.msra.mxu0 0.0
        %5027 = vmatpush.msra.mxu0 0.0
        %5028 = vmatpush.msra.mxu0 0.0
        %5029 = vmatpush.msra.mxu0 0.0
        %5030 = vmatpush.msra.mxu0 0.0
        %5031 = vmatpush.msra.mxu0 0.0
        %5032 = vmatpush.msra.mxu0 0.0
        %5033 = vmatpush.msra.mxu0 0.0
        %5034 = vmatpush.msra.mxu0 0.0
        %5035 = vmatpush.msra.mxu0 %v5020
        %5036 = vmatpush.msra.mxu0 %v5012
        %5037 = vmatpush.msra.mxu0 %v5010
        %5038 = vmatmul.f32.gmra.mxu0 %v5018
        %v5039 = vpop.f32.mrf.mxu0
        %v5040 = vadd.f32 0.0, %v5039
        %5041 = vdwg.mxu0
        %5042 = vrot.lane.b32.xlu0 %v4178, 32
        %v5043 = vpop.permute.xlu0 %5042
        %v5046 = vsel %vm613, %v5040, 0
        %5048 = vmatpush.msra.mxu0 0.0
        %5049 = vmatpush.msra.mxu0 0.0
        %5050 = vmatpush.msra.mxu0 0.0
        %5051 = vmatpush.msra.mxu0 0.0
        %5052 = vmatpush.msra.mxu0 0.0
        %5053 = vmatpush.msra.mxu0 0.0
        %5054 = vmatpush.msra.mxu0 0.0
        %5055 = vmatpush.msra.mxu0 0.0
        %5056 = vmatpush.msra.mxu0 0.0
        %5057 = vmatpush.msra.mxu0 0.0
        %5058 = vmatpush.msra.mxu0 0.0
        %5059 = vmatpush.msra.mxu0 0.0
        %5060 = vmatpush.msra.mxu0 0.0
        %5061 = vmatpush.msra.mxu0 0.0
        %5062 = vmatpush.msra.mxu0 0.0
        %5063 = vmatpush.msra.mxu0 %v5043
        %5064 = vmatmul.f32.gmra.mxu0 %v5046
        %v5065 = vpop.f32.mrf.mxu0
        %v5066 = vadd.f32 0.0, %v5065
        %5067 = vdwg.mxu0
        %v5068 = vadd.f32 %v4946, %v5066
        %5069 = vrot.lane.b32.xlu0 %v4836, 112
        %v5070 = vpop.permute.xlu0 %5069
        %5071 = vrot.lane.b32.xlu0 %v4789, 112
        %v5072 = vpop.permute.xlu0 %5071
        %5073 = vrot.lane.b32.xlu0 %v4792, 112
        %v5074 = vpop.permute.xlu0 %5073
        %5075 = vrot.lane.b32.xlu0 %v4795, 112
        %v5076 = vpop.permute.xlu0 %5075
        %v5077 = vsel %vm613, %v5070, 0
        %v5079 = vsel %vm613, %v5072, 0
        %v5081 = vsel %vm613, %v5074, 0
        %v5083 = vsel %vm613, %v5076, 0
        %5085 = vmatpush.xpose.msra.mxu0 0.0
        %5086 = vmatpush.xpose.msra.mxu0 0.0
        %5087 = vmatpush.xpose.msra.mxu0 0.0
        %5088 = vmatpush.xpose.msra.mxu0 0.0
        %5089 = vmatpush.xpose.msra.mxu0 0.0
        %5090 = vmatpush.xpose.msra.mxu0 0.0
        %5091 = vmatpush.xpose.msra.mxu0 0.0
        %5092 = vmatpush.xpose.msra.mxu0 0.0
        %5093 = vmatpush.xpose.msra.mxu0 0.0
        %5094 = vmatpush.xpose.msra.mxu0 0.0
        %5095 = vmatpush.xpose.msra.mxu0 0.0
        %5096 = vmatpush.xpose.msra.mxu0 0.0
        %5097 = vmatpush.xpose.msra.mxu0 0.0
        %5098 = vmatpush.xpose.msra.mxu0 %v5083
        %5099 = vmatpush.xpose.msra.mxu0 %v5081
        %5100 = vmatpush.xpose.msra.mxu0 %v5079
        %5101 = vmatmul.f32.gmra.mxu0 %v5077
        %v5102 = vpop.f32.mrf.mxu0
        %v5103 = vadd.f32 0.0, %v5102
        %5104 = vdwg.mxu0
        %v5105 = vsel %vm658, %v5103, -inf
        %5106 = vmax.xlane.f32.xlu0 %v5105
        %v5107 = vpop.xlane.xlu0 %5106
        %v5108 = vsub.f32 %v5103, %v5107
        %v5109 = vmul.f32 %v5108, 1.442695
        %v5110 = vpow.pop %v5109
        %v5111 = vsel %vm658, %v5110, 0.0
        %5112 = vadd.xlane.f32.xlu0 %v5111
        %v5113 = vpop.xlane.xlu0 %5112
        %v5114 = vrcp.pop %v5113
        %v5115 = vmul.f32 %v5113, %v5114
        %v5116 = vsub.f32 1.0, %v5115
        %v5117 = vmul.f32 %v5114, %v5116
        %v5118 = vadd.f32 %v5114, %v5117
        %vm5119 = vweird.f32 %v5113
        %vm5120 = vweird.f32 %v5114
        %vm5121 = vmor %vm5119, %vm5120
        %v5122 = vsel %vm5121, %v5114, %v5118
        %v5123 = vand.u32 2147483647, %v5113
        %vm5124 = vcmp.eq.f32.partialorder %v5123, 8.507059e+37
        %v5125 = vand.u32 %v5113, 2147483648
        %v5126 = vor.u32 1.1754944e-38, %v5125
        %v5127 = vsel %vm5124, %v5126, %v5122
        %v5128 = vmul.f32 %v5110, %v5127
        %5129 = vrot.lane.b32.xlu0 %v4828, 112
        %v5130 = vpop.permute.xlu0 %5129
        %5131 = vrot.lane.b32.xlu0 %v4831, 112
        %v5132 = vpop.permute.xlu0 %5131
        %5133 = vrot.lane.b32.xlu0 %v4834, 112
        %v5134 = vpop.permute.xlu0 %5133
        %v5138 = vsel %vm658, %v5128, 0
        %v5140 = vsel %vm741, %v5134, 0
        %5142 = vmatpush.msra.mxu0 0.0
        %5143 = vmatpush.msra.mxu0 0.0
        %5144 = vmatpush.msra.mxu0 0.0
        %5145 = vmatpush.msra.mxu0 0.0
        %5146 = vmatpush.msra.mxu0 0.0
        %5147 = vmatpush.msra.mxu0 0.0
        %5148 = vmatpush.msra.mxu0 0.0
        %5149 = vmatpush.msra.mxu0 0.0
        %5150 = vmatpush.msra.mxu0 0.0
        %5151 = vmatpush.msra.mxu0 0.0
        %5152 = vmatpush.msra.mxu0 0.0
        %5153 = vmatpush.msra.mxu0 0.0
        %5154 = vmatpush.msra.mxu0 0.0
        %5155 = vmatpush.msra.mxu0 %v5140
        %5156 = vmatpush.msra.mxu0 %v5132
        %5157 = vmatpush.msra.mxu0 %v5130
        %5158 = vmatmul.f32.gmra.mxu0 %v5138
        %v5159 = vpop.f32.mrf.mxu0
        %v5160 = vadd.f32 0.0, %v5159
        %5161 = vdwg.mxu0
        %5162 = vrot.lane.b32.xlu0 %v4180, 32
        %v5163 = vpop.permute.xlu0 %5162
        %v5166 = vsel %vm613, %v5160, 0
        %5168 = vmatpush.msra.mxu0 0.0
        %5169 = vmatpush.msra.mxu0 0.0
        %5170 = vmatpush.msra.mxu0 0.0
        %5171 = vmatpush.msra.mxu0 0.0
        %5172 = vmatpush.msra.mxu0 0.0
        %5173 = vmatpush.msra.mxu0 0.0
        %5174 = vmatpush.msra.mxu0 0.0
        %5175 = vmatpush.msra.mxu0 0.0
        %5176 = vmatpush.msra.mxu0 0.0
        %5177 = vmatpush.msra.mxu0 0.0
        %5178 = vmatpush.msra.mxu0 0.0
        %5179 = vmatpush.msra.mxu0 0.0
        %5180 = vmatpush.msra.mxu0 0.0
        %5181 = vmatpush.msra.mxu0 0.0
        %5182 = vmatpush.msra.mxu0 0.0
        %5183 = vmatpush.msra.mxu0 %v5163
        %5184 = vmatmul.f32.gmra.mxu0 %v5166
        %v5185 = vpop.f32.mrf.mxu0
        %v5186 = vadd.f32 0.0, %v5185
        %5187 = vdwg.mxu0
        %v5188 = vadd.f32 %v5068, %v5186
        %5189 = vrot.lane.b32.xlu0 %v4836, 104
        %v5190 = vpop.permute.xlu0 %5189
        %5191 = vrot.lane.b32.xlu0 %v4789, 104
        %v5192 = vpop.permute.xlu0 %5191
        %5193 = vrot.lane.b32.xlu0 %v4792, 104
        %v5194 = vpop.permute.xlu0 %5193
        %5195 = vrot.lane.b32.xlu0 %v4795, 104
        %v5196 = vpop.permute.xlu0 %5195
        %v5197 = vsel %vm613, %v5190, 0
        %v5199 = vsel %vm613, %v5192, 0
        %v5201 = vsel %vm613, %v5194, 0
        %v5203 = vsel %vm613, %v5196, 0
        %5205 = vmatpush.xpose.msra.mxu0 0.0
        %5206 = vmatpush.xpose.msra.mxu0 0.0
        %5207 = vmatpush.xpose.msra.mxu0 0.0
        %5208 = vmatpush.xpose.msra.mxu0 0.0
        %5209 = vmatpush.xpose.msra.mxu0 0.0
        %5210 = vmatpush.xpose.msra.mxu0 0.0
        %5211 = vmatpush.xpose.msra.mxu0 0.0
        %5212 = vmatpush.xpose.msra.mxu0 0.0
        %5213 = vmatpush.xpose.msra.mxu0 0.0
        %5214 = vmatpush.xpose.msra.mxu0 0.0
        %5215 = vmatpush.xpose.msra.mxu0 0.0
        %5216 = vmatpush.xpose.msra.mxu0 0.0
        %5217 = vmatpush.xpose.msra.mxu0 0.0
        %5218 = vmatpush.xpose.msra.mxu0 %v5203
        %5219 = vmatpush.xpose.msra.mxu0 %v5201
        %5220 = vmatpush.xpose.msra.mxu0 %v5199
        %5221 = vmatmul.f32.gmra.mxu0 %v5197
        %v5222 = vpop.f32.mrf.mxu0
        %v5223 = vadd.f32 0.0, %v5222
        %5224 = vdwg.mxu0
        %v5225 = vsel %vm658, %v5223, -inf
        %5226 = vmax.xlane.f32.xlu0 %v5225
        %v5227 = vpop.xlane.xlu0 %5226
        %v5228 = vsub.f32 %v5223, %v5227
        %v5229 = vmul.f32 %v5228, 1.442695
        %v5230 = vpow.pop %v5229
        %v5231 = vsel %vm658, %v5230, 0.0
        %5232 = vadd.xlane.f32.xlu0 %v5231
        %v5233 = vpop.xlane.xlu0 %5232
        %v5234 = vrcp.pop %v5233
        %v5235 = vmul.f32 %v5233, %v5234
        %v5236 = vsub.f32 1.0, %v5235
        %v5237 = vmul.f32 %v5234, %v5236
        %v5238 = vadd.f32 %v5234, %v5237
        %vm5239 = vweird.f32 %v5233
        %vm5240 = vweird.f32 %v5234
        %vm5241 = vmor %vm5239, %vm5240
        %v5242 = vsel %vm5241, %v5234, %v5238
        %v5243 = vand.u32 2147483647, %v5233
        %vm5244 = vcmp.eq.f32.partialorder %v5243, 8.507059e+37
        %v5245 = vand.u32 %v5233, 2147483648
        %v5246 = vor.u32 1.1754944e-38, %v5245
        %v5247 = vsel %vm5244, %v5246, %v5242
        %v5248 = vmul.f32 %v5230, %v5247
        %5249 = vrot.lane.b32.xlu0 %v4828, 104
        %v5250 = vpop.permute.xlu0 %5249
        %5251 = vrot.lane.b32.xlu0 %v4831, 104
        %v5252 = vpop.permute.xlu0 %5251
        %5253 = vrot.lane.b32.xlu0 %v4834, 104
        %v5254 = vpop.permute.xlu0 %5253
        %v5258 = vsel %vm658, %v5248, 0
        %v5260 = vsel %vm741, %v5254, 0
        %5262 = vmatpush.msra.mxu0 0.0
        %5263 = vmatpush.msra.mxu0 0.0
        %5264 = vmatpush.msra.mxu0 0.0
        %5265 = vmatpush.msra.mxu0 0.0
        %5266 = vmatpush.msra.mxu0 0.0
        %5267 = vmatpush.msra.mxu0 0.0
        %5268 = vmatpush.msra.mxu0 0.0
        %5269 = vmatpush.msra.mxu0 0.0
        %5270 = vmatpush.msra.mxu0 0.0
        %5271 = vmatpush.msra.mxu0 0.0
        %5272 = vmatpush.msra.mxu0 0.0
        %5273 = vmatpush.msra.mxu0 0.0
        %5274 = vmatpush.msra.mxu0 0.0
        %5275 = vmatpush.msra.mxu0 %v5260
        %5276 = vmatpush.msra.mxu0 %v5252
        %5277 = vmatpush.msra.mxu0 %v5250
        %5278 = vmatmul.f32.gmra.mxu0 %v5258
        %v5279 = vpop.f32.mrf.mxu0
        %v5280 = vadd.f32 0.0, %v5279
        %5281 = vdwg.mxu0
        %5282 = vrot.lane.b32.xlu0 %v4182, 32
        %v5283 = vpop.permute.xlu0 %5282
        %v5286 = vsel %vm613, %v5280, 0
        %5288 = vmatpush.msra.mxu0 0.0
        %5289 = vmatpush.msra.mxu0 0.0
        %5290 = vmatpush.msra.mxu0 0.0
        %5291 = vmatpush.msra.mxu0 0.0
        %5292 = vmatpush.msra.mxu0 0.0
        %5293 = vmatpush.msra.mxu0 0.0
        %5294 = vmatpush.msra.mxu0 0.0
        %5295 = vmatpush.msra.mxu0 0.0
        %5296 = vmatpush.msra.mxu0 0.0
        %5297 = vmatpush.msra.mxu0 0.0
        %5298 = vmatpush.msra.mxu0 0.0
        %5299 = vmatpush.msra.mxu0 0.0
        %5300 = vmatpush.msra.mxu0 0.0
        %5301 = vmatpush.msra.mxu0 0.0
        %5302 = vmatpush.msra.mxu0 0.0
        %5303 = vmatpush.msra.mxu0 %v5283
        %5304 = vmatmul.f32.gmra.mxu0 %v5286
        %v5305 = vpop.f32.mrf.mxu0
        %v5306 = vadd.f32 0.0, %v5305
        %5307 = vdwg.mxu0
        %v5308 = vadd.f32 %v5188, %v5306
        %v5309 = vadd.f32 %v4728, %v5308
        %v5310 = vsel %vm483, %v5309, 0.0
        %5311 = vadd.xlane.f32.xlu0 %v5310
        %v5312 = vpop.xlane.xlu0 %5311
        %v5313 = vmul.f32 %v5312, %v1458
        %v5314 = vsub.f32 %v5309, %v5313
        %v5315 = vmul.f32 %v5314, %v5314
        %v5316 = vsel %vm483, %v5315, 0.0
        %5317 = vadd.xlane.f32.xlu0 %v5316
        %v5318 = vpop.xlane.xlu0 %5317
        %v5319 = vmul.f32 %v5318, %v1458
        %v5320 = vadd.f32 %v5319, 1e-05
        %v5321 = vrsqrt.pop %v5320
        %v5322 = vmul.f32 %v5321, %v5320
        %v5323 = vmul.f32 %v5322, %v5321
        %v5324 = vmul.f32 0.5, %v5323
        %v5325 = vsub.f32 1.5, %v5324
        %v5326 = vmul.f32 %v5321, %v5325
        %vm5327 = vweird.f32 %v5320
        %vm5328 = vweird.f32 %v5321
        %vm5329 = vmor %vm5327, %vm5328
        %v5330 = vsel %vm5329, %v5321, %v5326
        %v5331 = vmul.f32 %v5314, %v5330
        %v5332 = vperm.slane %v4185, 2
        %v5333 = vmul.f32 %v5331, %v5332
        %v5334 = vperm.slane %v4185, 3
        %v5335 = vadd.f32 %v5333, %v5334
        %s5336 = scalar_lea.vmem %s9, 32
        %v5337 = vld [vmem:[%s5336] sm:$0xff]
        %v5338 = vld [vmem:[%s5336 + $0x8] sm:$0xff]
        %v5339 = vld [vmem:[%s5336 + $0x10] sm:$0xff]
        %v5340 = vld [vmem:[%s5336 + $0x18] sm:$0xff]
        %s5341 = scalar_lea.vmem %s12, 1
        %v5342 = vld [vmem:[%s5341] sm:$0x1]
        %v5344 = vperm.slane %v5342, 0
        %v5347 = vsel %vm483, %v5335, 0
        %5349 = vmatpush.msra.mxu0 0.0
        %5350 = vmatpush.msra.mxu0 0.0
        %5351 = vmatpush.msra.mxu0 0.0
        %5352 = vmatpush.msra.mxu0 0.0
        %5353 = vmatpush.msra.mxu0 0.0
        %5354 = vmatpush.msra.mxu0 0.0
        %5355 = vmatpush.msra.mxu0 0.0
        %5356 = vmatpush.msra.mxu0 0.0
        %5357 = vmatpush.msra.mxu0 0.0
        %5358 = vmatpush.msra.mxu0 0.0
        %5359 = vmatpush.msra.mxu0 0.0
        %5360 = vmatpush.msra.mxu0 0.0
        %5361 = vmatpush.msra.mxu0 %v5340
        %5362 = vmatpush.msra.mxu0 %v5339
        %5363 = vmatpush.msra.mxu0 %v5338
        %5364 = vmatpush.msra.mxu0 %v5337
        %5365 = vmatmul.f32.gmra.mxu0 %v5347
        %v5366 = vpop.f32.mrf.mxu0
        %v5367 = vadd.f32 %v5344, %v5366
        %5368 = vdwg.mxu0
        %v5369 = vmax.f32 %v5367, 0.0
        %s5370 = scalar_lea.vmem %s10, 64
        %v5371 = vld [vmem:[%s5370] sm:$0xff]
        %v5372 = vld [vmem:[%s5370 + $0x8] sm:$0xff]
        %v5373 = vld [vmem:[%s5370 + $0x10] sm:$0xff]
        %v5374 = vld [vmem:[%s5370 + $0x18] sm:$0xff]
        %v5375 = vld [vmem:[%s5370 + $0x20] sm:$0xff]
        %v5376 = vld [vmem:[%s5370 + $0x28] sm:$0xff]
        %v5377 = vld [vmem:[%s5370 + $0x30] sm:$0xff]
        %v5378 = vld [vmem:[%s5370 + $0x38] sm:$0xff]
        %v5379 = vperm.slane %v4185, 4
        %v5381 = vsel %vm1579, %v5369, 0
        %5383 = vmatpush.msra.mxu0 0.0
        %5384 = vmatpush.msra.mxu0 0.0
        %5385 = vmatpush.msra.mxu0 0.0
        %5386 = vmatpush.msra.mxu0 0.0
        %5387 = vmatpush.msra.mxu0 0.0
        %5388 = vmatpush.msra.mxu0 0.0
        %5389 = vmatpush.msra.mxu0 0.0
        %5390 = vmatpush.msra.mxu0 0.0
        %5391 = vmatpush.msra.mxu0 %v5378
        %5392 = vmatpush.msra.mxu0 %v5377
        %5393 = vmatpush.msra.mxu0 %v5376
        %5394 = vmatpush.msra.mxu0 %v5375
        %5395 = vmatpush.msra.mxu0 %v5374
        %5396 = vmatpush.msra.mxu0 %v5373
        %5397 = vmatpush.msra.mxu0 %v5372
        %5398 = vmatpush.msra.mxu0 %v5371
        %5399 = vmatmul.f32.gmra.mxu0 %v5381
        %v5400 = vpop.f32.mrf.mxu0
        %v5401 = vadd.f32 %v5379, %v5400
        %5402 = vdwg.mxu0
        %v5403 = vadd.f32 %v5335, %v5401
        %v5404 = vsel %vm483, %v5403, 0.0
        %5405 = vadd.xlane.f32.xlu0 %v5404
        %v5406 = vpop.xlane.xlu0 %5405
        %v5407 = vmul.f32 %v5406, %v1458
        %v5408 = vsub.f32 %v5403, %v5407
        %v5409 = vmul.f32 %v5408, %v5408
        %v5410 = vsel %vm483, %v5409, 0.0
        %5411 = vadd.xlane.f32.xlu0 %v5410
        %v5412 = vpop.xlane.xlu0 %5411
        %v5413 = vmul.f32 %v5412, %v1458
        %v5414 = vadd.f32 %v5413, 1e-05
        %v5415 = vrsqrt.pop %v5414
        %v5416 = vmul.f32 %v5415, %v5414
        %v5417 = vmul.f32 %v5416, %v5415
        %v5418 = vmul.f32 0.5, %v5417
        %v5419 = vsub.f32 1.5, %v5418
        %v5420 = vmul.f32 %v5415, %v5419
        %vm5421 = vweird.f32 %v5414
        %vm5422 = vweird.f32 %v5415
        %vm5423 = vmor %vm5421, %vm5422
        %v5424 = vsel %vm5423, %v5415, %v5420
        %v5425 = vmul.f32 %v5408, %v5424
        %v5426 = vperm.slane %v4185, 5
        %v5427 = vmul.f32 %v5425, %v5426
        %v5428 = vperm.slane %v4185, 6
        %v5429 = vadd.f32 %v5427, %v5428
        %v5430 = vld [vmem:[%s13] sm:$0x3]
        %v5431 = vsel %vm483, %v5429, 0.0
        %5432 = vadd.xlane.f32.xlu0 %v5431
        %v5433 = vpop.xlane.xlu0 %5432
        %v5434 = vmul.f32 %v5433, %v1458
        %v5435 = vsub.f32 %v5429, %v5434
        %v5436 = vmul.f32 %v5435, %v5435
        %v5437 = vsel %vm483, %v5436, 0.0
        %5438 = vadd.xlane.f32.xlu0 %v5437
        %v5439 = vpop.xlane.xlu0 %5438
        %v5440 = vmul.f32 %v5439, %v1458
        %v5441 = vadd.f32 %v5440, 1e-05
        %v5442 = vrsqrt.pop %v5441
        %v5443 = vmul.f32 %v5442, %v5441
        %v5444 = vmul.f32 %v5443, %v5442
        %v5445 = vmul.f32 0.5, %v5444
        %v5446 = vsub.f32 1.5, %v5445
        %v5447 = vmul.f32 %v5442, %v5446
        %vm5448 = vweird.f32 %v5441
        %vm5449 = vweird.f32 %v5442
        %vm5450 = vmor %vm5448, %vm5449
        %v5451 = vsel %vm5450, %v5442, %v5447
        %v5452 = vmul.f32 %v5435, %v5451
        %v5453 = vperm.slane %v5430, 0
        %v5454 = vmul.f32 %v5452, %v5453
        %v5455 = vperm.slane %v5430, 1
        %v5456 = vadd.f32 %v5454, %v5455
        %5457 = vst.msk [vmem:[%s460] sm:$0xff] %vm483, %v5456
        %s5458 = sand.u32 %s335, 1
        %s5459 = scalar_lea.sflag [#allocation3], %s5458
        %s5460 = sand.u32 %s335, 1
        %s5461 = smul.addr %s5460, 8
        %s5462 = scalar_lea.vmem [#allocation2], %s5461
        // Predicated region
        $region77: #{transformer_forward.1} parent=75 // pred_check
          %p5463 = pneg %p345
        $region78: #{transformer_forward.1} parent=75 // pred_check_branch
          %5465 = sbr.rel (%p5463) target = $region80
        $region79: #{transformer_forward.1} parent=75 // pred_region
          %5467 = vsyncadd %s5459, 0
          %s5468 = smul.addr %s28, 8
          %s5469 = scalar_lea.hbm %s14, %s5468
          %s5471 = sshll.u32 %s5462, 4
          %s5472 = int_to_ptr.vmem [resolvable:$true] %s5471
          %s5473 = sshll.u32 %s5469, 4
          %s5474 = int_to_ptr.hbm [resolvable:$true] %s5473
          %5476 = dma.vmem_to_hbm [thread:$0]  %s5472, 128, %s5474, %s5459
        $region80: #{transformer_forward.1} parent=75 // pred_fallthru
          _
      $region76: #{transformer_forward.1} parent=5 // pred_fallthru
        _
      %p5477 = scmp.le.s32.totalorder 2, %s23
      // Predicated region
      $region81: #{transformer_forward.1} parent=5 // pred_check
        %p5478 = pneg %p5477
      $region82: #{transformer_forward.1} parent=5 // pred_check_branch
        %5480 = sbr.rel (%p5478) target = $region84
      $region83: #{transformer_forward.1} parent=5 // pred_region
        %s5481 = ssub.s32 %s23, 2
        // Predicated region
        $region85: #{transformer_forward.1} parent=83 // pred_check
          %p5482 = pneg %p351
        $region86: #{transformer_forward.1} parent=83 // pred_check_branch
          %5484 = sbr.rel (%p5482) target = $region88
        $region87: #{transformer_forward.1} parent=83 // pred_region
          %s5485 = sand.u32 %s336, 1
          %s5486 = scalar_lea.sflag [#allocation3], %s5485
          %s5487 = sand.u32 %s336, 1
          %s5488 = smul.addr %s5487, 8
          %s5489 = scalar_lea.vmem [#allocation2], %s5488
          %5491 = dma.done %s5486, 128
        $region88: #{transformer_forward.1} parent=83 // pred_fallthru
          _
      $region84: #{transformer_forward.1} parent=5 // pred_fallthru
        _
    $region6: #{transformer_forward.1} parent=1 // loop_footer
      %s27 = sadd.s32 1, %s23
    $region7: #{transformer_forward.1} parent=1 // loop_footer_branch
      %22 = sbr.rel target = $region3
    $region8: #{transformer_forward.1} parent=1 // loop_exit
      _
    %5492 = vsyncpa [#allocation3], 1
    %s5493 = scalar_lea.sflag [#allocation3], 1
    %5494 = vsyncpa %s5493, 1

</llo_original>
